<compile_context>
chip_gen: v6e
topology: v6e:2x2x1
jax: 0.10.0
libtpu: 0.0.40
codegen_flags: <defaults>
</compile_context>

<pallas_src>
import jax
import jax.numpy as jnp
from jax.experimental import pallas as pl
from jax.experimental.pallas import tpu as pltpu


# ------------------------------ Pallas kernels ------------------------------

def _convT_bn_relu_kernel(a_ref, w_ref, g_ref, b_ref, out_ref):
    """Fused (im2col) matmul -> BatchNorm(batch stats) -> ReLU.

    The whole layer lives in one block, so per-channel batch statistics are
    computed directly on the in-VMEM matmul result and normalize+ReLU is a
    pure epilogue -- no extra pallas_call, no HBM round trip of y.
    """
    y = jnp.dot(a_ref[...], w_ref[...], preferred_element_type=jnp.float32)
    mean = jnp.mean(y, axis=0, keepdims=True)            # (1, C)
    d = y - mean
    var = jnp.mean(d * d, axis=0, keepdims=True)         # biased, two-pass
    inv = jax.lax.rsqrt(var + 1e-5)
    z = d * (inv * g_ref[...]) + b_ref[...]
    out_ref[...] = jnp.maximum(z, 0.0).astype(out_ref.dtype)


def _convT_tanh_kernel(a_ref, w_ref, out_ref):
    """Final layer: (im2col) matmul -> tanh.  No stats computed."""
    y = jnp.dot(a_ref[...], w_ref[...], preferred_element_type=jnp.float32)
    out_ref[...] = jnp.tanh(y).astype(out_ref.dtype)


# ----------------------------- Pallas wrappers ------------------------------

def convT_bn_relu(patches, wm, gamma, beta):
    """patches:(M,K), wm:(K,C), gamma/beta:(C,) -> (M,C) normalized+ReLU."""
    M, K = patches.shape
    C = wm.shape[1]
    return pl.pallas_call(
        _convT_bn_relu_kernel,
        out_shape=jax.ShapeDtypeStruct((M, C), jnp.float32),
        grid=(1,),
        in_specs=[pl.BlockSpec((M, K), lambda i: (0, 0)),
                  pl.BlockSpec((K, C), lambda i: (0, 0)),
                  pl.BlockSpec((1, C), lambda i: (0, 0)),
                  pl.BlockSpec((1, C), lambda i: (0, 0))],
        out_specs=pl.BlockSpec((M, C), lambda i: (0, 0)),
        compiler_params=pltpu.CompilerParams(
            dimension_semantics=("arbitrary",)),
    )(patches, wm, gamma.reshape(1, C), beta.reshape(1, C))


def convT_tanh(patches, wm, tm_max=2048):
    """patches:(M,K), wm:(K,C) -> tanh(patches @ wm), M tiled 'parallel'."""
    M, K = patches.shape
    C = wm.shape[1]
    tm = M
    if M > tm_max:
        tm = tm_max
        while M % tm:                 # find a divisor of M (stays mult. of 8)
            tm //= 2
    return pl.pallas_call(
        _convT_tanh_kernel,
        out_shape=jax.ShapeDtypeStruct((M, C), jnp.float32),
        grid=(M // tm,),
        in_specs=[pl.BlockSpec((tm, K), lambda i: (i, 0)),
                  pl.BlockSpec((K, C), lambda i: (0, 0))],
        out_specs=pl.BlockSpec((tm, C), lambda i: (i, 0)),
        compiler_params=pltpu.CompilerParams(
            dimension_semantics=("parallel",)),
    )(patches, wm)


# ------------------------------- JAX glue -----------------------------------

def _im2col_s1(x, k):
    """Channels-last stride-1 valid-conv patches.

    x:(B,H,W,C) -> (B*Ho*Wo, k*k*C) with K ordered (kh, kw, c)."""
    B, H, W, C = x.shape
    Ho, Wo = H - k + 1, W - k + 1
    cols = [x[:, kh:kh + Ho, kw:kw + Wo, :]
            for kh in range(k) for kw in range(k)]
    p = jnp.stack(cols, axis=3)                  # (B, Ho, Wo, k*k, C)
    return p.reshape(B * Ho * Wo, k * k * C), Ho, Wo


def conv_transpose_layer(h, wt, stride, pad, gamma=None, beta=None,
                         final_tanh=False):
    """One ConvTranspose2d(+BN+ReLU | +Tanh) layer, channels-last in and out.

    h:(B,H,W,Cin);  wt:(Cin,Cout,k,k) = PyTorch ConvTranspose2d weight.
    """
    B, H, W, Cin = h.shape
    _, Cout, k, _ = wt.shape
    pp = k - 1 - pad                              # equivalent-conv padding
    Hd = (H - 1) * stride + 1                     # zero-dilated size
    Wd = (W - 1) * stride + 1
    xd = jnp.zeros((B, Hd + 2 * pp, Wd + 2 * pp, Cin), h.dtype)
    xd = xd.at[:, pp:pp + Hd:stride, pp:pp + Wd:stride, :].set(h)
    patches, Ho, Wo = _im2col_s1(xd, k)
    # ConvTranspose weight -> equivalent stride-1 conv weight in (kh,kw,Cin,Cout)
    wm = jnp.flip(wt, axis=(2, 3)).transpose(2, 3, 0, 1).reshape(k * k * Cin, Cout)
    if final_tanh:
        y = convT_tanh(patches, wm)
    else:
        y = convT_bn_relu(patches, wm, gamma, beta)
    return y.reshape(B, Ho, Wo, Cout)


def generator_forward(z, params):
    """z:(B, z_dim, 1, 1) NCHW -> image:(B, image_size, 64, 64) NCHW."""
    B, Z = z.shape[0], z.shape[1]
    h = z.reshape(B, Z, 1, 1).transpose(0, 2, 3, 1)        # -> (B,1,1,Z) once
    h = conv_transpose_layer(h, params["w1"], 1, 0,
                             params["gamma1"], params["beta1"])
    h = conv_transpose_layer(h, params["w2"], 2, 1,
                             params["gamma2"], params["beta2"])
    h = conv_transpose_layer(h, params["w3"], 2, 1,
                             params["gamma3"], params["beta3"])
    h = conv_transpose_layer(h, params["w4"], 2, 1,
                             params["gamma4"], params["beta4"])
    h = conv_transpose_layer(h, params["w5"], 2, 1, final_tanh=True)
    return h.transpose(0, 3, 1, 2)                         # -> NCHW once


# --------------------------- pure-JAX reference ------------------------------

def reference_forward(z, params):
    def convT(x, wt, s, p):
        k = wt.shape[2]
        w_conv = jnp.flip(wt, axis=(2, 3)).transpose(1, 0, 2, 3)  # (Cout,Cin,k,k)
        pp = k - 1 - p
        return jax.lax.conv_general_dilated(
            x, w_conv, window_strides=(1, 1),
            padding=[(pp, pp), (pp, pp)], lhs_dilation=(s, s),
            dimension_numbers=("NCHW", "OIHW", "NCHW"))

    def bn_relu(v, g, b):
        mean = v.mean(axis=(0, 2, 3), keepdims=True)
        var = v.var(axis=(0, 2, 3), keepdims=True)   # biased (BN training fwd)
        vhat = (v - mean) * jax.lax.rsqrt(var + 1e-5)
        return jnp.maximum(vhat * g[None, :, None, None]
                           + b[None, :, None, None], 0.0)

    h = bn_relu(convT(z, params["w1"], 1, 0), params["gamma1"], params["beta1"])
    h = bn_relu(convT(h, params["w2"], 2, 1), params["gamma2"], params["beta2"])
    h = bn_relu(convT(h, params["w3"], 2, 1), params["gamma3"], params["beta3"])
    h = bn_relu(convT(h, params["w4"], 2, 1), params["gamma4"], params["beta4"])
    return jnp.tanh(convT(h, params["w5"], 2, 1))


# ----------------------------------- main ------------------------------------

if __name__ == "__main__":
    # args.z_dimention = 16, args.G_size = 8, args.image_size = 3 (channels).
    B, Z, G, IMG_C = 2, 16, 8, 3

    key = jax.random.PRNGKey(0)
    keys = jax.random.split(key, 14)

    def w_init(k, shape):
        return (0.02 * jax.random.normal(k, shape)).astype(jnp.float32)

    params = {
        # ConvTranspose2d weight layout: (C_in, C_out, kh, kw)
        "w1": w_init(keys[0], (Z, 8 * G, 4, 4)),
        "w2": w_init(keys[1], (8 * G, 4 * G, 4, 4)),
        "w3": w_init(keys[2], (4 * G, 2 * G, 4, 4)),
        "w4": w_init(keys[3], (2 * G, G, 4, 4)),
        "w5": w_init(keys[4], (G, IMG_C, 4, 4)),
        "gamma1": (1.0 + 0.1 * jax.random.normal(keys[5], (8 * G,))).astype(jnp.float32),
        "beta1": (0.1 * jax.random.normal(keys[6], (8 * G,))).astype(jnp.float32),
        "gamma2": (1.0 + 0.1 * jax.random.normal(keys[7], (4 * G,))).astype(jnp.float32),
        "beta2": (0.1 * jax.random.normal(keys[8], (4 * G,))).astype(jnp.float32),
        "gamma3": (1.0 + 0.1 * jax.random.normal(keys[9], (2 * G,))).astype(jnp.float32),
        "beta3": (0.1 * jax.random.normal(keys[10], (2 * G,))).astype(jnp.float32),
        "gamma4": (1.0 + 0.1 * jax.random.normal(keys[11], (G,))).astype(jnp.float32),
        "beta4": (0.1 * jax.random.normal(keys[12], (G,))).astype(jnp.float32),
    }

    z = jax.random.normal(keys[13], (B, Z, 1, 1), dtype=jnp.float32)

    fwd = jax.jit(generator_forward)
    out = jax.block_until_ready(fwd(z, params))
    ref = jax.block_until_ready(reference_forward(z, params))

    assert out.shape == (B, IMG_C, 64, 64), out.shape
    assert jnp.allclose(out, ref, rtol=1e-3, atol=1e-3), (
        float(jnp.max(jnp.abs(out - ref))))
    print("KERNEL_OK")
</pallas_src>

<mosaic_0001>
module attributes {stable_mosaic.version = 11 : i64} {
  func.func @_convT_bn_relu_kernel(%arg0: i32, %arg1: memref<32x256xf32, #tpu.memory_space<vmem>>, %arg2: memref<256x64xf32, #tpu.memory_space<vmem>>, %arg3: memref<1x64xf32, #tpu.memory_space<vmem>>, %arg4: memref<1x64xf32, #tpu.memory_space<vmem>>, %arg5: memref<32x64xf32, #tpu.memory_space<vmem>>) attributes {dimension_semantics = [#tpu.dimension_semantics<arbitrary>], iteration_bounds = array<i64: 1>, scalar_prefetch = 0 : i64, scratch_operands = 0 : i64, tpu.core_type = #tpu.core_type<tc>, window_params = [{pipeline_mode = #tpu.pipeline_mode<synchronous>, transform_indices = @transform_0, window_bounds = array<i64: 32, 256>}, {pipeline_mode = #tpu.pipeline_mode<synchronous>, transform_indices = @transform_1, window_bounds = array<i64: 256, 64>}, {pipeline_mode = #tpu.pipeline_mode<synchronous>, transform_indices = @transform_2, window_bounds = array<i64: 1, 64>}, {pipeline_mode = #tpu.pipeline_mode<synchronous>, transform_indices = @transform_3, window_bounds = array<i64: 1, 64>}, {pipeline_mode = #tpu.pipeline_mode<synchronous>, transform_indices = @transform_4, window_bounds = array<i64: 32, 64>}]} {
    %c0 = arith.constant 0 : index
    %c0_0 = arith.constant 0 : index
    %0 = vector.load %arg1[%c0, %c0_0] : memref<32x256xf32, #tpu.memory_space<vmem>>, vector<32x256xf32>
    %c0_1 = arith.constant 0 : index
    %c0_2 = arith.constant 0 : index
    %1 = vector.load %arg2[%c0_1, %c0_2] : memref<256x64xf32, #tpu.memory_space<vmem>>, vector<256x64xf32>
    %cst = arith.constant dense<0.000000e+00> : vector<32x64xf32>
    %2 = tpu.matmul %0, %1, %cst {dimension_numbers = #tpu.dot_dimension_numbers<[1], [0], [0], [1], [0, 0, 1, 1], [], []>} : vector<32x256xf32>, vector<256x64xf32>, vector<32x64xf32> -> vector<32x64xf32>
    %cst_3 = arith.constant dense<0.000000e+00> : vector<64xf32>
    %3 = vector.multi_reduction <add>, %2, %cst_3 [0] : vector<32x64xf32> to vector<64xf32>
    %4 = vector.shape_cast %3 : vector<64xf32> to vector<1x64xf32>
    %cst_4 = arith.constant 3.200000e+01 : f32
    %5 = vector.broadcast %cst_4 : f32 to vector<1x64xf32>
    %6 = arith.divf %4, %5 : vector<1x64xf32>
    %7 = vector.broadcast %6 : vector<1x64xf32> to vector<32x64xf32>
    %8 = arith.subf %2, %7 : vector<32x64xf32>
    %9 = arith.mulf %8, %8 : vector<32x64xf32>
    %cst_5 = arith.constant dense<0.000000e+00> : vector<64xf32>
    %10 = vector.multi_reduction <add>, %9, %cst_5 [0] : vector<32x64xf32> to vector<64xf32>
    %11 = vector.shape_cast %10 : vector<64xf32> to vector<1x64xf32>
    %cst_6 = arith.constant 3.200000e+01 : f32
    %12 = vector.broadcast %cst_6 : f32 to vector<1x64xf32>
    %13 = arith.divf %11, %12 : vector<1x64xf32>
    %cst_7 = arith.constant 9.99999974E-6 : f32
    %14 = vector.broadcast %cst_7 : f32 to vector<1x64xf32>
    %15 = arith.addf %13, %14 : vector<1x64xf32>
    %16 = math.rsqrt %15 : vector<1x64xf32>
    %c0_8 = arith.constant 0 : index
    %c0_9 = arith.constant 0 : index
    %17 = vector.load %arg3[%c0_8, %c0_9] : memref<1x64xf32, #tpu.memory_space<vmem>>, vector<1x64xf32>
    %18 = arith.mulf %16, %17 : vector<1x64xf32>
    %19 = vector.broadcast %18 : vector<1x64xf32> to vector<32x64xf32>
    %20 = arith.mulf %8, %19 : vector<32x64xf32>
    %c0_10 = arith.constant 0 : index
    %c0_11 = arith.constant 0 : index
    %21 = vector.load %arg4[%c0_10, %c0_11] : memref<1x64xf32, #tpu.memory_space<vmem>>, vector<1x64xf32>
    %22 = vector.broadcast %21 : vector<1x64xf32> to vector<32x64xf32>
    %23 = arith.addf %20, %22 : vector<32x64xf32>
    %cst_12 = arith.constant 0.000000e+00 : f32
    %24 = vector.broadcast %cst_12 : f32 to vector<32x64xf32>
    %25 = arith.maximumf %23, %24 : vector<32x64xf32>
    %c0_13 = arith.constant 0 : index
    %c0_14 = arith.constant 0 : index
    %26 = vector.load %arg5[%c0_13, %c0_14] : memref<32x64xf32, #tpu.memory_space<vmem>>, vector<32x64xf32>
    tpu.vector_store %arg5[%c0_13, %c0_14], %25 {strides = array<i32>} : memref<32x64xf32, #tpu.memory_space<vmem>>, vector<32x64xf32>,
    return
  }
  func.func @transform_0(%arg0: i32) -> (i32, i32) {
    %c0_i32 = arith.constant 0 : i32
    %c0_i32_0 = arith.constant 0 : i32
    %c0_i32_1 = arith.constant 0 : i32
    return %c0_i32, %c0_i32_0 : i32, i32
  }
  func.func @transform_1(%arg0: i32) -> (i32, i32) {
    %c0_i32 = arith.constant 0 : i32
    %c0_i32_0 = arith.constant 0 : i32
    %c0_i32_1 = arith.constant 0 : i32
    return %c0_i32, %c0_i32_0 : i32, i32
  }
  func.func @transform_2(%arg0: i32) -> (i32, i32) {
    %c0_i32 = arith.constant 0 : i32
    %c0_i32_0 = arith.constant 0 : i32
    %c0_i32_1 = arith.constant 0 : i32
    return %c0_i32, %c0_i32_0 : i32, i32
  }
  func.func @transform_3(%arg0: i32) -> (i32, i32) {
    %c0_i32 = arith.constant 0 : i32
    %c0_i32_0 = arith.constant 0 : i32
    %c0_i32_1 = arith.constant 0 : i32
    return %c0_i32, %c0_i32_0 : i32, i32
  }
  func.func @transform_4(%arg0: i32) -> (i32, i32) {
    %c0_i32 = arith.constant 0 : i32
    %c0_i32_0 = arith.constant 0 : i32
    %c0_i32_1 = arith.constant 0 : i32
    return %c0_i32, %c0_i32_0 : i32, i32
  }
}

module attributes {stable_mosaic.version = 11 : i64} {
  func.func @_convT_bn_relu_kernel(%arg0: i32, %arg1: memref<128x1024xf32, #tpu.memory_space<vmem>>, %arg2: memref<1024x32xf32, #tpu.memory_space<vmem>>, %arg3: memref<1x32xf32, #tpu.memory_space<vmem>>, %arg4: memref<1x32xf32, #tpu.memory_space<vmem>>, %arg5: memref<128x32xf32, #tpu.memory_space<vmem>>) attributes {dimension_semantics = [#tpu.dimension_semantics<arbitrary>], iteration_bounds = array<i64: 1>, scalar_prefetch = 0 : i64, scratch_operands = 0 : i64, tpu.core_type = #tpu.core_type<tc>, window_params = [{pipeline_mode = #tpu.pipeline_mode<synchronous>, transform_indices = @transform_0, window_bounds = array<i64: 128, 1024>}, {pipeline_mode = #tpu.pipeline_mode<synchronous>, transform_indices = @transform_1, window_bounds = array<i64: 1024, 32>}, {pipeline_mode = #tpu.pipeline_mode<synchronous>, transform_indices = @transform_2, window_bounds = array<i64: 1, 32>}, {pipeline_mode = #tpu.pipeline_mode<synchronous>, transform_indices = @transform_3, window_bounds = array<i64: 1, 32>}, {pipeline_mode = #tpu.pipeline_mode<synchronous>, transform_indices = @transform_4, window_bounds = array<i64: 128, 32>}]} {
    %c0 = arith.constant 0 : index
    %c0_0 = arith.constant 0 : index
    %0 = vector.load %arg1[%c0, %c0_0] : memref<128x1024xf32, #tpu.memory_space<vmem>>, vector<128x1024xf32>
    %c0_1 = arith.constant 0 : index
    %c0_2 = arith.constant 0 : index
    %1 = vector.load %arg2[%c0_1, %c0_2] : memref<1024x32xf32, #tpu.memory_space<vmem>>, vector<1024x32xf32>
    %cst = arith.constant dense<0.000000e+00> : vector<128x32xf32>
    %2 = tpu.matmul %0, %1, %cst {dimension_numbers = #tpu.dot_dimension_numbers<[1], [0], [0], [1], [0, 0, 1, 1], [], []>} : vector<128x1024xf32>, vector<1024x32xf32>, vector<128x32xf32> -> vector<128x32xf32>
    %cst_3 = arith.constant dense<0.000000e+00> : vector<32xf32>
    %3 = vector.multi_reduction <add>, %2, %cst_3 [0] : vector<128x32xf32> to vector<32xf32>
    %4 = vector.shape_cast %3 : vector<32xf32> to vector<1x32xf32>
    %cst_4 = arith.constant 1.280000e+02 : f32
    %5 = vector.broadcast %cst_4 : f32 to vector<1x32xf32>
    %6 = arith.divf %4, %5 : vector<1x32xf32>
    %7 = vector.broadcast %6 : vector<1x32xf32> to vector<128x32xf32>
    %8 = arith.subf %2, %7 : vector<128x32xf32>
    %9 = arith.mulf %8, %8 : vector<128x32xf32>
    %cst_5 = arith.constant dense<0.000000e+00> : vector<32xf32>
    %10 = vector.multi_reduction <add>, %9, %cst_5 [0] : vector<128x32xf32> to vector<32xf32>
    %11 = vector.shape_cast %10 : vector<32xf32> to vector<1x32xf32>
    %cst_6 = arith.constant 1.280000e+02 : f32
    %12 = vector.broadcast %cst_6 : f32 to vector<1x32xf32>
    %13 = arith.divf %11, %12 : vector<1x32xf32>
    %cst_7 = arith.constant 9.99999974E-6 : f32
    %14 = vector.broadcast %cst_7 : f32 to vector<1x32xf32>
    %15 = arith.addf %13, %14 : vector<1x32xf32>
    %16 = math.rsqrt %15 : vector<1x32xf32>
    %c0_8 = arith.constant 0 : index
    %c0_9 = arith.constant 0 : index
    %17 = vector.load %arg3[%c0_8, %c0_9] : memref<1x32xf32, #tpu.memory_space<vmem>>, vector<1x32xf32>
    %18 = arith.mulf %16, %17 : vector<1x32xf32>
    %19 = vector.broadcast %18 : vector<1x32xf32> to vector<128x32xf32>
    %20 = arith.mulf %8, %19 : vector<128x32xf32>
    %c0_10 = arith.constant 0 : index
    %c0_11 = arith.constant 0 : index
    %21 = vector.load %arg4[%c0_10, %c0_11] : memref<1x32xf32, #tpu.memory_space<vmem>>, vector<1x32xf32>
    %22 = vector.broadcast %21 : vector<1x32xf32> to vector<128x32xf32>
    %23 = arith.addf %20, %22 : vector<128x32xf32>
    %cst_12 = arith.constant 0.000000e+00 : f32
    %24 = vector.broadcast %cst_12 : f32 to vector<128x32xf32>
    %25 = arith.maximumf %23, %24 : vector<128x32xf32>
    %c0_13 = arith.constant 0 : index
    %c0_14 = arith.constant 0 : index
    %26 = vector.load %arg5[%c0_13, %c0_14] : memref<128x32xf32, #tpu.memory_space<vmem>>, vector<128x32xf32>
    tpu.vector_store %arg5[%c0_13, %c0_14], %25 {strides = array<i32>} : memref<128x32xf32, #tpu.memory_space<vmem>>, vector<128x32xf32>,
    return
  }
  func.func @transform_0(%arg0: i32) -> (i32, i32) {
    %c0_i32 = arith.constant 0 : i32
    %c0_i32_0 = arith.constant 0 : i32
    %c0_i32_1 = arith.constant 0 : i32
    return %c0_i32, %c0_i32_0 : i32, i32
  }
  func.func @transform_1(%arg0: i32) -> (i32, i32) {
    %c0_i32 = arith.constant 0 : i32
    %c0_i32_0 = arith.constant 0 : i32
    %c0_i32_1 = arith.constant 0 : i32
    return %c0_i32, %c0_i32_0 : i32, i32
  }
  func.func @transform_2(%arg0: i32) -> (i32, i32) {
    %c0_i32 = arith.constant 0 : i32
    %c0_i32_0 = arith.constant 0 : i32
    %c0_i32_1 = arith.constant 0 : i32
    return %c0_i32, %c0_i32_0 : i32, i32
  }
  func.func @transform_3(%arg0: i32) -> (i32, i32) {
    %c0_i32 = arith.constant 0 : i32
    %c0_i32_0 = arith.constant 0 : i32
    %c0_i32_1 = arith.constant 0 : i32
    return %c0_i32, %c0_i32_0 : i32, i32
  }
  func.func @transform_4(%arg0: i32) -> (i32, i32) {
    %c0_i32 = arith.constant 0 : i32
    %c0_i32_0 = arith.constant 0 : i32
    %c0_i32_1 = arith.constant 0 : i32
    return %c0_i32, %c0_i32_0 : i32, i32
  }
}

module attributes {stable_mosaic.version = 11 : i64} {
  func.func @_convT_bn_relu_kernel(%arg0: i32, %arg1: memref<512x512xf32, #tpu.memory_space<vmem>>, %arg2: memref<512x16xf32, #tpu.memory_space<vmem>>, %arg3: memref<1x16xf32, #tpu.memory_space<vmem>>, %arg4: memref<1x16xf32, #tpu.memory_space<vmem>>, %arg5: memref<512x16xf32, #tpu.memory_space<vmem>>) attributes {dimension_semantics = [#tpu.dimension_semantics<arbitrary>], iteration_bounds = array<i64: 1>, scalar_prefetch = 0 : i64, scratch_operands = 0 : i64, tpu.core_type = #tpu.core_type<tc>, window_params = [{pipeline_mode = #tpu.pipeline_mode<synchronous>, transform_indices = @transform_0, window_bounds = array<i64: 512, 512>}, {pipeline_mode = #tpu.pipeline_mode<synchronous>, transform_indices = @transform_1, window_bounds = array<i64: 512, 16>}, {pipeline_mode = #tpu.pipeline_mode<synchronous>, transform_indices = @transform_2, window_bounds = array<i64: 1, 16>}, {pipeline_mode = #tpu.pipeline_mode<synchronous>, transform_indices = @transform_3, window_bounds = array<i64: 1, 16>}, {pipeline_mode = #tpu.pipeline_mode<synchronous>, transform_indices = @transform_4, window_bounds = array<i64: 512, 16>}]} {
    %c0 = arith.constant 0 : index
    %c0_0 = arith.constant 0 : index
    %0 = vector.load %arg1[%c0, %c0_0] : memref<512x512xf32, #tpu.memory_space<vmem>>, vector<512x512xf32>
    %c0_1 = arith.constant 0 : index
    %c0_2 = arith.constant 0 : index
    %1 = vector.load %arg2[%c0_1, %c0_2] : memref<512x16xf32, #tpu.memory_space<vmem>>, vector<512x16xf32>
    %cst = arith.constant dense<0.000000e+00> : vector<512x16xf32>
    %2 = tpu.matmul %0, %1, %cst {dimension_numbers = #tpu.dot_dimension_numbers<[1], [0], [0], [1], [0, 0, 1, 1], [], []>} : vector<512x512xf32>, vector<512x16xf32>, vector<512x16xf32> -> vector<512x16xf32>
    %cst_3 = arith.constant dense<0.000000e+00> : vector<16xf32>
    %3 = vector.multi_reduction <add>, %2, %cst_3 [0] : vector<512x16xf32> to vector<16xf32>
    %4 = vector.shape_cast %3 : vector<16xf32> to vector<1x16xf32>
    %cst_4 = arith.constant 5.120000e+02 : f32
    %5 = vector.broadcast %cst_4 : f32 to vector<1x16xf32>
    %6 = arith.divf %4, %5 : vector<1x16xf32>
    %7 = vector.broadcast %6 : vector<1x16xf32> to vector<512x16xf32>
    %8 = arith.subf %2, %7 : vector<512x16xf32>
    %9 = arith.mulf %8, %8 : vector<512x16xf32>
    %cst_5 = arith.constant dense<0.000000e+00> : vector<16xf32>
    %10 = vector.multi_reduction <add>, %9, %cst_5 [0] : vector<512x16xf32> to vector<16xf32>
    %11 = vector.shape_cast %10 : vector<16xf32> to vector<1x16xf32>
    %cst_6 = arith.constant 5.120000e+02 : f32
    %12 = vector.broadcast %cst_6 : f32 to vector<1x16xf32>
    %13 = arith.divf %11, %12 : vector<1x16xf32>
    %cst_7 = arith.constant 9.99999974E-6 : f32
    %14 = vector.broadcast %cst_7 : f32 to vector<1x16xf32>
    %15 = arith.addf %13, %14 : vector<1x16xf32>
    %16 = math.rsqrt %15 : vector<1x16xf32>
    %c0_8 = arith.constant 0 : index
    %c0_9 = arith.constant 0 : index
    %17 = vector.load %arg3[%c0_8, %c0_9] : memref<1x16xf32, #tpu.memory_space<vmem>>, vector<1x16xf32>
    %18 = arith.mulf %16, %17 : vector<1x16xf32>
    %19 = vector.broadcast %18 : vector<1x16xf32> to vector<512x16xf32>
    %20 = arith.mulf %8, %19 : vector<512x16xf32>
    %c0_10 = arith.constant 0 : index
    %c0_11 = arith.constant 0 : index
    %21 = vector.load %arg4[%c0_10, %c0_11] : memref<1x16xf32, #tpu.memory_space<vmem>>, vector<1x16xf32>
    %22 = vector.broadcast %21 : vector<1x16xf32> to vector<512x16xf32>
    %23 = arith.addf %20, %22 : vector<512x16xf32>
    %cst_12 = arith.constant 0.000000e+00 : f32
    %24 = vector.broadcast %cst_12 : f32 to vector<512x16xf32>
    %25 = arith.maximumf %23, %24 : vector<512x16xf32>
    %c0_13 = arith.constant 0 : index
    %c0_14 = arith.constant 0 : index
    %26 = vector.load %arg5[%c0_13, %c0_14] : memref<512x16xf32, #tpu.memory_space<vmem>>, vector<512x16xf32>
    tpu.vector_store %arg5[%c0_13, %c0_14], %25 {strides = array<i32>} : memref<512x16xf32, #tpu.memory_space<vmem>>, vector<512x16xf32>,
    return
  }
  func.func @transform_0(%arg0: i32) -> (i32, i32) {
    %c0_i32 = arith.constant 0 : i32
    %c0_i32_0 = arith.constant 0 : i32
    %c0_i32_1 = arith.constant 0 : i32
    return %c0_i32, %c0_i32_0 : i32, i32
  }
  func.func @transform_1(%arg0: i32) -> (i32, i32) {
    %c0_i32 = arith.constant 0 : i32
    %c0_i32_0 = arith.constant 0 : i32
    %c0_i32_1 = arith.constant 0 : i32
    return %c0_i32, %c0_i32_0 : i32, i32
  }
  func.func @transform_2(%arg0: i32) -> (i32, i32) {
    %c0_i32 = arith.constant 0 : i32
    %c0_i32_0 = arith.constant 0 : i32
    %c0_i32_1 = arith.constant 0 : i32
    return %c0_i32, %c0_i32_0 : i32, i32
  }
  func.func @transform_3(%arg0: i32) -> (i32, i32) {
    %c0_i32 = arith.constant 0 : i32
    %c0_i32_0 = arith.constant 0 : i32
    %c0_i32_1 = arith.constant 0 : i32
    return %c0_i32, %c0_i32_0 : i32, i32
  }
  func.func @transform_4(%arg0: i32) -> (i32, i32) {
    %c0_i32 = arith.constant 0 : i32
    %c0_i32_0 = arith.constant 0 : i32
    %c0_i32_1 = arith.constant 0 : i32
    return %c0_i32, %c0_i32_0 : i32, i32
  }
}

module attributes {stable_mosaic.version = 11 : i64} {
  func.func @_convT_bn_relu_kernel(%arg0: i32, %arg1: memref<2048x256xf32, #tpu.memory_space<vmem>>, %arg2: memref<256x8xf32, #tpu.memory_space<vmem>>, %arg3: memref<1x8xf32, #tpu.memory_space<vmem>>, %arg4: memref<1x8xf32, #tpu.memory_space<vmem>>, %arg5: memref<2048x8xf32, #tpu.memory_space<vmem>>) attributes {dimension_semantics = [#tpu.dimension_semantics<arbitrary>], iteration_bounds = array<i64: 1>, scalar_prefetch = 0 : i64, scratch_operands = 0 : i64, tpu.core_type = #tpu.core_type<tc>, window_params = [{pipeline_mode = #tpu.pipeline_mode<synchronous>, transform_indices = @transform_0, window_bounds = array<i64: 2048, 256>}, {pipeline_mode = #tpu.pipeline_mode<synchronous>, transform_indices = @transform_1, window_bounds = array<i64: 256, 8>}, {pipeline_mode = #tpu.pipeline_mode<synchronous>, transform_indices = @transform_2, window_bounds = array<i64: 1, 8>}, {pipeline_mode = #tpu.pipeline_mode<synchronous>, transform_indices = @transform_3, window_bounds = array<i64: 1, 8>}, {pipeline_mode = #tpu.pipeline_mode<synchronous>, transform_indices = @transform_4, window_bounds = array<i64: 2048, 8>}]} {
    %c0 = arith.constant 0 : index
    %c0_0 = arith.constant 0 : index
    %0 = vector.load %arg1[%c0, %c0_0] : memref<2048x256xf32, #tpu.memory_space<vmem>>, vector<2048x256xf32>
    %c0_1 = arith.constant 0 : index
    %c0_2 = arith.constant 0 : index
    %1 = vector.load %arg2[%c0_1, %c0_2] : memref<256x8xf32, #tpu.memory_space<vmem>>, vector<256x8xf32>
    %cst = arith.constant dense<0.000000e+00> : vector<2048x8xf32>
    %2 = tpu.matmul %0, %1, %cst {dimension_numbers = #tpu.dot_dimension_numbers<[1], [0], [0], [1], [0, 0, 1, 1], [], []>} : vector<2048x256xf32>, vector<256x8xf32>, vector<2048x8xf32> -> vector<2048x8xf32>
    %cst_3 = arith.constant dense<0.000000e+00> : vector<8xf32>
    %3 = vector.multi_reduction <add>, %2, %cst_3 [0] : vector<2048x8xf32> to vector<8xf32>
    %4 = vector.shape_cast %3 : vector<8xf32> to vector<1x8xf32>
    %cst_4 = arith.constant 2.048000e+03 : f32
    %5 = vector.broadcast %cst_4 : f32 to vector<1x8xf32>
    %6 = arith.divf %4, %5 : vector<1x8xf32>
    %7 = vector.broadcast %6 : vector<1x8xf32> to vector<2048x8xf32>
    %8 = arith.subf %2, %7 : vector<2048x8xf32>
    %9 = arith.mulf %8, %8 : vector<2048x8xf32>
    %cst_5 = arith.constant dense<0.000000e+00> : vector<8xf32>
    %10 = vector.multi_reduction <add>, %9, %cst_5 [0] : vector<2048x8xf32> to vector<8xf32>
    %11 = vector.shape_cast %10 : vector<8xf32> to vector<1x8xf32>
    %cst_6 = arith.constant 2.048000e+03 : f32
    %12 = vector.broadcast %cst_6 : f32 to vector<1x8xf32>
    %13 = arith.divf %11, %12 : vector<1x8xf32>
    %cst_7 = arith.constant 9.99999974E-6 : f32
    %14 = vector.broadcast %cst_7 : f32 to vector<1x8xf32>
    %15 = arith.addf %13, %14 : vector<1x8xf32>
    %16 = math.rsqrt %15 : vector<1x8xf32>
    %c0_8 = arith.constant 0 : index
    %c0_9 = arith.constant 0 : index
    %17 = vector.load %arg3[%c0_8, %c0_9] : memref<1x8xf32, #tpu.memory_space<vmem>>, vector<1x8xf32>
    %18 = arith.mulf %16, %17 : vector<1x8xf32>
    %19 = vector.broadcast %18 : vector<1x8xf32> to vector<2048x8xf32>
    %20 = arith.mulf %8, %19 : vector<2048x8xf32>
    %c0_10 = arith.constant 0 : index
    %c0_11 = arith.constant 0 : index
    %21 = vector.load %arg4[%c0_10, %c0_11] : memref<1x8xf32, #tpu.memory_space<vmem>>, vector<1x8xf32>
    %22 = vector.broadcast %21 : vector<1x8xf32> to vector<2048x8xf32>
    %23 = arith.addf %20, %22 : vector<2048x8xf32>
    %cst_12 = arith.constant 0.000000e+00 : f32
    %24 = vector.broadcast %cst_12 : f32 to vector<2048x8xf32>
    %25 = arith.maximumf %23, %24 : vector<2048x8xf32>
    %c0_13 = arith.constant 0 : index
    %c0_14 = arith.constant 0 : index
    %26 = vector.load %arg5[%c0_13, %c0_14] : memref<2048x8xf32, #tpu.memory_space<vmem>>, vector<2048x8xf32>
    tpu.vector_store %arg5[%c0_13, %c0_14], %25 {strides = array<i32>} : memref<2048x8xf32, #tpu.memory_space<vmem>>, vector<2048x8xf32>,
    return
  }
  func.func @transform_0(%arg0: i32) -> (i32, i32) {
    %c0_i32 = arith.constant 0 : i32
    %c0_i32_0 = arith.constant 0 : i32
    %c0_i32_1 = arith.constant 0 : i32
    return %c0_i32, %c0_i32_0 : i32, i32
  }
  func.func @transform_1(%arg0: i32) -> (i32, i32) {
    %c0_i32 = arith.constant 0 : i32
    %c0_i32_0 = arith.constant 0 : i32
    %c0_i32_1 = arith.constant 0 : i32
    return %c0_i32, %c0_i32_0 : i32, i32
  }
  func.func @transform_2(%arg0: i32) -> (i32, i32) {
    %c0_i32 = arith.constant 0 : i32
    %c0_i32_0 = arith.constant 0 : i32
    %c0_i32_1 = arith.constant 0 : i32
    return %c0_i32, %c0_i32_0 : i32, i32
  }
  func.func @transform_3(%arg0: i32) -> (i32, i32) {
    %c0_i32 = arith.constant 0 : i32
    %c0_i32_0 = arith.constant 0 : i32
    %c0_i32_1 = arith.constant 0 : i32
    return %c0_i32, %c0_i32_0 : i32, i32
  }
  func.func @transform_4(%arg0: i32) -> (i32, i32) {
    %c0_i32 = arith.constant 0 : i32
    %c0_i32_0 = arith.constant 0 : i32
    %c0_i32_1 = arith.constant 0 : i32
    return %c0_i32, %c0_i32_0 : i32, i32
  }
}

module attributes {stable_mosaic.version = 11 : i64} {
  func.func @_convT_tanh_kernel(%arg0: i32, %arg1: memref<2048x128xf32, #tpu.memory_space<vmem>>, %arg2: memref<128x3xf32, #tpu.memory_space<vmem>>, %arg3: memref<2048x3xf32, #tpu.memory_space<vmem>>) attributes {dimension_semantics = [#tpu.dimension_semantics<parallel>], iteration_bounds = array<i64: 4>, scalar_prefetch = 0 : i64, scratch_operands = 0 : i64, tpu.core_type = #tpu.core_type<tc>, window_params = [{transform_indices = @transform_0, window_bounds = array<i64: 2048, 128>}, {pipeline_mode = #tpu.pipeline_mode<synchronous>, transform_indices = @transform_1, window_bounds = array<i64: 128, 3>}, {transform_indices = @transform_2, window_bounds = array<i64: 2048, 3>}]} {
    %c0 = arith.constant 0 : index
    %c0_0 = arith.constant 0 : index
    %0 = vector.load %arg1[%c0, %c0_0] : memref<2048x128xf32, #tpu.memory_space<vmem>>, vector<2048x128xf32>
    %c0_1 = arith.constant 0 : index
    %c0_2 = arith.constant 0 : index
    %1 = vector.load %arg2[%c0_1, %c0_2] : memref<128x3xf32, #tpu.memory_space<vmem>>, vector<128x3xf32>
    %cst = arith.constant dense<0.000000e+00> : vector<2048x3xf32>
    %2 = tpu.matmul %0, %1, %cst {dimension_numbers = #tpu.dot_dimension_numbers<[1], [0], [0], [1], [0, 0, 1, 1], [], []>} : vector<2048x128xf32>, vector<128x3xf32>, vector<2048x3xf32> -> vector<2048x3xf32>
    %3 = math.tanh %2 : vector<2048x3xf32>
    %c0_3 = arith.constant 0 : index
    %c0_4 = arith.constant 0 : index
    %4 = vector.load %arg3[%c0_3, %c0_4] : memref<2048x3xf32, #tpu.memory_space<vmem>>, vector<2048x3xf32>
    tpu.vector_store %arg3[%c0_3, %c0_4], %3 {strides = array<i32>} : memref<2048x3xf32, #tpu.memory_space<vmem>>, vector<2048x3xf32>,
    return
  }
  func.func @transform_0(%arg0: i32) -> (i32, i32) {
    %c0_i32 = arith.constant 0 : i32
    %c0_i32_0 = arith.constant 0 : i32
    return %arg0, %c0_i32 : i32, i32
  }
  func.func @transform_1(%arg0: i32) -> (i32, i32) {
    %c0_i32 = arith.constant 0 : i32
    %c0_i32_0 = arith.constant 0 : i32
    %c0_i32_1 = arith.constant 0 : i32
    return %c0_i32, %c0_i32_0 : i32, i32
  }
  func.func @transform_2(%arg0: i32) -> (i32, i32) {
    %c0_i32 = arith.constant 0 : i32
    %c0_i32_0 = arith.constant 0 : i32
    return %arg0, %c0_i32 : i32, i32
  }
}

</mosaic_0001>

<llo_original>
// kernel: generator_forward.5
$region0: #{generator_forward.5}
  #allocation0 [shape = 'u32[]', space=smem, size = 0x4, offset = 0x4, fixed_abs, tag = 'smem constant byte address 0x4 - core index']
  #allocation1 [shape = 'u32[144,128]{1,0:T(1,128)}', space=vmem, size = 0x12000, scoped, tag = 'internal scratch']
  %s0 = inlined_call_operand.vmem [shape: f32[32,256], index: 0, kind: input, shape index: {}]
  %s1 = inlined_call_operand.vmem [shape: f32[256,64], index: 1, kind: input, shape index: {}]
  %s2 = inlined_call_operand.hbm [shape: f32[1,64], index: 2, kind: input, shape index: {}]
  %s3 = inlined_call_operand.hbm [shape: f32[1,64], index: 3, kind: input, shape index: {}]
  %s4 = inlined_call_operand.vmem [shape: f32[32,64], index: 4, kind: output, shape index: {}]
  %s5 = sld [smem:[#allocation0]]
  $region34: #{generator_forward.5} parent=0
    _
  %s7 = ssub.s32 1, %s5
  %s8 = scalar_select 0, %s7, %s5
  $region1: #{generator_forward.5} parent=0
    #allocation2 [shape = 'u8[512]{0}', space=vmem, size = 0x400, scoped, tag = 'input window, operand 2, single buffered']
    #allocation3 [shape = 's32[1]{0}', space=sflag, size = 0x4, scoped, tag = 'scoped memory for generator_forward.5']
    #allocation4 [shape = 'u8[512]{0}', space=vmem, size = 0x400, scoped, tag = 'input window, operand 3, single buffered']
    #allocation5 [shape = 's32[1]{0}', space=sflag, size = 0x4, scoped, tag = 'scoped memory for generator_forward.5']
    %9 = vsyncpa [#allocation3], 0
    %10 = vsyncpa [#allocation5], 0
    // Predicated region
    $region2: #{generator_forward.5} parent=1 // pred_check
      _
    $region3: #{generator_forward.5} parent=1 // pred_check_branch
      %12 = sbr.rel (0) target = $region5
    $region4: #{generator_forward.5} parent=1 // pred_region
      _
    $region5: #{generator_forward.5} parent=1 // pred_fallthru
      _
    // Predicated region
    $region6: #{generator_forward.5} parent=1 // pred_check
      _
    $region7: #{generator_forward.5} parent=1 // pred_check_branch
      %14 = sbr.rel (0) target = $region9
    $region8: #{generator_forward.5} parent=1 // pred_region
      _
    $region9: #{generator_forward.5} parent=1 // pred_fallthru
      _
    // Predicated region
    $region10: #{generator_forward.5} parent=1 // pred_check
      _
    $region11: #{generator_forward.5} parent=1 // pred_check_branch
      %16 = sbr.rel (0) target = $region13
    $region12: #{generator_forward.5} parent=1 // pred_region
      %s18 = ssub.s32 16, 16
      %19 = vsyncadd [#allocation3], %s18
      %s21 = sshll.u32 [#allocation2], 4
      %s22 = int_to_ptr.vmem [resolvable:$true] %s21
      %24 = dma.hbm_to_vmem [thread:$0]  %s2, 16, %s22, [#allocation3]
    $region13: #{generator_forward.5} parent=1 // pred_fallthru
      _
    // Predicated region
    $region14: #{generator_forward.5} parent=1 // pred_check
      _
    $region15: #{generator_forward.5} parent=1 // pred_check_branch
      %26 = sbr.rel (0) target = $region17
    $region16: #{generator_forward.5} parent=1 // pred_region
      %s28 = ssub.s32 16, 16
      %29 = vsyncadd [#allocation5], %s28
      %s31 = sshll.u32 [#allocation4], 4
      %s32 = int_to_ptr.vmem [resolvable:$true] %s31
      %34 = dma.hbm_to_vmem [thread:$0]  %s3, 16, %s32, [#allocation5]
    $region17: #{generator_forward.5} parent=1 // pred_fallthru
      _
    // Predicated region
    $region18: #{generator_forward.5} parent=1 // pred_check
      _
    $region19: #{generator_forward.5} parent=1 // pred_check_branch
      %36 = sbr.rel (0) target = $region21
    $region20: #{generator_forward.5} parent=1 // pred_region
      %37 = dma.done [#allocation3], 16
    $region21: #{generator_forward.5} parent=1 // pred_fallthru
      _
    // Predicated region
    $region22: #{generator_forward.5} parent=1 // pred_check
      _
    $region23: #{generator_forward.5} parent=1 // pred_check_branch
      %39 = sbr.rel (0) target = $region25
    $region24: #{generator_forward.5} parent=1 // pred_region
      %40 = dma.done [#allocation5], 16
    $region25: #{generator_forward.5} parent=1 // pred_fallthru
      _
    %v41 = vld [vmem:[%s0] sm:$0xff]
    %v42 = vld [vmem:[%s0 + $0x8] sm:$0xff]
    %v43 = vld [vmem:[%s0 + $0x10] sm:$0xff]
    %v44 = vld [vmem:[%s0 + $0x18] sm:$0xff]
    %v45 = vld [vmem:[%s0 + $0x20] sm:$0xff]
    %v46 = vld [vmem:[%s0 + $0x28] sm:$0xff]
    %v47 = vld [vmem:[%s0 + $0x30] sm:$0xff]
    %v48 = vld [vmem:[%s0 + $0x38] sm:$0xff]
    %v49 = vld [vmem:[%s1] sm:$0xff]
    %v50 = vld [vmem:[%s1 + $0x8] sm:$0xff]
    %v51 = vld [vmem:[%s1 + $0x10] sm:$0xff]
    %v52 = vld [vmem:[%s1 + $0x18] sm:$0xff]
    %v53 = vld [vmem:[%s1 + $0x20] sm:$0xff]
    %v54 = vld [vmem:[%s1 + $0x28] sm:$0xff]
    %v55 = vld [vmem:[%s1 + $0x30] sm:$0xff]
    %v56 = vld [vmem:[%s1 + $0x38] sm:$0xff]
    %v57 = vld [vmem:[%s1 + $0x40] sm:$0xff]
    %v58 = vld [vmem:[%s1 + $0x48] sm:$0xff]
    %v59 = vld [vmem:[%s1 + $0x50] sm:$0xff]
    %v60 = vld [vmem:[%s1 + $0x58] sm:$0xff]
    %v61 = vld [vmem:[%s1 + $0x60] sm:$0xff]
    %v62 = vld [vmem:[%s1 + $0x68] sm:$0xff]
    %v63 = vld [vmem:[%s1 + $0x70] sm:$0xff]
    %v64 = vld [vmem:[%s1 + $0x78] sm:$0xff]
    %v65 = vld [vmem:[%s1 + $0x80] sm:$0xff]
    %v66 = vld [vmem:[%s1 + $0x88] sm:$0xff]
    %v67 = vld [vmem:[%s1 + $0x90] sm:$0xff]
    %v68 = vld [vmem:[%s1 + $0x98] sm:$0xff]
    %v69 = vld [vmem:[%s1 + $0xa0] sm:$0xff]
    %v70 = vld [vmem:[%s1 + $0xa8] sm:$0xff]
    %v71 = vld [vmem:[%s1 + $0xb0] sm:$0xff]
    %v72 = vld [vmem:[%s1 + $0xb8] sm:$0xff]
    %v73 = vld [vmem:[%s1 + $0xc0] sm:$0xff]
    %v74 = vld [vmem:[%s1 + $0xc8] sm:$0xff]
    %v75 = vld [vmem:[%s1 + $0xd0] sm:$0xff]
    %v76 = vld [vmem:[%s1 + $0xd8] sm:$0xff]
    %v77 = vld [vmem:[%s1 + $0xe0] sm:$0xff]
    %v78 = vld [vmem:[%s1 + $0xe8] sm:$0xff]
    %v79 = vld [vmem:[%s1 + $0xf0] sm:$0xff]
    %v80 = vld [vmem:[%s1 + $0xf8] sm:$0xff]
    %81 = vmatprep.subr.mxu0 0.0
    %82 = vmatpush1.msra.mxu0 %v64
    %83 = vmatprep.subr.mxu0 0.0
    %84 = vmatpush1.msra.mxu0 %v63
    %85 = vmatprep.subr.mxu0 0.0
    %86 = vmatpush1.msra.mxu0 %v62
    %87 = vmatprep.subr.mxu0 0.0
    %88 = vmatpush1.msra.mxu0 %v61
    %89 = vmatprep.subr.mxu0 0.0
    %90 = vmatpush1.msra.mxu0 %v60
    %91 = vmatprep.subr.mxu0 0.0
    %92 = vmatpush1.msra.mxu0 %v59
    %93 = vmatprep.subr.mxu0 0.0
    %94 = vmatpush1.msra.mxu0 %v58
    %95 = vmatprep.subr.mxu0 0.0
    %96 = vmatpush1.msra.mxu0 %v57
    %97 = vmatprep.subr.mxu0 0.0
    %98 = vmatpush1.msra.mxu0 %v56
    %99 = vmatprep.subr.mxu0 0.0
    %100 = vmatpush1.msra.mxu0 %v55
    %101 = vmatprep.subr.mxu0 0.0
    %102 = vmatpush1.msra.mxu0 %v54
    %103 = vmatprep.subr.mxu0 0.0
    %104 = vmatpush1.msra.mxu0 %v53
    %105 = vmatprep.subr.mxu0 0.0
    %106 = vmatpush1.msra.mxu0 %v52
    %107 = vmatprep.subr.mxu0 0.0
    %108 = vmatpush1.msra.mxu0 %v51
    %109 = vmatprep.subr.mxu0 0.0
    %110 = vmatpush1.msra.mxu0 %v50
    %111 = vmatprep.subr.mxu0 0.0
    %112 = vmatpush1.msra.mxu0 %v49
    %113 = vmatprep.subr.mxu0 0.0
    %114 = vmatpush2.msra.mxu0 %v80
    %115 = vmatprep.subr.mxu0 0.0
    %116 = vmatpush2.msra.mxu0 %v79
    %117 = vmatprep.subr.mxu0 0.0
    %118 = vmatpush2.msra.mxu0 %v78
    %119 = vmatprep.subr.mxu0 0.0
    %120 = vmatpush2.msra.mxu0 %v77
    %121 = vmatprep.subr.mxu0 0.0
    %122 = vmatpush2.msra.mxu0 %v76
    %123 = vmatprep.subr.mxu0 0.0
    %124 = vmatpush2.msra.mxu0 %v75
    %125 = vmatprep.subr.mxu0 0.0
    %126 = vmatpush2.msra.mxu0 %v74
    %127 = vmatprep.subr.mxu0 0.0
    %128 = vmatpush2.msra.mxu0 %v73
    %129 = vmatprep.subr.mxu0 0.0
    %130 = vmatpush2.msra.mxu0 %v72
    %131 = vmatprep.subr.mxu0 0.0
    %132 = vmatpush2.msra.mxu0 %v71
    %133 = vmatprep.subr.mxu0 0.0
    %134 = vmatpush2.msra.mxu0 %v70
    %135 = vmatprep.subr.mxu0 0.0
    %136 = vmatpush2.msra.mxu0 %v69
    %137 = vmatprep.subr.mxu0 0.0
    %138 = vmatpush2.msra.mxu0 %v68
    %139 = vmatprep.subr.mxu0 0.0
    %140 = vmatpush2.msra.mxu0 %v67
    %141 = vmatprep.subr.mxu0 0.0
    %142 = vmatpush2.msra.mxu0 %v66
    %143 = vmatprep.subr.mxu0 0.0
    %144 = vmatpush2.msra.mxu0 %v65
    %145 = vmatprep.mubr.f32.mxu0 %v42
    %146 = vmatmul.mubr.f32.gmra.mxu0 %v41
    %v147 = vpop.f32.mrf.mxu0
    %v148 = vadd.f32 0.0, %v147
    %v149 = vpop.f32.mrf.mxu0
    %150 = vmatprep.mubr.f32.mxu0 %v44
    %151 = vmatmul.mubr.f32.gmra.mxu0 %v43
    %v152 = vpop.f32.mrf.mxu0
    %v153 = vadd.f32 0.0, %v152
    %v154 = vpop.f32.mrf.mxu0
    %155 = vmatprep.mubr.f32.mxu0 %v46
    %156 = vmatmul.mubr.f32.gmra.mxu0 %v45
    %v157 = vpop.f32.mrf.mxu0
    %v158 = vadd.f32 0.0, %v157
    %v159 = vpop.f32.mrf.mxu0
    %160 = vmatprep.mubr.f32.mxu0 %v48
    %161 = vmatmul.mubr.f32.gmra.mxu0 %v47
    %v162 = vpop.f32.mrf.mxu0
    %v163 = vadd.f32 0.0, %v162
    %v164 = vpop.f32.mrf.mxu0
    %165 = vdwg.mxu0
    %vm166 = vcmask 523264
    %v167 = vsel %vm166, %v148, 0.0
    %v168 = vsel %vm166, %v153, 0.0
    %v169 = vadd.f32 %v167, %v168
    %v170 = vsel %vm166, %v158, 0.0
    %v171 = vadd.f32 %v169, %v170
    %v172 = vsel %vm166, %v163, 0.0
    %v173 = vadd.f32 %v171, %v172
    %v174 = vrot.slane %v173, 4
    %v175 = vadd.f32 %v173, %v174
    %v176 = vrot.slane %v175, 2
    %v177 = vadd.f32 %v175, %v176
    %v178 = vrot.slane %v177, 1
    %v179 = vadd.f32 %v177, %v178
    %v180 = vrcp.pop 32.0
    %v181 = vmul.f32 %v179, %v180
    %v182 = vsub.f32 %v148, %v181
    %v183 = vsub.f32 %v153, %v181
    %v184 = vsub.f32 %v158, %v181
    %v185 = vsub.f32 %v163, %v181
    %v186 = vmul.f32 %v182, %v182
    %v187 = vmul.f32 %v183, %v183
    %v188 = vmul.f32 %v184, %v184
    %v189 = vmul.f32 %v185, %v185
    %v190 = vsel %vm166, %v186, 0.0
    %v191 = vsel %vm166, %v187, 0.0
    %v192 = vadd.f32 %v190, %v191
    %v193 = vsel %vm166, %v188, 0.0
    %v194 = vadd.f32 %v192, %v193
    %v195 = vsel %vm166, %v189, 0.0
    %v196 = vadd.f32 %v194, %v195
    %v197 = vrot.slane %v196, 4
    %v198 = vadd.f32 %v196, %v197
    %v199 = vrot.slane %v198, 2
    %v200 = vadd.f32 %v198, %v199
    %v201 = vrot.slane %v200, 1
    %v202 = vadd.f32 %v200, %v201
    %v203 = vmul.f32 %v202, %v180
    %v204 = vadd.f32 %v203, 1e-05
    %v205 = vrsqrt.pop %v204
    %v206 = vld [vmem:[#allocation2] sm:$0x1]
    %v207 = vmul.f32 %v205, %v206
    %v208 = vlaneseq
    %v209 = vshrl.u32 %v208, 7
    %v210 = vsub.s32 0, %v209
    %v211 = vrot.slane %v207, %v210
    %v212 = vmul.f32 %v182, %v211
    %v213 = vmul.f32 %v183, %v211
    %v214 = vmul.f32 %v184, %v211
    %v215 = vmul.f32 %v185, %v211
    %v216 = vld [vmem:[#allocation4] sm:$0x1]
    %v218 = vlaneseq
    %v219 = vshrl.u32 %v218, 7
    %v220 = vsub.s32 0, %v219
    %v221 = vrot.slane %v216, %v220
    %v223 = vadd.f32 %v212, %v221
    %v224 = vadd.f32 %v213, %v221
    %v225 = vadd.f32 %v214, %v221
    %v226 = vadd.f32 %v215, %v221
    %v227 = vmax.f32 %v223, 0.0
    %v228 = vmax.f32 %v224, 0.0
    %v229 = vmax.f32 %v225, 0.0
    %v230 = vmax.f32 %v226, 0.0
    %231 = vst.msk [vmem:[%s4] sm:$0xff] %vm166, %v227
    %232 = vst.msk [vmem:[%s4 + $0x8] sm:$0xff] %vm166, %v228
    %233 = vst.msk [vmem:[%s4 + $0x10] sm:$0xff] %vm166, %v229
    %234 = vst.msk [vmem:[%s4 + $0x18] sm:$0xff] %vm166, %v230
    // Predicated region
    $region26: #{generator_forward.5} parent=1 // pred_check
      _
    $region27: #{generator_forward.5} parent=1 // pred_check_branch
      %236 = sbr.rel (0) target = $region29
    $region28: #{generator_forward.5} parent=1 // pred_region
      _
    $region29: #{generator_forward.5} parent=1 // pred_fallthru
      _
    // Predicated region
    $region30: #{generator_forward.5} parent=1 // pred_check
      _
    $region31: #{generator_forward.5} parent=1 // pred_check_branch
      %238 = sbr.rel (0) target = $region33
    $region32: #{generator_forward.5} parent=1 // pred_region
      _
    $region33: #{generator_forward.5} parent=1 // pred_fallthru
      _
    %239 = vsyncpa [#allocation3], 1
    %240 = vsyncpa [#allocation5], 1

// kernel: generator_forward.6
$region0: #{generator_forward.6}
  #allocation0 [shape = 'u32[]', space=smem, size = 0x4, offset = 0x4, fixed_abs, tag = 'smem constant byte address 0x4 - core index']
  #allocation1 [shape = 'u32[144,128]{1,0:T(1,128)}', space=vmem, size = 0x12000, scoped, tag = 'internal scratch']
  %s0 = inlined_call_operand.vmem [shape: f32[128,1024], index: 0, kind: input, shape index: {}]
  %s1 = inlined_call_operand.vmem [shape: f32[1024,32], index: 1, kind: input, shape index: {}]
  %s2 = inlined_call_operand.vmem [shape: f32[1,32], index: 2, kind: input, shape index: {}]
  %s3 = inlined_call_operand.vmem [shape: f32[1,32], index: 3, kind: input, shape index: {}]
  %s4 = inlined_call_operand.vmem [shape: f32[128,32], index: 4, kind: output, shape index: {}]
  %s5 = sld [smem:[#allocation0]]
  $region26: #{generator_forward.6} parent=0
    _
  %s7 = ssub.s32 1, %s5
  %s8 = scalar_select 0, %s7, %s5
  // Predicated region
  $region2: #{generator_forward.6} parent=0 // pred_check
    _
  $region3: #{generator_forward.6} parent=0 // pred_check_branch
    %10 = sbr.rel (0) target = $region5
  $region4: #{generator_forward.6} parent=0 // pred_region
    _
  $region5: #{generator_forward.6} parent=0 // pred_fallthru
    _
  // Predicated region
  $region6: #{generator_forward.6} parent=0 // pred_check
    _
  $region7: #{generator_forward.6} parent=0 // pred_check_branch
    %12 = sbr.rel (0) target = $region9
  $region8: #{generator_forward.6} parent=0 // pred_region
    _
  $region9: #{generator_forward.6} parent=0 // pred_fallthru
    _
  // Predicated region
  $region10: #{generator_forward.6} parent=0 // pred_check
    _
  $region11: #{generator_forward.6} parent=0 // pred_check_branch
    %14 = sbr.rel (0) target = $region13
  $region12: #{generator_forward.6} parent=0 // pred_region
    _
  $region13: #{generator_forward.6} parent=0 // pred_fallthru
    _
  // Predicated region
  $region14: #{generator_forward.6} parent=0 // pred_check
    _
  $region15: #{generator_forward.6} parent=0 // pred_check_branch
    %16 = sbr.rel (0) target = $region17
  $region16: #{generator_forward.6} parent=0 // pred_region
    _
  $region17: #{generator_forward.6} parent=0 // pred_fallthru
    _
  %v17 = vld [vmem:[%s0] sm:$0xff]
  %v18 = vld [vmem:[%s0 + $0x8] sm:$0xff]
  %v19 = vld [vmem:[%s0 + $0x10] sm:$0xff]
  %v20 = vld [vmem:[%s0 + $0x18] sm:$0xff]
  %v21 = vld [vmem:[%s0 + $0x20] sm:$0xff]
  %v22 = vld [vmem:[%s0 + $0x28] sm:$0xff]
  %v23 = vld [vmem:[%s0 + $0x30] sm:$0xff]
  %v24 = vld [vmem:[%s0 + $0x38] sm:$0xff]
  %v25 = vld [vmem:[%s0 + $0x40] sm:$0xff]
  %v26 = vld [vmem:[%s0 + $0x48] sm:$0xff]
  %v27 = vld [vmem:[%s0 + $0x50] sm:$0xff]
  %v28 = vld [vmem:[%s0 + $0x58] sm:$0xff]
  %v29 = vld [vmem:[%s0 + $0x60] sm:$0xff]
  %v30 = vld [vmem:[%s0 + $0x68] sm:$0xff]
  %v31 = vld [vmem:[%s0 + $0x70] sm:$0xff]
  %v32 = vld [vmem:[%s0 + $0x78] sm:$0xff]
  %v33 = vld [vmem:[%s0 + $0x80] sm:$0xff]
  %v34 = vld [vmem:[%s0 + $0x88] sm:$0xff]
  %v35 = vld [vmem:[%s0 + $0x90] sm:$0xff]
  %v36 = vld [vmem:[%s0 + $0x98] sm:$0xff]
  %v37 = vld [vmem:[%s0 + $0xa0] sm:$0xff]
  %v38 = vld [vmem:[%s0 + $0xa8] sm:$0xff]
  %v39 = vld [vmem:[%s0 + $0xb0] sm:$0xff]
  %v40 = vld [vmem:[%s0 + $0xb8] sm:$0xff]
  %v41 = vld [vmem:[%s0 + $0xc0] sm:$0xff]
  %v42 = vld [vmem:[%s0 + $0xc8] sm:$0xff]
  %v43 = vld [vmem:[%s0 + $0xd0] sm:$0xff]
  %v44 = vld [vmem:[%s0 + $0xd8] sm:$0xff]
  %v45 = vld [vmem:[%s0 + $0xe0] sm:$0xff]
  %v46 = vld [vmem:[%s0 + $0xe8] sm:$0xff]
  %v47 = vld [vmem:[%s0 + $0xf0] sm:$0xff]
  %v48 = vld [vmem:[%s0 + $0xf8] sm:$0xff]
  %v49 = vld [vmem:[%s0 + $0x100] sm:$0xff]
  %v50 = vld [vmem:[%s0 + $0x108] sm:$0xff]
  %v51 = vld [vmem:[%s0 + $0x110] sm:$0xff]
  %v52 = vld [vmem:[%s0 + $0x118] sm:$0xff]
  %v53 = vld [vmem:[%s0 + $0x120] sm:$0xff]
  %v54 = vld [vmem:[%s0 + $0x128] sm:$0xff]
  %v55 = vld [vmem:[%s0 + $0x130] sm:$0xff]
  %v56 = vld [vmem:[%s0 + $0x138] sm:$0xff]
  %v57 = vld [vmem:[%s0 + $0x140] sm:$0xff]
  %v58 = vld [vmem:[%s0 + $0x148] sm:$0xff]
  %v59 = vld [vmem:[%s0 + $0x150] sm:$0xff]
  %v60 = vld [vmem:[%s0 + $0x158] sm:$0xff]
  %v61 = vld [vmem:[%s0 + $0x160] sm:$0xff]
  %v62 = vld [vmem:[%s0 + $0x168] sm:$0xff]
  %v63 = vld [vmem:[%s0 + $0x170] sm:$0xff]
  %v64 = vld [vmem:[%s0 + $0x178] sm:$0xff]
  %v65 = vld [vmem:[%s0 + $0x180] sm:$0xff]
  %v66 = vld [vmem:[%s0 + $0x188] sm:$0xff]
  %v67 = vld [vmem:[%s0 + $0x190] sm:$0xff]
  %v68 = vld [vmem:[%s0 + $0x198] sm:$0xff]
  %v69 = vld [vmem:[%s0 + $0x1a0] sm:$0xff]
  %v70 = vld [vmem:[%s0 + $0x1a8] sm:$0xff]
  %v71 = vld [vmem:[%s0 + $0x1b0] sm:$0xff]
  %v72 = vld [vmem:[%s0 + $0x1b8] sm:$0xff]
  %v73 = vld [vmem:[%s0 + $0x1c0] sm:$0xff]
  %v74 = vld [vmem:[%s0 + $0x1c8] sm:$0xff]
  %v75 = vld [vmem:[%s0 + $0x1d0] sm:$0xff]
  %v76 = vld [vmem:[%s0 + $0x1d8] sm:$0xff]
  %v77 = vld [vmem:[%s0 + $0x1e0] sm:$0xff]
  %v78 = vld [vmem:[%s0 + $0x1e8] sm:$0xff]
  %v79 = vld [vmem:[%s0 + $0x1f0] sm:$0xff]
  %v80 = vld [vmem:[%s0 + $0x1f8] sm:$0xff]
  %v81 = vld [vmem:[%s0 + $0x200] sm:$0xff]
  %v82 = vld [vmem:[%s0 + $0x208] sm:$0xff]
  %v83 = vld [vmem:[%s0 + $0x210] sm:$0xff]
  %v84 = vld [vmem:[%s0 + $0x218] sm:$0xff]
  %v85 = vld [vmem:[%s0 + $0x220] sm:$0xff]
  %v86 = vld [vmem:[%s0 + $0x228] sm:$0xff]
  %v87 = vld [vmem:[%s0 + $0x230] sm:$0xff]
  %v88 = vld [vmem:[%s0 + $0x238] sm:$0xff]
  %v89 = vld [vmem:[%s0 + $0x240] sm:$0xff]
  %v90 = vld [vmem:[%s0 + $0x248] sm:$0xff]
  %v91 = vld [vmem:[%s0 + $0x250] sm:$0xff]
  %v92 = vld [vmem:[%s0 + $0x258] sm:$0xff]
  %v93 = vld [vmem:[%s0 + $0x260] sm:$0xff]
  %v94 = vld [vmem:[%s0 + $0x268] sm:$0xff]
  %v95 = vld [vmem:[%s0 + $0x270] sm:$0xff]
  %v96 = vld [vmem:[%s0 + $0x278] sm:$0xff]
  %v97 = vld [vmem:[%s0 + $0x280] sm:$0xff]
  %v98 = vld [vmem:[%s0 + $0x288] sm:$0xff]
  %v99 = vld [vmem:[%s0 + $0x290] sm:$0xff]
  %v100 = vld [vmem:[%s0 + $0x298] sm:$0xff]
  %v101 = vld [vmem:[%s0 + $0x2a0] sm:$0xff]
  %v102 = vld [vmem:[%s0 + $0x2a8] sm:$0xff]
  %v103 = vld [vmem:[%s0 + $0x2b0] sm:$0xff]
  %v104 = vld [vmem:[%s0 + $0x2b8] sm:$0xff]
  %v105 = vld [vmem:[%s0 + $0x2c0] sm:$0xff]
  %v106 = vld [vmem:[%s0 + $0x2c8] sm:$0xff]
  %v107 = vld [vmem:[%s0 + $0x2d0] sm:$0xff]
  %v108 = vld [vmem:[%s0 + $0x2d8] sm:$0xff]
  %v109 = vld [vmem:[%s0 + $0x2e0] sm:$0xff]
  %v110 = vld [vmem:[%s0 + $0x2e8] sm:$0xff]
  %v111 = vld [vmem:[%s0 + $0x2f0] sm:$0xff]
  %v112 = vld [vmem:[%s0 + $0x2f8] sm:$0xff]
  %v113 = vld [vmem:[%s0 + $0x300] sm:$0xff]
  %v114 = vld [vmem:[%s0 + $0x308] sm:$0xff]
  %v115 = vld [vmem:[%s0 + $0x310] sm:$0xff]
  %v116 = vld [vmem:[%s0 + $0x318] sm:$0xff]
  %v117 = vld [vmem:[%s0 + $0x320] sm:$0xff]
  %v118 = vld [vmem:[%s0 + $0x328] sm:$0xff]
  %v119 = vld [vmem:[%s0 + $0x330] sm:$0xff]
  %v120 = vld [vmem:[%s0 + $0x338] sm:$0xff]
  %v121 = vld [vmem:[%s0 + $0x340] sm:$0xff]
  %v122 = vld [vmem:[%s0 + $0x348] sm:$0xff]
  %v123 = vld [vmem:[%s0 + $0x350] sm:$0xff]
  %v124 = vld [vmem:[%s0 + $0x358] sm:$0xff]
  %v125 = vld [vmem:[%s0 + $0x360] sm:$0xff]
  %v126 = vld [vmem:[%s0 + $0x368] sm:$0xff]
  %v127 = vld [vmem:[%s0 + $0x370] sm:$0xff]
  %v128 = vld [vmem:[%s0 + $0x378] sm:$0xff]
  %v129 = vld [vmem:[%s0 + $0x380] sm:$0xff]
  %v130 = vld [vmem:[%s0 + $0x388] sm:$0xff]
  %v131 = vld [vmem:[%s0 + $0x390] sm:$0xff]
  %v132 = vld [vmem:[%s0 + $0x398] sm:$0xff]
  %v133 = vld [vmem:[%s0 + $0x3a0] sm:$0xff]
  %v134 = vld [vmem:[%s0 + $0x3a8] sm:$0xff]
  %v135 = vld [vmem:[%s0 + $0x3b0] sm:$0xff]
  %v136 = vld [vmem:[%s0 + $0x3b8] sm:$0xff]
  %v137 = vld [vmem:[%s0 + $0x3c0] sm:$0xff]
  %v138 = vld [vmem:[%s0 + $0x3c8] sm:$0xff]
  %v139 = vld [vmem:[%s0 + $0x3d0] sm:$0xff]
  %v140 = vld [vmem:[%s0 + $0x3d8] sm:$0xff]
  %v141 = vld [vmem:[%s0 + $0x3e0] sm:$0xff]
  %v142 = vld [vmem:[%s0 + $0x3e8] sm:$0xff]
  %v143 = vld [vmem:[%s0 + $0x3f0] sm:$0xff]
  %v144 = vld [vmem:[%s0 + $0x3f8] sm:$0xff]
  %v145 = vld [vmem:[%s1] sm:$0xff]
  %v146 = vld [vmem:[%s1 + $0x8] sm:$0xff]
  %v147 = vld [vmem:[%s1 + $0x10] sm:$0xff]
  %v148 = vld [vmem:[%s1 + $0x18] sm:$0xff]
  %v149 = vld [vmem:[%s1 + $0x20] sm:$0xff]
  %v150 = vld [vmem:[%s1 + $0x28] sm:$0xff]
  %v151 = vld [vmem:[%s1 + $0x30] sm:$0xff]
  %v152 = vld [vmem:[%s1 + $0x38] sm:$0xff]
  %v153 = vld [vmem:[%s1 + $0x40] sm:$0xff]
  %v154 = vld [vmem:[%s1 + $0x48] sm:$0xff]
  %v155 = vld [vmem:[%s1 + $0x50] sm:$0xff]
  %v156 = vld [vmem:[%s1 + $0x58] sm:$0xff]
  %v157 = vld [vmem:[%s1 + $0x60] sm:$0xff]
  %v158 = vld [vmem:[%s1 + $0x68] sm:$0xff]
  %v159 = vld [vmem:[%s1 + $0x70] sm:$0xff]
  %v160 = vld [vmem:[%s1 + $0x78] sm:$0xff]
  %v161 = vld [vmem:[%s1 + $0x80] sm:$0xff]
  %v162 = vld [vmem:[%s1 + $0x88] sm:$0xff]
  %v163 = vld [vmem:[%s1 + $0x90] sm:$0xff]
  %v164 = vld [vmem:[%s1 + $0x98] sm:$0xff]
  %v165 = vld [vmem:[%s1 + $0xa0] sm:$0xff]
  %v166 = vld [vmem:[%s1 + $0xa8] sm:$0xff]
  %v167 = vld [vmem:[%s1 + $0xb0] sm:$0xff]
  %v168 = vld [vmem:[%s1 + $0xb8] sm:$0xff]
  %v169 = vld [vmem:[%s1 + $0xc0] sm:$0xff]
  %v170 = vld [vmem:[%s1 + $0xc8] sm:$0xff]
  %v171 = vld [vmem:[%s1 + $0xd0] sm:$0xff]
  %v172 = vld [vmem:[%s1 + $0xd8] sm:$0xff]
  %v173 = vld [vmem:[%s1 + $0xe0] sm:$0xff]
  %v174 = vld [vmem:[%s1 + $0xe8] sm:$0xff]
  %v175 = vld [vmem:[%s1 + $0xf0] sm:$0xff]
  %v176 = vld [vmem:[%s1 + $0xf8] sm:$0xff]
  %v177 = vld [vmem:[%s1 + $0x100] sm:$0xff]
  %v178 = vld [vmem:[%s1 + $0x108] sm:$0xff]
  %v179 = vld [vmem:[%s1 + $0x110] sm:$0xff]
  %v180 = vld [vmem:[%s1 + $0x118] sm:$0xff]
  %v181 = vld [vmem:[%s1 + $0x120] sm:$0xff]
  %v182 = vld [vmem:[%s1 + $0x128] sm:$0xff]
  %v183 = vld [vmem:[%s1 + $0x130] sm:$0xff]
  %v184 = vld [vmem:[%s1 + $0x138] sm:$0xff]
  %v185 = vld [vmem:[%s1 + $0x140] sm:$0xff]
  %v186 = vld [vmem:[%s1 + $0x148] sm:$0xff]
  %v187 = vld [vmem:[%s1 + $0x150] sm:$0xff]
  %v188 = vld [vmem:[%s1 + $0x158] sm:$0xff]
  %v189 = vld [vmem:[%s1 + $0x160] sm:$0xff]
  %v190 = vld [vmem:[%s1 + $0x168] sm:$0xff]
  %v191 = vld [vmem:[%s1 + $0x170] sm:$0xff]
  %v192 = vld [vmem:[%s1 + $0x178] sm:$0xff]
  %v193 = vld [vmem:[%s1 + $0x180] sm:$0xff]
  %v194 = vld [vmem:[%s1 + $0x188] sm:$0xff]
  %v195 = vld [vmem:[%s1 + $0x190] sm:$0xff]
  %v196 = vld [vmem:[%s1 + $0x198] sm:$0xff]
  %v197 = vld [vmem:[%s1 + $0x1a0] sm:$0xff]
  %v198 = vld [vmem:[%s1 + $0x1a8] sm:$0xff]
  %v199 = vld [vmem:[%s1 + $0x1b0] sm:$0xff]
  %v200 = vld [vmem:[%s1 + $0x1b8] sm:$0xff]
  %v201 = vld [vmem:[%s1 + $0x1c0] sm:$0xff]
  %v202 = vld [vmem:[%s1 + $0x1c8] sm:$0xff]
  %v203 = vld [vmem:[%s1 + $0x1d0] sm:$0xff]
  %v204 = vld [vmem:[%s1 + $0x1d8] sm:$0xff]
  %v205 = vld [vmem:[%s1 + $0x1e0] sm:$0xff]
  %v206 = vld [vmem:[%s1 + $0x1e8] sm:$0xff]
  %v207 = vld [vmem:[%s1 + $0x1f0] sm:$0xff]
  %v208 = vld [vmem:[%s1 + $0x1f8] sm:$0xff]
  %v209 = vld [vmem:[%s1 + $0x200] sm:$0xff]
  %v210 = vld [vmem:[%s1 + $0x208] sm:$0xff]
  %v211 = vld [vmem:[%s1 + $0x210] sm:$0xff]
  %v212 = vld [vmem:[%s1 + $0x218] sm:$0xff]
  %v213 = vld [vmem:[%s1 + $0x220] sm:$0xff]
  %v214 = vld [vmem:[%s1 + $0x228] sm:$0xff]
  %v215 = vld [vmem:[%s1 + $0x230] sm:$0xff]
  %v216 = vld [vmem:[%s1 + $0x238] sm:$0xff]
  %v217 = vld [vmem:[%s1 + $0x240] sm:$0xff]
  %v218 = vld [vmem:[%s1 + $0x248] sm:$0xff]
  %v219 = vld [vmem:[%s1 + $0x250] sm:$0xff]
  %v220 = vld [vmem:[%s1 + $0x258] sm:$0xff]
  %v221 = vld [vmem:[%s1 + $0x260] sm:$0xff]
  %v222 = vld [vmem:[%s1 + $0x268] sm:$0xff]
  %v223 = vld [vmem:[%s1 + $0x270] sm:$0xff]
  %v224 = vld [vmem:[%s1 + $0x278] sm:$0xff]
  %v225 = vld [vmem:[%s1 + $0x280] sm:$0xff]
  %v226 = vld [vmem:[%s1 + $0x288] sm:$0xff]
  %v227 = vld [vmem:[%s1 + $0x290] sm:$0xff]
  %v228 = vld [vmem:[%s1 + $0x298] sm:$0xff]
  %v229 = vld [vmem:[%s1 + $0x2a0] sm:$0xff]
  %v230 = vld [vmem:[%s1 + $0x2a8] sm:$0xff]
  %v231 = vld [vmem:[%s1 + $0x2b0] sm:$0xff]
  %v232 = vld [vmem:[%s1 + $0x2b8] sm:$0xff]
  %v233 = vld [vmem:[%s1 + $0x2c0] sm:$0xff]
  %v234 = vld [vmem:[%s1 + $0x2c8] sm:$0xff]
  %v235 = vld [vmem:[%s1 + $0x2d0] sm:$0xff]
  %v236 = vld [vmem:[%s1 + $0x2d8] sm:$0xff]
  %v237 = vld [vmem:[%s1 + $0x2e0] sm:$0xff]
  %v238 = vld [vmem:[%s1 + $0x2e8] sm:$0xff]
  %v239 = vld [vmem:[%s1 + $0x2f0] sm:$0xff]
  %v240 = vld [vmem:[%s1 + $0x2f8] sm:$0xff]
  %v241 = vld [vmem:[%s1 + $0x300] sm:$0xff]
  %v242 = vld [vmem:[%s1 + $0x308] sm:$0xff]
  %v243 = vld [vmem:[%s1 + $0x310] sm:$0xff]
  %v244 = vld [vmem:[%s1 + $0x318] sm:$0xff]
  %v245 = vld [vmem:[%s1 + $0x320] sm:$0xff]
  %v246 = vld [vmem:[%s1 + $0x328] sm:$0xff]
  %v247 = vld [vmem:[%s1 + $0x330] sm:$0xff]
  %v248 = vld [vmem:[%s1 + $0x338] sm:$0xff]
  %v249 = vld [vmem:[%s1 + $0x340] sm:$0xff]
  %v250 = vld [vmem:[%s1 + $0x348] sm:$0xff]
  %v251 = vld [vmem:[%s1 + $0x350] sm:$0xff]
  %v252 = vld [vmem:[%s1 + $0x358] sm:$0xff]
  %v253 = vld [vmem:[%s1 + $0x360] sm:$0xff]
  %v254 = vld [vmem:[%s1 + $0x368] sm:$0xff]
  %v255 = vld [vmem:[%s1 + $0x370] sm:$0xff]
  %v256 = vld [vmem:[%s1 + $0x378] sm:$0xff]
  %v257 = vld [vmem:[%s1 + $0x380] sm:$0xff]
  %v258 = vld [vmem:[%s1 + $0x388] sm:$0xff]
  %v259 = vld [vmem:[%s1 + $0x390] sm:$0xff]
  %v260 = vld [vmem:[%s1 + $0x398] sm:$0xff]
  %v261 = vld [vmem:[%s1 + $0x3a0] sm:$0xff]
  %v262 = vld [vmem:[%s1 + $0x3a8] sm:$0xff]
  %v263 = vld [vmem:[%s1 + $0x3b0] sm:$0xff]
  %v264 = vld [vmem:[%s1 + $0x3b8] sm:$0xff]
  %v265 = vld [vmem:[%s1 + $0x3c0] sm:$0xff]
  %v266 = vld [vmem:[%s1 + $0x3c8] sm:$0xff]
  %v267 = vld [vmem:[%s1 + $0x3d0] sm:$0xff]
  %v268 = vld [vmem:[%s1 + $0x3d8] sm:$0xff]
  %v269 = vld [vmem:[%s1 + $0x3e0] sm:$0xff]
  %v270 = vld [vmem:[%s1 + $0x3e8] sm:$0xff]
  %v271 = vld [vmem:[%s1 + $0x3f0] sm:$0xff]
  %v272 = vld [vmem:[%s1 + $0x3f8] sm:$0xff]
  %273 = vmatprep.subr.mxu0 0.0
  %274 = vmatpush1.msra.mxu0 %v160
  %275 = vmatprep.subr.mxu0 0.0
  %276 = vmatpush1.msra.mxu0 %v159
  %277 = vmatprep.subr.mxu0 0.0
  %278 = vmatpush1.msra.mxu0 %v158
  %279 = vmatprep.subr.mxu0 0.0
  %280 = vmatpush1.msra.mxu0 %v157
  %281 = vmatprep.subr.mxu0 0.0
  %282 = vmatpush1.msra.mxu0 %v156
  %283 = vmatprep.subr.mxu0 0.0
  %284 = vmatpush1.msra.mxu0 %v155
  %285 = vmatprep.subr.mxu0 0.0
  %286 = vmatpush1.msra.mxu0 %v154
  %287 = vmatprep.subr.mxu0 0.0
  %288 = vmatpush1.msra.mxu0 %v153
  %289 = vmatprep.subr.mxu0 0.0
  %290 = vmatpush1.msra.mxu0 %v152
  %291 = vmatprep.subr.mxu0 0.0
  %292 = vmatpush1.msra.mxu0 %v151
  %293 = vmatprep.subr.mxu0 0.0
  %294 = vmatpush1.msra.mxu0 %v150
  %295 = vmatprep.subr.mxu0 0.0
  %296 = vmatpush1.msra.mxu0 %v149
  %297 = vmatprep.subr.mxu0 0.0
  %298 = vmatpush1.msra.mxu0 %v148
  %299 = vmatprep.subr.mxu0 0.0
  %300 = vmatpush1.msra.mxu0 %v147
  %301 = vmatprep.subr.mxu0 0.0
  %302 = vmatpush1.msra.mxu0 %v146
  %303 = vmatprep.subr.mxu0 0.0
  %304 = vmatpush1.msra.mxu0 %v145
  %305 = vmatprep.subr.mxu0 0.0
  %306 = vmatpush2.msra.mxu0 %v176
  %307 = vmatprep.subr.mxu0 0.0
  %308 = vmatpush2.msra.mxu0 %v175
  %309 = vmatprep.subr.mxu0 0.0
  %310 = vmatpush2.msra.mxu0 %v174
  %311 = vmatprep.subr.mxu0 0.0
  %312 = vmatpush2.msra.mxu0 %v173
  %313 = vmatprep.subr.mxu0 0.0
  %314 = vmatpush2.msra.mxu0 %v172
  %315 = vmatprep.subr.mxu0 0.0
  %316 = vmatpush2.msra.mxu0 %v171
  %317 = vmatprep.subr.mxu0 0.0
  %318 = vmatpush2.msra.mxu0 %v170
  %319 = vmatprep.subr.mxu0 0.0
  %320 = vmatpush2.msra.mxu0 %v169
  %321 = vmatprep.subr.mxu0 0.0
  %322 = vmatpush2.msra.mxu0 %v168
  %323 = vmatprep.subr.mxu0 0.0
  %324 = vmatpush2.msra.mxu0 %v167
  %325 = vmatprep.subr.mxu0 0.0
  %326 = vmatpush2.msra.mxu0 %v166
  %327 = vmatprep.subr.mxu0 0.0
  %328 = vmatpush2.msra.mxu0 %v165
  %329 = vmatprep.subr.mxu0 0.0
  %330 = vmatpush2.msra.mxu0 %v164
  %331 = vmatprep.subr.mxu0 0.0
  %332 = vmatpush2.msra.mxu0 %v163
  %333 = vmatprep.subr.mxu0 0.0
  %334 = vmatpush2.msra.mxu0 %v162
  %335 = vmatprep.subr.mxu0 0.0
  %336 = vmatpush2.msra.mxu0 %v161
  %337 = vmatprep.mubr.f32.mxu0 %v18
  %338 = vmatmul.mubr.f32.gmra.mxu0 %v17
  %v339 = vpop.f32.mrf.mxu0
  %v340 = vadd.f32 0.0, %v339
  %v341 = vpop.f32.mrf.mxu0
  %342 = vmatprep.mubr.f32.mxu0 %v26
  %343 = vmatmul.mubr.f32.gmra.mxu0 %v25
  %v344 = vpop.f32.mrf.mxu0
  %v345 = vadd.f32 0.0, %v344
  %v346 = vpop.f32.mrf.mxu0
  %347 = vmatprep.mubr.f32.mxu0 %v34
  %348 = vmatmul.mubr.f32.gmra.mxu0 %v33
  %v349 = vpop.f32.mrf.mxu0
  %v350 = vadd.f32 0.0, %v349
  %v351 = vpop.f32.mrf.mxu0
  %352 = vmatprep.mubr.f32.mxu0 %v42
  %353 = vmatmul.mubr.f32.gmra.mxu0 %v41
  %v354 = vpop.f32.mrf.mxu0
  %v355 = vadd.f32 0.0, %v354
  %v356 = vpop.f32.mrf.mxu0
  %357 = vmatprep.mubr.f32.mxu0 %v50
  %358 = vmatmul.mubr.f32.gmra.mxu0 %v49
  %v359 = vpop.f32.mrf.mxu0
  %v360 = vadd.f32 0.0, %v359
  %v361 = vpop.f32.mrf.mxu0
  %362 = vmatprep.mubr.f32.mxu0 %v58
  %363 = vmatmul.mubr.f32.gmra.mxu0 %v57
  %v364 = vpop.f32.mrf.mxu0
  %v365 = vadd.f32 0.0, %v364
  %v366 = vpop.f32.mrf.mxu0
  %367 = vmatprep.mubr.f32.mxu0 %v66
  %368 = vmatmul.mubr.f32.gmra.mxu0 %v65
  %v369 = vpop.f32.mrf.mxu0
  %v370 = vadd.f32 0.0, %v369
  %v371 = vpop.f32.mrf.mxu0
  %372 = vmatprep.mubr.f32.mxu0 %v74
  %373 = vmatmul.mubr.f32.gmra.mxu0 %v73
  %v374 = vpop.f32.mrf.mxu0
  %v375 = vadd.f32 0.0, %v374
  %v376 = vpop.f32.mrf.mxu0
  %377 = vmatprep.mubr.f32.mxu0 %v82
  %378 = vmatmul.mubr.f32.gmra.mxu0 %v81
  %v379 = vpop.f32.mrf.mxu0
  %v380 = vadd.f32 0.0, %v379
  %v381 = vpop.f32.mrf.mxu0
  %382 = vmatprep.mubr.f32.mxu0 %v90
  %383 = vmatmul.mubr.f32.gmra.mxu0 %v89
  %v384 = vpop.f32.mrf.mxu0
  %v385 = vadd.f32 0.0, %v384
  %v386 = vpop.f32.mrf.mxu0
  %387 = vmatprep.mubr.f32.mxu0 %v98
  %388 = vmatmul.mubr.f32.gmra.mxu0 %v97
  %v389 = vpop.f32.mrf.mxu0
  %v390 = vadd.f32 0.0, %v389
  %v391 = vpop.f32.mrf.mxu0
  %392 = vmatprep.mubr.f32.mxu0 %v106
  %393 = vmatmul.mubr.f32.gmra.mxu0 %v105
  %v394 = vpop.f32.mrf.mxu0
  %v395 = vadd.f32 0.0, %v394
  %v396 = vpop.f32.mrf.mxu0
  %397 = vmatprep.mubr.f32.mxu0 %v114
  %398 = vmatmul.mubr.f32.gmra.mxu0 %v113
  %v399 = vpop.f32.mrf.mxu0
  %v400 = vadd.f32 0.0, %v399
  %v401 = vpop.f32.mrf.mxu0
  %402 = vmatprep.mubr.f32.mxu0 %v122
  %403 = vmatmul.mubr.f32.gmra.mxu0 %v121
  %v404 = vpop.f32.mrf.mxu0
  %v405 = vadd.f32 0.0, %v404
  %v406 = vpop.f32.mrf.mxu0
  %407 = vmatprep.mubr.f32.mxu0 %v130
  %408 = vmatmul.mubr.f32.gmra.mxu0 %v129
  %v409 = vpop.f32.mrf.mxu0
  %v410 = vadd.f32 0.0, %v409
  %v411 = vpop.f32.mrf.mxu0
  %412 = vmatprep.mubr.f32.mxu0 %v138
  %413 = vmatmul.mubr.f32.gmra.mxu0 %v137
  %v414 = vpop.f32.mrf.mxu0
  %v415 = vadd.f32 0.0, %v414
  %v416 = vpop.f32.mrf.mxu0
  %417 = vdwg.mxu0
  %418 = vmatprep.subr.mxu0 0.0
  %419 = vmatpush1.msra.mxu0 %v192
  %420 = vmatprep.subr.mxu0 0.0
  %421 = vmatpush1.msra.mxu0 %v191
  %422 = vmatprep.subr.mxu0 0.0
  %423 = vmatpush1.msra.mxu0 %v190
  %424 = vmatprep.subr.mxu0 0.0
  %425 = vmatpush1.msra.mxu0 %v189
  %426 = vmatprep.subr.mxu0 0.0
  %427 = vmatpush1.msra.mxu0 %v188
  %428 = vmatprep.subr.mxu0 0.0
  %429 = vmatpush1.msra.mxu0 %v187
  %430 = vmatprep.subr.mxu0 0.0
  %431 = vmatpush1.msra.mxu0 %v186
  %432 = vmatprep.subr.mxu0 0.0
  %433 = vmatpush1.msra.mxu0 %v185
  %434 = vmatprep.subr.mxu0 0.0
  %435 = vmatpush1.msra.mxu0 %v184
  %436 = vmatprep.subr.mxu0 0.0
  %437 = vmatpush1.msra.mxu0 %v183
  %438 = vmatprep.subr.mxu0 0.0
  %439 = vmatpush1.msra.mxu0 %v182
  %440 = vmatprep.subr.mxu0 0.0
  %441 = vmatpush1.msra.mxu0 %v181
  %442 = vmatprep.subr.mxu0 0.0
  %443 = vmatpush1.msra.mxu0 %v180
  %444 = vmatprep.subr.mxu0 0.0
  %445 = vmatpush1.msra.mxu0 %v179
  %446 = vmatprep.subr.mxu0 0.0
  %447 = vmatpush1.msra.mxu0 %v178
  %448 = vmatprep.subr.mxu0 0.0
  %449 = vmatpush1.msra.mxu0 %v177
  %450 = vmatprep.subr.mxu0 0.0
  %451 = vmatpush2.msra.mxu0 %v208
  %452 = vmatprep.subr.mxu0 0.0
  %453 = vmatpush2.msra.mxu0 %v207
  %454 = vmatprep.subr.mxu0 0.0
  %455 = vmatpush2.msra.mxu0 %v206
  %456 = vmatprep.subr.mxu0 0.0
  %457 = vmatpush2.msra.mxu0 %v205
  %458 = vmatprep.subr.mxu0 0.0
  %459 = vmatpush2.msra.mxu0 %v204
  %460 = vmatprep.subr.mxu0 0.0
  %461 = vmatpush2.msra.mxu0 %v203
  %462 = vmatprep.subr.mxu0 0.0
  %463 = vmatpush2.msra.mxu0 %v202
  %464 = vmatprep.subr.mxu0 0.0
  %465 = vmatpush2.msra.mxu0 %v201
  %466 = vmatprep.subr.mxu0 0.0
  %467 = vmatpush2.msra.mxu0 %v200
  %468 = vmatprep.subr.mxu0 0.0
  %469 = vmatpush2.msra.mxu0 %v199
  %470 = vmatprep.subr.mxu0 0.0
  %471 = vmatpush2.msra.mxu0 %v198
  %472 = vmatprep.subr.mxu0 0.0
  %473 = vmatpush2.msra.mxu0 %v197
  %474 = vmatprep.subr.mxu0 0.0
  %475 = vmatpush2.msra.mxu0 %v196
  %476 = vmatprep.subr.mxu0 0.0
  %477 = vmatpush2.msra.mxu0 %v195
  %478 = vmatprep.subr.mxu0 0.0
  %479 = vmatpush2.msra.mxu0 %v194
  %480 = vmatprep.subr.mxu0 0.0
  %481 = vmatpush2.msra.mxu0 %v193
  %482 = vmatprep.mubr.f32.mxu0 %v20
  %483 = vmatmul.mubr.f32.gmra.mxu0 %v19
  %v484 = vpop.f32.mrf.mxu0
  %v485 = vadd.f32 %v340, %v484
  %v486 = vpop.f32.mrf.mxu0
  %487 = vmatprep.mubr.f32.mxu0 %v28
  %488 = vmatmul.mubr.f32.gmra.mxu0 %v27
  %v489 = vpop.f32.mrf.mxu0
  %v490 = vadd.f32 %v345, %v489
  %v491 = vpop.f32.mrf.mxu0
  %492 = vmatprep.mubr.f32.mxu0 %v36
  %493 = vmatmul.mubr.f32.gmra.mxu0 %v35
  %v494 = vpop.f32.mrf.mxu0
  %v495 = vadd.f32 %v350, %v494
  %v496 = vpop.f32.mrf.mxu0
  %497 = vmatprep.mubr.f32.mxu0 %v44
  %498 = vmatmul.mubr.f32.gmra.mxu0 %v43
  %v499 = vpop.f32.mrf.mxu0
  %v500 = vadd.f32 %v355, %v499
  %v501 = vpop.f32.mrf.mxu0
  %502 = vmatprep.mubr.f32.mxu0 %v52
  %503 = vmatmul.mubr.f32.gmra.mxu0 %v51
  %v504 = vpop.f32.mrf.mxu0
  %v505 = vadd.f32 %v360, %v504
  %v506 = vpop.f32.mrf.mxu0
  %507 = vmatprep.mubr.f32.mxu0 %v60
  %508 = vmatmul.mubr.f32.gmra.mxu0 %v59
  %v509 = vpop.f32.mrf.mxu0
  %v510 = vadd.f32 %v365, %v509
  %v511 = vpop.f32.mrf.mxu0
  %512 = vmatprep.mubr.f32.mxu0 %v68
  %513 = vmatmul.mubr.f32.gmra.mxu0 %v67
  %v514 = vpop.f32.mrf.mxu0
  %v515 = vadd.f32 %v370, %v514
  %v516 = vpop.f32.mrf.mxu0
  %517 = vmatprep.mubr.f32.mxu0 %v76
  %518 = vmatmul.mubr.f32.gmra.mxu0 %v75
  %v519 = vpop.f32.mrf.mxu0
  %v520 = vadd.f32 %v375, %v519
  %v521 = vpop.f32.mrf.mxu0
  %522 = vmatprep.mubr.f32.mxu0 %v84
  %523 = vmatmul.mubr.f32.gmra.mxu0 %v83
  %v524 = vpop.f32.mrf.mxu0
  %v525 = vadd.f32 %v380, %v524
  %v526 = vpop.f32.mrf.mxu0
  %527 = vmatprep.mubr.f32.mxu0 %v92
  %528 = vmatmul.mubr.f32.gmra.mxu0 %v91
  %v529 = vpop.f32.mrf.mxu0
  %v530 = vadd.f32 %v385, %v529
  %v531 = vpop.f32.mrf.mxu0
  %532 = vmatprep.mubr.f32.mxu0 %v100
  %533 = vmatmul.mubr.f32.gmra.mxu0 %v99
  %v534 = vpop.f32.mrf.mxu0
  %v535 = vadd.f32 %v390, %v534
  %v536 = vpop.f32.mrf.mxu0
  %537 = vmatprep.mubr.f32.mxu0 %v108
  %538 = vmatmul.mubr.f32.gmra.mxu0 %v107
  %v539 = vpop.f32.mrf.mxu0
  %v540 = vadd.f32 %v395, %v539
  %v541 = vpop.f32.mrf.mxu0
  %542 = vmatprep.mubr.f32.mxu0 %v116
  %543 = vmatmul.mubr.f32.gmra.mxu0 %v115
  %v544 = vpop.f32.mrf.mxu0
  %v545 = vadd.f32 %v400, %v544
  %v546 = vpop.f32.mrf.mxu0
  %547 = vmatprep.mubr.f32.mxu0 %v124
  %548 = vmatmul.mubr.f32.gmra.mxu0 %v123
  %v549 = vpop.f32.mrf.mxu0
  %v550 = vadd.f32 %v405, %v549
  %v551 = vpop.f32.mrf.mxu0
  %552 = vmatprep.mubr.f32.mxu0 %v132
  %553 = vmatmul.mubr.f32.gmra.mxu0 %v131
  %v554 = vpop.f32.mrf.mxu0
  %v555 = vadd.f32 %v410, %v554
  %v556 = vpop.f32.mrf.mxu0
  %557 = vmatprep.mubr.f32.mxu0 %v140
  %558 = vmatmul.mubr.f32.gmra.mxu0 %v139
  %v559 = vpop.f32.mrf.mxu0
  %v560 = vadd.f32 %v415, %v559
  %v561 = vpop.f32.mrf.mxu0
  %562 = vdwg.mxu0
  %563 = vmatprep.subr.mxu0 0.0
  %564 = vmatpush1.msra.mxu0 %v224
  %565 = vmatprep.subr.mxu0 0.0
  %566 = vmatpush1.msra.mxu0 %v223
  %567 = vmatprep.subr.mxu0 0.0
  %568 = vmatpush1.msra.mxu0 %v222
  %569 = vmatprep.subr.mxu0 0.0
  %570 = vmatpush1.msra.mxu0 %v221
  %571 = vmatprep.subr.mxu0 0.0
  %572 = vmatpush1.msra.mxu0 %v220
  %573 = vmatprep.subr.mxu0 0.0
  %574 = vmatpush1.msra.mxu0 %v219
  %575 = vmatprep.subr.mxu0 0.0
  %576 = vmatpush1.msra.mxu0 %v218
  %577 = vmatprep.subr.mxu0 0.0
  %578 = vmatpush1.msra.mxu0 %v217
  %579 = vmatprep.subr.mxu0 0.0
  %580 = vmatpush1.msra.mxu0 %v216
  %581 = vmatprep.subr.mxu0 0.0
  %582 = vmatpush1.msra.mxu0 %v215
  %583 = vmatprep.subr.mxu0 0.0
  %584 = vmatpush1.msra.mxu0 %v214
  %585 = vmatprep.subr.mxu0 0.0
  %586 = vmatpush1.msra.mxu0 %v213
  %587 = vmatprep.subr.mxu0 0.0
  %588 = vmatpush1.msra.mxu0 %v212
  %589 = vmatprep.subr.mxu0 0.0
  %590 = vmatpush1.msra.mxu0 %v211
  %591 = vmatprep.subr.mxu0 0.0
  %592 = vmatpush1.msra.mxu0 %v210
  %593 = vmatprep.subr.mxu0 0.0
  %594 = vmatpush1.msra.mxu0 %v209
  %595 = vmatprep.subr.mxu0 0.0
  %596 = vmatpush2.msra.mxu0 %v240
  %597 = vmatprep.subr.mxu0 0.0
  %598 = vmatpush2.msra.mxu0 %v239
  %599 = vmatprep.subr.mxu0 0.0
  %600 = vmatpush2.msra.mxu0 %v238
  %601 = vmatprep.subr.mxu0 0.0
  %602 = vmatpush2.msra.mxu0 %v237
  %603 = vmatprep.subr.mxu0 0.0
  %604 = vmatpush2.msra.mxu0 %v236
  %605 = vmatprep.subr.mxu0 0.0
  %606 = vmatpush2.msra.mxu0 %v235
  %607 = vmatprep.subr.mxu0 0.0
  %608 = vmatpush2.msra.mxu0 %v234
  %609 = vmatprep.subr.mxu0 0.0
  %610 = vmatpush2.msra.mxu0 %v233
  %611 = vmatprep.subr.mxu0 0.0
  %612 = vmatpush2.msra.mxu0 %v232
  %613 = vmatprep.subr.mxu0 0.0
  %614 = vmatpush2.msra.mxu0 %v231
  %615 = vmatprep.subr.mxu0 0.0
  %616 = vmatpush2.msra.mxu0 %v230
  %617 = vmatprep.subr.mxu0 0.0
  %618 = vmatpush2.msra.mxu0 %v229
  %619 = vmatprep.subr.mxu0 0.0
  %620 = vmatpush2.msra.mxu0 %v228
  %621 = vmatprep.subr.mxu0 0.0
  %622 = vmatpush2.msra.mxu0 %v227
  %623 = vmatprep.subr.mxu0 0.0
  %624 = vmatpush2.msra.mxu0 %v226
  %625 = vmatprep.subr.mxu0 0.0
  %626 = vmatpush2.msra.mxu0 %v225
  %627 = vmatprep.mubr.f32.mxu0 %v22
  %628 = vmatmul.mubr.f32.gmra.mxu0 %v21
  %v629 = vpop.f32.mrf.mxu0
  %v630 = vadd.f32 %v485, %v629
  %v631 = vpop.f32.mrf.mxu0
  %632 = vmatprep.mubr.f32.mxu0 %v30
  %633 = vmatmul.mubr.f32.gmra.mxu0 %v29
  %v634 = vpop.f32.mrf.mxu0
  %v635 = vadd.f32 %v490, %v634
  %v636 = vpop.f32.mrf.mxu0
  %637 = vmatprep.mubr.f32.mxu0 %v38
  %638 = vmatmul.mubr.f32.gmra.mxu0 %v37
  %v639 = vpop.f32.mrf.mxu0
  %v640 = vadd.f32 %v495, %v639
  %v641 = vpop.f32.mrf.mxu0
  %642 = vmatprep.mubr.f32.mxu0 %v46
  %643 = vmatmul.mubr.f32.gmra.mxu0 %v45
  %v644 = vpop.f32.mrf.mxu0
  %v645 = vadd.f32 %v500, %v644
  %v646 = vpop.f32.mrf.mxu0
  %647 = vmatprep.mubr.f32.mxu0 %v54
  %648 = vmatmul.mubr.f32.gmra.mxu0 %v53
  %v649 = vpop.f32.mrf.mxu0
  %v650 = vadd.f32 %v505, %v649
  %v651 = vpop.f32.mrf.mxu0
  %652 = vmatprep.mubr.f32.mxu0 %v62
  %653 = vmatmul.mubr.f32.gmra.mxu0 %v61
  %v654 = vpop.f32.mrf.mxu0
  %v655 = vadd.f32 %v510, %v654
  %v656 = vpop.f32.mrf.mxu0
  %657 = vmatprep.mubr.f32.mxu0 %v70
  %658 = vmatmul.mubr.f32.gmra.mxu0 %v69
  %v659 = vpop.f32.mrf.mxu0
  %v660 = vadd.f32 %v515, %v659
  %v661 = vpop.f32.mrf.mxu0
  %662 = vmatprep.mubr.f32.mxu0 %v78
  %663 = vmatmul.mubr.f32.gmra.mxu0 %v77
  %v664 = vpop.f32.mrf.mxu0
  %v665 = vadd.f32 %v520, %v664
  %v666 = vpop.f32.mrf.mxu0
  %667 = vmatprep.mubr.f32.mxu0 %v86
  %668 = vmatmul.mubr.f32.gmra.mxu0 %v85
  %v669 = vpop.f32.mrf.mxu0
  %v670 = vadd.f32 %v525, %v669
  %v671 = vpop.f32.mrf.mxu0
  %672 = vmatprep.mubr.f32.mxu0 %v94
  %673 = vmatmul.mubr.f32.gmra.mxu0 %v93
  %v674 = vpop.f32.mrf.mxu0
  %v675 = vadd.f32 %v530, %v674
  %v676 = vpop.f32.mrf.mxu0
  %677 = vmatprep.mubr.f32.mxu0 %v102
  %678 = vmatmul.mubr.f32.gmra.mxu0 %v101
  %v679 = vpop.f32.mrf.mxu0
  %v680 = vadd.f32 %v535, %v679
  %v681 = vpop.f32.mrf.mxu0
  %682 = vmatprep.mubr.f32.mxu0 %v110
  %683 = vmatmul.mubr.f32.gmra.mxu0 %v109
  %v684 = vpop.f32.mrf.mxu0
  %v685 = vadd.f32 %v540, %v684
  %v686 = vpop.f32.mrf.mxu0
  %687 = vmatprep.mubr.f32.mxu0 %v118
  %688 = vmatmul.mubr.f32.gmra.mxu0 %v117
  %v689 = vpop.f32.mrf.mxu0
  %v690 = vadd.f32 %v545, %v689
  %v691 = vpop.f32.mrf.mxu0
  %692 = vmatprep.mubr.f32.mxu0 %v126
  %693 = vmatmul.mubr.f32.gmra.mxu0 %v125
  %v694 = vpop.f32.mrf.mxu0
  %v695 = vadd.f32 %v550, %v694
  %v696 = vpop.f32.mrf.mxu0
  %697 = vmatprep.mubr.f32.mxu0 %v134
  %698 = vmatmul.mubr.f32.gmra.mxu0 %v133
  %v699 = vpop.f32.mrf.mxu0
  %v700 = vadd.f32 %v555, %v699
  %v701 = vpop.f32.mrf.mxu0
  %702 = vmatprep.mubr.f32.mxu0 %v142
  %703 = vmatmul.mubr.f32.gmra.mxu0 %v141
  %v704 = vpop.f32.mrf.mxu0
  %v705 = vadd.f32 %v560, %v704
  %v706 = vpop.f32.mrf.mxu0
  %707 = vdwg.mxu0
  %708 = vmatprep.subr.mxu0 0.0
  %709 = vmatpush1.msra.mxu0 %v256
  %710 = vmatprep.subr.mxu0 0.0
  %711 = vmatpush1.msra.mxu0 %v255
  %712 = vmatprep.subr.mxu0 0.0
  %713 = vmatpush1.msra.mxu0 %v254
  %714 = vmatprep.subr.mxu0 0.0
  %715 = vmatpush1.msra.mxu0 %v253
  %716 = vmatprep.subr.mxu0 0.0
  %717 = vmatpush1.msra.mxu0 %v252
  %718 = vmatprep.subr.mxu0 0.0
  %719 = vmatpush1.msra.mxu0 %v251
  %720 = vmatprep.subr.mxu0 0.0
  %721 = vmatpush1.msra.mxu0 %v250
  %722 = vmatprep.subr.mxu0 0.0
  %723 = vmatpush1.msra.mxu0 %v249
  %724 = vmatprep.subr.mxu0 0.0
  %725 = vmatpush1.msra.mxu0 %v248
  %726 = vmatprep.subr.mxu0 0.0
  %727 = vmatpush1.msra.mxu0 %v247
  %728 = vmatprep.subr.mxu0 0.0
  %729 = vmatpush1.msra.mxu0 %v246
  %730 = vmatprep.subr.mxu0 0.0
  %731 = vmatpush1.msra.mxu0 %v245
  %732 = vmatprep.subr.mxu0 0.0
  %733 = vmatpush1.msra.mxu0 %v244
  %734 = vmatprep.subr.mxu0 0.0
  %735 = vmatpush1.msra.mxu0 %v243
  %736 = vmatprep.subr.mxu0 0.0
  %737 = vmatpush1.msra.mxu0 %v242
  %738 = vmatprep.subr.mxu0 0.0
  %739 = vmatpush1.msra.mxu0 %v241
  %740 = vmatprep.subr.mxu0 0.0
  %741 = vmatpush2.msra.mxu0 %v272
  %742 = vmatprep.subr.mxu0 0.0
  %743 = vmatpush2.msra.mxu0 %v271
  %744 = vmatprep.subr.mxu0 0.0
  %745 = vmatpush2.msra.mxu0 %v270
  %746 = vmatprep.subr.mxu0 0.0
  %747 = vmatpush2.msra.mxu0 %v269
  %748 = vmatprep.subr.mxu0 0.0
  %749 = vmatpush2.msra.mxu0 %v268
  %750 = vmatprep.subr.mxu0 0.0
  %751 = vmatpush2.msra.mxu0 %v267
  %752 = vmatprep.subr.mxu0 0.0
  %753 = vmatpush2.msra.mxu0 %v266
  %754 = vmatprep.subr.mxu0 0.0
  %755 = vmatpush2.msra.mxu0 %v265
  %756 = vmatprep.subr.mxu0 0.0
  %757 = vmatpush2.msra.mxu0 %v264
  %758 = vmatprep.subr.mxu0 0.0
  %759 = vmatpush2.msra.mxu0 %v263
  %760 = vmatprep.subr.mxu0 0.0
  %761 = vmatpush2.msra.mxu0 %v262
  %762 = vmatprep.subr.mxu0 0.0
  %763 = vmatpush2.msra.mxu0 %v261
  %764 = vmatprep.subr.mxu0 0.0
  %765 = vmatpush2.msra.mxu0 %v260
  %766 = vmatprep.subr.mxu0 0.0
  %767 = vmatpush2.msra.mxu0 %v259
  %768 = vmatprep.subr.mxu0 0.0
  %769 = vmatpush2.msra.mxu0 %v258
  %770 = vmatprep.subr.mxu0 0.0
  %771 = vmatpush2.msra.mxu0 %v257
  %772 = vmatprep.mubr.f32.mxu0 %v24
  %773 = vmatmul.mubr.f32.gmra.mxu0 %v23
  %v774 = vpop.f32.mrf.mxu0
  %v775 = vadd.f32 %v630, %v774
  %v776 = vpop.f32.mrf.mxu0
  %777 = vmatprep.mubr.f32.mxu0 %v32
  %778 = vmatmul.mubr.f32.gmra.mxu0 %v31
  %v779 = vpop.f32.mrf.mxu0
  %v780 = vadd.f32 %v635, %v779
  %v781 = vpop.f32.mrf.mxu0
  %782 = vmatprep.mubr.f32.mxu0 %v40
  %783 = vmatmul.mubr.f32.gmra.mxu0 %v39
  %v784 = vpop.f32.mrf.mxu0
  %v785 = vadd.f32 %v640, %v784
  %v786 = vpop.f32.mrf.mxu0
  %787 = vmatprep.mubr.f32.mxu0 %v48
  %788 = vmatmul.mubr.f32.gmra.mxu0 %v47
  %v789 = vpop.f32.mrf.mxu0
  %v790 = vadd.f32 %v645, %v789
  %v791 = vpop.f32.mrf.mxu0
  %792 = vmatprep.mubr.f32.mxu0 %v56
  %793 = vmatmul.mubr.f32.gmra.mxu0 %v55
  %v794 = vpop.f32.mrf.mxu0
  %v795 = vadd.f32 %v650, %v794
  %v796 = vpop.f32.mrf.mxu0
  %797 = vmatprep.mubr.f32.mxu0 %v64
  %798 = vmatmul.mubr.f32.gmra.mxu0 %v63
  %v799 = vpop.f32.mrf.mxu0
  %v800 = vadd.f32 %v655, %v799
  %v801 = vpop.f32.mrf.mxu0
  %802 = vmatprep.mubr.f32.mxu0 %v72
  %803 = vmatmul.mubr.f32.gmra.mxu0 %v71
  %v804 = vpop.f32.mrf.mxu0
  %v805 = vadd.f32 %v660, %v804
  %v806 = vpop.f32.mrf.mxu0
  %807 = vmatprep.mubr.f32.mxu0 %v80
  %808 = vmatmul.mubr.f32.gmra.mxu0 %v79
  %v809 = vpop.f32.mrf.mxu0
  %v810 = vadd.f32 %v665, %v809
  %v811 = vpop.f32.mrf.mxu0
  %812 = vmatprep.mubr.f32.mxu0 %v88
  %813 = vmatmul.mubr.f32.gmra.mxu0 %v87
  %v814 = vpop.f32.mrf.mxu0
  %v815 = vadd.f32 %v670, %v814
  %v816 = vpop.f32.mrf.mxu0
  %817 = vmatprep.mubr.f32.mxu0 %v96
  %818 = vmatmul.mubr.f32.gmra.mxu0 %v95
  %v819 = vpop.f32.mrf.mxu0
  %v820 = vadd.f32 %v675, %v819
  %v821 = vpop.f32.mrf.mxu0
  %822 = vmatprep.mubr.f32.mxu0 %v104
  %823 = vmatmul.mubr.f32.gmra.mxu0 %v103
  %v824 = vpop.f32.mrf.mxu0
  %v825 = vadd.f32 %v680, %v824
  %v826 = vpop.f32.mrf.mxu0
  %827 = vmatprep.mubr.f32.mxu0 %v112
  %828 = vmatmul.mubr.f32.gmra.mxu0 %v111
  %v829 = vpop.f32.mrf.mxu0
  %v830 = vadd.f32 %v685, %v829
  %v831 = vpop.f32.mrf.mxu0
  %832 = vmatprep.mubr.f32.mxu0 %v120
  %833 = vmatmul.mubr.f32.gmra.mxu0 %v119
  %v834 = vpop.f32.mrf.mxu0
  %v835 = vadd.f32 %v690, %v834
  %v836 = vpop.f32.mrf.mxu0
  %837 = vmatprep.mubr.f32.mxu0 %v128
  %838 = vmatmul.mubr.f32.gmra.mxu0 %v127
  %v839 = vpop.f32.mrf.mxu0
  %v840 = vadd.f32 %v695, %v839
  %v841 = vpop.f32.mrf.mxu0
  %842 = vmatprep.mubr.f32.mxu0 %v136
  %843 = vmatmul.mubr.f32.gmra.mxu0 %v135
  %v844 = vpop.f32.mrf.mxu0
  %v845 = vadd.f32 %v700, %v844
  %v846 = vpop.f32.mrf.mxu0
  %847 = vmatprep.mubr.f32.mxu0 %v144
  %848 = vmatmul.mubr.f32.gmra.mxu0 %v143
  %v849 = vpop.f32.mrf.mxu0
  %v850 = vadd.f32 %v705, %v849
  %v851 = vpop.f32.mrf.mxu0
  %852 = vdwg.mxu0
  %vm853 = vcmask 261120
  %v854 = vsel %vm853, %v775, 0.0
  %v855 = vsel %vm853, %v780, 0.0
  %v856 = vadd.f32 %v854, %v855
  %v857 = vsel %vm853, %v785, 0.0
  %v858 = vadd.f32 %v856, %v857
  %v859 = vsel %vm853, %v790, 0.0
  %v860 = vadd.f32 %v858, %v859
  %v861 = vsel %vm853, %v795, 0.0
  %v862 = vadd.f32 %v860, %v861
  %v863 = vsel %vm853, %v800, 0.0
  %v864 = vadd.f32 %v862, %v863
  %v865 = vsel %vm853, %v805, 0.0
  %v866 = vadd.f32 %v864, %v865
  %v867 = vsel %vm853, %v810, 0.0
  %v868 = vadd.f32 %v866, %v867
  %v869 = vsel %vm853, %v815, 0.0
  %v870 = vadd.f32 %v868, %v869
  %v871 = vsel %vm853, %v820, 0.0
  %v872 = vadd.f32 %v870, %v871
  %v873 = vsel %vm853, %v825, 0.0
  %v874 = vadd.f32 %v872, %v873
  %v875 = vsel %vm853, %v830, 0.0
  %v876 = vadd.f32 %v874, %v875
  %v877 = vsel %vm853, %v835, 0.0
  %v878 = vadd.f32 %v876, %v877
  %v879 = vsel %vm853, %v840, 0.0
  %v880 = vadd.f32 %v878, %v879
  %v881 = vsel %vm853, %v845, 0.0
  %v882 = vadd.f32 %v880, %v881
  %v883 = vsel %vm853, %v850, 0.0
  %v884 = vadd.f32 %v882, %v883
  %v885 = vrot.slane %v884, 4
  %v886 = vadd.f32 %v884, %v885
  %v887 = vrot.slane %v886, 2
  %v888 = vadd.f32 %v886, %v887
  %v889 = vrot.slane %v888, 1
  %v890 = vadd.f32 %v888, %v889
  %v891 = vrcp.pop 128.0
  %v892 = vmul.f32 %v890, %v891
  %v893 = vsub.f32 %v775, %v892
  %v894 = vsub.f32 %v780, %v892
  %v895 = vsub.f32 %v785, %v892
  %v896 = vsub.f32 %v790, %v892
  %v897 = vsub.f32 %v795, %v892
  %v898 = vsub.f32 %v800, %v892
  %v899 = vsub.f32 %v805, %v892
  %v900 = vsub.f32 %v810, %v892
  %v901 = vsub.f32 %v815, %v892
  %v902 = vsub.f32 %v820, %v892
  %v903 = vsub.f32 %v825, %v892
  %v904 = vsub.f32 %v830, %v892
  %v905 = vsub.f32 %v835, %v892
  %v906 = vsub.f32 %v840, %v892
  %v907 = vsub.f32 %v845, %v892
  %v908 = vsub.f32 %v850, %v892
  %v909 = vmul.f32 %v893, %v893
  %v910 = vmul.f32 %v894, %v894
  %v911 = vmul.f32 %v895, %v895
  %v912 = vmul.f32 %v896, %v896
  %v913 = vmul.f32 %v897, %v897
  %v914 = vmul.f32 %v898, %v898
  %v915 = vmul.f32 %v899, %v899
  %v916 = vmul.f32 %v900, %v900
  %v917 = vmul.f32 %v901, %v901
  %v918 = vmul.f32 %v902, %v902
  %v919 = vmul.f32 %v903, %v903
  %v920 = vmul.f32 %v904, %v904
  %v921 = vmul.f32 %v905, %v905
  %v922 = vmul.f32 %v906, %v906
  %v923 = vmul.f32 %v907, %v907
  %v924 = vmul.f32 %v908, %v908
  %v925 = vsel %vm853, %v909, 0.0
  %v926 = vsel %vm853, %v910, 0.0
  %v927 = vadd.f32 %v925, %v926
  %v928 = vsel %vm853, %v911, 0.0
  %v929 = vadd.f32 %v927, %v928
  %v930 = vsel %vm853, %v912, 0.0
  %v931 = vadd.f32 %v929, %v930
  %v932 = vsel %vm853, %v913, 0.0
  %v933 = vadd.f32 %v931, %v932
  %v934 = vsel %vm853, %v914, 0.0
  %v935 = vadd.f32 %v933, %v934
  %v936 = vsel %vm853, %v915, 0.0
  %v937 = vadd.f32 %v935, %v936
  %v938 = vsel %vm853, %v916, 0.0
  %v939 = vadd.f32 %v937, %v938
  %v940 = vsel %vm853, %v917, 0.0
  %v941 = vadd.f32 %v939, %v940
  %v942 = vsel %vm853, %v918, 0.0
  %v943 = vadd.f32 %v941, %v942
  %v944 = vsel %vm853, %v919, 0.0
  %v945 = vadd.f32 %v943, %v944
  %v946 = vsel %vm853, %v920, 0.0
  %v947 = vadd.f32 %v945, %v946
  %v948 = vsel %vm853, %v921, 0.0
  %v949 = vadd.f32 %v947, %v948
  %v950 = vsel %vm853, %v922, 0.0
  %v951 = vadd.f32 %v949, %v950
  %v952 = vsel %vm853, %v923, 0.0
  %v953 = vadd.f32 %v951, %v952
  %v954 = vsel %vm853, %v924, 0.0
  %v955 = vadd.f32 %v953, %v954
  %v956 = vrot.slane %v955, 4
  %v957 = vadd.f32 %v955, %v956
  %v958 = vrot.slane %v957, 2
  %v959 = vadd.f32 %v957, %v958
  %v960 = vrot.slane %v959, 1
  %v961 = vadd.f32 %v959, %v960
  %v962 = vmul.f32 %v961, %v891
  %v963 = vadd.f32 %v962, 1e-05
  %v964 = vrsqrt.pop %v963
  %v965 = vld [vmem:[%s2] sm:$0x1]
  %v966 = vmul.f32 %v964, %v965
  %v967 = vlaneseq
  %v968 = vshrl.u32 %v967, 7
  %v969 = vsub.s32 0, %v968
  %v970 = vrot.slane %v966, %v969
  %v971 = vmul.f32 %v893, %v970
  %v972 = vmul.f32 %v894, %v970
  %v973 = vmul.f32 %v895, %v970
  %v974 = vmul.f32 %v896, %v970
  %v975 = vmul.f32 %v897, %v970
  %v976 = vmul.f32 %v898, %v970
  %v977 = vmul.f32 %v899, %v970
  %v978 = vmul.f32 %v900, %v970
  %v979 = vmul.f32 %v901, %v970
  %v980 = vmul.f32 %v902, %v970
  %v981 = vmul.f32 %v903, %v970
  %v982 = vmul.f32 %v904, %v970
  %v983 = vmul.f32 %v905, %v970
  %v984 = vmul.f32 %v906, %v970
  %v985 = vmul.f32 %v907, %v970
  %v986 = vmul.f32 %v908, %v970
  %v987 = vld [vmem:[%s3] sm:$0x1]
  %v989 = vlaneseq
  %v990 = vshrl.u32 %v989, 7
  %v991 = vsub.s32 0, %v990
  %v992 = vrot.slane %v987, %v991
  %v994 = vadd.f32 %v971, %v992
  %v995 = vadd.f32 %v972, %v992
  %v996 = vadd.f32 %v973, %v992
  %v997 = vadd.f32 %v974, %v992
  %v998 = vadd.f32 %v975, %v992
  %v999 = vadd.f32 %v976, %v992
  %v1000 = vadd.f32 %v977, %v992
  %v1001 = vadd.f32 %v978, %v992
  %v1002 = vadd.f32 %v979, %v992
  %v1003 = vadd.f32 %v980, %v992
  %v1004 = vadd.f32 %v981, %v992
  %v1005 = vadd.f32 %v982, %v992
  %v1006 = vadd.f32 %v983, %v992
  %v1007 = vadd.f32 %v984, %v992
  %v1008 = vadd.f32 %v985, %v992
  %v1009 = vadd.f32 %v986, %v992
  %v1010 = vmax.f32 %v994, 0.0
  %v1011 = vmax.f32 %v995, 0.0
  %v1012 = vmax.f32 %v996, 0.0
  %v1013 = vmax.f32 %v997, 0.0
  %v1014 = vmax.f32 %v998, 0.0
  %v1015 = vmax.f32 %v999, 0.0
  %v1016 = vmax.f32 %v1000, 0.0
  %v1017 = vmax.f32 %v1001, 0.0
  %v1018 = vmax.f32 %v1002, 0.0
  %v1019 = vmax.f32 %v1003, 0.0
  %v1020 = vmax.f32 %v1004, 0.0
  %v1021 = vmax.f32 %v1005, 0.0
  %v1022 = vmax.f32 %v1006, 0.0
  %v1023 = vmax.f32 %v1007, 0.0
  %v1024 = vmax.f32 %v1008, 0.0
  %v1025 = vmax.f32 %v1009, 0.0
  %1026 = vst.msk [vmem:[%s4] sm:$0xff] %vm853, %v1010
  %1027 = vst.msk [vmem:[%s4 + $0x8] sm:$0xff] %vm853, %v1011
  %1028 = vst.msk [vmem:[%s4 + $0x10] sm:$0xff] %vm853, %v1012
  %1029 = vst.msk [vmem:[%s4 + $0x18] sm:$0xff] %vm853, %v1013
  %1030 = vst.msk [vmem:[%s4 + $0x20] sm:$0xff] %vm853, %v1014
  %1031 = vst.msk [vmem:[%s4 + $0x28] sm:$0xff] %vm853, %v1015
  %1032 = vst.msk [vmem:[%s4 + $0x30] sm:$0xff] %vm853, %v1016
  %1033 = vst.msk [vmem:[%s4 + $0x38] sm:$0xff] %vm853, %v1017
  %1034 = vst.msk [vmem:[%s4 + $0x40] sm:$0xff] %vm853, %v1018
  %1035 = vst.msk [vmem:[%s4 + $0x48] sm:$0xff] %vm853, %v1019
  %1036 = vst.msk [vmem:[%s4 + $0x50] sm:$0xff] %vm853, %v1020
  %1037 = vst.msk [vmem:[%s4 + $0x58] sm:$0xff] %vm853, %v1021
  %1038 = vst.msk [vmem:[%s4 + $0x60] sm:$0xff] %vm853, %v1022
  %1039 = vst.msk [vmem:[%s4 + $0x68] sm:$0xff] %vm853, %v1023
  %1040 = vst.msk [vmem:[%s4 + $0x70] sm:$0xff] %vm853, %v1024
  %1041 = vst.msk [vmem:[%s4 + $0x78] sm:$0xff] %vm853, %v1025
  // Predicated region
  $region18: #{generator_forward.6} parent=0 // pred_check
    _
  $region19: #{generator_forward.6} parent=0 // pred_check_branch
    %1043 = sbr.rel (0) target = $region21
  $region20: #{generator_forward.6} parent=0 // pred_region
    _
  $region21: #{generator_forward.6} parent=0 // pred_fallthru
    _
  // Predicated region
  $region22: #{generator_forward.6} parent=0 // pred_check
    _
  $region23: #{generator_forward.6} parent=0 // pred_check_branch
    %1045 = sbr.rel (0) target = $region25
  $region24: #{generator_forward.6} parent=0 // pred_region
    _
  $region25: #{generator_forward.6} parent=0 // pred_fallthru
    _

// kernel: generator_forward.7
$region0: #{generator_forward.7}
  #allocation0 [shape = 'u32[]', space=smem, size = 0x4, offset = 0x4, fixed_abs, tag = 'smem constant byte address 0x4 - core index']
  #allocation1 [shape = 'u32[144,128]{1,0:T(1,128)}', space=vmem, size = 0x12000, scoped, tag = 'internal scratch']
  %s0 = inlined_call_operand.vmem [shape: f32[512,512], index: 0, kind: input, shape index: {}]
  %s1 = inlined_call_operand.vmem [shape: f32[512,16], index: 1, kind: input, shape index: {}]
  %s2 = inlined_call_operand.vmem [shape: f32[1,16], index: 2, kind: input, shape index: {}]
  %s3 = inlined_call_operand.vmem [shape: f32[1,16], index: 3, kind: input, shape index: {}]
  %s4 = inlined_call_operand.vmem [shape: f32[512,16], index: 4, kind: output, shape index: {}]
  %s5 = sld [smem:[#allocation0]]
  $region26: #{generator_forward.7} parent=0
    _
  %s7 = ssub.s32 1, %s5
  %s8 = scalar_select 0, %s7, %s5
  // Predicated region
  $region2: #{generator_forward.7} parent=0 // pred_check
    _
  $region3: #{generator_forward.7} parent=0 // pred_check_branch
    %10 = sbr.rel (0) target = $region5
  $region4: #{generator_forward.7} parent=0 // pred_region
    _
  $region5: #{generator_forward.7} parent=0 // pred_fallthru
    _
  // Predicated region
  $region6: #{generator_forward.7} parent=0 // pred_check
    _
  $region7: #{generator_forward.7} parent=0 // pred_check_branch
    %12 = sbr.rel (0) target = $region9
  $region8: #{generator_forward.7} parent=0 // pred_region
    _
  $region9: #{generator_forward.7} parent=0 // pred_fallthru
    _
  // Predicated region
  $region10: #{generator_forward.7} parent=0 // pred_check
    _
  $region11: #{generator_forward.7} parent=0 // pred_check_branch
    %14 = sbr.rel (0) target = $region13
  $region12: #{generator_forward.7} parent=0 // pred_region
    _
  $region13: #{generator_forward.7} parent=0 // pred_fallthru
    _
  // Predicated region
  $region14: #{generator_forward.7} parent=0 // pred_check
    _
  $region15: #{generator_forward.7} parent=0 // pred_check_branch
    %16 = sbr.rel (0) target = $region17
  $region16: #{generator_forward.7} parent=0 // pred_region
    _
  $region17: #{generator_forward.7} parent=0 // pred_fallthru
    _
  %v17 = vld [vmem:[%s0] sm:$0xff]
  %v18 = vld [vmem:[%s0 + $0x8] sm:$0xff]
  %v19 = vld [vmem:[%s0 + $0x10] sm:$0xff]
  %v20 = vld [vmem:[%s0 + $0x18] sm:$0xff]
  %v21 = vld [vmem:[%s0 + $0x20] sm:$0xff]
  %v22 = vld [vmem:[%s0 + $0x28] sm:$0xff]
  %v23 = vld [vmem:[%s0 + $0x30] sm:$0xff]
  %v24 = vld [vmem:[%s0 + $0x38] sm:$0xff]
  %v25 = vld [vmem:[%s0 + $0x40] sm:$0xff]
  %v26 = vld [vmem:[%s0 + $0x48] sm:$0xff]
  %v27 = vld [vmem:[%s0 + $0x50] sm:$0xff]
  %v28 = vld [vmem:[%s0 + $0x58] sm:$0xff]
  %v29 = vld [vmem:[%s0 + $0x60] sm:$0xff]
  %v30 = vld [vmem:[%s0 + $0x68] sm:$0xff]
  %v31 = vld [vmem:[%s0 + $0x70] sm:$0xff]
  %v32 = vld [vmem:[%s0 + $0x78] sm:$0xff]
  %v33 = vld [vmem:[%s0 + $0x80] sm:$0xff]
  %v34 = vld [vmem:[%s0 + $0x88] sm:$0xff]
  %v35 = vld [vmem:[%s0 + $0x90] sm:$0xff]
  %v36 = vld [vmem:[%s0 + $0x98] sm:$0xff]
  %v37 = vld [vmem:[%s0 + $0xa0] sm:$0xff]
  %v38 = vld [vmem:[%s0 + $0xa8] sm:$0xff]
  %v39 = vld [vmem:[%s0 + $0xb0] sm:$0xff]
  %v40 = vld [vmem:[%s0 + $0xb8] sm:$0xff]
  %v41 = vld [vmem:[%s0 + $0xc0] sm:$0xff]
  %v42 = vld [vmem:[%s0 + $0xc8] sm:$0xff]
  %v43 = vld [vmem:[%s0 + $0xd0] sm:$0xff]
  %v44 = vld [vmem:[%s0 + $0xd8] sm:$0xff]
  %v45 = vld [vmem:[%s0 + $0xe0] sm:$0xff]
  %v46 = vld [vmem:[%s0 + $0xe8] sm:$0xff]
  %v47 = vld [vmem:[%s0 + $0xf0] sm:$0xff]
  %v48 = vld [vmem:[%s0 + $0xf8] sm:$0xff]
  %v49 = vld [vmem:[%s0 + $0x100] sm:$0xff]
  %v50 = vld [vmem:[%s0 + $0x108] sm:$0xff]
  %v51 = vld [vmem:[%s0 + $0x110] sm:$0xff]
  %v52 = vld [vmem:[%s0 + $0x118] sm:$0xff]
  %v53 = vld [vmem:[%s0 + $0x120] sm:$0xff]
  %v54 = vld [vmem:[%s0 + $0x128] sm:$0xff]
  %v55 = vld [vmem:[%s0 + $0x130] sm:$0xff]
  %v56 = vld [vmem:[%s0 + $0x138] sm:$0xff]
  %v57 = vld [vmem:[%s0 + $0x140] sm:$0xff]
  %v58 = vld [vmem:[%s0 + $0x148] sm:$0xff]
  %v59 = vld [vmem:[%s0 + $0x150] sm:$0xff]
  %v60 = vld [vmem:[%s0 + $0x158] sm:$0xff]
  %v61 = vld [vmem:[%s0 + $0x160] sm:$0xff]
  %v62 = vld [vmem:[%s0 + $0x168] sm:$0xff]
  %v63 = vld [vmem:[%s0 + $0x170] sm:$0xff]
  %v64 = vld [vmem:[%s0 + $0x178] sm:$0xff]
  %v65 = vld [vmem:[%s0 + $0x180] sm:$0xff]
  %v66 = vld [vmem:[%s0 + $0x188] sm:$0xff]
  %v67 = vld [vmem:[%s0 + $0x190] sm:$0xff]
  %v68 = vld [vmem:[%s0 + $0x198] sm:$0xff]
  %v69 = vld [vmem:[%s0 + $0x1a0] sm:$0xff]
  %v70 = vld [vmem:[%s0 + $0x1a8] sm:$0xff]
  %v71 = vld [vmem:[%s0 + $0x1b0] sm:$0xff]
  %v72 = vld [vmem:[%s0 + $0x1b8] sm:$0xff]
  %v73 = vld [vmem:[%s0 + $0x1c0] sm:$0xff]
  %v74 = vld [vmem:[%s0 + $0x1c8] sm:$0xff]
  %v75 = vld [vmem:[%s0 + $0x1d0] sm:$0xff]
  %v76 = vld [vmem:[%s0 + $0x1d8] sm:$0xff]
  %v77 = vld [vmem:[%s0 + $0x1e0] sm:$0xff]
  %v78 = vld [vmem:[%s0 + $0x1e8] sm:$0xff]
  %v79 = vld [vmem:[%s0 + $0x1f0] sm:$0xff]
  %v80 = vld [vmem:[%s0 + $0x1f8] sm:$0xff]
  %v81 = vld [vmem:[%s0 + $0x200] sm:$0xff]
  %v82 = vld [vmem:[%s0 + $0x208] sm:$0xff]
  %v83 = vld [vmem:[%s0 + $0x210] sm:$0xff]
  %v84 = vld [vmem:[%s0 + $0x218] sm:$0xff]
  %v85 = vld [vmem:[%s0 + $0x220] sm:$0xff]
  %v86 = vld [vmem:[%s0 + $0x228] sm:$0xff]
  %v87 = vld [vmem:[%s0 + $0x230] sm:$0xff]
  %v88 = vld [vmem:[%s0 + $0x238] sm:$0xff]
  %v89 = vld [vmem:[%s0 + $0x240] sm:$0xff]
  %v90 = vld [vmem:[%s0 + $0x248] sm:$0xff]
  %v91 = vld [vmem:[%s0 + $0x250] sm:$0xff]
  %v92 = vld [vmem:[%s0 + $0x258] sm:$0xff]
  %v93 = vld [vmem:[%s0 + $0x260] sm:$0xff]
  %v94 = vld [vmem:[%s0 + $0x268] sm:$0xff]
  %v95 = vld [vmem:[%s0 + $0x270] sm:$0xff]
  %v96 = vld [vmem:[%s0 + $0x278] sm:$0xff]
  %v97 = vld [vmem:[%s0 + $0x280] sm:$0xff]
  %v98 = vld [vmem:[%s0 + $0x288] sm:$0xff]
  %v99 = vld [vmem:[%s0 + $0x290] sm:$0xff]
  %v100 = vld [vmem:[%s0 + $0x298] sm:$0xff]
  %v101 = vld [vmem:[%s0 + $0x2a0] sm:$0xff]
  %v102 = vld [vmem:[%s0 + $0x2a8] sm:$0xff]
  %v103 = vld [vmem:[%s0 + $0x2b0] sm:$0xff]
  %v104 = vld [vmem:[%s0 + $0x2b8] sm:$0xff]
  %v105 = vld [vmem:[%s0 + $0x2c0] sm:$0xff]
  %v106 = vld [vmem:[%s0 + $0x2c8] sm:$0xff]
  %v107 = vld [vmem:[%s0 + $0x2d0] sm:$0xff]
  %v108 = vld [vmem:[%s0 + $0x2d8] sm:$0xff]
  %v109 = vld [vmem:[%s0 + $0x2e0] sm:$0xff]
  %v110 = vld [vmem:[%s0 + $0x2e8] sm:$0xff]
  %v111 = vld [vmem:[%s0 + $0x2f0] sm:$0xff]
  %v112 = vld [vmem:[%s0 + $0x2f8] sm:$0xff]
  %v113 = vld [vmem:[%s0 + $0x300] sm:$0xff]
  %v114 = vld [vmem:[%s0 + $0x308] sm:$0xff]
  %v115 = vld [vmem:[%s0 + $0x310] sm:$0xff]
  %v116 = vld [vmem:[%s0 + $0x318] sm:$0xff]
  %v117 = vld [vmem:[%s0 + $0x320] sm:$0xff]
  %v118 = vld [vmem:[%s0 + $0x328] sm:$0xff]
  %v119 = vld [vmem:[%s0 + $0x330] sm:$0xff]
  %v120 = vld [vmem:[%s0 + $0x338] sm:$0xff]
  %v121 = vld [vmem:[%s0 + $0x340] sm:$0xff]
  %v122 = vld [vmem:[%s0 + $0x348] sm:$0xff]
  %v123 = vld [vmem:[%s0 + $0x350] sm:$0xff]
  %v124 = vld [vmem:[%s0 + $0x358] sm:$0xff]
  %v125 = vld [vmem:[%s0 + $0x360] sm:$0xff]
  %v126 = vld [vmem:[%s0 + $0x368] sm:$0xff]
  %v127 = vld [vmem:[%s0 + $0x370] sm:$0xff]
  %v128 = vld [vmem:[%s0 + $0x378] sm:$0xff]
  %v129 = vld [vmem:[%s0 + $0x380] sm:$0xff]
  %v130 = vld [vmem:[%s0 + $0x388] sm:$0xff]
  %v131 = vld [vmem:[%s0 + $0x390] sm:$0xff]
  %v132 = vld [vmem:[%s0 + $0x398] sm:$0xff]
  %v133 = vld [vmem:[%s0 + $0x3a0] sm:$0xff]
  %v134 = vld [vmem:[%s0 + $0x3a8] sm:$0xff]
  %v135 = vld [vmem:[%s0 + $0x3b0] sm:$0xff]
  %v136 = vld [vmem:[%s0 + $0x3b8] sm:$0xff]
  %v137 = vld [vmem:[%s0 + $0x3c0] sm:$0xff]
  %v138 = vld [vmem:[%s0 + $0x3c8] sm:$0xff]
  %v139 = vld [vmem:[%s0 + $0x3d0] sm:$0xff]
  %v140 = vld [vmem:[%s0 + $0x3d8] sm:$0xff]
  %v141 = vld [vmem:[%s0 + $0x3e0] sm:$0xff]
  %v142 = vld [vmem:[%s0 + $0x3e8] sm:$0xff]
  %v143 = vld [vmem:[%s0 + $0x3f0] sm:$0xff]
  %v144 = vld [vmem:[%s0 + $0x3f8] sm:$0xff]
  %v145 = vld [vmem:[%s0 + $0x400] sm:$0xff]
  %v146 = vld [vmem:[%s0 + $0x408] sm:$0xff]
  %v147 = vld [vmem:[%s0 + $0x410] sm:$0xff]
  %v148 = vld [vmem:[%s0 + $0x418] sm:$0xff]
  %v149 = vld [vmem:[%s0 + $0x420] sm:$0xff]
  %v150 = vld [vmem:[%s0 + $0x428] sm:$0xff]
  %v151 = vld [vmem:[%s0 + $0x430] sm:$0xff]
  %v152 = vld [vmem:[%s0 + $0x438] sm:$0xff]
  %v153 = vld [vmem:[%s0 + $0x440] sm:$0xff]
  %v154 = vld [vmem:[%s0 + $0x448] sm:$0xff]
  %v155 = vld [vmem:[%s0 + $0x450] sm:$0xff]
  %v156 = vld [vmem:[%s0 + $0x458] sm:$0xff]
  %v157 = vld [vmem:[%s0 + $0x460] sm:$0xff]
  %v158 = vld [vmem:[%s0 + $0x468] sm:$0xff]
  %v159 = vld [vmem:[%s0 + $0x470] sm:$0xff]
  %v160 = vld [vmem:[%s0 + $0x478] sm:$0xff]
  %v161 = vld [vmem:[%s0 + $0x480] sm:$0xff]
  %v162 = vld [vmem:[%s0 + $0x488] sm:$0xff]
  %v163 = vld [vmem:[%s0 + $0x490] sm:$0xff]
  %v164 = vld [vmem:[%s0 + $0x498] sm:$0xff]
  %v165 = vld [vmem:[%s0 + $0x4a0] sm:$0xff]
  %v166 = vld [vmem:[%s0 + $0x4a8] sm:$0xff]
  %v167 = vld [vmem:[%s0 + $0x4b0] sm:$0xff]
  %v168 = vld [vmem:[%s0 + $0x4b8] sm:$0xff]
  %v169 = vld [vmem:[%s0 + $0x4c0] sm:$0xff]
  %v170 = vld [vmem:[%s0 + $0x4c8] sm:$0xff]
  %v171 = vld [vmem:[%s0 + $0x4d0] sm:$0xff]
  %v172 = vld [vmem:[%s0 + $0x4d8] sm:$0xff]
  %v173 = vld [vmem:[%s0 + $0x4e0] sm:$0xff]
  %v174 = vld [vmem:[%s0 + $0x4e8] sm:$0xff]
  %v175 = vld [vmem:[%s0 + $0x4f0] sm:$0xff]
  %v176 = vld [vmem:[%s0 + $0x4f8] sm:$0xff]
  %v177 = vld [vmem:[%s0 + $0x500] sm:$0xff]
  %v178 = vld [vmem:[%s0 + $0x508] sm:$0xff]
  %v179 = vld [vmem:[%s0 + $0x510] sm:$0xff]
  %v180 = vld [vmem:[%s0 + $0x518] sm:$0xff]
  %v181 = vld [vmem:[%s0 + $0x520] sm:$0xff]
  %v182 = vld [vmem:[%s0 + $0x528] sm:$0xff]
  %v183 = vld [vmem:[%s0 + $0x530] sm:$0xff]
  %v184 = vld [vmem:[%s0 + $0x538] sm:$0xff]
  %v185 = vld [vmem:[%s0 + $0x540] sm:$0xff]
  %v186 = vld [vmem:[%s0 + $0x548] sm:$0xff]
  %v187 = vld [vmem:[%s0 + $0x550] sm:$0xff]
  %v188 = vld [vmem:[%s0 + $0x558] sm:$0xff]
  %v189 = vld [vmem:[%s0 + $0x560] sm:$0xff]
  %v190 = vld [vmem:[%s0 + $0x568] sm:$0xff]
  %v191 = vld [vmem:[%s0 + $0x570] sm:$0xff]
  %v192 = vld [vmem:[%s0 + $0x578] sm:$0xff]
  %v193 = vld [vmem:[%s0 + $0x580] sm:$0xff]
  %v194 = vld [vmem:[%s0 + $0x588] sm:$0xff]
  %v195 = vld [vmem:[%s0 + $0x590] sm:$0xff]
  %v196 = vld [vmem:[%s0 + $0x598] sm:$0xff]
  %v197 = vld [vmem:[%s0 + $0x5a0] sm:$0xff]
  %v198 = vld [vmem:[%s0 + $0x5a8] sm:$0xff]
  %v199 = vld [vmem:[%s0 + $0x5b0] sm:$0xff]
  %v200 = vld [vmem:[%s0 + $0x5b8] sm:$0xff]
  %v201 = vld [vmem:[%s0 + $0x5c0] sm:$0xff]
  %v202 = vld [vmem:[%s0 + $0x5c8] sm:$0xff]
  %v203 = vld [vmem:[%s0 + $0x5d0] sm:$0xff]
  %v204 = vld [vmem:[%s0 + $0x5d8] sm:$0xff]
  %v205 = vld [vmem:[%s0 + $0x5e0] sm:$0xff]
  %v206 = vld [vmem:[%s0 + $0x5e8] sm:$0xff]
  %v207 = vld [vmem:[%s0 + $0x5f0] sm:$0xff]
  %v208 = vld [vmem:[%s0 + $0x5f8] sm:$0xff]
  %v209 = vld [vmem:[%s0 + $0x600] sm:$0xff]
  %v210 = vld [vmem:[%s0 + $0x608] sm:$0xff]
  %v211 = vld [vmem:[%s0 + $0x610] sm:$0xff]
  %v212 = vld [vmem:[%s0 + $0x618] sm:$0xff]
  %v213 = vld [vmem:[%s0 + $0x620] sm:$0xff]
  %v214 = vld [vmem:[%s0 + $0x628] sm:$0xff]
  %v215 = vld [vmem:[%s0 + $0x630] sm:$0xff]
  %v216 = vld [vmem:[%s0 + $0x638] sm:$0xff]
  %v217 = vld [vmem:[%s0 + $0x640] sm:$0xff]
  %v218 = vld [vmem:[%s0 + $0x648] sm:$0xff]
  %v219 = vld [vmem:[%s0 + $0x650] sm:$0xff]
  %v220 = vld [vmem:[%s0 + $0x658] sm:$0xff]
  %v221 = vld [vmem:[%s0 + $0x660] sm:$0xff]
  %v222 = vld [vmem:[%s0 + $0x668] sm:$0xff]
  %v223 = vld [vmem:[%s0 + $0x670] sm:$0xff]
  %v224 = vld [vmem:[%s0 + $0x678] sm:$0xff]
  %v225 = vld [vmem:[%s0 + $0x680] sm:$0xff]
  %v226 = vld [vmem:[%s0 + $0x688] sm:$0xff]
  %v227 = vld [vmem:[%s0 + $0x690] sm:$0xff]
  %v228 = vld [vmem:[%s0 + $0x698] sm:$0xff]
  %v229 = vld [vmem:[%s0 + $0x6a0] sm:$0xff]
  %v230 = vld [vmem:[%s0 + $0x6a8] sm:$0xff]
  %v231 = vld [vmem:[%s0 + $0x6b0] sm:$0xff]
  %v232 = vld [vmem:[%s0 + $0x6b8] sm:$0xff]
  %v233 = vld [vmem:[%s0 + $0x6c0] sm:$0xff]
  %v234 = vld [vmem:[%s0 + $0x6c8] sm:$0xff]
  %v235 = vld [vmem:[%s0 + $0x6d0] sm:$0xff]
  %v236 = vld [vmem:[%s0 + $0x6d8] sm:$0xff]
  %v237 = vld [vmem:[%s0 + $0x6e0] sm:$0xff]
  %v238 = vld [vmem:[%s0 + $0x6e8] sm:$0xff]
  %v239 = vld [vmem:[%s0 + $0x6f0] sm:$0xff]
  %v240 = vld [vmem:[%s0 + $0x6f8] sm:$0xff]
  %v241 = vld [vmem:[%s0 + $0x700] sm:$0xff]
  %v242 = vld [vmem:[%s0 + $0x708] sm:$0xff]
  %v243 = vld [vmem:[%s0 + $0x710] sm:$0xff]
  %v244 = vld [vmem:[%s0 + $0x718] sm:$0xff]
  %v245 = vld [vmem:[%s0 + $0x720] sm:$0xff]
  %v246 = vld [vmem:[%s0 + $0x728] sm:$0xff]
  %v247 = vld [vmem:[%s0 + $0x730] sm:$0xff]
  %v248 = vld [vmem:[%s0 + $0x738] sm:$0xff]
  %v249 = vld [vmem:[%s0 + $0x740] sm:$0xff]
  %v250 = vld [vmem:[%s0 + $0x748] sm:$0xff]
  %v251 = vld [vmem:[%s0 + $0x750] sm:$0xff]
  %v252 = vld [vmem:[%s0 + $0x758] sm:$0xff]
  %v253 = vld [vmem:[%s0 + $0x760] sm:$0xff]
  %v254 = vld [vmem:[%s0 + $0x768] sm:$0xff]
  %v255 = vld [vmem:[%s0 + $0x770] sm:$0xff]
  %v256 = vld [vmem:[%s0 + $0x778] sm:$0xff]
  %v257 = vld [vmem:[%s0 + $0x780] sm:$0xff]
  %v258 = vld [vmem:[%s0 + $0x788] sm:$0xff]
  %v259 = vld [vmem:[%s0 + $0x790] sm:$0xff]
  %v260 = vld [vmem:[%s0 + $0x798] sm:$0xff]
  %v261 = vld [vmem:[%s0 + $0x7a0] sm:$0xff]
  %v262 = vld [vmem:[%s0 + $0x7a8] sm:$0xff]
  %v263 = vld [vmem:[%s0 + $0x7b0] sm:$0xff]
  %v264 = vld [vmem:[%s0 + $0x7b8] sm:$0xff]
  %v265 = vld [vmem:[%s0 + $0x7c0] sm:$0xff]
  %v266 = vld [vmem:[%s0 + $0x7c8] sm:$0xff]
  %v267 = vld [vmem:[%s0 + $0x7d0] sm:$0xff]
  %v268 = vld [vmem:[%s0 + $0x7d8] sm:$0xff]
  %v269 = vld [vmem:[%s0 + $0x7e0] sm:$0xff]
  %v270 = vld [vmem:[%s0 + $0x7e8] sm:$0xff]
  %v271 = vld [vmem:[%s0 + $0x7f0] sm:$0xff]
  %v272 = vld [vmem:[%s0 + $0x7f8] sm:$0xff]
  %v273 = vld [vmem:[%s1] sm:$0xff]
  %v274 = vld [vmem:[%s1 + $0x8] sm:$0xff]
  %v275 = vld [vmem:[%s1 + $0x10] sm:$0xff]
  %v276 = vld [vmem:[%s1 + $0x18] sm:$0xff]
  %v277 = vld [vmem:[%s1 + $0x20] sm:$0xff]
  %v278 = vld [vmem:[%s1 + $0x28] sm:$0xff]
  %v279 = vld [vmem:[%s1 + $0x30] sm:$0xff]
  %v280 = vld [vmem:[%s1 + $0x38] sm:$0xff]
  %v281 = vld [vmem:[%s1 + $0x40] sm:$0xff]
  %v282 = vld [vmem:[%s1 + $0x48] sm:$0xff]
  %v283 = vld [vmem:[%s1 + $0x50] sm:$0xff]
  %v284 = vld [vmem:[%s1 + $0x58] sm:$0xff]
  %v285 = vld [vmem:[%s1 + $0x60] sm:$0xff]
  %v286 = vld [vmem:[%s1 + $0x68] sm:$0xff]
  %v287 = vld [vmem:[%s1 + $0x70] sm:$0xff]
  %v288 = vld [vmem:[%s1 + $0x78] sm:$0xff]
  %v289 = vld [vmem:[%s1 + $0x80] sm:$0xff]
  %v290 = vld [vmem:[%s1 + $0x88] sm:$0xff]
  %v291 = vld [vmem:[%s1 + $0x90] sm:$0xff]
  %v292 = vld [vmem:[%s1 + $0x98] sm:$0xff]
  %v293 = vld [vmem:[%s1 + $0xa0] sm:$0xff]
  %v294 = vld [vmem:[%s1 + $0xa8] sm:$0xff]
  %v295 = vld [vmem:[%s1 + $0xb0] sm:$0xff]
  %v296 = vld [vmem:[%s1 + $0xb8] sm:$0xff]
  %v297 = vld [vmem:[%s1 + $0xc0] sm:$0xff]
  %v298 = vld [vmem:[%s1 + $0xc8] sm:$0xff]
  %v299 = vld [vmem:[%s1 + $0xd0] sm:$0xff]
  %v300 = vld [vmem:[%s1 + $0xd8] sm:$0xff]
  %v301 = vld [vmem:[%s1 + $0xe0] sm:$0xff]
  %v302 = vld [vmem:[%s1 + $0xe8] sm:$0xff]
  %v303 = vld [vmem:[%s1 + $0xf0] sm:$0xff]
  %v304 = vld [vmem:[%s1 + $0xf8] sm:$0xff]
  %v305 = vld [vmem:[%s1 + $0x100] sm:$0xff]
  %v306 = vld [vmem:[%s1 + $0x108] sm:$0xff]
  %v307 = vld [vmem:[%s1 + $0x110] sm:$0xff]
  %v308 = vld [vmem:[%s1 + $0x118] sm:$0xff]
  %v309 = vld [vmem:[%s1 + $0x120] sm:$0xff]
  %v310 = vld [vmem:[%s1 + $0x128] sm:$0xff]
  %v311 = vld [vmem:[%s1 + $0x130] sm:$0xff]
  %v312 = vld [vmem:[%s1 + $0x138] sm:$0xff]
  %v313 = vld [vmem:[%s1 + $0x140] sm:$0xff]
  %v314 = vld [vmem:[%s1 + $0x148] sm:$0xff]
  %v315 = vld [vmem:[%s1 + $0x150] sm:$0xff]
  %v316 = vld [vmem:[%s1 + $0x158] sm:$0xff]
  %v317 = vld [vmem:[%s1 + $0x160] sm:$0xff]
  %v318 = vld [vmem:[%s1 + $0x168] sm:$0xff]
  %v319 = vld [vmem:[%s1 + $0x170] sm:$0xff]
  %v320 = vld [vmem:[%s1 + $0x178] sm:$0xff]
  %v321 = vld [vmem:[%s1 + $0x180] sm:$0xff]
  %v322 = vld [vmem:[%s1 + $0x188] sm:$0xff]
  %v323 = vld [vmem:[%s1 + $0x190] sm:$0xff]
  %v324 = vld [vmem:[%s1 + $0x198] sm:$0xff]
  %v325 = vld [vmem:[%s1 + $0x1a0] sm:$0xff]
  %v326 = vld [vmem:[%s1 + $0x1a8] sm:$0xff]
  %v327 = vld [vmem:[%s1 + $0x1b0] sm:$0xff]
  %v328 = vld [vmem:[%s1 + $0x1b8] sm:$0xff]
  %v329 = vld [vmem:[%s1 + $0x1c0] sm:$0xff]
  %v330 = vld [vmem:[%s1 + $0x1c8] sm:$0xff]
  %v331 = vld [vmem:[%s1 + $0x1d0] sm:$0xff]
  %v332 = vld [vmem:[%s1 + $0x1d8] sm:$0xff]
  %v333 = vld [vmem:[%s1 + $0x1e0] sm:$0xff]
  %v334 = vld [vmem:[%s1 + $0x1e8] sm:$0xff]
  %v335 = vld [vmem:[%s1 + $0x1f0] sm:$0xff]
  %v336 = vld [vmem:[%s1 + $0x1f8] sm:$0xff]
  %337 = vmatprep.subr.mxu0 0.0
  %338 = vmatpush1.msra.mxu0 %v288
  %339 = vmatprep.subr.mxu0 0.0
  %340 = vmatpush1.msra.mxu0 %v287
  %341 = vmatprep.subr.mxu0 0.0
  %342 = vmatpush1.msra.mxu0 %v286
  %343 = vmatprep.subr.mxu0 0.0
  %344 = vmatpush1.msra.mxu0 %v285
  %345 = vmatprep.subr.mxu0 0.0
  %346 = vmatpush1.msra.mxu0 %v284
  %347 = vmatprep.subr.mxu0 0.0
  %348 = vmatpush1.msra.mxu0 %v283
  %349 = vmatprep.subr.mxu0 0.0
  %350 = vmatpush1.msra.mxu0 %v282
  %351 = vmatprep.subr.mxu0 0.0
  %352 = vmatpush1.msra.mxu0 %v281
  %353 = vmatprep.subr.mxu0 0.0
  %354 = vmatpush1.msra.mxu0 %v280
  %355 = vmatprep.subr.mxu0 0.0
  %356 = vmatpush1.msra.mxu0 %v279
  %357 = vmatprep.subr.mxu0 0.0
  %358 = vmatpush1.msra.mxu0 %v278
  %359 = vmatprep.subr.mxu0 0.0
  %360 = vmatpush1.msra.mxu0 %v277
  %361 = vmatprep.subr.mxu0 0.0
  %362 = vmatpush1.msra.mxu0 %v276
  %363 = vmatprep.subr.mxu0 0.0
  %364 = vmatpush1.msra.mxu0 %v275
  %365 = vmatprep.subr.mxu0 0.0
  %366 = vmatpush1.msra.mxu0 %v274
  %367 = vmatprep.subr.mxu0 0.0
  %368 = vmatpush1.msra.mxu0 %v273
  %369 = vmatprep.subr.mxu0 0.0
  %370 = vmatpush2.msra.mxu0 %v304
  %371 = vmatprep.subr.mxu0 0.0
  %372 = vmatpush2.msra.mxu0 %v303
  %373 = vmatprep.subr.mxu0 0.0
  %374 = vmatpush2.msra.mxu0 %v302
  %375 = vmatprep.subr.mxu0 0.0
  %376 = vmatpush2.msra.mxu0 %v301
  %377 = vmatprep.subr.mxu0 0.0
  %378 = vmatpush2.msra.mxu0 %v300
  %379 = vmatprep.subr.mxu0 0.0
  %380 = vmatpush2.msra.mxu0 %v299
  %381 = vmatprep.subr.mxu0 0.0
  %382 = vmatpush2.msra.mxu0 %v298
  %383 = vmatprep.subr.mxu0 0.0
  %384 = vmatpush2.msra.mxu0 %v297
  %385 = vmatprep.subr.mxu0 0.0
  %386 = vmatpush2.msra.mxu0 %v296
  %387 = vmatprep.subr.mxu0 0.0
  %388 = vmatpush2.msra.mxu0 %v295
  %389 = vmatprep.subr.mxu0 0.0
  %390 = vmatpush2.msra.mxu0 %v294
  %391 = vmatprep.subr.mxu0 0.0
  %392 = vmatpush2.msra.mxu0 %v293
  %393 = vmatprep.subr.mxu0 0.0
  %394 = vmatpush2.msra.mxu0 %v292
  %395 = vmatprep.subr.mxu0 0.0
  %396 = vmatpush2.msra.mxu0 %v291
  %397 = vmatprep.subr.mxu0 0.0
  %398 = vmatpush2.msra.mxu0 %v290
  %399 = vmatprep.subr.mxu0 0.0
  %400 = vmatpush2.msra.mxu0 %v289
  %401 = vmatprep.mubr.f32.mxu0 %v18
  %402 = vmatmul.mubr.f32.gmra.mxu0 %v17
  %v403 = vpop.f32.mrf.mxu0
  %v404 = vadd.f32 0.0, %v403
  %v405 = vpop.f32.mrf.mxu0
  %406 = vmatprep.mubr.f32.mxu0 %v22
  %407 = vmatmul.mubr.f32.gmra.mxu0 %v21
  %v408 = vpop.f32.mrf.mxu0
  %v409 = vadd.f32 0.0, %v408
  %v410 = vpop.f32.mrf.mxu0
  %411 = vmatprep.mubr.f32.mxu0 %v26
  %412 = vmatmul.mubr.f32.gmra.mxu0 %v25
  %v413 = vpop.f32.mrf.mxu0
  %v414 = vadd.f32 0.0, %v413
  %v415 = vpop.f32.mrf.mxu0
  %416 = vmatprep.mubr.f32.mxu0 %v30
  %417 = vmatmul.mubr.f32.gmra.mxu0 %v29
  %v418 = vpop.f32.mrf.mxu0
  %v419 = vadd.f32 0.0, %v418
  %v420 = vpop.f32.mrf.mxu0
  %421 = vmatprep.mubr.f32.mxu0 %v34
  %422 = vmatmul.mubr.f32.gmra.mxu0 %v33
  %v423 = vpop.f32.mrf.mxu0
  %v424 = vadd.f32 0.0, %v423
  %v425 = vpop.f32.mrf.mxu0
  %426 = vmatprep.mubr.f32.mxu0 %v38
  %427 = vmatmul.mubr.f32.gmra.mxu0 %v37
  %v428 = vpop.f32.mrf.mxu0
  %v429 = vadd.f32 0.0, %v428
  %v430 = vpop.f32.mrf.mxu0
  %431 = vmatprep.mubr.f32.mxu0 %v42
  %432 = vmatmul.mubr.f32.gmra.mxu0 %v41
  %v433 = vpop.f32.mrf.mxu0
  %v434 = vadd.f32 0.0, %v433
  %v435 = vpop.f32.mrf.mxu0
  %436 = vmatprep.mubr.f32.mxu0 %v46
  %437 = vmatmul.mubr.f32.gmra.mxu0 %v45
  %v438 = vpop.f32.mrf.mxu0
  %v439 = vadd.f32 0.0, %v438
  %v440 = vpop.f32.mrf.mxu0
  %441 = vmatprep.mubr.f32.mxu0 %v50
  %442 = vmatmul.mubr.f32.gmra.mxu0 %v49
  %v443 = vpop.f32.mrf.mxu0
  %v444 = vadd.f32 0.0, %v443
  %v445 = vpop.f32.mrf.mxu0
  %446 = vmatprep.mubr.f32.mxu0 %v54
  %447 = vmatmul.mubr.f32.gmra.mxu0 %v53
  %v448 = vpop.f32.mrf.mxu0
  %v449 = vadd.f32 0.0, %v448
  %v450 = vpop.f32.mrf.mxu0
  %451 = vmatprep.mubr.f32.mxu0 %v58
  %452 = vmatmul.mubr.f32.gmra.mxu0 %v57
  %v453 = vpop.f32.mrf.mxu0
  %v454 = vadd.f32 0.0, %v453
  %v455 = vpop.f32.mrf.mxu0
  %456 = vmatprep.mubr.f32.mxu0 %v62
  %457 = vmatmul.mubr.f32.gmra.mxu0 %v61
  %v458 = vpop.f32.mrf.mxu0
  %v459 = vadd.f32 0.0, %v458
  %v460 = vpop.f32.mrf.mxu0
  %461 = vmatprep.mubr.f32.mxu0 %v66
  %462 = vmatmul.mubr.f32.gmra.mxu0 %v65
  %v463 = vpop.f32.mrf.mxu0
  %v464 = vadd.f32 0.0, %v463
  %v465 = vpop.f32.mrf.mxu0
  %466 = vmatprep.mubr.f32.mxu0 %v70
  %467 = vmatmul.mubr.f32.gmra.mxu0 %v69
  %v468 = vpop.f32.mrf.mxu0
  %v469 = vadd.f32 0.0, %v468
  %v470 = vpop.f32.mrf.mxu0
  %471 = vmatprep.mubr.f32.mxu0 %v74
  %472 = vmatmul.mubr.f32.gmra.mxu0 %v73
  %v473 = vpop.f32.mrf.mxu0
  %v474 = vadd.f32 0.0, %v473
  %v475 = vpop.f32.mrf.mxu0
  %476 = vmatprep.mubr.f32.mxu0 %v78
  %477 = vmatmul.mubr.f32.gmra.mxu0 %v77
  %v478 = vpop.f32.mrf.mxu0
  %v479 = vadd.f32 0.0, %v478
  %v480 = vpop.f32.mrf.mxu0
  %481 = vmatprep.mubr.f32.mxu0 %v82
  %482 = vmatmul.mubr.f32.gmra.mxu0 %v81
  %v483 = vpop.f32.mrf.mxu0
  %v484 = vadd.f32 0.0, %v483
  %v485 = vpop.f32.mrf.mxu0
  %486 = vmatprep.mubr.f32.mxu0 %v86
  %487 = vmatmul.mubr.f32.gmra.mxu0 %v85
  %v488 = vpop.f32.mrf.mxu0
  %v489 = vadd.f32 0.0, %v488
  %v490 = vpop.f32.mrf.mxu0
  %491 = vmatprep.mubr.f32.mxu0 %v90
  %492 = vmatmul.mubr.f32.gmra.mxu0 %v89
  %v493 = vpop.f32.mrf.mxu0
  %v494 = vadd.f32 0.0, %v493
  %v495 = vpop.f32.mrf.mxu0
  %496 = vmatprep.mubr.f32.mxu0 %v94
  %497 = vmatmul.mubr.f32.gmra.mxu0 %v93
  %v498 = vpop.f32.mrf.mxu0
  %v499 = vadd.f32 0.0, %v498
  %v500 = vpop.f32.mrf.mxu0
  %501 = vmatprep.mubr.f32.mxu0 %v98
  %502 = vmatmul.mubr.f32.gmra.mxu0 %v97
  %v503 = vpop.f32.mrf.mxu0
  %v504 = vadd.f32 0.0, %v503
  %v505 = vpop.f32.mrf.mxu0
  %506 = vmatprep.mubr.f32.mxu0 %v102
  %507 = vmatmul.mubr.f32.gmra.mxu0 %v101
  %v508 = vpop.f32.mrf.mxu0
  %v509 = vadd.f32 0.0, %v508
  %v510 = vpop.f32.mrf.mxu0
  %511 = vmatprep.mubr.f32.mxu0 %v106
  %512 = vmatmul.mubr.f32.gmra.mxu0 %v105
  %v513 = vpop.f32.mrf.mxu0
  %v514 = vadd.f32 0.0, %v513
  %v515 = vpop.f32.mrf.mxu0
  %516 = vmatprep.mubr.f32.mxu0 %v110
  %517 = vmatmul.mubr.f32.gmra.mxu0 %v109
  %v518 = vpop.f32.mrf.mxu0
  %v519 = vadd.f32 0.0, %v518
  %v520 = vpop.f32.mrf.mxu0
  %521 = vmatprep.mubr.f32.mxu0 %v114
  %522 = vmatmul.mubr.f32.gmra.mxu0 %v113
  %v523 = vpop.f32.mrf.mxu0
  %v524 = vadd.f32 0.0, %v523
  %v525 = vpop.f32.mrf.mxu0
  %526 = vmatprep.mubr.f32.mxu0 %v118
  %527 = vmatmul.mubr.f32.gmra.mxu0 %v117
  %v528 = vpop.f32.mrf.mxu0
  %v529 = vadd.f32 0.0, %v528
  %v530 = vpop.f32.mrf.mxu0
  %531 = vmatprep.mubr.f32.mxu0 %v122
  %532 = vmatmul.mubr.f32.gmra.mxu0 %v121
  %v533 = vpop.f32.mrf.mxu0
  %v534 = vadd.f32 0.0, %v533
  %v535 = vpop.f32.mrf.mxu0
  %536 = vmatprep.mubr.f32.mxu0 %v126
  %537 = vmatmul.mubr.f32.gmra.mxu0 %v125
  %v538 = vpop.f32.mrf.mxu0
  %v539 = vadd.f32 0.0, %v538
  %v540 = vpop.f32.mrf.mxu0
  %541 = vmatprep.mubr.f32.mxu0 %v130
  %542 = vmatmul.mubr.f32.gmra.mxu0 %v129
  %v543 = vpop.f32.mrf.mxu0
  %v544 = vadd.f32 0.0, %v543
  %v545 = vpop.f32.mrf.mxu0
  %546 = vmatprep.mubr.f32.mxu0 %v134
  %547 = vmatmul.mubr.f32.gmra.mxu0 %v133
  %v548 = vpop.f32.mrf.mxu0
  %v549 = vadd.f32 0.0, %v548
  %v550 = vpop.f32.mrf.mxu0
  %551 = vmatprep.mubr.f32.mxu0 %v138
  %552 = vmatmul.mubr.f32.gmra.mxu0 %v137
  %v553 = vpop.f32.mrf.mxu0
  %v554 = vadd.f32 0.0, %v553
  %v555 = vpop.f32.mrf.mxu0
  %556 = vmatprep.mubr.f32.mxu0 %v142
  %557 = vmatmul.mubr.f32.gmra.mxu0 %v141
  %v558 = vpop.f32.mrf.mxu0
  %v559 = vadd.f32 0.0, %v558
  %v560 = vpop.f32.mrf.mxu0
  %561 = vmatprep.mubr.f32.mxu0 %v146
  %562 = vmatmul.mubr.f32.gmra.mxu0 %v145
  %v563 = vpop.f32.mrf.mxu0
  %v564 = vadd.f32 0.0, %v563
  %v565 = vpop.f32.mrf.mxu0
  %566 = vmatprep.mubr.f32.mxu0 %v150
  %567 = vmatmul.mubr.f32.gmra.mxu0 %v149
  %v568 = vpop.f32.mrf.mxu0
  %v569 = vadd.f32 0.0, %v568
  %v570 = vpop.f32.mrf.mxu0
  %571 = vmatprep.mubr.f32.mxu0 %v154
  %572 = vmatmul.mubr.f32.gmra.mxu0 %v153
  %v573 = vpop.f32.mrf.mxu0
  %v574 = vadd.f32 0.0, %v573
  %v575 = vpop.f32.mrf.mxu0
  %576 = vmatprep.mubr.f32.mxu0 %v158
  %577 = vmatmul.mubr.f32.gmra.mxu0 %v157
  %v578 = vpop.f32.mrf.mxu0
  %v579 = vadd.f32 0.0, %v578
  %v580 = vpop.f32.mrf.mxu0
  %581 = vmatprep.mubr.f32.mxu0 %v162
  %582 = vmatmul.mubr.f32.gmra.mxu0 %v161
  %v583 = vpop.f32.mrf.mxu0
  %v584 = vadd.f32 0.0, %v583
  %v585 = vpop.f32.mrf.mxu0
  %586 = vmatprep.mubr.f32.mxu0 %v166
  %587 = vmatmul.mubr.f32.gmra.mxu0 %v165
  %v588 = vpop.f32.mrf.mxu0
  %v589 = vadd.f32 0.0, %v588
  %v590 = vpop.f32.mrf.mxu0
  %591 = vmatprep.mubr.f32.mxu0 %v170
  %592 = vmatmul.mubr.f32.gmra.mxu0 %v169
  %v593 = vpop.f32.mrf.mxu0
  %v594 = vadd.f32 0.0, %v593
  %v595 = vpop.f32.mrf.mxu0
  %596 = vmatprep.mubr.f32.mxu0 %v174
  %597 = vmatmul.mubr.f32.gmra.mxu0 %v173
  %v598 = vpop.f32.mrf.mxu0
  %v599 = vadd.f32 0.0, %v598
  %v600 = vpop.f32.mrf.mxu0
  %601 = vmatprep.mubr.f32.mxu0 %v178
  %602 = vmatmul.mubr.f32.gmra.mxu0 %v177
  %v603 = vpop.f32.mrf.mxu0
  %v604 = vadd.f32 0.0, %v603
  %v605 = vpop.f32.mrf.mxu0
  %606 = vmatprep.mubr.f32.mxu0 %v182
  %607 = vmatmul.mubr.f32.gmra.mxu0 %v181
  %v608 = vpop.f32.mrf.mxu0
  %v609 = vadd.f32 0.0, %v608
  %v610 = vpop.f32.mrf.mxu0
  %611 = vmatprep.mubr.f32.mxu0 %v186
  %612 = vmatmul.mubr.f32.gmra.mxu0 %v185
  %v613 = vpop.f32.mrf.mxu0
  %v614 = vadd.f32 0.0, %v613
  %v615 = vpop.f32.mrf.mxu0
  %616 = vmatprep.mubr.f32.mxu0 %v190
  %617 = vmatmul.mubr.f32.gmra.mxu0 %v189
  %v618 = vpop.f32.mrf.mxu0
  %v619 = vadd.f32 0.0, %v618
  %v620 = vpop.f32.mrf.mxu0
  %621 = vmatprep.mubr.f32.mxu0 %v194
  %622 = vmatmul.mubr.f32.gmra.mxu0 %v193
  %v623 = vpop.f32.mrf.mxu0
  %v624 = vadd.f32 0.0, %v623
  %v625 = vpop.f32.mrf.mxu0
  %626 = vmatprep.mubr.f32.mxu0 %v198
  %627 = vmatmul.mubr.f32.gmra.mxu0 %v197
  %v628 = vpop.f32.mrf.mxu0
  %v629 = vadd.f32 0.0, %v628
  %v630 = vpop.f32.mrf.mxu0
  %631 = vmatprep.mubr.f32.mxu0 %v202
  %632 = vmatmul.mubr.f32.gmra.mxu0 %v201
  %v633 = vpop.f32.mrf.mxu0
  %v634 = vadd.f32 0.0, %v633
  %v635 = vpop.f32.mrf.mxu0
  %636 = vmatprep.mubr.f32.mxu0 %v206
  %637 = vmatmul.mubr.f32.gmra.mxu0 %v205
  %v638 = vpop.f32.mrf.mxu0
  %v639 = vadd.f32 0.0, %v638
  %v640 = vpop.f32.mrf.mxu0
  %641 = vmatprep.mubr.f32.mxu0 %v210
  %642 = vmatmul.mubr.f32.gmra.mxu0 %v209
  %v643 = vpop.f32.mrf.mxu0
  %v644 = vadd.f32 0.0, %v643
  %v645 = vpop.f32.mrf.mxu0
  %646 = vmatprep.mubr.f32.mxu0 %v214
  %647 = vmatmul.mubr.f32.gmra.mxu0 %v213
  %v648 = vpop.f32.mrf.mxu0
  %v649 = vadd.f32 0.0, %v648
  %v650 = vpop.f32.mrf.mxu0
  %651 = vmatprep.mubr.f32.mxu0 %v218
  %652 = vmatmul.mubr.f32.gmra.mxu0 %v217
  %v653 = vpop.f32.mrf.mxu0
  %v654 = vadd.f32 0.0, %v653
  %v655 = vpop.f32.mrf.mxu0
  %656 = vmatprep.mubr.f32.mxu0 %v222
  %657 = vmatmul.mubr.f32.gmra.mxu0 %v221
  %v658 = vpop.f32.mrf.mxu0
  %v659 = vadd.f32 0.0, %v658
  %v660 = vpop.f32.mrf.mxu0
  %661 = vmatprep.mubr.f32.mxu0 %v226
  %662 = vmatmul.mubr.f32.gmra.mxu0 %v225
  %v663 = vpop.f32.mrf.mxu0
  %v664 = vadd.f32 0.0, %v663
  %v665 = vpop.f32.mrf.mxu0
  %666 = vmatprep.mubr.f32.mxu0 %v230
  %667 = vmatmul.mubr.f32.gmra.mxu0 %v229
  %v668 = vpop.f32.mrf.mxu0
  %v669 = vadd.f32 0.0, %v668
  %v670 = vpop.f32.mrf.mxu0
  %671 = vmatprep.mubr.f32.mxu0 %v234
  %672 = vmatmul.mubr.f32.gmra.mxu0 %v233
  %v673 = vpop.f32.mrf.mxu0
  %v674 = vadd.f32 0.0, %v673
  %v675 = vpop.f32.mrf.mxu0
  %676 = vmatprep.mubr.f32.mxu0 %v238
  %677 = vmatmul.mubr.f32.gmra.mxu0 %v237
  %v678 = vpop.f32.mrf.mxu0
  %v679 = vadd.f32 0.0, %v678
  %v680 = vpop.f32.mrf.mxu0
  %681 = vmatprep.mubr.f32.mxu0 %v242
  %682 = vmatmul.mubr.f32.gmra.mxu0 %v241
  %v683 = vpop.f32.mrf.mxu0
  %v684 = vadd.f32 0.0, %v683
  %v685 = vpop.f32.mrf.mxu0
  %686 = vmatprep.mubr.f32.mxu0 %v246
  %687 = vmatmul.mubr.f32.gmra.mxu0 %v245
  %v688 = vpop.f32.mrf.mxu0
  %v689 = vadd.f32 0.0, %v688
  %v690 = vpop.f32.mrf.mxu0
  %691 = vmatprep.mubr.f32.mxu0 %v250
  %692 = vmatmul.mubr.f32.gmra.mxu0 %v249
  %v693 = vpop.f32.mrf.mxu0
  %v694 = vadd.f32 0.0, %v693
  %v695 = vpop.f32.mrf.mxu0
  %696 = vmatprep.mubr.f32.mxu0 %v254
  %697 = vmatmul.mubr.f32.gmra.mxu0 %v253
  %v698 = vpop.f32.mrf.mxu0
  %v699 = vadd.f32 0.0, %v698
  %v700 = vpop.f32.mrf.mxu0
  %701 = vmatprep.mubr.f32.mxu0 %v258
  %702 = vmatmul.mubr.f32.gmra.mxu0 %v257
  %v703 = vpop.f32.mrf.mxu0
  %v704 = vadd.f32 0.0, %v703
  %v705 = vpop.f32.mrf.mxu0
  %706 = vmatprep.mubr.f32.mxu0 %v262
  %707 = vmatmul.mubr.f32.gmra.mxu0 %v261
  %v708 = vpop.f32.mrf.mxu0
  %v709 = vadd.f32 0.0, %v708
  %v710 = vpop.f32.mrf.mxu0
  %711 = vmatprep.mubr.f32.mxu0 %v266
  %712 = vmatmul.mubr.f32.gmra.mxu0 %v265
  %v713 = vpop.f32.mrf.mxu0
  %v714 = vadd.f32 0.0, %v713
  %v715 = vpop.f32.mrf.mxu0
  %716 = vmatprep.mubr.f32.mxu0 %v270
  %717 = vmatmul.mubr.f32.gmra.mxu0 %v269
  %v718 = vpop.f32.mrf.mxu0
  %v719 = vadd.f32 0.0, %v718
  %v720 = vpop.f32.mrf.mxu0
  %721 = vdwg.mxu0
  %722 = vmatprep.subr.mxu0 0.0
  %723 = vmatpush1.msra.mxu0 %v320
  %724 = vmatprep.subr.mxu0 0.0
  %725 = vmatpush1.msra.mxu0 %v319
  %726 = vmatprep.subr.mxu0 0.0
  %727 = vmatpush1.msra.mxu0 %v318
  %728 = vmatprep.subr.mxu0 0.0
  %729 = vmatpush1.msra.mxu0 %v317
  %730 = vmatprep.subr.mxu0 0.0
  %731 = vmatpush1.msra.mxu0 %v316
  %732 = vmatprep.subr.mxu0 0.0
  %733 = vmatpush1.msra.mxu0 %v315
  %734 = vmatprep.subr.mxu0 0.0
  %735 = vmatpush1.msra.mxu0 %v314
  %736 = vmatprep.subr.mxu0 0.0
  %737 = vmatpush1.msra.mxu0 %v313
  %738 = vmatprep.subr.mxu0 0.0
  %739 = vmatpush1.msra.mxu0 %v312
  %740 = vmatprep.subr.mxu0 0.0
  %741 = vmatpush1.msra.mxu0 %v311
  %742 = vmatprep.subr.mxu0 0.0
  %743 = vmatpush1.msra.mxu0 %v310
  %744 = vmatprep.subr.mxu0 0.0
  %745 = vmatpush1.msra.mxu0 %v309
  %746 = vmatprep.subr.mxu0 0.0
  %747 = vmatpush1.msra.mxu0 %v308
  %748 = vmatprep.subr.mxu0 0.0
  %749 = vmatpush1.msra.mxu0 %v307
  %750 = vmatprep.subr.mxu0 0.0
  %751 = vmatpush1.msra.mxu0 %v306
  %752 = vmatprep.subr.mxu0 0.0
  %753 = vmatpush1.msra.mxu0 %v305
  %754 = vmatprep.subr.mxu0 0.0
  %755 = vmatpush2.msra.mxu0 %v336
  %756 = vmatprep.subr.mxu0 0.0
  %757 = vmatpush2.msra.mxu0 %v335
  %758 = vmatprep.subr.mxu0 0.0
  %759 = vmatpush2.msra.mxu0 %v334
  %760 = vmatprep.subr.mxu0 0.0
  %761 = vmatpush2.msra.mxu0 %v333
  %762 = vmatprep.subr.mxu0 0.0
  %763 = vmatpush2.msra.mxu0 %v332
  %764 = vmatprep.subr.mxu0 0.0
  %765 = vmatpush2.msra.mxu0 %v331
  %766 = vmatprep.subr.mxu0 0.0
  %767 = vmatpush2.msra.mxu0 %v330
  %768 = vmatprep.subr.mxu0 0.0
  %769 = vmatpush2.msra.mxu0 %v329
  %770 = vmatprep.subr.mxu0 0.0
  %771 = vmatpush2.msra.mxu0 %v328
  %772 = vmatprep.subr.mxu0 0.0
  %773 = vmatpush2.msra.mxu0 %v327
  %774 = vmatprep.subr.mxu0 0.0
  %775 = vmatpush2.msra.mxu0 %v326
  %776 = vmatprep.subr.mxu0 0.0
  %777 = vmatpush2.msra.mxu0 %v325
  %778 = vmatprep.subr.mxu0 0.0
  %779 = vmatpush2.msra.mxu0 %v324
  %780 = vmatprep.subr.mxu0 0.0
  %781 = vmatpush2.msra.mxu0 %v323
  %782 = vmatprep.subr.mxu0 0.0
  %783 = vmatpush2.msra.mxu0 %v322
  %784 = vmatprep.subr.mxu0 0.0
  %785 = vmatpush2.msra.mxu0 %v321
  %786 = vmatprep.mubr.f32.mxu0 %v20
  %787 = vmatmul.mubr.f32.gmra.mxu0 %v19
  %v788 = vpop.f32.mrf.mxu0
  %v789 = vadd.f32 %v404, %v788
  %v790 = vpop.f32.mrf.mxu0
  %791 = vmatprep.mubr.f32.mxu0 %v24
  %792 = vmatmul.mubr.f32.gmra.mxu0 %v23
  %v793 = vpop.f32.mrf.mxu0
  %v794 = vadd.f32 %v409, %v793
  %v795 = vpop.f32.mrf.mxu0
  %796 = vmatprep.mubr.f32.mxu0 %v28
  %797 = vmatmul.mubr.f32.gmra.mxu0 %v27
  %v798 = vpop.f32.mrf.mxu0
  %v799 = vadd.f32 %v414, %v798
  %v800 = vpop.f32.mrf.mxu0
  %801 = vmatprep.mubr.f32.mxu0 %v32
  %802 = vmatmul.mubr.f32.gmra.mxu0 %v31
  %v803 = vpop.f32.mrf.mxu0
  %v804 = vadd.f32 %v419, %v803
  %v805 = vpop.f32.mrf.mxu0
  %806 = vmatprep.mubr.f32.mxu0 %v36
  %807 = vmatmul.mubr.f32.gmra.mxu0 %v35
  %v808 = vpop.f32.mrf.mxu0
  %v809 = vadd.f32 %v424, %v808
  %v810 = vpop.f32.mrf.mxu0
  %811 = vmatprep.mubr.f32.mxu0 %v40
  %812 = vmatmul.mubr.f32.gmra.mxu0 %v39
  %v813 = vpop.f32.mrf.mxu0
  %v814 = vadd.f32 %v429, %v813
  %v815 = vpop.f32.mrf.mxu0
  %816 = vmatprep.mubr.f32.mxu0 %v44
  %817 = vmatmul.mubr.f32.gmra.mxu0 %v43
  %v818 = vpop.f32.mrf.mxu0
  %v819 = vadd.f32 %v434, %v818
  %v820 = vpop.f32.mrf.mxu0
  %821 = vmatprep.mubr.f32.mxu0 %v48
  %822 = vmatmul.mubr.f32.gmra.mxu0 %v47
  %v823 = vpop.f32.mrf.mxu0
  %v824 = vadd.f32 %v439, %v823
  %v825 = vpop.f32.mrf.mxu0
  %826 = vmatprep.mubr.f32.mxu0 %v52
  %827 = vmatmul.mubr.f32.gmra.mxu0 %v51
  %v828 = vpop.f32.mrf.mxu0
  %v829 = vadd.f32 %v444, %v828
  %v830 = vpop.f32.mrf.mxu0
  %831 = vmatprep.mubr.f32.mxu0 %v56
  %832 = vmatmul.mubr.f32.gmra.mxu0 %v55
  %v833 = vpop.f32.mrf.mxu0
  %v834 = vadd.f32 %v449, %v833
  %v835 = vpop.f32.mrf.mxu0
  %836 = vmatprep.mubr.f32.mxu0 %v60
  %837 = vmatmul.mubr.f32.gmra.mxu0 %v59
  %v838 = vpop.f32.mrf.mxu0
  %v839 = vadd.f32 %v454, %v838
  %v840 = vpop.f32.mrf.mxu0
  %841 = vmatprep.mubr.f32.mxu0 %v64
  %842 = vmatmul.mubr.f32.gmra.mxu0 %v63
  %v843 = vpop.f32.mrf.mxu0
  %v844 = vadd.f32 %v459, %v843
  %v845 = vpop.f32.mrf.mxu0
  %846 = vmatprep.mubr.f32.mxu0 %v68
  %847 = vmatmul.mubr.f32.gmra.mxu0 %v67
  %v848 = vpop.f32.mrf.mxu0
  %v849 = vadd.f32 %v464, %v848
  %v850 = vpop.f32.mrf.mxu0
  %851 = vmatprep.mubr.f32.mxu0 %v72
  %852 = vmatmul.mubr.f32.gmra.mxu0 %v71
  %v853 = vpop.f32.mrf.mxu0
  %v854 = vadd.f32 %v469, %v853
  %v855 = vpop.f32.mrf.mxu0
  %856 = vmatprep.mubr.f32.mxu0 %v76
  %857 = vmatmul.mubr.f32.gmra.mxu0 %v75
  %v858 = vpop.f32.mrf.mxu0
  %v859 = vadd.f32 %v474, %v858
  %v860 = vpop.f32.mrf.mxu0
  %861 = vmatprep.mubr.f32.mxu0 %v80
  %862 = vmatmul.mubr.f32.gmra.mxu0 %v79
  %v863 = vpop.f32.mrf.mxu0
  %v864 = vadd.f32 %v479, %v863
  %v865 = vpop.f32.mrf.mxu0
  %866 = vmatprep.mubr.f32.mxu0 %v84
  %867 = vmatmul.mubr.f32.gmra.mxu0 %v83
  %v868 = vpop.f32.mrf.mxu0
  %v869 = vadd.f32 %v484, %v868
  %v870 = vpop.f32.mrf.mxu0
  %871 = vmatprep.mubr.f32.mxu0 %v88
  %872 = vmatmul.mubr.f32.gmra.mxu0 %v87
  %v873 = vpop.f32.mrf.mxu0
  %v874 = vadd.f32 %v489, %v873
  %v875 = vpop.f32.mrf.mxu0
  %876 = vmatprep.mubr.f32.mxu0 %v92
  %877 = vmatmul.mubr.f32.gmra.mxu0 %v91
  %v878 = vpop.f32.mrf.mxu0
  %v879 = vadd.f32 %v494, %v878
  %v880 = vpop.f32.mrf.mxu0
  %881 = vmatprep.mubr.f32.mxu0 %v96
  %882 = vmatmul.mubr.f32.gmra.mxu0 %v95
  %v883 = vpop.f32.mrf.mxu0
  %v884 = vadd.f32 %v499, %v883
  %v885 = vpop.f32.mrf.mxu0
  %886 = vmatprep.mubr.f32.mxu0 %v100
  %887 = vmatmul.mubr.f32.gmra.mxu0 %v99
  %v888 = vpop.f32.mrf.mxu0
  %v889 = vadd.f32 %v504, %v888
  %v890 = vpop.f32.mrf.mxu0
  %891 = vmatprep.mubr.f32.mxu0 %v104
  %892 = vmatmul.mubr.f32.gmra.mxu0 %v103
  %v893 = vpop.f32.mrf.mxu0
  %v894 = vadd.f32 %v509, %v893
  %v895 = vpop.f32.mrf.mxu0
  %896 = vmatprep.mubr.f32.mxu0 %v108
  %897 = vmatmul.mubr.f32.gmra.mxu0 %v107
  %v898 = vpop.f32.mrf.mxu0
  %v899 = vadd.f32 %v514, %v898
  %v900 = vpop.f32.mrf.mxu0
  %901 = vmatprep.mubr.f32.mxu0 %v112
  %902 = vmatmul.mubr.f32.gmra.mxu0 %v111
  %v903 = vpop.f32.mrf.mxu0
  %v904 = vadd.f32 %v519, %v903
  %v905 = vpop.f32.mrf.mxu0
  %906 = vmatprep.mubr.f32.mxu0 %v116
  %907 = vmatmul.mubr.f32.gmra.mxu0 %v115
  %v908 = vpop.f32.mrf.mxu0
  %v909 = vadd.f32 %v524, %v908
  %v910 = vpop.f32.mrf.mxu0
  %911 = vmatprep.mubr.f32.mxu0 %v120
  %912 = vmatmul.mubr.f32.gmra.mxu0 %v119
  %v913 = vpop.f32.mrf.mxu0
  %v914 = vadd.f32 %v529, %v913
  %v915 = vpop.f32.mrf.mxu0
  %916 = vmatprep.mubr.f32.mxu0 %v124
  %917 = vmatmul.mubr.f32.gmra.mxu0 %v123
  %v918 = vpop.f32.mrf.mxu0
  %v919 = vadd.f32 %v534, %v918
  %v920 = vpop.f32.mrf.mxu0
  %921 = vmatprep.mubr.f32.mxu0 %v128
  %922 = vmatmul.mubr.f32.gmra.mxu0 %v127
  %v923 = vpop.f32.mrf.mxu0
  %v924 = vadd.f32 %v539, %v923
  %v925 = vpop.f32.mrf.mxu0
  %926 = vmatprep.mubr.f32.mxu0 %v132
  %927 = vmatmul.mubr.f32.gmra.mxu0 %v131
  %v928 = vpop.f32.mrf.mxu0
  %v929 = vadd.f32 %v544, %v928
  %v930 = vpop.f32.mrf.mxu0
  %931 = vmatprep.mubr.f32.mxu0 %v136
  %932 = vmatmul.mubr.f32.gmra.mxu0 %v135
  %v933 = vpop.f32.mrf.mxu0
  %v934 = vadd.f32 %v549, %v933
  %v935 = vpop.f32.mrf.mxu0
  %936 = vmatprep.mubr.f32.mxu0 %v140
  %937 = vmatmul.mubr.f32.gmra.mxu0 %v139
  %v938 = vpop.f32.mrf.mxu0
  %v939 = vadd.f32 %v554, %v938
  %v940 = vpop.f32.mrf.mxu0
  %941 = vmatprep.mubr.f32.mxu0 %v144
  %942 = vmatmul.mubr.f32.gmra.mxu0 %v143
  %v943 = vpop.f32.mrf.mxu0
  %v944 = vadd.f32 %v559, %v943
  %v945 = vpop.f32.mrf.mxu0
  %946 = vmatprep.mubr.f32.mxu0 %v148
  %947 = vmatmul.mubr.f32.gmra.mxu0 %v147
  %v948 = vpop.f32.mrf.mxu0
  %v949 = vadd.f32 %v564, %v948
  %v950 = vpop.f32.mrf.mxu0
  %951 = vmatprep.mubr.f32.mxu0 %v152
  %952 = vmatmul.mubr.f32.gmra.mxu0 %v151
  %v953 = vpop.f32.mrf.mxu0
  %v954 = vadd.f32 %v569, %v953
  %v955 = vpop.f32.mrf.mxu0
  %956 = vmatprep.mubr.f32.mxu0 %v156
  %957 = vmatmul.mubr.f32.gmra.mxu0 %v155
  %v958 = vpop.f32.mrf.mxu0
  %v959 = vadd.f32 %v574, %v958
  %v960 = vpop.f32.mrf.mxu0
  %961 = vmatprep.mubr.f32.mxu0 %v160
  %962 = vmatmul.mubr.f32.gmra.mxu0 %v159
  %v963 = vpop.f32.mrf.mxu0
  %v964 = vadd.f32 %v579, %v963
  %v965 = vpop.f32.mrf.mxu0
  %966 = vmatprep.mubr.f32.mxu0 %v164
  %967 = vmatmul.mubr.f32.gmra.mxu0 %v163
  %v968 = vpop.f32.mrf.mxu0
  %v969 = vadd.f32 %v584, %v968
  %v970 = vpop.f32.mrf.mxu0
  %971 = vmatprep.mubr.f32.mxu0 %v168
  %972 = vmatmul.mubr.f32.gmra.mxu0 %v167
  %v973 = vpop.f32.mrf.mxu0
  %v974 = vadd.f32 %v589, %v973
  %v975 = vpop.f32.mrf.mxu0
  %976 = vmatprep.mubr.f32.mxu0 %v172
  %977 = vmatmul.mubr.f32.gmra.mxu0 %v171
  %v978 = vpop.f32.mrf.mxu0
  %v979 = vadd.f32 %v594, %v978
  %v980 = vpop.f32.mrf.mxu0
  %981 = vmatprep.mubr.f32.mxu0 %v176
  %982 = vmatmul.mubr.f32.gmra.mxu0 %v175
  %v983 = vpop.f32.mrf.mxu0
  %v984 = vadd.f32 %v599, %v983
  %v985 = vpop.f32.mrf.mxu0
  %986 = vmatprep.mubr.f32.mxu0 %v180
  %987 = vmatmul.mubr.f32.gmra.mxu0 %v179
  %v988 = vpop.f32.mrf.mxu0
  %v989 = vadd.f32 %v604, %v988
  %v990 = vpop.f32.mrf.mxu0
  %991 = vmatprep.mubr.f32.mxu0 %v184
  %992 = vmatmul.mubr.f32.gmra.mxu0 %v183
  %v993 = vpop.f32.mrf.mxu0
  %v994 = vadd.f32 %v609, %v993
  %v995 = vpop.f32.mrf.mxu0
  %996 = vmatprep.mubr.f32.mxu0 %v188
  %997 = vmatmul.mubr.f32.gmra.mxu0 %v187
  %v998 = vpop.f32.mrf.mxu0
  %v999 = vadd.f32 %v614, %v998
  %v1000 = vpop.f32.mrf.mxu0
  %1001 = vmatprep.mubr.f32.mxu0 %v192
  %1002 = vmatmul.mubr.f32.gmra.mxu0 %v191
  %v1003 = vpop.f32.mrf.mxu0
  %v1004 = vadd.f32 %v619, %v1003
  %v1005 = vpop.f32.mrf.mxu0
  %1006 = vmatprep.mubr.f32.mxu0 %v196
  %1007 = vmatmul.mubr.f32.gmra.mxu0 %v195
  %v1008 = vpop.f32.mrf.mxu0
  %v1009 = vadd.f32 %v624, %v1008
  %v1010 = vpop.f32.mrf.mxu0
  %1011 = vmatprep.mubr.f32.mxu0 %v200
  %1012 = vmatmul.mubr.f32.gmra.mxu0 %v199
  %v1013 = vpop.f32.mrf.mxu0
  %v1014 = vadd.f32 %v629, %v1013
  %v1015 = vpop.f32.mrf.mxu0
  %1016 = vmatprep.mubr.f32.mxu0 %v204
  %1017 = vmatmul.mubr.f32.gmra.mxu0 %v203
  %v1018 = vpop.f32.mrf.mxu0
  %v1019 = vadd.f32 %v634, %v1018
  %v1020 = vpop.f32.mrf.mxu0
  %1021 = vmatprep.mubr.f32.mxu0 %v208
  %1022 = vmatmul.mubr.f32.gmra.mxu0 %v207
  %v1023 = vpop.f32.mrf.mxu0
  %v1024 = vadd.f32 %v639, %v1023
  %v1025 = vpop.f32.mrf.mxu0
  %1026 = vmatprep.mubr.f32.mxu0 %v212
  %1027 = vmatmul.mubr.f32.gmra.mxu0 %v211
  %v1028 = vpop.f32.mrf.mxu0
  %v1029 = vadd.f32 %v644, %v1028
  %v1030 = vpop.f32.mrf.mxu0
  %1031 = vmatprep.mubr.f32.mxu0 %v216
  %1032 = vmatmul.mubr.f32.gmra.mxu0 %v215
  %v1033 = vpop.f32.mrf.mxu0
  %v1034 = vadd.f32 %v649, %v1033
  %v1035 = vpop.f32.mrf.mxu0
  %1036 = vmatprep.mubr.f32.mxu0 %v220
  %1037 = vmatmul.mubr.f32.gmra.mxu0 %v219
  %v1038 = vpop.f32.mrf.mxu0
  %v1039 = vadd.f32 %v654, %v1038
  %v1040 = vpop.f32.mrf.mxu0
  %1041 = vmatprep.mubr.f32.mxu0 %v224
  %1042 = vmatmul.mubr.f32.gmra.mxu0 %v223
  %v1043 = vpop.f32.mrf.mxu0
  %v1044 = vadd.f32 %v659, %v1043
  %v1045 = vpop.f32.mrf.mxu0
  %1046 = vmatprep.mubr.f32.mxu0 %v228
  %1047 = vmatmul.mubr.f32.gmra.mxu0 %v227
  %v1048 = vpop.f32.mrf.mxu0
  %v1049 = vadd.f32 %v664, %v1048
  %v1050 = vpop.f32.mrf.mxu0
  %1051 = vmatprep.mubr.f32.mxu0 %v232
  %1052 = vmatmul.mubr.f32.gmra.mxu0 %v231
  %v1053 = vpop.f32.mrf.mxu0
  %v1054 = vadd.f32 %v669, %v1053
  %v1055 = vpop.f32.mrf.mxu0
  %1056 = vmatprep.mubr.f32.mxu0 %v236
  %1057 = vmatmul.mubr.f32.gmra.mxu0 %v235
  %v1058 = vpop.f32.mrf.mxu0
  %v1059 = vadd.f32 %v674, %v1058
  %v1060 = vpop.f32.mrf.mxu0
  %1061 = vmatprep.mubr.f32.mxu0 %v240
  %1062 = vmatmul.mubr.f32.gmra.mxu0 %v239
  %v1063 = vpop.f32.mrf.mxu0
  %v1064 = vadd.f32 %v679, %v1063
  %v1065 = vpop.f32.mrf.mxu0
  %1066 = vmatprep.mubr.f32.mxu0 %v244
  %1067 = vmatmul.mubr.f32.gmra.mxu0 %v243
  %v1068 = vpop.f32.mrf.mxu0
  %v1069 = vadd.f32 %v684, %v1068
  %v1070 = vpop.f32.mrf.mxu0
  %1071 = vmatprep.mubr.f32.mxu0 %v248
  %1072 = vmatmul.mubr.f32.gmra.mxu0 %v247
  %v1073 = vpop.f32.mrf.mxu0
  %v1074 = vadd.f32 %v689, %v1073
  %v1075 = vpop.f32.mrf.mxu0
  %1076 = vmatprep.mubr.f32.mxu0 %v252
  %1077 = vmatmul.mubr.f32.gmra.mxu0 %v251
  %v1078 = vpop.f32.mrf.mxu0
  %v1079 = vadd.f32 %v694, %v1078
  %v1080 = vpop.f32.mrf.mxu0
  %1081 = vmatprep.mubr.f32.mxu0 %v256
  %1082 = vmatmul.mubr.f32.gmra.mxu0 %v255
  %v1083 = vpop.f32.mrf.mxu0
  %v1084 = vadd.f32 %v699, %v1083
  %v1085 = vpop.f32.mrf.mxu0
  %1086 = vmatprep.mubr.f32.mxu0 %v260
  %1087 = vmatmul.mubr.f32.gmra.mxu0 %v259
  %v1088 = vpop.f32.mrf.mxu0
  %v1089 = vadd.f32 %v704, %v1088
  %v1090 = vpop.f32.mrf.mxu0
  %1091 = vmatprep.mubr.f32.mxu0 %v264
  %1092 = vmatmul.mubr.f32.gmra.mxu0 %v263
  %v1093 = vpop.f32.mrf.mxu0
  %v1094 = vadd.f32 %v709, %v1093
  %v1095 = vpop.f32.mrf.mxu0
  %1096 = vmatprep.mubr.f32.mxu0 %v268
  %1097 = vmatmul.mubr.f32.gmra.mxu0 %v267
  %v1098 = vpop.f32.mrf.mxu0
  %v1099 = vadd.f32 %v714, %v1098
  %v1100 = vpop.f32.mrf.mxu0
  %1101 = vmatprep.mubr.f32.mxu0 %v272
  %1102 = vmatmul.mubr.f32.gmra.mxu0 %v271
  %v1103 = vpop.f32.mrf.mxu0
  %v1104 = vadd.f32 %v719, %v1103
  %v1105 = vpop.f32.mrf.mxu0
  %1106 = vdwg.mxu0
  %vm1107 = vcmask 130048
  %v1108 = vsel %vm1107, %v789, 0.0
  %v1109 = vsel %vm1107, %v794, 0.0
  %v1110 = vadd.f32 %v1108, %v1109
  %v1111 = vsel %vm1107, %v799, 0.0
  %v1112 = vadd.f32 %v1110, %v1111
  %v1113 = vsel %vm1107, %v804, 0.0
  %v1114 = vadd.f32 %v1112, %v1113
  %v1115 = vsel %vm1107, %v809, 0.0
  %v1116 = vadd.f32 %v1114, %v1115
  %v1117 = vsel %vm1107, %v814, 0.0
  %v1118 = vadd.f32 %v1116, %v1117
  %v1119 = vsel %vm1107, %v819, 0.0
  %v1120 = vadd.f32 %v1118, %v1119
  %v1121 = vsel %vm1107, %v824, 0.0
  %v1122 = vadd.f32 %v1120, %v1121
  %v1123 = vsel %vm1107, %v829, 0.0
  %v1124 = vadd.f32 %v1122, %v1123
  %v1125 = vsel %vm1107, %v834, 0.0
  %v1126 = vadd.f32 %v1124, %v1125
  %v1127 = vsel %vm1107, %v839, 0.0
  %v1128 = vadd.f32 %v1126, %v1127
  %v1129 = vsel %vm1107, %v844, 0.0
  %v1130 = vadd.f32 %v1128, %v1129
  %v1131 = vsel %vm1107, %v849, 0.0
  %v1132 = vadd.f32 %v1130, %v1131
  %v1133 = vsel %vm1107, %v854, 0.0
  %v1134 = vadd.f32 %v1132, %v1133
  %v1135 = vsel %vm1107, %v859, 0.0
  %v1136 = vadd.f32 %v1134, %v1135
  %v1137 = vsel %vm1107, %v864, 0.0
  %v1138 = vadd.f32 %v1136, %v1137
  %v1139 = vsel %vm1107, %v869, 0.0
  %v1140 = vadd.f32 %v1138, %v1139
  %v1141 = vsel %vm1107, %v874, 0.0
  %v1142 = vadd.f32 %v1140, %v1141
  %v1143 = vsel %vm1107, %v879, 0.0
  %v1144 = vadd.f32 %v1142, %v1143
  %v1145 = vsel %vm1107, %v884, 0.0
  %v1146 = vadd.f32 %v1144, %v1145
  %v1147 = vsel %vm1107, %v889, 0.0
  %v1148 = vadd.f32 %v1146, %v1147
  %v1149 = vsel %vm1107, %v894, 0.0
  %v1150 = vadd.f32 %v1148, %v1149
  %v1151 = vsel %vm1107, %v899, 0.0
  %v1152 = vadd.f32 %v1150, %v1151
  %v1153 = vsel %vm1107, %v904, 0.0
  %v1154 = vadd.f32 %v1152, %v1153
  %v1155 = vsel %vm1107, %v909, 0.0
  %v1156 = vadd.f32 %v1154, %v1155
  %v1157 = vsel %vm1107, %v914, 0.0
  %v1158 = vadd.f32 %v1156, %v1157
  %v1159 = vsel %vm1107, %v919, 0.0
  %v1160 = vadd.f32 %v1158, %v1159
  %v1161 = vsel %vm1107, %v924, 0.0
  %v1162 = vadd.f32 %v1160, %v1161
  %v1163 = vsel %vm1107, %v929, 0.0
  %v1164 = vadd.f32 %v1162, %v1163
  %v1165 = vsel %vm1107, %v934, 0.0
  %v1166 = vadd.f32 %v1164, %v1165
  %v1167 = vsel %vm1107, %v939, 0.0
  %v1168 = vadd.f32 %v1166, %v1167
  %v1169 = vsel %vm1107, %v944, 0.0
  %v1170 = vadd.f32 %v1168, %v1169
  %v1171 = vsel %vm1107, %v949, 0.0
  %v1172 = vadd.f32 %v1170, %v1171
  %v1173 = vsel %vm1107, %v954, 0.0
  %v1174 = vadd.f32 %v1172, %v1173
  %v1175 = vsel %vm1107, %v959, 0.0
  %v1176 = vadd.f32 %v1174, %v1175
  %v1177 = vsel %vm1107, %v964, 0.0
  %v1178 = vadd.f32 %v1176, %v1177
  %v1179 = vsel %vm1107, %v969, 0.0
  %v1180 = vadd.f32 %v1178, %v1179
  %v1181 = vsel %vm1107, %v974, 0.0
  %v1182 = vadd.f32 %v1180, %v1181
  %v1183 = vsel %vm1107, %v979, 0.0
  %v1184 = vadd.f32 %v1182, %v1183
  %v1185 = vsel %vm1107, %v984, 0.0
  %v1186 = vadd.f32 %v1184, %v1185
  %v1187 = vsel %vm1107, %v989, 0.0
  %v1188 = vadd.f32 %v1186, %v1187
  %v1189 = vsel %vm1107, %v994, 0.0
  %v1190 = vadd.f32 %v1188, %v1189
  %v1191 = vsel %vm1107, %v999, 0.0
  %v1192 = vadd.f32 %v1190, %v1191
  %v1193 = vsel %vm1107, %v1004, 0.0
  %v1194 = vadd.f32 %v1192, %v1193
  %v1195 = vsel %vm1107, %v1009, 0.0
  %v1196 = vadd.f32 %v1194, %v1195
  %v1197 = vsel %vm1107, %v1014, 0.0
  %v1198 = vadd.f32 %v1196, %v1197
  %v1199 = vsel %vm1107, %v1019, 0.0
  %v1200 = vadd.f32 %v1198, %v1199
  %v1201 = vsel %vm1107, %v1024, 0.0
  %v1202 = vadd.f32 %v1200, %v1201
  %v1203 = vsel %vm1107, %v1029, 0.0
  %v1204 = vadd.f32 %v1202, %v1203
  %v1205 = vsel %vm1107, %v1034, 0.0
  %v1206 = vadd.f32 %v1204, %v1205
  %v1207 = vsel %vm1107, %v1039, 0.0
  %v1208 = vadd.f32 %v1206, %v1207
  %v1209 = vsel %vm1107, %v1044, 0.0
  %v1210 = vadd.f32 %v1208, %v1209
  %v1211 = vsel %vm1107, %v1049, 0.0
  %v1212 = vadd.f32 %v1210, %v1211
  %v1213 = vsel %vm1107, %v1054, 0.0
  %v1214 = vadd.f32 %v1212, %v1213
  %v1215 = vsel %vm1107, %v1059, 0.0
  %v1216 = vadd.f32 %v1214, %v1215
  %v1217 = vsel %vm1107, %v1064, 0.0
  %v1218 = vadd.f32 %v1216, %v1217
  %v1219 = vsel %vm1107, %v1069, 0.0
  %v1220 = vadd.f32 %v1218, %v1219
  %v1221 = vsel %vm1107, %v1074, 0.0
  %v1222 = vadd.f32 %v1220, %v1221
  %v1223 = vsel %vm1107, %v1079, 0.0
  %v1224 = vadd.f32 %v1222, %v1223
  %v1225 = vsel %vm1107, %v1084, 0.0
  %v1226 = vadd.f32 %v1224, %v1225
  %v1227 = vsel %vm1107, %v1089, 0.0
  %v1228 = vadd.f32 %v1226, %v1227
  %v1229 = vsel %vm1107, %v1094, 0.0
  %v1230 = vadd.f32 %v1228, %v1229
  %v1231 = vsel %vm1107, %v1099, 0.0
  %v1232 = vadd.f32 %v1230, %v1231
  %v1233 = vsel %vm1107, %v1104, 0.0
  %v1234 = vadd.f32 %v1232, %v1233
  %v1235 = vrot.slane %v1234, 4
  %v1236 = vadd.f32 %v1234, %v1235
  %v1237 = vrot.slane %v1236, 2
  %v1238 = vadd.f32 %v1236, %v1237
  %v1239 = vrot.slane %v1238, 1
  %v1240 = vadd.f32 %v1238, %v1239
  %v1241 = vrcp.pop 512.0
  %v1242 = vmul.f32 %v1240, %v1241
  %v1243 = vsub.f32 %v789, %v1242
  %v1244 = vsub.f32 %v794, %v1242
  %v1245 = vsub.f32 %v799, %v1242
  %v1246 = vsub.f32 %v804, %v1242
  %v1247 = vsub.f32 %v809, %v1242
  %v1248 = vsub.f32 %v814, %v1242
  %v1249 = vsub.f32 %v819, %v1242
  %v1250 = vsub.f32 %v824, %v1242
  %v1251 = vsub.f32 %v829, %v1242
  %v1252 = vsub.f32 %v834, %v1242
  %v1253 = vsub.f32 %v839, %v1242
  %v1254 = vsub.f32 %v844, %v1242
  %v1255 = vsub.f32 %v849, %v1242
  %v1256 = vsub.f32 %v854, %v1242
  %v1257 = vsub.f32 %v859, %v1242
  %v1258 = vsub.f32 %v864, %v1242
  %v1259 = vsub.f32 %v869, %v1242
  %v1260 = vsub.f32 %v874, %v1242
  %v1261 = vsub.f32 %v879, %v1242
  %v1262 = vsub.f32 %v884, %v1242
  %v1263 = vsub.f32 %v889, %v1242
  %v1264 = vsub.f32 %v894, %v1242
  %v1265 = vsub.f32 %v899, %v1242
  %v1266 = vsub.f32 %v904, %v1242
  %v1267 = vsub.f32 %v909, %v1242
  %v1268 = vsub.f32 %v914, %v1242
  %v1269 = vsub.f32 %v919, %v1242
  %v1270 = vsub.f32 %v924, %v1242
  %v1271 = vsub.f32 %v929, %v1242
  %v1272 = vsub.f32 %v934, %v1242
  %v1273 = vsub.f32 %v939, %v1242
  %v1274 = vsub.f32 %v944, %v1242
  %v1275 = vsub.f32 %v949, %v1242
  %v1276 = vsub.f32 %v954, %v1242
  %v1277 = vsub.f32 %v959, %v1242
  %v1278 = vsub.f32 %v964, %v1242
  %v1279 = vsub.f32 %v969, %v1242
  %v1280 = vsub.f32 %v974, %v1242
  %v1281 = vsub.f32 %v979, %v1242
  %v1282 = vsub.f32 %v984, %v1242
  %v1283 = vsub.f32 %v989, %v1242
  %v1284 = vsub.f32 %v994, %v1242
  %v1285 = vsub.f32 %v999, %v1242
  %v1286 = vsub.f32 %v1004, %v1242
  %v1287 = vsub.f32 %v1009, %v1242
  %v1288 = vsub.f32 %v1014, %v1242
  %v1289 = vsub.f32 %v1019, %v1242
  %v1290 = vsub.f32 %v1024, %v1242
  %v1291 = vsub.f32 %v1029, %v1242
  %v1292 = vsub.f32 %v1034, %v1242
  %v1293 = vsub.f32 %v1039, %v1242
  %v1294 = vsub.f32 %v1044, %v1242
  %v1295 = vsub.f32 %v1049, %v1242
  %v1296 = vsub.f32 %v1054, %v1242
  %v1297 = vsub.f32 %v1059, %v1242
  %v1298 = vsub.f32 %v1064, %v1242
  %v1299 = vsub.f32 %v1069, %v1242
  %v1300 = vsub.f32 %v1074, %v1242
  %v1301 = vsub.f32 %v1079, %v1242
  %v1302 = vsub.f32 %v1084, %v1242
  %v1303 = vsub.f32 %v1089, %v1242
  %v1304 = vsub.f32 %v1094, %v1242
  %v1305 = vsub.f32 %v1099, %v1242
  %v1306 = vsub.f32 %v1104, %v1242
  %v1307 = vmul.f32 %v1243, %v1243
  %v1308 = vmul.f32 %v1244, %v1244
  %v1309 = vmul.f32 %v1245, %v1245
  %v1310 = vmul.f32 %v1246, %v1246
  %v1311 = vmul.f32 %v1247, %v1247
  %v1312 = vmul.f32 %v1248, %v1248
  %v1313 = vmul.f32 %v1249, %v1249
  %v1314 = vmul.f32 %v1250, %v1250
  %v1315 = vmul.f32 %v1251, %v1251
  %v1316 = vmul.f32 %v1252, %v1252
  %v1317 = vmul.f32 %v1253, %v1253
  %v1318 = vmul.f32 %v1254, %v1254
  %v1319 = vmul.f32 %v1255, %v1255
  %v1320 = vmul.f32 %v1256, %v1256
  %v1321 = vmul.f32 %v1257, %v1257
  %v1322 = vmul.f32 %v1258, %v1258
  %v1323 = vmul.f32 %v1259, %v1259
  %v1324 = vmul.f32 %v1260, %v1260
  %v1325 = vmul.f32 %v1261, %v1261
  %v1326 = vmul.f32 %v1262, %v1262
  %v1327 = vmul.f32 %v1263, %v1263
  %v1328 = vmul.f32 %v1264, %v1264
  %v1329 = vmul.f32 %v1265, %v1265
  %v1330 = vmul.f32 %v1266, %v1266
  %v1331 = vmul.f32 %v1267, %v1267
  %v1332 = vmul.f32 %v1268, %v1268
  %v1333 = vmul.f32 %v1269, %v1269
  %v1334 = vmul.f32 %v1270, %v1270
  %v1335 = vmul.f32 %v1271, %v1271
  %v1336 = vmul.f32 %v1272, %v1272
  %v1337 = vmul.f32 %v1273, %v1273
  %v1338 = vmul.f32 %v1274, %v1274
  %v1339 = vmul.f32 %v1275, %v1275
  %v1340 = vmul.f32 %v1276, %v1276
  %v1341 = vmul.f32 %v1277, %v1277
  %v1342 = vmul.f32 %v1278, %v1278
  %v1343 = vmul.f32 %v1279, %v1279
  %v1344 = vmul.f32 %v1280, %v1280
  %v1345 = vmul.f32 %v1281, %v1281
  %v1346 = vmul.f32 %v1282, %v1282
  %v1347 = vmul.f32 %v1283, %v1283
  %v1348 = vmul.f32 %v1284, %v1284
  %v1349 = vmul.f32 %v1285, %v1285
  %v1350 = vmul.f32 %v1286, %v1286
  %v1351 = vmul.f32 %v1287, %v1287
  %v1352 = vmul.f32 %v1288, %v1288
  %v1353 = vmul.f32 %v1289, %v1289
  %v1354 = vmul.f32 %v1290, %v1290
  %v1355 = vmul.f32 %v1291, %v1291
  %v1356 = vmul.f32 %v1292, %v1292
  %v1357 = vmul.f32 %v1293, %v1293
  %v1358 = vmul.f32 %v1294, %v1294
  %v1359 = vmul.f32 %v1295, %v1295
  %v1360 = vmul.f32 %v1296, %v1296
  %v1361 = vmul.f32 %v1297, %v1297
  %v1362 = vmul.f32 %v1298, %v1298
  %v1363 = vmul.f32 %v1299, %v1299
  %v1364 = vmul.f32 %v1300, %v1300
  %v1365 = vmul.f32 %v1301, %v1301
  %v1366 = vmul.f32 %v1302, %v1302
  %v1367 = vmul.f32 %v1303, %v1303
  %v1368 = vmul.f32 %v1304, %v1304
  %v1369 = vmul.f32 %v1305, %v1305
  %v1370 = vmul.f32 %v1306, %v1306
  %v1371 = vsel %vm1107, %v1307, 0.0
  %v1372 = vsel %vm1107, %v1308, 0.0
  %v1373 = vadd.f32 %v1371, %v1372
  %v1374 = vsel %vm1107, %v1309, 0.0
  %v1375 = vadd.f32 %v1373, %v1374
  %v1376 = vsel %vm1107, %v1310, 0.0
  %v1377 = vadd.f32 %v1375, %v1376
  %v1378 = vsel %vm1107, %v1311, 0.0
  %v1379 = vadd.f32 %v1377, %v1378
  %v1380 = vsel %vm1107, %v1312, 0.0
  %v1381 = vadd.f32 %v1379, %v1380
  %v1382 = vsel %vm1107, %v1313, 0.0
  %v1383 = vadd.f32 %v1381, %v1382
  %v1384 = vsel %vm1107, %v1314, 0.0
  %v1385 = vadd.f32 %v1383, %v1384
  %v1386 = vsel %vm1107, %v1315, 0.0
  %v1387 = vadd.f32 %v1385, %v1386
  %v1388 = vsel %vm1107, %v1316, 0.0
  %v1389 = vadd.f32 %v1387, %v1388
  %v1390 = vsel %vm1107, %v1317, 0.0
  %v1391 = vadd.f32 %v1389, %v1390
  %v1392 = vsel %vm1107, %v1318, 0.0
  %v1393 = vadd.f32 %v1391, %v1392
  %v1394 = vsel %vm1107, %v1319, 0.0
  %v1395 = vadd.f32 %v1393, %v1394
  %v1396 = vsel %vm1107, %v1320, 0.0
  %v1397 = vadd.f32 %v1395, %v1396
  %v1398 = vsel %vm1107, %v1321, 0.0
  %v1399 = vadd.f32 %v1397, %v1398
  %v1400 = vsel %vm1107, %v1322, 0.0
  %v1401 = vadd.f32 %v1399, %v1400
  %v1402 = vsel %vm1107, %v1323, 0.0
  %v1403 = vadd.f32 %v1401, %v1402
  %v1404 = vsel %vm1107, %v1324, 0.0
  %v1405 = vadd.f32 %v1403, %v1404
  %v1406 = vsel %vm1107, %v1325, 0.0
  %v1407 = vadd.f32 %v1405, %v1406
  %v1408 = vsel %vm1107, %v1326, 0.0
  %v1409 = vadd.f32 %v1407, %v1408
  %v1410 = vsel %vm1107, %v1327, 0.0
  %v1411 = vadd.f32 %v1409, %v1410
  %v1412 = vsel %vm1107, %v1328, 0.0
  %v1413 = vadd.f32 %v1411, %v1412
  %v1414 = vsel %vm1107, %v1329, 0.0
  %v1415 = vadd.f32 %v1413, %v1414
  %v1416 = vsel %vm1107, %v1330, 0.0
  %v1417 = vadd.f32 %v1415, %v1416
  %v1418 = vsel %vm1107, %v1331, 0.0
  %v1419 = vadd.f32 %v1417, %v1418
  %v1420 = vsel %vm1107, %v1332, 0.0
  %v1421 = vadd.f32 %v1419, %v1420
  %v1422 = vsel %vm1107, %v1333, 0.0
  %v1423 = vadd.f32 %v1421, %v1422
  %v1424 = vsel %vm1107, %v1334, 0.0
  %v1425 = vadd.f32 %v1423, %v1424
  %v1426 = vsel %vm1107, %v1335, 0.0
  %v1427 = vadd.f32 %v1425, %v1426
  %v1428 = vsel %vm1107, %v1336, 0.0
  %v1429 = vadd.f32 %v1427, %v1428
  %v1430 = vsel %vm1107, %v1337, 0.0
  %v1431 = vadd.f32 %v1429, %v1430
  %v1432 = vsel %vm1107, %v1338, 0.0
  %v1433 = vadd.f32 %v1431, %v1432
  %v1434 = vsel %vm1107, %v1339, 0.0
  %v1435 = vadd.f32 %v1433, %v1434
  %v1436 = vsel %vm1107, %v1340, 0.0
  %v1437 = vadd.f32 %v1435, %v1436
  %v1438 = vsel %vm1107, %v1341, 0.0
  %v1439 = vadd.f32 %v1437, %v1438
  %v1440 = vsel %vm1107, %v1342, 0.0
  %v1441 = vadd.f32 %v1439, %v1440
  %v1442 = vsel %vm1107, %v1343, 0.0
  %v1443 = vadd.f32 %v1441, %v1442
  %v1444 = vsel %vm1107, %v1344, 0.0
  %v1445 = vadd.f32 %v1443, %v1444
  %v1446 = vsel %vm1107, %v1345, 0.0
  %v1447 = vadd.f32 %v1445, %v1446
  %v1448 = vsel %vm1107, %v1346, 0.0
  %v1449 = vadd.f32 %v1447, %v1448
  %v1450 = vsel %vm1107, %v1347, 0.0
  %v1451 = vadd.f32 %v1449, %v1450
  %v1452 = vsel %vm1107, %v1348, 0.0
  %v1453 = vadd.f32 %v1451, %v1452
  %v1454 = vsel %vm1107, %v1349, 0.0
  %v1455 = vadd.f32 %v1453, %v1454
  %v1456 = vsel %vm1107, %v1350, 0.0
  %v1457 = vadd.f32 %v1455, %v1456
  %v1458 = vsel %vm1107, %v1351, 0.0
  %v1459 = vadd.f32 %v1457, %v1458
  %v1460 = vsel %vm1107, %v1352, 0.0
  %v1461 = vadd.f32 %v1459, %v1460
  %v1462 = vsel %vm1107, %v1353, 0.0
  %v1463 = vadd.f32 %v1461, %v1462
  %v1464 = vsel %vm1107, %v1354, 0.0
  %v1465 = vadd.f32 %v1463, %v1464
  %v1466 = vsel %vm1107, %v1355, 0.0
  %v1467 = vadd.f32 %v1465, %v1466
  %v1468 = vsel %vm1107, %v1356, 0.0
  %v1469 = vadd.f32 %v1467, %v1468
  %v1470 = vsel %vm1107, %v1357, 0.0
  %v1471 = vadd.f32 %v1469, %v1470
  %v1472 = vsel %vm1107, %v1358, 0.0
  %v1473 = vadd.f32 %v1471, %v1472
  %v1474 = vsel %vm1107, %v1359, 0.0
  %v1475 = vadd.f32 %v1473, %v1474
  %v1476 = vsel %vm1107, %v1360, 0.0
  %v1477 = vadd.f32 %v1475, %v1476
  %v1478 = vsel %vm1107, %v1361, 0.0
  %v1479 = vadd.f32 %v1477, %v1478
  %v1480 = vsel %vm1107, %v1362, 0.0
  %v1481 = vadd.f32 %v1479, %v1480
  %v1482 = vsel %vm1107, %v1363, 0.0
  %v1483 = vadd.f32 %v1481, %v1482
  %v1484 = vsel %vm1107, %v1364, 0.0
  %v1485 = vadd.f32 %v1483, %v1484
  %v1486 = vsel %vm1107, %v1365, 0.0
  %v1487 = vadd.f32 %v1485, %v1486
  %v1488 = vsel %vm1107, %v1366, 0.0
  %v1489 = vadd.f32 %v1487, %v1488
  %v1490 = vsel %vm1107, %v1367, 0.0
  %v1491 = vadd.f32 %v1489, %v1490
  %v1492 = vsel %vm1107, %v1368, 0.0
  %v1493 = vadd.f32 %v1491, %v1492
  %v1494 = vsel %vm1107, %v1369, 0.0
  %v1495 = vadd.f32 %v1493, %v1494
  %v1496 = vsel %vm1107, %v1370, 0.0
  %v1497 = vadd.f32 %v1495, %v1496
  %v1498 = vrot.slane %v1497, 4
  %v1499 = vadd.f32 %v1497, %v1498
  %v1500 = vrot.slane %v1499, 2
  %v1501 = vadd.f32 %v1499, %v1500
  %v1502 = vrot.slane %v1501, 1
  %v1503 = vadd.f32 %v1501, %v1502
  %v1504 = vmul.f32 %v1503, %v1241
  %v1505 = vadd.f32 %v1504, 1e-05
  %v1506 = vrsqrt.pop %v1505
  %v1507 = vld [vmem:[%s2] sm:$0x1]
  %v1508 = vmul.f32 %v1506, %v1507
  %v1509 = vlaneseq
  %v1510 = vshrl.u32 %v1509, 7
  %v1511 = vsub.s32 0, %v1510
  %v1512 = vrot.slane %v1508, %v1511
  %v1513 = vmul.f32 %v1243, %v1512
  %v1514 = vmul.f32 %v1244, %v1512
  %v1515 = vmul.f32 %v1245, %v1512
  %v1516 = vmul.f32 %v1246, %v1512
  %v1517 = vmul.f32 %v1247, %v1512
  %v1518 = vmul.f32 %v1248, %v1512
  %v1519 = vmul.f32 %v1249, %v1512
  %v1520 = vmul.f32 %v1250, %v1512
  %v1521 = vmul.f32 %v1251, %v1512
  %v1522 = vmul.f32 %v1252, %v1512
  %v1523 = vmul.f32 %v1253, %v1512
  %v1524 = vmul.f32 %v1254, %v1512
  %v1525 = vmul.f32 %v1255, %v1512
  %v1526 = vmul.f32 %v1256, %v1512
  %v1527 = vmul.f32 %v1257, %v1512
  %v1528 = vmul.f32 %v1258, %v1512
  %v1529 = vmul.f32 %v1259, %v1512
  %v1530 = vmul.f32 %v1260, %v1512
  %v1531 = vmul.f32 %v1261, %v1512
  %v1532 = vmul.f32 %v1262, %v1512
  %v1533 = vmul.f32 %v1263, %v1512
  %v1534 = vmul.f32 %v1264, %v1512
  %v1535 = vmul.f32 %v1265, %v1512
  %v1536 = vmul.f32 %v1266, %v1512
  %v1537 = vmul.f32 %v1267, %v1512
  %v1538 = vmul.f32 %v1268, %v1512
  %v1539 = vmul.f32 %v1269, %v1512
  %v1540 = vmul.f32 %v1270, %v1512
  %v1541 = vmul.f32 %v1271, %v1512
  %v1542 = vmul.f32 %v1272, %v1512
  %v1543 = vmul.f32 %v1273, %v1512
  %v1544 = vmul.f32 %v1274, %v1512
  %v1545 = vmul.f32 %v1275, %v1512
  %v1546 = vmul.f32 %v1276, %v1512
  %v1547 = vmul.f32 %v1277, %v1512
  %v1548 = vmul.f32 %v1278, %v1512
  %v1549 = vmul.f32 %v1279, %v1512
  %v1550 = vmul.f32 %v1280, %v1512
  %v1551 = vmul.f32 %v1281, %v1512
  %v1552 = vmul.f32 %v1282, %v1512
  %v1553 = vmul.f32 %v1283, %v1512
  %v1554 = vmul.f32 %v1284, %v1512
  %v1555 = vmul.f32 %v1285, %v1512
  %v1556 = vmul.f32 %v1286, %v1512
  %v1557 = vmul.f32 %v1287, %v1512
  %v1558 = vmul.f32 %v1288, %v1512
  %v1559 = vmul.f32 %v1289, %v1512
  %v1560 = vmul.f32 %v1290, %v1512
  %v1561 = vmul.f32 %v1291, %v1512
  %v1562 = vmul.f32 %v1292, %v1512
  %v1563 = vmul.f32 %v1293, %v1512
  %v1564 = vmul.f32 %v1294, %v1512
  %v1565 = vmul.f32 %v1295, %v1512
  %v1566 = vmul.f32 %v1296, %v1512
  %v1567 = vmul.f32 %v1297, %v1512
  %v1568 = vmul.f32 %v1298, %v1512
  %v1569 = vmul.f32 %v1299, %v1512
  %v1570 = vmul.f32 %v1300, %v1512
  %v1571 = vmul.f32 %v1301, %v1512
  %v1572 = vmul.f32 %v1302, %v1512
  %v1573 = vmul.f32 %v1303, %v1512
  %v1574 = vmul.f32 %v1304, %v1512
  %v1575 = vmul.f32 %v1305, %v1512
  %v1576 = vmul.f32 %v1306, %v1512
  %v1577 = vld [vmem:[%s3] sm:$0x1]
  %v1579 = vlaneseq
  %v1580 = vshrl.u32 %v1579, 7
  %v1581 = vsub.s32 0, %v1580
  %v1582 = vrot.slane %v1577, %v1581
  %v1584 = vadd.f32 %v1513, %v1582
  %v1585 = vadd.f32 %v1514, %v1582
  %v1586 = vadd.f32 %v1515, %v1582
  %v1587 = vadd.f32 %v1516, %v1582
  %v1588 = vadd.f32 %v1517, %v1582
  %v1589 = vadd.f32 %v1518, %v1582
  %v1590 = vadd.f32 %v1519, %v1582
  %v1591 = vadd.f32 %v1520, %v1582
  %v1592 = vadd.f32 %v1521, %v1582
  %v1593 = vadd.f32 %v1522, %v1582
  %v1594 = vadd.f32 %v1523, %v1582
  %v1595 = vadd.f32 %v1524, %v1582
  %v1596 = vadd.f32 %v1525, %v1582
  %v1597 = vadd.f32 %v1526, %v1582
  %v1598 = vadd.f32 %v1527, %v1582
  %v1599 = vadd.f32 %v1528, %v1582
  %v1600 = vadd.f32 %v1529, %v1582
  %v1601 = vadd.f32 %v1530, %v1582
  %v1602 = vadd.f32 %v1531, %v1582
  %v1603 = vadd.f32 %v1532, %v1582
  %v1604 = vadd.f32 %v1533, %v1582
  %v1605 = vadd.f32 %v1534, %v1582
  %v1606 = vadd.f32 %v1535, %v1582
  %v1607 = vadd.f32 %v1536, %v1582
  %v1608 = vadd.f32 %v1537, %v1582
  %v1609 = vadd.f32 %v1538, %v1582
  %v1610 = vadd.f32 %v1539, %v1582
  %v1611 = vadd.f32 %v1540, %v1582
  %v1612 = vadd.f32 %v1541, %v1582
  %v1613 = vadd.f32 %v1542, %v1582
  %v1614 = vadd.f32 %v1543, %v1582
  %v1615 = vadd.f32 %v1544, %v1582
  %v1616 = vadd.f32 %v1545, %v1582
  %v1617 = vadd.f32 %v1546, %v1582
  %v1618 = vadd.f32 %v1547, %v1582
  %v1619 = vadd.f32 %v1548, %v1582
  %v1620 = vadd.f32 %v1549, %v1582
  %v1621 = vadd.f32 %v1550, %v1582
  %v1622 = vadd.f32 %v1551, %v1582
  %v1623 = vadd.f32 %v1552, %v1582
  %v1624 = vadd.f32 %v1553, %v1582
  %v1625 = vadd.f32 %v1554, %v1582
  %v1626 = vadd.f32 %v1555, %v1582
  %v1627 = vadd.f32 %v1556, %v1582
  %v1628 = vadd.f32 %v1557, %v1582
  %v1629 = vadd.f32 %v1558, %v1582
  %v1630 = vadd.f32 %v1559, %v1582
  %v1631 = vadd.f32 %v1560, %v1582
  %v1632 = vadd.f32 %v1561, %v1582
  %v1633 = vadd.f32 %v1562, %v1582
  %v1634 = vadd.f32 %v1563, %v1582
  %v1635 = vadd.f32 %v1564, %v1582
  %v1636 = vadd.f32 %v1565, %v1582
  %v1637 = vadd.f32 %v1566, %v1582
  %v1638 = vadd.f32 %v1567, %v1582
  %v1639 = vadd.f32 %v1568, %v1582
  %v1640 = vadd.f32 %v1569, %v1582
  %v1641 = vadd.f32 %v1570, %v1582
  %v1642 = vadd.f32 %v1571, %v1582
  %v1643 = vadd.f32 %v1572, %v1582
  %v1644 = vadd.f32 %v1573, %v1582
  %v1645 = vadd.f32 %v1574, %v1582
  %v1646 = vadd.f32 %v1575, %v1582
  %v1647 = vadd.f32 %v1576, %v1582
  %v1648 = vmax.f32 %v1584, 0.0
  %v1649 = vmax.f32 %v1585, 0.0
  %v1650 = vmax.f32 %v1586, 0.0
  %v1651 = vmax.f32 %v1587, 0.0
  %v1652 = vmax.f32 %v1588, 0.0
  %v1653 = vmax.f32 %v1589, 0.0
  %v1654 = vmax.f32 %v1590, 0.0
  %v1655 = vmax.f32 %v1591, 0.0
  %v1656 = vmax.f32 %v1592, 0.0
  %v1657 = vmax.f32 %v1593, 0.0
  %v1658 = vmax.f32 %v1594, 0.0
  %v1659 = vmax.f32 %v1595, 0.0
  %v1660 = vmax.f32 %v1596, 0.0
  %v1661 = vmax.f32 %v1597, 0.0
  %v1662 = vmax.f32 %v1598, 0.0
  %v1663 = vmax.f32 %v1599, 0.0
  %v1664 = vmax.f32 %v1600, 0.0
  %v1665 = vmax.f32 %v1601, 0.0
  %v1666 = vmax.f32 %v1602, 0.0
  %v1667 = vmax.f32 %v1603, 0.0
  %v1668 = vmax.f32 %v1604, 0.0
  %v1669 = vmax.f32 %v1605, 0.0
  %v1670 = vmax.f32 %v1606, 0.0
  %v1671 = vmax.f32 %v1607, 0.0
  %v1672 = vmax.f32 %v1608, 0.0
  %v1673 = vmax.f32 %v1609, 0.0
  %v1674 = vmax.f32 %v1610, 0.0
  %v1675 = vmax.f32 %v1611, 0.0
  %v1676 = vmax.f32 %v1612, 0.0
  %v1677 = vmax.f32 %v1613, 0.0
  %v1678 = vmax.f32 %v1614, 0.0
  %v1679 = vmax.f32 %v1615, 0.0
  %v1680 = vmax.f32 %v1616, 0.0
  %v1681 = vmax.f32 %v1617, 0.0
  %v1682 = vmax.f32 %v1618, 0.0
  %v1683 = vmax.f32 %v1619, 0.0
  %v1684 = vmax.f32 %v1620, 0.0
  %v1685 = vmax.f32 %v1621, 0.0
  %v1686 = vmax.f32 %v1622, 0.0
  %v1687 = vmax.f32 %v1623, 0.0
  %v1688 = vmax.f32 %v1624, 0.0
  %v1689 = vmax.f32 %v1625, 0.0
  %v1690 = vmax.f32 %v1626, 0.0
  %v1691 = vmax.f32 %v1627, 0.0
  %v1692 = vmax.f32 %v1628, 0.0
  %v1693 = vmax.f32 %v1629, 0.0
  %v1694 = vmax.f32 %v1630, 0.0
  %v1695 = vmax.f32 %v1631, 0.0
  %v1696 = vmax.f32 %v1632, 0.0
  %v1697 = vmax.f32 %v1633, 0.0
  %v1698 = vmax.f32 %v1634, 0.0
  %v1699 = vmax.f32 %v1635, 0.0
  %v1700 = vmax.f32 %v1636, 0.0
  %v1701 = vmax.f32 %v1637, 0.0
  %v1702 = vmax.f32 %v1638, 0.0
  %v1703 = vmax.f32 %v1639, 0.0
  %v1704 = vmax.f32 %v1640, 0.0
  %v1705 = vmax.f32 %v1641, 0.0
  %v1706 = vmax.f32 %v1642, 0.0
  %v1707 = vmax.f32 %v1643, 0.0
  %v1708 = vmax.f32 %v1644, 0.0
  %v1709 = vmax.f32 %v1645, 0.0
  %v1710 = vmax.f32 %v1646, 0.0
  %v1711 = vmax.f32 %v1647, 0.0
  %1712 = vst.msk [vmem:[%s4] sm:$0xff] %vm1107, %v1648
  %1713 = vst.msk [vmem:[%s4 + $0x8] sm:$0xff] %vm1107, %v1649
  %1714 = vst.msk [vmem:[%s4 + $0x10] sm:$0xff] %vm1107, %v1650
  %1715 = vst.msk [vmem:[%s4 + $0x18] sm:$0xff] %vm1107, %v1651
  %1716 = vst.msk [vmem:[%s4 + $0x20] sm:$0xff] %vm1107, %v1652
  %1717 = vst.msk [vmem:[%s4 + $0x28] sm:$0xff] %vm1107, %v1653
  %1718 = vst.msk [vmem:[%s4 + $0x30] sm:$0xff] %vm1107, %v1654
  %1719 = vst.msk [vmem:[%s4 + $0x38] sm:$0xff] %vm1107, %v1655
  %1720 = vst.msk [vmem:[%s4 + $0x40] sm:$0xff] %vm1107, %v1656
  %1721 = vst.msk [vmem:[%s4 + $0x48] sm:$0xff] %vm1107, %v1657
  %1722 = vst.msk [vmem:[%s4 + $0x50] sm:$0xff] %vm1107, %v1658
  %1723 = vst.msk [vmem:[%s4 + $0x58] sm:$0xff] %vm1107, %v1659
  %1724 = vst.msk [vmem:[%s4 + $0x60] sm:$0xff] %vm1107, %v1660
  %1725 = vst.msk [vmem:[%s4 + $0x68] sm:$0xff] %vm1107, %v1661
  %1726 = vst.msk [vmem:[%s4 + $0x70] sm:$0xff] %vm1107, %v1662
  %1727 = vst.msk [vmem:[%s4 + $0x78] sm:$0xff] %vm1107, %v1663
  %1728 = vst.msk [vmem:[%s4 + $0x80] sm:$0xff] %vm1107, %v1664
  %1729 = vst.msk [vmem:[%s4 + $0x88] sm:$0xff] %vm1107, %v1665
  %1730 = vst.msk [vmem:[%s4 + $0x90] sm:$0xff] %vm1107, %v1666
  %1731 = vst.msk [vmem:[%s4 + $0x98] sm:$0xff] %vm1107, %v1667
  %1732 = vst.msk [vmem:[%s4 + $0xa0] sm:$0xff] %vm1107, %v1668
  %1733 = vst.msk [vmem:[%s4 + $0xa8] sm:$0xff] %vm1107, %v1669
  %1734 = vst.msk [vmem:[%s4 + $0xb0] sm:$0xff] %vm1107, %v1670
  %1735 = vst.msk [vmem:[%s4 + $0xb8] sm:$0xff] %vm1107, %v1671
  %1736 = vst.msk [vmem:[%s4 + $0xc0] sm:$0xff] %vm1107, %v1672
  %1737 = vst.msk [vmem:[%s4 + $0xc8] sm:$0xff] %vm1107, %v1673
  %1738 = vst.msk [vmem:[%s4 + $0xd0] sm:$0xff] %vm1107, %v1674
  %1739 = vst.msk [vmem:[%s4 + $0xd8] sm:$0xff] %vm1107, %v1675
  %1740 = vst.msk [vmem:[%s4 + $0xe0] sm:$0xff] %vm1107, %v1676
  %1741 = vst.msk [vmem:[%s4 + $0xe8] sm:$0xff] %vm1107, %v1677
  %1742 = vst.msk [vmem:[%s4 + $0xf0] sm:$0xff] %vm1107, %v1678
  %1743 = vst.msk [vmem:[%s4 + $0xf8] sm:$0xff] %vm1107, %v1679
  %1744 = vst.msk [vmem:[%s4 + $0x100] sm:$0xff] %vm1107, %v1680
  %1745 = vst.msk [vmem:[%s4 + $0x108] sm:$0xff] %vm1107, %v1681
  %1746 = vst.msk [vmem:[%s4 + $0x110] sm:$0xff] %vm1107, %v1682
  %1747 = vst.msk [vmem:[%s4 + $0x118] sm:$0xff] %vm1107, %v1683
  %1748 = vst.msk [vmem:[%s4 + $0x120] sm:$0xff] %vm1107, %v1684
  %1749 = vst.msk [vmem:[%s4 + $0x128] sm:$0xff] %vm1107, %v1685
  %1750 = vst.msk [vmem:[%s4 + $0x130] sm:$0xff] %vm1107, %v1686
  %1751 = vst.msk [vmem:[%s4 + $0x138] sm:$0xff] %vm1107, %v1687
  %1752 = vst.msk [vmem:[%s4 + $0x140] sm:$0xff] %vm1107, %v1688
  %1753 = vst.msk [vmem:[%s4 + $0x148] sm:$0xff] %vm1107, %v1689
  %1754 = vst.msk [vmem:[%s4 + $0x150] sm:$0xff] %vm1107, %v1690
  %1755 = vst.msk [vmem:[%s4 + $0x158] sm:$0xff] %vm1107, %v1691
  %1756 = vst.msk [vmem:[%s4 + $0x160] sm:$0xff] %vm1107, %v1692
  %1757 = vst.msk [vmem:[%s4 + $0x168] sm:$0xff] %vm1107, %v1693
  %1758 = vst.msk [vmem:[%s4 + $0x170] sm:$0xff] %vm1107, %v1694
  %1759 = vst.msk [vmem:[%s4 + $0x178] sm:$0xff] %vm1107, %v1695
  %1760 = vst.msk [vmem:[%s4 + $0x180] sm:$0xff] %vm1107, %v1696
  %1761 = vst.msk [vmem:[%s4 + $0x188] sm:$0xff] %vm1107, %v1697
  %1762 = vst.msk [vmem:[%s4 + $0x190] sm:$0xff] %vm1107, %v1698
  %1763 = vst.msk [vmem:[%s4 + $0x198] sm:$0xff] %vm1107, %v1699
  %1764 = vst.msk [vmem:[%s4 + $0x1a0] sm:$0xff] %vm1107, %v1700
  %1765 = vst.msk [vmem:[%s4 + $0x1a8] sm:$0xff] %vm1107, %v1701
  %1766 = vst.msk [vmem:[%s4 + $0x1b0] sm:$0xff] %vm1107, %v1702
  %1767 = vst.msk [vmem:[%s4 + $0x1b8] sm:$0xff] %vm1107, %v1703
  %1768 = vst.msk [vmem:[%s4 + $0x1c0] sm:$0xff] %vm1107, %v1704
  %1769 = vst.msk [vmem:[%s4 + $0x1c8] sm:$0xff] %vm1107, %v1705
  %1770 = vst.msk [vmem:[%s4 + $0x1d0] sm:$0xff] %vm1107, %v1706
  %1771 = vst.msk [vmem:[%s4 + $0x1d8] sm:$0xff] %vm1107, %v1707
  %1772 = vst.msk [vmem:[%s4 + $0x1e0] sm:$0xff] %vm1107, %v1708
  %1773 = vst.msk [vmem:[%s4 + $0x1e8] sm:$0xff] %vm1107, %v1709
  %1774 = vst.msk [vmem:[%s4 + $0x1f0] sm:$0xff] %vm1107, %v1710
  %1775 = vst.msk [vmem:[%s4 + $0x1f8] sm:$0xff] %vm1107, %v1711
  // Predicated region
  $region18: #{generator_forward.7} parent=0 // pred_check
    _
  $region19: #{generator_forward.7} parent=0 // pred_check_branch
    %1777 = sbr.rel (0) target = $region21
  $region20: #{generator_forward.7} parent=0 // pred_region
    _
  $region21: #{generator_forward.7} parent=0 // pred_fallthru
    _
  // Predicated region
  $region22: #{generator_forward.7} parent=0 // pred_check
    _
  $region23: #{generator_forward.7} parent=0 // pred_check_branch
    %1779 = sbr.rel (0) target = $region25
  $region24: #{generator_forward.7} parent=0 // pred_region
    _
  $region25: #{generator_forward.7} parent=0 // pred_fallthru
    _

// kernel: generator_forward.8
$region0: #{generator_forward.8}
  #allocation0 [shape = 'u32[]', space=smem, size = 0x4, offset = 0x4, fixed_abs, tag = 'smem constant byte address 0x4 - core index']
  #allocation1 [shape = 'u32[144,128]{1,0:T(1,128)}', space=vmem, size = 0x12000, scoped, tag = 'internal scratch']
  %s0 = inlined_call_operand.vmem [shape: f32[2048,256], index: 0, kind: input, shape index: {}]
  %s1 = inlined_call_operand.vmem [shape: f32[256,8], index: 1, kind: input, shape index: {}]
  %s2 = inlined_call_operand.vmem [shape: f32[1,8], index: 2, kind: input, shape index: {}]
  %s3 = inlined_call_operand.vmem [shape: f32[1,8], index: 3, kind: input, shape index: {}]
  %s4 = inlined_call_operand.vmem [shape: f32[2048,8], index: 4, kind: output, shape index: {}]
  %s5 = sld [smem:[#allocation0]]
  $region26: #{generator_forward.8} parent=0
    _
  %s7 = ssub.s32 1, %s5
  %s8 = scalar_select 0, %s7, %s5
  // Predicated region
  $region2: #{generator_forward.8} parent=0 // pred_check
    _
  $region3: #{generator_forward.8} parent=0 // pred_check_branch
    %10 = sbr.rel (0) target = $region5
  $region4: #{generator_forward.8} parent=0 // pred_region
    _
  $region5: #{generator_forward.8} parent=0 // pred_fallthru
    _
  // Predicated region
  $region6: #{generator_forward.8} parent=0 // pred_check
    _
  $region7: #{generator_forward.8} parent=0 // pred_check_branch
    %12 = sbr.rel (0) target = $region9
  $region8: #{generator_forward.8} parent=0 // pred_region
    _
  $region9: #{generator_forward.8} parent=0 // pred_fallthru
    _
  // Predicated region
  $region10: #{generator_forward.8} parent=0 // pred_check
    _
  $region11: #{generator_forward.8} parent=0 // pred_check_branch
    %14 = sbr.rel (0) target = $region13
  $region12: #{generator_forward.8} parent=0 // pred_region
    _
  $region13: #{generator_forward.8} parent=0 // pred_fallthru
    _
  // Predicated region
  $region14: #{generator_forward.8} parent=0 // pred_check
    _
  $region15: #{generator_forward.8} parent=0 // pred_check_branch
    %16 = sbr.rel (0) target = $region17
  $region16: #{generator_forward.8} parent=0 // pred_region
    _
  $region17: #{generator_forward.8} parent=0 // pred_fallthru
    _
  %v17 = vld [vmem:[%s0] sm:$0xff]
  %v18 = vld [vmem:[%s0 + $0x8] sm:$0xff]
  %v19 = vld [vmem:[%s0 + $0x10] sm:$0xff]
  %v20 = vld [vmem:[%s0 + $0x18] sm:$0xff]
  %v21 = vld [vmem:[%s0 + $0x20] sm:$0xff]
  %v22 = vld [vmem:[%s0 + $0x28] sm:$0xff]
  %v23 = vld [vmem:[%s0 + $0x30] sm:$0xff]
  %v24 = vld [vmem:[%s0 + $0x38] sm:$0xff]
  %v25 = vld [vmem:[%s0 + $0x40] sm:$0xff]
  %v26 = vld [vmem:[%s0 + $0x48] sm:$0xff]
  %v27 = vld [vmem:[%s0 + $0x50] sm:$0xff]
  %v28 = vld [vmem:[%s0 + $0x58] sm:$0xff]
  %v29 = vld [vmem:[%s0 + $0x60] sm:$0xff]
  %v30 = vld [vmem:[%s0 + $0x68] sm:$0xff]
  %v31 = vld [vmem:[%s0 + $0x70] sm:$0xff]
  %v32 = vld [vmem:[%s0 + $0x78] sm:$0xff]
  %v33 = vld [vmem:[%s0 + $0x80] sm:$0xff]
  %v34 = vld [vmem:[%s0 + $0x88] sm:$0xff]
  %v35 = vld [vmem:[%s0 + $0x90] sm:$0xff]
  %v36 = vld [vmem:[%s0 + $0x98] sm:$0xff]
  %v37 = vld [vmem:[%s0 + $0xa0] sm:$0xff]
  %v38 = vld [vmem:[%s0 + $0xa8] sm:$0xff]
  %v39 = vld [vmem:[%s0 + $0xb0] sm:$0xff]
  %v40 = vld [vmem:[%s0 + $0xb8] sm:$0xff]
  %v41 = vld [vmem:[%s0 + $0xc0] sm:$0xff]
  %v42 = vld [vmem:[%s0 + $0xc8] sm:$0xff]
  %v43 = vld [vmem:[%s0 + $0xd0] sm:$0xff]
  %v44 = vld [vmem:[%s0 + $0xd8] sm:$0xff]
  %v45 = vld [vmem:[%s0 + $0xe0] sm:$0xff]
  %v46 = vld [vmem:[%s0 + $0xe8] sm:$0xff]
  %v47 = vld [vmem:[%s0 + $0xf0] sm:$0xff]
  %v48 = vld [vmem:[%s0 + $0xf8] sm:$0xff]
  %v49 = vld [vmem:[%s0 + $0x100] sm:$0xff]
  %v50 = vld [vmem:[%s0 + $0x108] sm:$0xff]
  %v51 = vld [vmem:[%s0 + $0x110] sm:$0xff]
  %v52 = vld [vmem:[%s0 + $0x118] sm:$0xff]
  %v53 = vld [vmem:[%s0 + $0x120] sm:$0xff]
  %v54 = vld [vmem:[%s0 + $0x128] sm:$0xff]
  %v55 = vld [vmem:[%s0 + $0x130] sm:$0xff]
  %v56 = vld [vmem:[%s0 + $0x138] sm:$0xff]
  %v57 = vld [vmem:[%s0 + $0x140] sm:$0xff]
  %v58 = vld [vmem:[%s0 + $0x148] sm:$0xff]
  %v59 = vld [vmem:[%s0 + $0x150] sm:$0xff]
  %v60 = vld [vmem:[%s0 + $0x158] sm:$0xff]
  %v61 = vld [vmem:[%s0 + $0x160] sm:$0xff]
  %v62 = vld [vmem:[%s0 + $0x168] sm:$0xff]
  %v63 = vld [vmem:[%s0 + $0x170] sm:$0xff]
  %v64 = vld [vmem:[%s0 + $0x178] sm:$0xff]
  %v65 = vld [vmem:[%s0 + $0x180] sm:$0xff]
  %v66 = vld [vmem:[%s0 + $0x188] sm:$0xff]
  %v67 = vld [vmem:[%s0 + $0x190] sm:$0xff]
  %v68 = vld [vmem:[%s0 + $0x198] sm:$0xff]
  %v69 = vld [vmem:[%s0 + $0x1a0] sm:$0xff]
  %v70 = vld [vmem:[%s0 + $0x1a8] sm:$0xff]
  %v71 = vld [vmem:[%s0 + $0x1b0] sm:$0xff]
  %v72 = vld [vmem:[%s0 + $0x1b8] sm:$0xff]
  %v73 = vld [vmem:[%s0 + $0x1c0] sm:$0xff]
  %v74 = vld [vmem:[%s0 + $0x1c8] sm:$0xff]
  %v75 = vld [vmem:[%s0 + $0x1d0] sm:$0xff]
  %v76 = vld [vmem:[%s0 + $0x1d8] sm:$0xff]
  %v77 = vld [vmem:[%s0 + $0x1e0] sm:$0xff]
  %v78 = vld [vmem:[%s0 + $0x1e8] sm:$0xff]
  %v79 = vld [vmem:[%s0 + $0x1f0] sm:$0xff]
  %v80 = vld [vmem:[%s0 + $0x1f8] sm:$0xff]
  %v81 = vld [vmem:[%s0 + $0x200] sm:$0xff]
  %v82 = vld [vmem:[%s0 + $0x208] sm:$0xff]
  %v83 = vld [vmem:[%s0 + $0x210] sm:$0xff]
  %v84 = vld [vmem:[%s0 + $0x218] sm:$0xff]
  %v85 = vld [vmem:[%s0 + $0x220] sm:$0xff]
  %v86 = vld [vmem:[%s0 + $0x228] sm:$0xff]
  %v87 = vld [vmem:[%s0 + $0x230] sm:$0xff]
  %v88 = vld [vmem:[%s0 + $0x238] sm:$0xff]
  %v89 = vld [vmem:[%s0 + $0x240] sm:$0xff]
  %v90 = vld [vmem:[%s0 + $0x248] sm:$0xff]
  %v91 = vld [vmem:[%s0 + $0x250] sm:$0xff]
  %v92 = vld [vmem:[%s0 + $0x258] sm:$0xff]
  %v93 = vld [vmem:[%s0 + $0x260] sm:$0xff]
  %v94 = vld [vmem:[%s0 + $0x268] sm:$0xff]
  %v95 = vld [vmem:[%s0 + $0x270] sm:$0xff]
  %v96 = vld [vmem:[%s0 + $0x278] sm:$0xff]
  %v97 = vld [vmem:[%s0 + $0x280] sm:$0xff]
  %v98 = vld [vmem:[%s0 + $0x288] sm:$0xff]
  %v99 = vld [vmem:[%s0 + $0x290] sm:$0xff]
  %v100 = vld [vmem:[%s0 + $0x298] sm:$0xff]
  %v101 = vld [vmem:[%s0 + $0x2a0] sm:$0xff]
  %v102 = vld [vmem:[%s0 + $0x2a8] sm:$0xff]
  %v103 = vld [vmem:[%s0 + $0x2b0] sm:$0xff]
  %v104 = vld [vmem:[%s0 + $0x2b8] sm:$0xff]
  %v105 = vld [vmem:[%s0 + $0x2c0] sm:$0xff]
  %v106 = vld [vmem:[%s0 + $0x2c8] sm:$0xff]
  %v107 = vld [vmem:[%s0 + $0x2d0] sm:$0xff]
  %v108 = vld [vmem:[%s0 + $0x2d8] sm:$0xff]
  %v109 = vld [vmem:[%s0 + $0x2e0] sm:$0xff]
  %v110 = vld [vmem:[%s0 + $0x2e8] sm:$0xff]
  %v111 = vld [vmem:[%s0 + $0x2f0] sm:$0xff]
  %v112 = vld [vmem:[%s0 + $0x2f8] sm:$0xff]
  %v113 = vld [vmem:[%s0 + $0x300] sm:$0xff]
  %v114 = vld [vmem:[%s0 + $0x308] sm:$0xff]
  %v115 = vld [vmem:[%s0 + $0x310] sm:$0xff]
  %v116 = vld [vmem:[%s0 + $0x318] sm:$0xff]
  %v117 = vld [vmem:[%s0 + $0x320] sm:$0xff]
  %v118 = vld [vmem:[%s0 + $0x328] sm:$0xff]
  %v119 = vld [vmem:[%s0 + $0x330] sm:$0xff]
  %v120 = vld [vmem:[%s0 + $0x338] sm:$0xff]
  %v121 = vld [vmem:[%s0 + $0x340] sm:$0xff]
  %v122 = vld [vmem:[%s0 + $0x348] sm:$0xff]
  %v123 = vld [vmem:[%s0 + $0x350] sm:$0xff]
  %v124 = vld [vmem:[%s0 + $0x358] sm:$0xff]
  %v125 = vld [vmem:[%s0 + $0x360] sm:$0xff]
  %v126 = vld [vmem:[%s0 + $0x368] sm:$0xff]
  %v127 = vld [vmem:[%s0 + $0x370] sm:$0xff]
  %v128 = vld [vmem:[%s0 + $0x378] sm:$0xff]
  %v129 = vld [vmem:[%s0 + $0x380] sm:$0xff]
  %v130 = vld [vmem:[%s0 + $0x388] sm:$0xff]
  %v131 = vld [vmem:[%s0 + $0x390] sm:$0xff]
  %v132 = vld [vmem:[%s0 + $0x398] sm:$0xff]
  %v133 = vld [vmem:[%s0 + $0x3a0] sm:$0xff]
  %v134 = vld [vmem:[%s0 + $0x3a8] sm:$0xff]
  %v135 = vld [vmem:[%s0 + $0x3b0] sm:$0xff]
  %v136 = vld [vmem:[%s0 + $0x3b8] sm:$0xff]
  %v137 = vld [vmem:[%s0 + $0x3c0] sm:$0xff]
  %v138 = vld [vmem:[%s0 + $0x3c8] sm:$0xff]
  %v139 = vld [vmem:[%s0 + $0x3d0] sm:$0xff]
  %v140 = vld [vmem:[%s0 + $0x3d8] sm:$0xff]
  %v141 = vld [vmem:[%s0 + $0x3e0] sm:$0xff]
  %v142 = vld [vmem:[%s0 + $0x3e8] sm:$0xff]
  %v143 = vld [vmem:[%s0 + $0x3f0] sm:$0xff]
  %v144 = vld [vmem:[%s0 + $0x3f8] sm:$0xff]
  %v145 = vld [vmem:[%s0 + $0x400] sm:$0xff]
  %v146 = vld [vmem:[%s0 + $0x408] sm:$0xff]
  %v147 = vld [vmem:[%s0 + $0x410] sm:$0xff]
  %v148 = vld [vmem:[%s0 + $0x418] sm:$0xff]
  %v149 = vld [vmem:[%s0 + $0x420] sm:$0xff]
  %v150 = vld [vmem:[%s0 + $0x428] sm:$0xff]
  %v151 = vld [vmem:[%s0 + $0x430] sm:$0xff]
  %v152 = vld [vmem:[%s0 + $0x438] sm:$0xff]
  %v153 = vld [vmem:[%s0 + $0x440] sm:$0xff]
  %v154 = vld [vmem:[%s0 + $0x448] sm:$0xff]
  %v155 = vld [vmem:[%s0 + $0x450] sm:$0xff]
  %v156 = vld [vmem:[%s0 + $0x458] sm:$0xff]
  %v157 = vld [vmem:[%s0 + $0x460] sm:$0xff]
  %v158 = vld [vmem:[%s0 + $0x468] sm:$0xff]
  %v159 = vld [vmem:[%s0 + $0x470] sm:$0xff]
  %v160 = vld [vmem:[%s0 + $0x478] sm:$0xff]
  %v161 = vld [vmem:[%s0 + $0x480] sm:$0xff]
  %v162 = vld [vmem:[%s0 + $0x488] sm:$0xff]
  %v163 = vld [vmem:[%s0 + $0x490] sm:$0xff]
  %v164 = vld [vmem:[%s0 + $0x498] sm:$0xff]
  %v165 = vld [vmem:[%s0 + $0x4a0] sm:$0xff]
  %v166 = vld [vmem:[%s0 + $0x4a8] sm:$0xff]
  %v167 = vld [vmem:[%s0 + $0x4b0] sm:$0xff]
  %v168 = vld [vmem:[%s0 + $0x4b8] sm:$0xff]
  %v169 = vld [vmem:[%s0 + $0x4c0] sm:$0xff]
  %v170 = vld [vmem:[%s0 + $0x4c8] sm:$0xff]
  %v171 = vld [vmem:[%s0 + $0x4d0] sm:$0xff]
  %v172 = vld [vmem:[%s0 + $0x4d8] sm:$0xff]
  %v173 = vld [vmem:[%s0 + $0x4e0] sm:$0xff]
  %v174 = vld [vmem:[%s0 + $0x4e8] sm:$0xff]
  %v175 = vld [vmem:[%s0 + $0x4f0] sm:$0xff]
  %v176 = vld [vmem:[%s0 + $0x4f8] sm:$0xff]
  %v177 = vld [vmem:[%s0 + $0x500] sm:$0xff]
  %v178 = vld [vmem:[%s0 + $0x508] sm:$0xff]
  %v179 = vld [vmem:[%s0 + $0x510] sm:$0xff]
  %v180 = vld [vmem:[%s0 + $0x518] sm:$0xff]
  %v181 = vld [vmem:[%s0 + $0x520] sm:$0xff]
  %v182 = vld [vmem:[%s0 + $0x528] sm:$0xff]
  %v183 = vld [vmem:[%s0 + $0x530] sm:$0xff]
  %v184 = vld [vmem:[%s0 + $0x538] sm:$0xff]
  %v185 = vld [vmem:[%s0 + $0x540] sm:$0xff]
  %v186 = vld [vmem:[%s0 + $0x548] sm:$0xff]
  %v187 = vld [vmem:[%s0 + $0x550] sm:$0xff]
  %v188 = vld [vmem:[%s0 + $0x558] sm:$0xff]
  %v189 = vld [vmem:[%s0 + $0x560] sm:$0xff]
  %v190 = vld [vmem:[%s0 + $0x568] sm:$0xff]
  %v191 = vld [vmem:[%s0 + $0x570] sm:$0xff]
  %v192 = vld [vmem:[%s0 + $0x578] sm:$0xff]
  %v193 = vld [vmem:[%s0 + $0x580] sm:$0xff]
  %v194 = vld [vmem:[%s0 + $0x588] sm:$0xff]
  %v195 = vld [vmem:[%s0 + $0x590] sm:$0xff]
  %v196 = vld [vmem:[%s0 + $0x598] sm:$0xff]
  %v197 = vld [vmem:[%s0 + $0x5a0] sm:$0xff]
  %v198 = vld [vmem:[%s0 + $0x5a8] sm:$0xff]
  %v199 = vld [vmem:[%s0 + $0x5b0] sm:$0xff]
  %v200 = vld [vmem:[%s0 + $0x5b8] sm:$0xff]
  %v201 = vld [vmem:[%s0 + $0x5c0] sm:$0xff]
  %v202 = vld [vmem:[%s0 + $0x5c8] sm:$0xff]
  %v203 = vld [vmem:[%s0 + $0x5d0] sm:$0xff]
  %v204 = vld [vmem:[%s0 + $0x5d8] sm:$0xff]
  %v205 = vld [vmem:[%s0 + $0x5e0] sm:$0xff]
  %v206 = vld [vmem:[%s0 + $0x5e8] sm:$0xff]
  %v207 = vld [vmem:[%s0 + $0x5f0] sm:$0xff]
  %v208 = vld [vmem:[%s0 + $0x5f8] sm:$0xff]
  %v209 = vld [vmem:[%s0 + $0x600] sm:$0xff]
  %v210 = vld [vmem:[%s0 + $0x608] sm:$0xff]
  %v211 = vld [vmem:[%s0 + $0x610] sm:$0xff]
  %v212 = vld [vmem:[%s0 + $0x618] sm:$0xff]
  %v213 = vld [vmem:[%s0 + $0x620] sm:$0xff]
  %v214 = vld [vmem:[%s0 + $0x628] sm:$0xff]
  %v215 = vld [vmem:[%s0 + $0x630] sm:$0xff]
  %v216 = vld [vmem:[%s0 + $0x638] sm:$0xff]
  %v217 = vld [vmem:[%s0 + $0x640] sm:$0xff]
  %v218 = vld [vmem:[%s0 + $0x648] sm:$0xff]
  %v219 = vld [vmem:[%s0 + $0x650] sm:$0xff]
  %v220 = vld [vmem:[%s0 + $0x658] sm:$0xff]
  %v221 = vld [vmem:[%s0 + $0x660] sm:$0xff]
  %v222 = vld [vmem:[%s0 + $0x668] sm:$0xff]
  %v223 = vld [vmem:[%s0 + $0x670] sm:$0xff]
  %v224 = vld [vmem:[%s0 + $0x678] sm:$0xff]
  %v225 = vld [vmem:[%s0 + $0x680] sm:$0xff]
  %v226 = vld [vmem:[%s0 + $0x688] sm:$0xff]
  %v227 = vld [vmem:[%s0 + $0x690] sm:$0xff]
  %v228 = vld [vmem:[%s0 + $0x698] sm:$0xff]
  %v229 = vld [vmem:[%s0 + $0x6a0] sm:$0xff]
  %v230 = vld [vmem:[%s0 + $0x6a8] sm:$0xff]
  %v231 = vld [vmem:[%s0 + $0x6b0] sm:$0xff]
  %v232 = vld [vmem:[%s0 + $0x6b8] sm:$0xff]
  %v233 = vld [vmem:[%s0 + $0x6c0] sm:$0xff]
  %v234 = vld [vmem:[%s0 + $0x6c8] sm:$0xff]
  %v235 = vld [vmem:[%s0 + $0x6d0] sm:$0xff]
  %v236 = vld [vmem:[%s0 + $0x6d8] sm:$0xff]
  %v237 = vld [vmem:[%s0 + $0x6e0] sm:$0xff]
  %v238 = vld [vmem:[%s0 + $0x6e8] sm:$0xff]
  %v239 = vld [vmem:[%s0 + $0x6f0] sm:$0xff]
  %v240 = vld [vmem:[%s0 + $0x6f8] sm:$0xff]
  %v241 = vld [vmem:[%s0 + $0x700] sm:$0xff]
  %v242 = vld [vmem:[%s0 + $0x708] sm:$0xff]
  %v243 = vld [vmem:[%s0 + $0x710] sm:$0xff]
  %v244 = vld [vmem:[%s0 + $0x718] sm:$0xff]
  %v245 = vld [vmem:[%s0 + $0x720] sm:$0xff]
  %v246 = vld [vmem:[%s0 + $0x728] sm:$0xff]
  %v247 = vld [vmem:[%s0 + $0x730] sm:$0xff]
  %v248 = vld [vmem:[%s0 + $0x738] sm:$0xff]
  %v249 = vld [vmem:[%s0 + $0x740] sm:$0xff]
  %v250 = vld [vmem:[%s0 + $0x748] sm:$0xff]
  %v251 = vld [vmem:[%s0 + $0x750] sm:$0xff]
  %v252 = vld [vmem:[%s0 + $0x758] sm:$0xff]
  %v253 = vld [vmem:[%s0 + $0x760] sm:$0xff]
  %v254 = vld [vmem:[%s0 + $0x768] sm:$0xff]
  %v255 = vld [vmem:[%s0 + $0x770] sm:$0xff]
  %v256 = vld [vmem:[%s0 + $0x778] sm:$0xff]
  %v257 = vld [vmem:[%s0 + $0x780] sm:$0xff]
  %v258 = vld [vmem:[%s0 + $0x788] sm:$0xff]
  %v259 = vld [vmem:[%s0 + $0x790] sm:$0xff]
  %v260 = vld [vmem:[%s0 + $0x798] sm:$0xff]
  %v261 = vld [vmem:[%s0 + $0x7a0] sm:$0xff]
  %v262 = vld [vmem:[%s0 + $0x7a8] sm:$0xff]
  %v263 = vld [vmem:[%s0 + $0x7b0] sm:$0xff]
  %v264 = vld [vmem:[%s0 + $0x7b8] sm:$0xff]
  %v265 = vld [vmem:[%s0 + $0x7c0] sm:$0xff]
  %v266 = vld [vmem:[%s0 + $0x7c8] sm:$0xff]
  %v267 = vld [vmem:[%s0 + $0x7d0] sm:$0xff]
  %v268 = vld [vmem:[%s0 + $0x7d8] sm:$0xff]
  %v269 = vld [vmem:[%s0 + $0x7e0] sm:$0xff]
  %v270 = vld [vmem:[%s0 + $0x7e8] sm:$0xff]
  %v271 = vld [vmem:[%s0 + $0x7f0] sm:$0xff]
  %v272 = vld [vmem:[%s0 + $0x7f8] sm:$0xff]
  %v273 = vld [vmem:[%s0 + $0x800] sm:$0xff]
  %v274 = vld [vmem:[%s0 + $0x808] sm:$0xff]
  %v275 = vld [vmem:[%s0 + $0x810] sm:$0xff]
  %v276 = vld [vmem:[%s0 + $0x818] sm:$0xff]
  %v277 = vld [vmem:[%s0 + $0x820] sm:$0xff]
  %v278 = vld [vmem:[%s0 + $0x828] sm:$0xff]
  %v279 = vld [vmem:[%s0 + $0x830] sm:$0xff]
  %v280 = vld [vmem:[%s0 + $0x838] sm:$0xff]
  %v281 = vld [vmem:[%s0 + $0x840] sm:$0xff]
  %v282 = vld [vmem:[%s0 + $0x848] sm:$0xff]
  %v283 = vld [vmem:[%s0 + $0x850] sm:$0xff]
  %v284 = vld [vmem:[%s0 + $0x858] sm:$0xff]
  %v285 = vld [vmem:[%s0 + $0x860] sm:$0xff]
  %v286 = vld [vmem:[%s0 + $0x868] sm:$0xff]
  %v287 = vld [vmem:[%s0 + $0x870] sm:$0xff]
  %v288 = vld [vmem:[%s0 + $0x878] sm:$0xff]
  %v289 = vld [vmem:[%s0 + $0x880] sm:$0xff]
  %v290 = vld [vmem:[%s0 + $0x888] sm:$0xff]
  %v291 = vld [vmem:[%s0 + $0x890] sm:$0xff]
  %v292 = vld [vmem:[%s0 + $0x898] sm:$0xff]
  %v293 = vld [vmem:[%s0 + $0x8a0] sm:$0xff]
  %v294 = vld [vmem:[%s0 + $0x8a8] sm:$0xff]
  %v295 = vld [vmem:[%s0 + $0x8b0] sm:$0xff]
  %v296 = vld [vmem:[%s0 + $0x8b8] sm:$0xff]
  %v297 = vld [vmem:[%s0 + $0x8c0] sm:$0xff]
  %v298 = vld [vmem:[%s0 + $0x8c8] sm:$0xff]
  %v299 = vld [vmem:[%s0 + $0x8d0] sm:$0xff]
  %v300 = vld [vmem:[%s0 + $0x8d8] sm:$0xff]
  %v301 = vld [vmem:[%s0 + $0x8e0] sm:$0xff]
  %v302 = vld [vmem:[%s0 + $0x8e8] sm:$0xff]
  %v303 = vld [vmem:[%s0 + $0x8f0] sm:$0xff]
  %v304 = vld [vmem:[%s0 + $0x8f8] sm:$0xff]
  %v305 = vld [vmem:[%s0 + $0x900] sm:$0xff]
  %v306 = vld [vmem:[%s0 + $0x908] sm:$0xff]
  %v307 = vld [vmem:[%s0 + $0x910] sm:$0xff]
  %v308 = vld [vmem:[%s0 + $0x918] sm:$0xff]
  %v309 = vld [vmem:[%s0 + $0x920] sm:$0xff]
  %v310 = vld [vmem:[%s0 + $0x928] sm:$0xff]
  %v311 = vld [vmem:[%s0 + $0x930] sm:$0xff]
  %v312 = vld [vmem:[%s0 + $0x938] sm:$0xff]
  %v313 = vld [vmem:[%s0 + $0x940] sm:$0xff]
  %v314 = vld [vmem:[%s0 + $0x948] sm:$0xff]
  %v315 = vld [vmem:[%s0 + $0x950] sm:$0xff]
  %v316 = vld [vmem:[%s0 + $0x958] sm:$0xff]
  %v317 = vld [vmem:[%s0 + $0x960] sm:$0xff]
  %v318 = vld [vmem:[%s0 + $0x968] sm:$0xff]
  %v319 = vld [vmem:[%s0 + $0x970] sm:$0xff]
  %v320 = vld [vmem:[%s0 + $0x978] sm:$0xff]
  %v321 = vld [vmem:[%s0 + $0x980] sm:$0xff]
  %v322 = vld [vmem:[%s0 + $0x988] sm:$0xff]
  %v323 = vld [vmem:[%s0 + $0x990] sm:$0xff]
  %v324 = vld [vmem:[%s0 + $0x998] sm:$0xff]
  %v325 = vld [vmem:[%s0 + $0x9a0] sm:$0xff]
  %v326 = vld [vmem:[%s0 + $0x9a8] sm:$0xff]
  %v327 = vld [vmem:[%s0 + $0x9b0] sm:$0xff]
  %v328 = vld [vmem:[%s0 + $0x9b8] sm:$0xff]
  %v329 = vld [vmem:[%s0 + $0x9c0] sm:$0xff]
  %v330 = vld [vmem:[%s0 + $0x9c8] sm:$0xff]
  %v331 = vld [vmem:[%s0 + $0x9d0] sm:$0xff]
  %v332 = vld [vmem:[%s0 + $0x9d8] sm:$0xff]
  %v333 = vld [vmem:[%s0 + $0x9e0] sm:$0xff]
  %v334 = vld [vmem:[%s0 + $0x9e8] sm:$0xff]
  %v335 = vld [vmem:[%s0 + $0x9f0] sm:$0xff]
  %v336 = vld [vmem:[%s0 + $0x9f8] sm:$0xff]
  %v337 = vld [vmem:[%s0 + $0xa00] sm:$0xff]
  %v338 = vld [vmem:[%s0 + $0xa08] sm:$0xff]
  %v339 = vld [vmem:[%s0 + $0xa10] sm:$0xff]
  %v340 = vld [vmem:[%s0 + $0xa18] sm:$0xff]
  %v341 = vld [vmem:[%s0 + $0xa20] sm:$0xff]
  %v342 = vld [vmem:[%s0 + $0xa28] sm:$0xff]
  %v343 = vld [vmem:[%s0 + $0xa30] sm:$0xff]
  %v344 = vld [vmem:[%s0 + $0xa38] sm:$0xff]
  %v345 = vld [vmem:[%s0 + $0xa40] sm:$0xff]
  %v346 = vld [vmem:[%s0 + $0xa48] sm:$0xff]
  %v347 = vld [vmem:[%s0 + $0xa50] sm:$0xff]
  %v348 = vld [vmem:[%s0 + $0xa58] sm:$0xff]
  %v349 = vld [vmem:[%s0 + $0xa60] sm:$0xff]
  %v350 = vld [vmem:[%s0 + $0xa68] sm:$0xff]
  %v351 = vld [vmem:[%s0 + $0xa70] sm:$0xff]
  %v352 = vld [vmem:[%s0 + $0xa78] sm:$0xff]
  %v353 = vld [vmem:[%s0 + $0xa80] sm:$0xff]
  %v354 = vld [vmem:[%s0 + $0xa88] sm:$0xff]
  %v355 = vld [vmem:[%s0 + $0xa90] sm:$0xff]
  %v356 = vld [vmem:[%s0 + $0xa98] sm:$0xff]
  %v357 = vld [vmem:[%s0 + $0xaa0] sm:$0xff]
  %v358 = vld [vmem:[%s0 + $0xaa8] sm:$0xff]
  %v359 = vld [vmem:[%s0 + $0xab0] sm:$0xff]
  %v360 = vld [vmem:[%s0 + $0xab8] sm:$0xff]
  %v361 = vld [vmem:[%s0 + $0xac0] sm:$0xff]
  %v362 = vld [vmem:[%s0 + $0xac8] sm:$0xff]
  %v363 = vld [vmem:[%s0 + $0xad0] sm:$0xff]
  %v364 = vld [vmem:[%s0 + $0xad8] sm:$0xff]
  %v365 = vld [vmem:[%s0 + $0xae0] sm:$0xff]
  %v366 = vld [vmem:[%s0 + $0xae8] sm:$0xff]
  %v367 = vld [vmem:[%s0 + $0xaf0] sm:$0xff]
  %v368 = vld [vmem:[%s0 + $0xaf8] sm:$0xff]
  %v369 = vld [vmem:[%s0 + $0xb00] sm:$0xff]
  %v370 = vld [vmem:[%s0 + $0xb08] sm:$0xff]
  %v371 = vld [vmem:[%s0 + $0xb10] sm:$0xff]
  %v372 = vld [vmem:[%s0 + $0xb18] sm:$0xff]
  %v373 = vld [vmem:[%s0 + $0xb20] sm:$0xff]
  %v374 = vld [vmem:[%s0 + $0xb28] sm:$0xff]
  %v375 = vld [vmem:[%s0 + $0xb30] sm:$0xff]
  %v376 = vld [vmem:[%s0 + $0xb38] sm:$0xff]
  %v377 = vld [vmem:[%s0 + $0xb40] sm:$0xff]
  %v378 = vld [vmem:[%s0 + $0xb48] sm:$0xff]
  %v379 = vld [vmem:[%s0 + $0xb50] sm:$0xff]
  %v380 = vld [vmem:[%s0 + $0xb58] sm:$0xff]
  %v381 = vld [vmem:[%s0 + $0xb60] sm:$0xff]
  %v382 = vld [vmem:[%s0 + $0xb68] sm:$0xff]
  %v383 = vld [vmem:[%s0 + $0xb70] sm:$0xff]
  %v384 = vld [vmem:[%s0 + $0xb78] sm:$0xff]
  %v385 = vld [vmem:[%s0 + $0xb80] sm:$0xff]
  %v386 = vld [vmem:[%s0 + $0xb88] sm:$0xff]
  %v387 = vld [vmem:[%s0 + $0xb90] sm:$0xff]
  %v388 = vld [vmem:[%s0 + $0xb98] sm:$0xff]
  %v389 = vld [vmem:[%s0 + $0xba0] sm:$0xff]
  %v390 = vld [vmem:[%s0 + $0xba8] sm:$0xff]
  %v391 = vld [vmem:[%s0 + $0xbb0] sm:$0xff]
  %v392 = vld [vmem:[%s0 + $0xbb8] sm:$0xff]
  %v393 = vld [vmem:[%s0 + $0xbc0] sm:$0xff]
  %v394 = vld [vmem:[%s0 + $0xbc8] sm:$0xff]
  %v395 = vld [vmem:[%s0 + $0xbd0] sm:$0xff]
  %v396 = vld [vmem:[%s0 + $0xbd8] sm:$0xff]
  %v397 = vld [vmem:[%s0 + $0xbe0] sm:$0xff]
  %v398 = vld [vmem:[%s0 + $0xbe8] sm:$0xff]
  %v399 = vld [vmem:[%s0 + $0xbf0] sm:$0xff]
  %v400 = vld [vmem:[%s0 + $0xbf8] sm:$0xff]
  %v401 = vld [vmem:[%s0 + $0xc00] sm:$0xff]
  %v402 = vld [vmem:[%s0 + $0xc08] sm:$0xff]
  %v403 = vld [vmem:[%s0 + $0xc10] sm:$0xff]
  %v404 = vld [vmem:[%s0 + $0xc18] sm:$0xff]
  %v405 = vld [vmem:[%s0 + $0xc20] sm:$0xff]
  %v406 = vld [vmem:[%s0 + $0xc28] sm:$0xff]
  %v407 = vld [vmem:[%s0 + $0xc30] sm:$0xff]
  %v408 = vld [vmem:[%s0 + $0xc38] sm:$0xff]
  %v409 = vld [vmem:[%s0 + $0xc40] sm:$0xff]
  %v410 = vld [vmem:[%s0 + $0xc48] sm:$0xff]
  %v411 = vld [vmem:[%s0 + $0xc50] sm:$0xff]
  %v412 = vld [vmem:[%s0 + $0xc58] sm:$0xff]
  %v413 = vld [vmem:[%s0 + $0xc60] sm:$0xff]
  %v414 = vld [vmem:[%s0 + $0xc68] sm:$0xff]
  %v415 = vld [vmem:[%s0 + $0xc70] sm:$0xff]
  %v416 = vld [vmem:[%s0 + $0xc78] sm:$0xff]
  %v417 = vld [vmem:[%s0 + $0xc80] sm:$0xff]
  %v418 = vld [vmem:[%s0 + $0xc88] sm:$0xff]
  %v419 = vld [vmem:[%s0 + $0xc90] sm:$0xff]
  %v420 = vld [vmem:[%s0 + $0xc98] sm:$0xff]
  %v421 = vld [vmem:[%s0 + $0xca0] sm:$0xff]
  %v422 = vld [vmem:[%s0 + $0xca8] sm:$0xff]
  %v423 = vld [vmem:[%s0 + $0xcb0] sm:$0xff]
  %v424 = vld [vmem:[%s0 + $0xcb8] sm:$0xff]
  %v425 = vld [vmem:[%s0 + $0xcc0] sm:$0xff]
  %v426 = vld [vmem:[%s0 + $0xcc8] sm:$0xff]
  %v427 = vld [vmem:[%s0 + $0xcd0] sm:$0xff]
  %v428 = vld [vmem:[%s0 + $0xcd8] sm:$0xff]
  %v429 = vld [vmem:[%s0 + $0xce0] sm:$0xff]
  %v430 = vld [vmem:[%s0 + $0xce8] sm:$0xff]
  %v431 = vld [vmem:[%s0 + $0xcf0] sm:$0xff]
  %v432 = vld [vmem:[%s0 + $0xcf8] sm:$0xff]
  %v433 = vld [vmem:[%s0 + $0xd00] sm:$0xff]
  %v434 = vld [vmem:[%s0 + $0xd08] sm:$0xff]
  %v435 = vld [vmem:[%s0 + $0xd10] sm:$0xff]
  %v436 = vld [vmem:[%s0 + $0xd18] sm:$0xff]
  %v437 = vld [vmem:[%s0 + $0xd20] sm:$0xff]
  %v438 = vld [vmem:[%s0 + $0xd28] sm:$0xff]
  %v439 = vld [vmem:[%s0 + $0xd30] sm:$0xff]
  %v440 = vld [vmem:[%s0 + $0xd38] sm:$0xff]
  %v441 = vld [vmem:[%s0 + $0xd40] sm:$0xff]
  %v442 = vld [vmem:[%s0 + $0xd48] sm:$0xff]
  %v443 = vld [vmem:[%s0 + $0xd50] sm:$0xff]
  %v444 = vld [vmem:[%s0 + $0xd58] sm:$0xff]
  %v445 = vld [vmem:[%s0 + $0xd60] sm:$0xff]
  %v446 = vld [vmem:[%s0 + $0xd68] sm:$0xff]
  %v447 = vld [vmem:[%s0 + $0xd70] sm:$0xff]
  %v448 = vld [vmem:[%s0 + $0xd78] sm:$0xff]
  %v449 = vld [vmem:[%s0 + $0xd80] sm:$0xff]
  %v450 = vld [vmem:[%s0 + $0xd88] sm:$0xff]
  %v451 = vld [vmem:[%s0 + $0xd90] sm:$0xff]
  %v452 = vld [vmem:[%s0 + $0xd98] sm:$0xff]
  %v453 = vld [vmem:[%s0 + $0xda0] sm:$0xff]
  %v454 = vld [vmem:[%s0 + $0xda8] sm:$0xff]
  %v455 = vld [vmem:[%s0 + $0xdb0] sm:$0xff]
  %v456 = vld [vmem:[%s0 + $0xdb8] sm:$0xff]
  %v457 = vld [vmem:[%s0 + $0xdc0] sm:$0xff]
  %v458 = vld [vmem:[%s0 + $0xdc8] sm:$0xff]
  %v459 = vld [vmem:[%s0 + $0xdd0] sm:$0xff]
  %v460 = vld [vmem:[%s0 + $0xdd8] sm:$0xff]
  %v461 = vld [vmem:[%s0 + $0xde0] sm:$0xff]
  %v462 = vld [vmem:[%s0 + $0xde8] sm:$0xff]
  %v463 = vld [vmem:[%s0 + $0xdf0] sm:$0xff]
  %v464 = vld [vmem:[%s0 + $0xdf8] sm:$0xff]
  %v465 = vld [vmem:[%s0 + $0xe00] sm:$0xff]
  %v466 = vld [vmem:[%s0 + $0xe08] sm:$0xff]
  %v467 = vld [vmem:[%s0 + $0xe10] sm:$0xff]
  %v468 = vld [vmem:[%s0 + $0xe18] sm:$0xff]
  %v469 = vld [vmem:[%s0 + $0xe20] sm:$0xff]
  %v470 = vld [vmem:[%s0 + $0xe28] sm:$0xff]
  %v471 = vld [vmem:[%s0 + $0xe30] sm:$0xff]
  %v472 = vld [vmem:[%s0 + $0xe38] sm:$0xff]
  %v473 = vld [vmem:[%s0 + $0xe40] sm:$0xff]
  %v474 = vld [vmem:[%s0 + $0xe48] sm:$0xff]
  %v475 = vld [vmem:[%s0 + $0xe50] sm:$0xff]
  %v476 = vld [vmem:[%s0 + $0xe58] sm:$0xff]
  %v477 = vld [vmem:[%s0 + $0xe60] sm:$0xff]
  %v478 = vld [vmem:[%s0 + $0xe68] sm:$0xff]
  %v479 = vld [vmem:[%s0 + $0xe70] sm:$0xff]
  %v480 = vld [vmem:[%s0 + $0xe78] sm:$0xff]
  %v481 = vld [vmem:[%s0 + $0xe80] sm:$0xff]
  %v482 = vld [vmem:[%s0 + $0xe88] sm:$0xff]
  %v483 = vld [vmem:[%s0 + $0xe90] sm:$0xff]
  %v484 = vld [vmem:[%s0 + $0xe98] sm:$0xff]
  %v485 = vld [vmem:[%s0 + $0xea0] sm:$0xff]
  %v486 = vld [vmem:[%s0 + $0xea8] sm:$0xff]
  %v487 = vld [vmem:[%s0 + $0xeb0] sm:$0xff]
  %v488 = vld [vmem:[%s0 + $0xeb8] sm:$0xff]
  %v489 = vld [vmem:[%s0 + $0xec0] sm:$0xff]
  %v490 = vld [vmem:[%s0 + $0xec8] sm:$0xff]
  %v491 = vld [vmem:[%s0 + $0xed0] sm:$0xff]
  %v492 = vld [vmem:[%s0 + $0xed8] sm:$0xff]
  %v493 = vld [vmem:[%s0 + $0xee0] sm:$0xff]
  %v494 = vld [vmem:[%s0 + $0xee8] sm:$0xff]
  %v495 = vld [vmem:[%s0 + $0xef0] sm:$0xff]
  %v496 = vld [vmem:[%s0 + $0xef8] sm:$0xff]
  %v497 = vld [vmem:[%s0 + $0xf00] sm:$0xff]
  %v498 = vld [vmem:[%s0 + $0xf08] sm:$0xff]
  %v499 = vld [vmem:[%s0 + $0xf10] sm:$0xff]
  %v500 = vld [vmem:[%s0 + $0xf18] sm:$0xff]
  %v501 = vld [vmem:[%s0 + $0xf20] sm:$0xff]
  %v502 = vld [vmem:[%s0 + $0xf28] sm:$0xff]
  %v503 = vld [vmem:[%s0 + $0xf30] sm:$0xff]
  %v504 = vld [vmem:[%s0 + $0xf38] sm:$0xff]
  %v505 = vld [vmem:[%s0 + $0xf40] sm:$0xff]
  %v506 = vld [vmem:[%s0 + $0xf48] sm:$0xff]
  %v507 = vld [vmem:[%s0 + $0xf50] sm:$0xff]
  %v508 = vld [vmem:[%s0 + $0xf58] sm:$0xff]
  %v509 = vld [vmem:[%s0 + $0xf60] sm:$0xff]
  %v510 = vld [vmem:[%s0 + $0xf68] sm:$0xff]
  %v511 = vld [vmem:[%s0 + $0xf70] sm:$0xff]
  %v512 = vld [vmem:[%s0 + $0xf78] sm:$0xff]
  %v513 = vld [vmem:[%s0 + $0xf80] sm:$0xff]
  %v514 = vld [vmem:[%s0 + $0xf88] sm:$0xff]
  %v515 = vld [vmem:[%s0 + $0xf90] sm:$0xff]
  %v516 = vld [vmem:[%s0 + $0xf98] sm:$0xff]
  %v517 = vld [vmem:[%s0 + $0xfa0] sm:$0xff]
  %v518 = vld [vmem:[%s0 + $0xfa8] sm:$0xff]
  %v519 = vld [vmem:[%s0 + $0xfb0] sm:$0xff]
  %v520 = vld [vmem:[%s0 + $0xfb8] sm:$0xff]
  %v521 = vld [vmem:[%s0 + $0xfc0] sm:$0xff]
  %v522 = vld [vmem:[%s0 + $0xfc8] sm:$0xff]
  %v523 = vld [vmem:[%s0 + $0xfd0] sm:$0xff]
  %v524 = vld [vmem:[%s0 + $0xfd8] sm:$0xff]
  %v525 = vld [vmem:[%s0 + $0xfe0] sm:$0xff]
  %v526 = vld [vmem:[%s0 + $0xfe8] sm:$0xff]
  %v527 = vld [vmem:[%s0 + $0xff0] sm:$0xff]
  %v528 = vld [vmem:[%s0 + $0xff8] sm:$0xff]
  %v529 = vld [vmem:[%s1] sm:$0xff]
  %v530 = vld [vmem:[%s1 + $0x8] sm:$0xff]
  %v531 = vld [vmem:[%s1 + $0x10] sm:$0xff]
  %v532 = vld [vmem:[%s1 + $0x18] sm:$0xff]
  %v533 = vld [vmem:[%s1 + $0x20] sm:$0xff]
  %v534 = vld [vmem:[%s1 + $0x28] sm:$0xff]
  %v535 = vld [vmem:[%s1 + $0x30] sm:$0xff]
  %v536 = vld [vmem:[%s1 + $0x38] sm:$0xff]
  %v537 = vld [vmem:[%s1 + $0x40] sm:$0xff]
  %v538 = vld [vmem:[%s1 + $0x48] sm:$0xff]
  %v539 = vld [vmem:[%s1 + $0x50] sm:$0xff]
  %v540 = vld [vmem:[%s1 + $0x58] sm:$0xff]
  %v541 = vld [vmem:[%s1 + $0x60] sm:$0xff]
  %v542 = vld [vmem:[%s1 + $0x68] sm:$0xff]
  %v543 = vld [vmem:[%s1 + $0x70] sm:$0xff]
  %v544 = vld [vmem:[%s1 + $0x78] sm:$0xff]
  %v545 = vld [vmem:[%s1 + $0x80] sm:$0xff]
  %v546 = vld [vmem:[%s1 + $0x88] sm:$0xff]
  %v547 = vld [vmem:[%s1 + $0x90] sm:$0xff]
  %v548 = vld [vmem:[%s1 + $0x98] sm:$0xff]
  %v549 = vld [vmem:[%s1 + $0xa0] sm:$0xff]
  %v550 = vld [vmem:[%s1 + $0xa8] sm:$0xff]
  %v551 = vld [vmem:[%s1 + $0xb0] sm:$0xff]
  %v552 = vld [vmem:[%s1 + $0xb8] sm:$0xff]
  %v553 = vld [vmem:[%s1 + $0xc0] sm:$0xff]
  %v554 = vld [vmem:[%s1 + $0xc8] sm:$0xff]
  %v555 = vld [vmem:[%s1 + $0xd0] sm:$0xff]
  %v556 = vld [vmem:[%s1 + $0xd8] sm:$0xff]
  %v557 = vld [vmem:[%s1 + $0xe0] sm:$0xff]
  %v558 = vld [vmem:[%s1 + $0xe8] sm:$0xff]
  %v559 = vld [vmem:[%s1 + $0xf0] sm:$0xff]
  %v560 = vld [vmem:[%s1 + $0xf8] sm:$0xff]
  %561 = vmatprep.subr.mxu0 0.0
  %562 = vmatpush1.msra.mxu0 %v544
  %563 = vmatprep.subr.mxu0 0.0
  %564 = vmatpush1.msra.mxu0 %v543
  %565 = vmatprep.subr.mxu0 0.0
  %566 = vmatpush1.msra.mxu0 %v542
  %567 = vmatprep.subr.mxu0 0.0
  %568 = vmatpush1.msra.mxu0 %v541
  %569 = vmatprep.subr.mxu0 0.0
  %570 = vmatpush1.msra.mxu0 %v540
  %571 = vmatprep.subr.mxu0 0.0
  %572 = vmatpush1.msra.mxu0 %v539
  %573 = vmatprep.subr.mxu0 0.0
  %574 = vmatpush1.msra.mxu0 %v538
  %575 = vmatprep.subr.mxu0 0.0
  %576 = vmatpush1.msra.mxu0 %v537
  %577 = vmatprep.subr.mxu0 0.0
  %578 = vmatpush1.msra.mxu0 %v536
  %579 = vmatprep.subr.mxu0 0.0
  %580 = vmatpush1.msra.mxu0 %v535
  %581 = vmatprep.subr.mxu0 0.0
  %582 = vmatpush1.msra.mxu0 %v534
  %583 = vmatprep.subr.mxu0 0.0
  %584 = vmatpush1.msra.mxu0 %v533
  %585 = vmatprep.subr.mxu0 0.0
  %586 = vmatpush1.msra.mxu0 %v532
  %587 = vmatprep.subr.mxu0 0.0
  %588 = vmatpush1.msra.mxu0 %v531
  %589 = vmatprep.subr.mxu0 0.0
  %590 = vmatpush1.msra.mxu0 %v530
  %591 = vmatprep.subr.mxu0 0.0
  %592 = vmatpush1.msra.mxu0 %v529
  %593 = vmatprep.subr.mxu0 0.0
  %594 = vmatpush2.msra.mxu0 %v560
  %595 = vmatprep.subr.mxu0 0.0
  %596 = vmatpush2.msra.mxu0 %v559
  %597 = vmatprep.subr.mxu0 0.0
  %598 = vmatpush2.msra.mxu0 %v558
  %599 = vmatprep.subr.mxu0 0.0
  %600 = vmatpush2.msra.mxu0 %v557
  %601 = vmatprep.subr.mxu0 0.0
  %602 = vmatpush2.msra.mxu0 %v556
  %603 = vmatprep.subr.mxu0 0.0
  %604 = vmatpush2.msra.mxu0 %v555
  %605 = vmatprep.subr.mxu0 0.0
  %606 = vmatpush2.msra.mxu0 %v554
  %607 = vmatprep.subr.mxu0 0.0
  %608 = vmatpush2.msra.mxu0 %v553
  %609 = vmatprep.subr.mxu0 0.0
  %610 = vmatpush2.msra.mxu0 %v552
  %611 = vmatprep.subr.mxu0 0.0
  %612 = vmatpush2.msra.mxu0 %v551
  %613 = vmatprep.subr.mxu0 0.0
  %614 = vmatpush2.msra.mxu0 %v550
  %615 = vmatprep.subr.mxu0 0.0
  %616 = vmatpush2.msra.mxu0 %v549
  %617 = vmatprep.subr.mxu0 0.0
  %618 = vmatpush2.msra.mxu0 %v548
  %619 = vmatprep.subr.mxu0 0.0
  %620 = vmatpush2.msra.mxu0 %v547
  %621 = vmatprep.subr.mxu0 0.0
  %622 = vmatpush2.msra.mxu0 %v546
  %623 = vmatprep.subr.mxu0 0.0
  %624 = vmatpush2.msra.mxu0 %v545
  %625 = vmatprep.mubr.f32.mxu0 %v18
  %626 = vmatmul.mubr.f32.gmra.mxu0 %v17
  %v627 = vpop.f32.mrf.mxu0
  %v628 = vadd.f32 0.0, %v627
  %v629 = vpop.f32.mrf.mxu0
  %630 = vmatprep.mubr.f32.mxu0 %v20
  %631 = vmatmul.mubr.f32.gmra.mxu0 %v19
  %v632 = vpop.f32.mrf.mxu0
  %v633 = vadd.f32 0.0, %v632
  %v634 = vpop.f32.mrf.mxu0
  %635 = vmatprep.mubr.f32.mxu0 %v22
  %636 = vmatmul.mubr.f32.gmra.mxu0 %v21
  %v637 = vpop.f32.mrf.mxu0
  %v638 = vadd.f32 0.0, %v637
  %v639 = vpop.f32.mrf.mxu0
  %640 = vmatprep.mubr.f32.mxu0 %v24
  %641 = vmatmul.mubr.f32.gmra.mxu0 %v23
  %v642 = vpop.f32.mrf.mxu0
  %v643 = vadd.f32 0.0, %v642
  %v644 = vpop.f32.mrf.mxu0
  %645 = vmatprep.mubr.f32.mxu0 %v26
  %646 = vmatmul.mubr.f32.gmra.mxu0 %v25
  %v647 = vpop.f32.mrf.mxu0
  %v648 = vadd.f32 0.0, %v647
  %v649 = vpop.f32.mrf.mxu0
  %650 = vmatprep.mubr.f32.mxu0 %v28
  %651 = vmatmul.mubr.f32.gmra.mxu0 %v27
  %v652 = vpop.f32.mrf.mxu0
  %v653 = vadd.f32 0.0, %v652
  %v654 = vpop.f32.mrf.mxu0
  %655 = vmatprep.mubr.f32.mxu0 %v30
  %656 = vmatmul.mubr.f32.gmra.mxu0 %v29
  %v657 = vpop.f32.mrf.mxu0
  %v658 = vadd.f32 0.0, %v657
  %v659 = vpop.f32.mrf.mxu0
  %660 = vmatprep.mubr.f32.mxu0 %v32
  %661 = vmatmul.mubr.f32.gmra.mxu0 %v31
  %v662 = vpop.f32.mrf.mxu0
  %v663 = vadd.f32 0.0, %v662
  %v664 = vpop.f32.mrf.mxu0
  %665 = vmatprep.mubr.f32.mxu0 %v34
  %666 = vmatmul.mubr.f32.gmra.mxu0 %v33
  %v667 = vpop.f32.mrf.mxu0
  %v668 = vadd.f32 0.0, %v667
  %v669 = vpop.f32.mrf.mxu0
  %670 = vmatprep.mubr.f32.mxu0 %v36
  %671 = vmatmul.mubr.f32.gmra.mxu0 %v35
  %v672 = vpop.f32.mrf.mxu0
  %v673 = vadd.f32 0.0, %v672
  %v674 = vpop.f32.mrf.mxu0
  %675 = vmatprep.mubr.f32.mxu0 %v38
  %676 = vmatmul.mubr.f32.gmra.mxu0 %v37
  %v677 = vpop.f32.mrf.mxu0
  %v678 = vadd.f32 0.0, %v677
  %v679 = vpop.f32.mrf.mxu0
  %680 = vmatprep.mubr.f32.mxu0 %v40
  %681 = vmatmul.mubr.f32.gmra.mxu0 %v39
  %v682 = vpop.f32.mrf.mxu0
  %v683 = vadd.f32 0.0, %v682
  %v684 = vpop.f32.mrf.mxu0
  %685 = vmatprep.mubr.f32.mxu0 %v42
  %686 = vmatmul.mubr.f32.gmra.mxu0 %v41
  %v687 = vpop.f32.mrf.mxu0
  %v688 = vadd.f32 0.0, %v687
  %v689 = vpop.f32.mrf.mxu0
  %690 = vmatprep.mubr.f32.mxu0 %v44
  %691 = vmatmul.mubr.f32.gmra.mxu0 %v43
  %v692 = vpop.f32.mrf.mxu0
  %v693 = vadd.f32 0.0, %v692
  %v694 = vpop.f32.mrf.mxu0
  %695 = vmatprep.mubr.f32.mxu0 %v46
  %696 = vmatmul.mubr.f32.gmra.mxu0 %v45
  %v697 = vpop.f32.mrf.mxu0
  %v698 = vadd.f32 0.0, %v697
  %v699 = vpop.f32.mrf.mxu0
  %700 = vmatprep.mubr.f32.mxu0 %v48
  %701 = vmatmul.mubr.f32.gmra.mxu0 %v47
  %v702 = vpop.f32.mrf.mxu0
  %v703 = vadd.f32 0.0, %v702
  %v704 = vpop.f32.mrf.mxu0
  %705 = vmatprep.mubr.f32.mxu0 %v50
  %706 = vmatmul.mubr.f32.gmra.mxu0 %v49
  %v707 = vpop.f32.mrf.mxu0
  %v708 = vadd.f32 0.0, %v707
  %v709 = vpop.f32.mrf.mxu0
  %710 = vmatprep.mubr.f32.mxu0 %v52
  %711 = vmatmul.mubr.f32.gmra.mxu0 %v51
  %v712 = vpop.f32.mrf.mxu0
  %v713 = vadd.f32 0.0, %v712
  %v714 = vpop.f32.mrf.mxu0
  %715 = vmatprep.mubr.f32.mxu0 %v54
  %716 = vmatmul.mubr.f32.gmra.mxu0 %v53
  %v717 = vpop.f32.mrf.mxu0
  %v718 = vadd.f32 0.0, %v717
  %v719 = vpop.f32.mrf.mxu0
  %720 = vmatprep.mubr.f32.mxu0 %v56
  %721 = vmatmul.mubr.f32.gmra.mxu0 %v55
  %v722 = vpop.f32.mrf.mxu0
  %v723 = vadd.f32 0.0, %v722
  %v724 = vpop.f32.mrf.mxu0
  %725 = vmatprep.mubr.f32.mxu0 %v58
  %726 = vmatmul.mubr.f32.gmra.mxu0 %v57
  %v727 = vpop.f32.mrf.mxu0
  %v728 = vadd.f32 0.0, %v727
  %v729 = vpop.f32.mrf.mxu0
  %730 = vmatprep.mubr.f32.mxu0 %v60
  %731 = vmatmul.mubr.f32.gmra.mxu0 %v59
  %v732 = vpop.f32.mrf.mxu0
  %v733 = vadd.f32 0.0, %v732
  %v734 = vpop.f32.mrf.mxu0
  %735 = vmatprep.mubr.f32.mxu0 %v62
  %736 = vmatmul.mubr.f32.gmra.mxu0 %v61
  %v737 = vpop.f32.mrf.mxu0
  %v738 = vadd.f32 0.0, %v737
  %v739 = vpop.f32.mrf.mxu0
  %740 = vmatprep.mubr.f32.mxu0 %v64
  %741 = vmatmul.mubr.f32.gmra.mxu0 %v63
  %v742 = vpop.f32.mrf.mxu0
  %v743 = vadd.f32 0.0, %v742
  %v744 = vpop.f32.mrf.mxu0
  %745 = vmatprep.mubr.f32.mxu0 %v66
  %746 = vmatmul.mubr.f32.gmra.mxu0 %v65
  %v747 = vpop.f32.mrf.mxu0
  %v748 = vadd.f32 0.0, %v747
  %v749 = vpop.f32.mrf.mxu0
  %750 = vmatprep.mubr.f32.mxu0 %v68
  %751 = vmatmul.mubr.f32.gmra.mxu0 %v67
  %v752 = vpop.f32.mrf.mxu0
  %v753 = vadd.f32 0.0, %v752
  %v754 = vpop.f32.mrf.mxu0
  %755 = vmatprep.mubr.f32.mxu0 %v70
  %756 = vmatmul.mubr.f32.gmra.mxu0 %v69
  %v757 = vpop.f32.mrf.mxu0
  %v758 = vadd.f32 0.0, %v757
  %v759 = vpop.f32.mrf.mxu0
  %760 = vmatprep.mubr.f32.mxu0 %v72
  %761 = vmatmul.mubr.f32.gmra.mxu0 %v71
  %v762 = vpop.f32.mrf.mxu0
  %v763 = vadd.f32 0.0, %v762
  %v764 = vpop.f32.mrf.mxu0
  %765 = vmatprep.mubr.f32.mxu0 %v74
  %766 = vmatmul.mubr.f32.gmra.mxu0 %v73
  %v767 = vpop.f32.mrf.mxu0
  %v768 = vadd.f32 0.0, %v767
  %v769 = vpop.f32.mrf.mxu0
  %770 = vmatprep.mubr.f32.mxu0 %v76
  %771 = vmatmul.mubr.f32.gmra.mxu0 %v75
  %v772 = vpop.f32.mrf.mxu0
  %v773 = vadd.f32 0.0, %v772
  %v774 = vpop.f32.mrf.mxu0
  %775 = vmatprep.mubr.f32.mxu0 %v78
  %776 = vmatmul.mubr.f32.gmra.mxu0 %v77
  %v777 = vpop.f32.mrf.mxu0
  %v778 = vadd.f32 0.0, %v777
  %v779 = vpop.f32.mrf.mxu0
  %780 = vmatprep.mubr.f32.mxu0 %v80
  %781 = vmatmul.mubr.f32.gmra.mxu0 %v79
  %v782 = vpop.f32.mrf.mxu0
  %v783 = vadd.f32 0.0, %v782
  %v784 = vpop.f32.mrf.mxu0
  %785 = vmatprep.mubr.f32.mxu0 %v82
  %786 = vmatmul.mubr.f32.gmra.mxu0 %v81
  %v787 = vpop.f32.mrf.mxu0
  %v788 = vadd.f32 0.0, %v787
  %v789 = vpop.f32.mrf.mxu0
  %790 = vmatprep.mubr.f32.mxu0 %v84
  %791 = vmatmul.mubr.f32.gmra.mxu0 %v83
  %v792 = vpop.f32.mrf.mxu0
  %v793 = vadd.f32 0.0, %v792
  %v794 = vpop.f32.mrf.mxu0
  %795 = vmatprep.mubr.f32.mxu0 %v86
  %796 = vmatmul.mubr.f32.gmra.mxu0 %v85
  %v797 = vpop.f32.mrf.mxu0
  %v798 = vadd.f32 0.0, %v797
  %v799 = vpop.f32.mrf.mxu0
  %800 = vmatprep.mubr.f32.mxu0 %v88
  %801 = vmatmul.mubr.f32.gmra.mxu0 %v87
  %v802 = vpop.f32.mrf.mxu0
  %v803 = vadd.f32 0.0, %v802
  %v804 = vpop.f32.mrf.mxu0
  %805 = vmatprep.mubr.f32.mxu0 %v90
  %806 = vmatmul.mubr.f32.gmra.mxu0 %v89
  %v807 = vpop.f32.mrf.mxu0
  %v808 = vadd.f32 0.0, %v807
  %v809 = vpop.f32.mrf.mxu0
  %810 = vmatprep.mubr.f32.mxu0 %v92
  %811 = vmatmul.mubr.f32.gmra.mxu0 %v91
  %v812 = vpop.f32.mrf.mxu0
  %v813 = vadd.f32 0.0, %v812
  %v814 = vpop.f32.mrf.mxu0
  %815 = vmatprep.mubr.f32.mxu0 %v94
  %816 = vmatmul.mubr.f32.gmra.mxu0 %v93
  %v817 = vpop.f32.mrf.mxu0
  %v818 = vadd.f32 0.0, %v817
  %v819 = vpop.f32.mrf.mxu0
  %820 = vmatprep.mubr.f32.mxu0 %v96
  %821 = vmatmul.mubr.f32.gmra.mxu0 %v95
  %v822 = vpop.f32.mrf.mxu0
  %v823 = vadd.f32 0.0, %v822
  %v824 = vpop.f32.mrf.mxu0
  %825 = vmatprep.mubr.f32.mxu0 %v98
  %826 = vmatmul.mubr.f32.gmra.mxu0 %v97
  %v827 = vpop.f32.mrf.mxu0
  %v828 = vadd.f32 0.0, %v827
  %v829 = vpop.f32.mrf.mxu0
  %830 = vmatprep.mubr.f32.mxu0 %v100
  %831 = vmatmul.mubr.f32.gmra.mxu0 %v99
  %v832 = vpop.f32.mrf.mxu0
  %v833 = vadd.f32 0.0, %v832
  %v834 = vpop.f32.mrf.mxu0
  %835 = vmatprep.mubr.f32.mxu0 %v102
  %836 = vmatmul.mubr.f32.gmra.mxu0 %v101
  %v837 = vpop.f32.mrf.mxu0
  %v838 = vadd.f32 0.0, %v837
  %v839 = vpop.f32.mrf.mxu0
  %840 = vmatprep.mubr.f32.mxu0 %v104
  %841 = vmatmul.mubr.f32.gmra.mxu0 %v103
  %v842 = vpop.f32.mrf.mxu0
  %v843 = vadd.f32 0.0, %v842
  %v844 = vpop.f32.mrf.mxu0
  %845 = vmatprep.mubr.f32.mxu0 %v106
  %846 = vmatmul.mubr.f32.gmra.mxu0 %v105
  %v847 = vpop.f32.mrf.mxu0
  %v848 = vadd.f32 0.0, %v847
  %v849 = vpop.f32.mrf.mxu0
  %850 = vmatprep.mubr.f32.mxu0 %v108
  %851 = vmatmul.mubr.f32.gmra.mxu0 %v107
  %v852 = vpop.f32.mrf.mxu0
  %v853 = vadd.f32 0.0, %v852
  %v854 = vpop.f32.mrf.mxu0
  %855 = vmatprep.mubr.f32.mxu0 %v110
  %856 = vmatmul.mubr.f32.gmra.mxu0 %v109
  %v857 = vpop.f32.mrf.mxu0
  %v858 = vadd.f32 0.0, %v857
  %v859 = vpop.f32.mrf.mxu0
  %860 = vmatprep.mubr.f32.mxu0 %v112
  %861 = vmatmul.mubr.f32.gmra.mxu0 %v111
  %v862 = vpop.f32.mrf.mxu0
  %v863 = vadd.f32 0.0, %v862
  %v864 = vpop.f32.mrf.mxu0
  %865 = vmatprep.mubr.f32.mxu0 %v114
  %866 = vmatmul.mubr.f32.gmra.mxu0 %v113
  %v867 = vpop.f32.mrf.mxu0
  %v868 = vadd.f32 0.0, %v867
  %v869 = vpop.f32.mrf.mxu0
  %870 = vmatprep.mubr.f32.mxu0 %v116
  %871 = vmatmul.mubr.f32.gmra.mxu0 %v115
  %v872 = vpop.f32.mrf.mxu0
  %v873 = vadd.f32 0.0, %v872
  %v874 = vpop.f32.mrf.mxu0
  %875 = vmatprep.mubr.f32.mxu0 %v118
  %876 = vmatmul.mubr.f32.gmra.mxu0 %v117
  %v877 = vpop.f32.mrf.mxu0
  %v878 = vadd.f32 0.0, %v877
  %v879 = vpop.f32.mrf.mxu0
  %880 = vmatprep.mubr.f32.mxu0 %v120
  %881 = vmatmul.mubr.f32.gmra.mxu0 %v119
  %v882 = vpop.f32.mrf.mxu0
  %v883 = vadd.f32 0.0, %v882
  %v884 = vpop.f32.mrf.mxu0
  %885 = vmatprep.mubr.f32.mxu0 %v122
  %886 = vmatmul.mubr.f32.gmra.mxu0 %v121
  %v887 = vpop.f32.mrf.mxu0
  %v888 = vadd.f32 0.0, %v887
  %v889 = vpop.f32.mrf.mxu0
  %890 = vmatprep.mubr.f32.mxu0 %v124
  %891 = vmatmul.mubr.f32.gmra.mxu0 %v123
  %v892 = vpop.f32.mrf.mxu0
  %v893 = vadd.f32 0.0, %v892
  %v894 = vpop.f32.mrf.mxu0
  %895 = vmatprep.mubr.f32.mxu0 %v126
  %896 = vmatmul.mubr.f32.gmra.mxu0 %v125
  %v897 = vpop.f32.mrf.mxu0
  %v898 = vadd.f32 0.0, %v897
  %v899 = vpop.f32.mrf.mxu0
  %900 = vmatprep.mubr.f32.mxu0 %v128
  %901 = vmatmul.mubr.f32.gmra.mxu0 %v127
  %v902 = vpop.f32.mrf.mxu0
  %v903 = vadd.f32 0.0, %v902
  %v904 = vpop.f32.mrf.mxu0
  %905 = vmatprep.mubr.f32.mxu0 %v130
  %906 = vmatmul.mubr.f32.gmra.mxu0 %v129
  %v907 = vpop.f32.mrf.mxu0
  %v908 = vadd.f32 0.0, %v907
  %v909 = vpop.f32.mrf.mxu0
  %910 = vmatprep.mubr.f32.mxu0 %v132
  %911 = vmatmul.mubr.f32.gmra.mxu0 %v131
  %v912 = vpop.f32.mrf.mxu0
  %v913 = vadd.f32 0.0, %v912
  %v914 = vpop.f32.mrf.mxu0
  %915 = vmatprep.mubr.f32.mxu0 %v134
  %916 = vmatmul.mubr.f32.gmra.mxu0 %v133
  %v917 = vpop.f32.mrf.mxu0
  %v918 = vadd.f32 0.0, %v917
  %v919 = vpop.f32.mrf.mxu0
  %920 = vmatprep.mubr.f32.mxu0 %v136
  %921 = vmatmul.mubr.f32.gmra.mxu0 %v135
  %v922 = vpop.f32.mrf.mxu0
  %v923 = vadd.f32 0.0, %v922
  %v924 = vpop.f32.mrf.mxu0
  %925 = vmatprep.mubr.f32.mxu0 %v138
  %926 = vmatmul.mubr.f32.gmra.mxu0 %v137
  %v927 = vpop.f32.mrf.mxu0
  %v928 = vadd.f32 0.0, %v927
  %v929 = vpop.f32.mrf.mxu0
  %930 = vmatprep.mubr.f32.mxu0 %v140
  %931 = vmatmul.mubr.f32.gmra.mxu0 %v139
  %v932 = vpop.f32.mrf.mxu0
  %v933 = vadd.f32 0.0, %v932
  %v934 = vpop.f32.mrf.mxu0
  %935 = vmatprep.mubr.f32.mxu0 %v142
  %936 = vmatmul.mubr.f32.gmra.mxu0 %v141
  %v937 = vpop.f32.mrf.mxu0
  %v938 = vadd.f32 0.0, %v937
  %v939 = vpop.f32.mrf.mxu0
  %940 = vmatprep.mubr.f32.mxu0 %v144
  %941 = vmatmul.mubr.f32.gmra.mxu0 %v143
  %v942 = vpop.f32.mrf.mxu0
  %v943 = vadd.f32 0.0, %v942
  %v944 = vpop.f32.mrf.mxu0
  %945 = vmatprep.mubr.f32.mxu0 %v146
  %946 = vmatmul.mubr.f32.gmra.mxu0 %v145
  %v947 = vpop.f32.mrf.mxu0
  %v948 = vadd.f32 0.0, %v947
  %v949 = vpop.f32.mrf.mxu0
  %950 = vmatprep.mubr.f32.mxu0 %v148
  %951 = vmatmul.mubr.f32.gmra.mxu0 %v147
  %v952 = vpop.f32.mrf.mxu0
  %v953 = vadd.f32 0.0, %v952
  %v954 = vpop.f32.mrf.mxu0
  %955 = vmatprep.mubr.f32.mxu0 %v150
  %956 = vmatmul.mubr.f32.gmra.mxu0 %v149
  %v957 = vpop.f32.mrf.mxu0
  %v958 = vadd.f32 0.0, %v957
  %v959 = vpop.f32.mrf.mxu0
  %960 = vmatprep.mubr.f32.mxu0 %v152
  %961 = vmatmul.mubr.f32.gmra.mxu0 %v151
  %v962 = vpop.f32.mrf.mxu0
  %v963 = vadd.f32 0.0, %v962
  %v964 = vpop.f32.mrf.mxu0
  %965 = vmatprep.mubr.f32.mxu0 %v154
  %966 = vmatmul.mubr.f32.gmra.mxu0 %v153
  %v967 = vpop.f32.mrf.mxu0
  %v968 = vadd.f32 0.0, %v967
  %v969 = vpop.f32.mrf.mxu0
  %970 = vmatprep.mubr.f32.mxu0 %v156
  %971 = vmatmul.mubr.f32.gmra.mxu0 %v155
  %v972 = vpop.f32.mrf.mxu0
  %v973 = vadd.f32 0.0, %v972
  %v974 = vpop.f32.mrf.mxu0
  %975 = vmatprep.mubr.f32.mxu0 %v158
  %976 = vmatmul.mubr.f32.gmra.mxu0 %v157
  %v977 = vpop.f32.mrf.mxu0
  %v978 = vadd.f32 0.0, %v977
  %v979 = vpop.f32.mrf.mxu0
  %980 = vmatprep.mubr.f32.mxu0 %v160
  %981 = vmatmul.mubr.f32.gmra.mxu0 %v159
  %v982 = vpop.f32.mrf.mxu0
  %v983 = vadd.f32 0.0, %v982
  %v984 = vpop.f32.mrf.mxu0
  %985 = vmatprep.mubr.f32.mxu0 %v162
  %986 = vmatmul.mubr.f32.gmra.mxu0 %v161
  %v987 = vpop.f32.mrf.mxu0
  %v988 = vadd.f32 0.0, %v987
  %v989 = vpop.f32.mrf.mxu0
  %990 = vmatprep.mubr.f32.mxu0 %v164
  %991 = vmatmul.mubr.f32.gmra.mxu0 %v163
  %v992 = vpop.f32.mrf.mxu0
  %v993 = vadd.f32 0.0, %v992
  %v994 = vpop.f32.mrf.mxu0
  %995 = vmatprep.mubr.f32.mxu0 %v166
  %996 = vmatmul.mubr.f32.gmra.mxu0 %v165
  %v997 = vpop.f32.mrf.mxu0
  %v998 = vadd.f32 0.0, %v997
  %v999 = vpop.f32.mrf.mxu0
  %1000 = vmatprep.mubr.f32.mxu0 %v168
  %1001 = vmatmul.mubr.f32.gmra.mxu0 %v167
  %v1002 = vpop.f32.mrf.mxu0
  %v1003 = vadd.f32 0.0, %v1002
  %v1004 = vpop.f32.mrf.mxu0
  %1005 = vmatprep.mubr.f32.mxu0 %v170
  %1006 = vmatmul.mubr.f32.gmra.mxu0 %v169
  %v1007 = vpop.f32.mrf.mxu0
  %v1008 = vadd.f32 0.0, %v1007
  %v1009 = vpop.f32.mrf.mxu0
  %1010 = vmatprep.mubr.f32.mxu0 %v172
  %1011 = vmatmul.mubr.f32.gmra.mxu0 %v171
  %v1012 = vpop.f32.mrf.mxu0
  %v1013 = vadd.f32 0.0, %v1012
  %v1014 = vpop.f32.mrf.mxu0
  %1015 = vmatprep.mubr.f32.mxu0 %v174
  %1016 = vmatmul.mubr.f32.gmra.mxu0 %v173
  %v1017 = vpop.f32.mrf.mxu0
  %v1018 = vadd.f32 0.0, %v1017
  %v1019 = vpop.f32.mrf.mxu0
  %1020 = vmatprep.mubr.f32.mxu0 %v176
  %1021 = vmatmul.mubr.f32.gmra.mxu0 %v175
  %v1022 = vpop.f32.mrf.mxu0
  %v1023 = vadd.f32 0.0, %v1022
  %v1024 = vpop.f32.mrf.mxu0
  %1025 = vmatprep.mubr.f32.mxu0 %v178
  %1026 = vmatmul.mubr.f32.gmra.mxu0 %v177
  %v1027 = vpop.f32.mrf.mxu0
  %v1028 = vadd.f32 0.0, %v1027
  %v1029 = vpop.f32.mrf.mxu0
  %1030 = vmatprep.mubr.f32.mxu0 %v180
  %1031 = vmatmul.mubr.f32.gmra.mxu0 %v179
  %v1032 = vpop.f32.mrf.mxu0
  %v1033 = vadd.f32 0.0, %v1032
  %v1034 = vpop.f32.mrf.mxu0
  %1035 = vmatprep.mubr.f32.mxu0 %v182
  %1036 = vmatmul.mubr.f32.gmra.mxu0 %v181
  %v1037 = vpop.f32.mrf.mxu0
  %v1038 = vadd.f32 0.0, %v1037
  %v1039 = vpop.f32.mrf.mxu0
  %1040 = vmatprep.mubr.f32.mxu0 %v184
  %1041 = vmatmul.mubr.f32.gmra.mxu0 %v183
  %v1042 = vpop.f32.mrf.mxu0
  %v1043 = vadd.f32 0.0, %v1042
  %v1044 = vpop.f32.mrf.mxu0
  %1045 = vmatprep.mubr.f32.mxu0 %v186
  %1046 = vmatmul.mubr.f32.gmra.mxu0 %v185
  %v1047 = vpop.f32.mrf.mxu0
  %v1048 = vadd.f32 0.0, %v1047
  %v1049 = vpop.f32.mrf.mxu0
  %1050 = vmatprep.mubr.f32.mxu0 %v188
  %1051 = vmatmul.mubr.f32.gmra.mxu0 %v187
  %v1052 = vpop.f32.mrf.mxu0
  %v1053 = vadd.f32 0.0, %v1052
  %v1054 = vpop.f32.mrf.mxu0
  %1055 = vmatprep.mubr.f32.mxu0 %v190
  %1056 = vmatmul.mubr.f32.gmra.mxu0 %v189
  %v1057 = vpop.f32.mrf.mxu0
  %v1058 = vadd.f32 0.0, %v1057
  %v1059 = vpop.f32.mrf.mxu0
  %1060 = vmatprep.mubr.f32.mxu0 %v192
  %1061 = vmatmul.mubr.f32.gmra.mxu0 %v191
  %v1062 = vpop.f32.mrf.mxu0
  %v1063 = vadd.f32 0.0, %v1062
  %v1064 = vpop.f32.mrf.mxu0
  %1065 = vmatprep.mubr.f32.mxu0 %v194
  %1066 = vmatmul.mubr.f32.gmra.mxu0 %v193
  %v1067 = vpop.f32.mrf.mxu0
  %v1068 = vadd.f32 0.0, %v1067
  %v1069 = vpop.f32.mrf.mxu0
  %1070 = vmatprep.mubr.f32.mxu0 %v196
  %1071 = vmatmul.mubr.f32.gmra.mxu0 %v195
  %v1072 = vpop.f32.mrf.mxu0
  %v1073 = vadd.f32 0.0, %v1072
  %v1074 = vpop.f32.mrf.mxu0
  %1075 = vmatprep.mubr.f32.mxu0 %v198
  %1076 = vmatmul.mubr.f32.gmra.mxu0 %v197
  %v1077 = vpop.f32.mrf.mxu0
  %v1078 = vadd.f32 0.0, %v1077
  %v1079 = vpop.f32.mrf.mxu0
  %1080 = vmatprep.mubr.f32.mxu0 %v200
  %1081 = vmatmul.mubr.f32.gmra.mxu0 %v199
  %v1082 = vpop.f32.mrf.mxu0
  %v1083 = vadd.f32 0.0, %v1082
  %v1084 = vpop.f32.mrf.mxu0
  %1085 = vmatprep.mubr.f32.mxu0 %v202
  %1086 = vmatmul.mubr.f32.gmra.mxu0 %v201
  %v1087 = vpop.f32.mrf.mxu0
  %v1088 = vadd.f32 0.0, %v1087
  %v1089 = vpop.f32.mrf.mxu0
  %1090 = vmatprep.mubr.f32.mxu0 %v204
  %1091 = vmatmul.mubr.f32.gmra.mxu0 %v203
  %v1092 = vpop.f32.mrf.mxu0
  %v1093 = vadd.f32 0.0, %v1092
  %v1094 = vpop.f32.mrf.mxu0
  %1095 = vmatprep.mubr.f32.mxu0 %v206
  %1096 = vmatmul.mubr.f32.gmra.mxu0 %v205
  %v1097 = vpop.f32.mrf.mxu0
  %v1098 = vadd.f32 0.0, %v1097
  %v1099 = vpop.f32.mrf.mxu0
  %1100 = vmatprep.mubr.f32.mxu0 %v208
  %1101 = vmatmul.mubr.f32.gmra.mxu0 %v207
  %v1102 = vpop.f32.mrf.mxu0
  %v1103 = vadd.f32 0.0, %v1102
  %v1104 = vpop.f32.mrf.mxu0
  %1105 = vmatprep.mubr.f32.mxu0 %v210
  %1106 = vmatmul.mubr.f32.gmra.mxu0 %v209
  %v1107 = vpop.f32.mrf.mxu0
  %v1108 = vadd.f32 0.0, %v1107
  %v1109 = vpop.f32.mrf.mxu0
  %1110 = vmatprep.mubr.f32.mxu0 %v212
  %1111 = vmatmul.mubr.f32.gmra.mxu0 %v211
  %v1112 = vpop.f32.mrf.mxu0
  %v1113 = vadd.f32 0.0, %v1112
  %v1114 = vpop.f32.mrf.mxu0
  %1115 = vmatprep.mubr.f32.mxu0 %v214
  %1116 = vmatmul.mubr.f32.gmra.mxu0 %v213
  %v1117 = vpop.f32.mrf.mxu0
  %v1118 = vadd.f32 0.0, %v1117
  %v1119 = vpop.f32.mrf.mxu0
  %1120 = vmatprep.mubr.f32.mxu0 %v216
  %1121 = vmatmul.mubr.f32.gmra.mxu0 %v215
  %v1122 = vpop.f32.mrf.mxu0
  %v1123 = vadd.f32 0.0, %v1122
  %v1124 = vpop.f32.mrf.mxu0
  %1125 = vmatprep.mubr.f32.mxu0 %v218
  %1126 = vmatmul.mubr.f32.gmra.mxu0 %v217
  %v1127 = vpop.f32.mrf.mxu0
  %v1128 = vadd.f32 0.0, %v1127
  %v1129 = vpop.f32.mrf.mxu0
  %1130 = vmatprep.mubr.f32.mxu0 %v220
  %1131 = vmatmul.mubr.f32.gmra.mxu0 %v219
  %v1132 = vpop.f32.mrf.mxu0
  %v1133 = vadd.f32 0.0, %v1132
  %v1134 = vpop.f32.mrf.mxu0
  %1135 = vmatprep.mubr.f32.mxu0 %v222
  %1136 = vmatmul.mubr.f32.gmra.mxu0 %v221
  %v1137 = vpop.f32.mrf.mxu0
  %v1138 = vadd.f32 0.0, %v1137
  %v1139 = vpop.f32.mrf.mxu0
  %1140 = vmatprep.mubr.f32.mxu0 %v224
  %1141 = vmatmul.mubr.f32.gmra.mxu0 %v223
  %v1142 = vpop.f32.mrf.mxu0
  %v1143 = vadd.f32 0.0, %v1142
  %v1144 = vpop.f32.mrf.mxu0
  %1145 = vmatprep.mubr.f32.mxu0 %v226
  %1146 = vmatmul.mubr.f32.gmra.mxu0 %v225
  %v1147 = vpop.f32.mrf.mxu0
  %v1148 = vadd.f32 0.0, %v1147
  %v1149 = vpop.f32.mrf.mxu0
  %1150 = vmatprep.mubr.f32.mxu0 %v228
  %1151 = vmatmul.mubr.f32.gmra.mxu0 %v227
  %v1152 = vpop.f32.mrf.mxu0
  %v1153 = vadd.f32 0.0, %v1152
  %v1154 = vpop.f32.mrf.mxu0
  %1155 = vmatprep.mubr.f32.mxu0 %v230
  %1156 = vmatmul.mubr.f32.gmra.mxu0 %v229
  %v1157 = vpop.f32.mrf.mxu0
  %v1158 = vadd.f32 0.0, %v1157
  %v1159 = vpop.f32.mrf.mxu0
  %1160 = vmatprep.mubr.f32.mxu0 %v232
  %1161 = vmatmul.mubr.f32.gmra.mxu0 %v231
  %v1162 = vpop.f32.mrf.mxu0
  %v1163 = vadd.f32 0.0, %v1162
  %v1164 = vpop.f32.mrf.mxu0
  %1165 = vmatprep.mubr.f32.mxu0 %v234
  %1166 = vmatmul.mubr.f32.gmra.mxu0 %v233
  %v1167 = vpop.f32.mrf.mxu0
  %v1168 = vadd.f32 0.0, %v1167
  %v1169 = vpop.f32.mrf.mxu0
  %1170 = vmatprep.mubr.f32.mxu0 %v236
  %1171 = vmatmul.mubr.f32.gmra.mxu0 %v235
  %v1172 = vpop.f32.mrf.mxu0
  %v1173 = vadd.f32 0.0, %v1172
  %v1174 = vpop.f32.mrf.mxu0
  %1175 = vmatprep.mubr.f32.mxu0 %v238
  %1176 = vmatmul.mubr.f32.gmra.mxu0 %v237
  %v1177 = vpop.f32.mrf.mxu0
  %v1178 = vadd.f32 0.0, %v1177
  %v1179 = vpop.f32.mrf.mxu0
  %1180 = vmatprep.mubr.f32.mxu0 %v240
  %1181 = vmatmul.mubr.f32.gmra.mxu0 %v239
  %v1182 = vpop.f32.mrf.mxu0
  %v1183 = vadd.f32 0.0, %v1182
  %v1184 = vpop.f32.mrf.mxu0
  %1185 = vmatprep.mubr.f32.mxu0 %v242
  %1186 = vmatmul.mubr.f32.gmra.mxu0 %v241
  %v1187 = vpop.f32.mrf.mxu0
  %v1188 = vadd.f32 0.0, %v1187
  %v1189 = vpop.f32.mrf.mxu0
  %1190 = vmatprep.mubr.f32.mxu0 %v244
  %1191 = vmatmul.mubr.f32.gmra.mxu0 %v243
  %v1192 = vpop.f32.mrf.mxu0
  %v1193 = vadd.f32 0.0, %v1192
  %v1194 = vpop.f32.mrf.mxu0
  %1195 = vmatprep.mubr.f32.mxu0 %v246
  %1196 = vmatmul.mubr.f32.gmra.mxu0 %v245
  %v1197 = vpop.f32.mrf.mxu0
  %v1198 = vadd.f32 0.0, %v1197
  %v1199 = vpop.f32.mrf.mxu0
  %1200 = vmatprep.mubr.f32.mxu0 %v248
  %1201 = vmatmul.mubr.f32.gmra.mxu0 %v247
  %v1202 = vpop.f32.mrf.mxu0
  %v1203 = vadd.f32 0.0, %v1202
  %v1204 = vpop.f32.mrf.mxu0
  %1205 = vmatprep.mubr.f32.mxu0 %v250
  %1206 = vmatmul.mubr.f32.gmra.mxu0 %v249
  %v1207 = vpop.f32.mrf.mxu0
  %v1208 = vadd.f32 0.0, %v1207
  %v1209 = vpop.f32.mrf.mxu0
  %1210 = vmatprep.mubr.f32.mxu0 %v252
  %1211 = vmatmul.mubr.f32.gmra.mxu0 %v251
  %v1212 = vpop.f32.mrf.mxu0
  %v1213 = vadd.f32 0.0, %v1212
  %v1214 = vpop.f32.mrf.mxu0
  %1215 = vmatprep.mubr.f32.mxu0 %v254
  %1216 = vmatmul.mubr.f32.gmra.mxu0 %v253
  %v1217 = vpop.f32.mrf.mxu0
  %v1218 = vadd.f32 0.0, %v1217
  %v1219 = vpop.f32.mrf.mxu0
  %1220 = vmatprep.mubr.f32.mxu0 %v256
  %1221 = vmatmul.mubr.f32.gmra.mxu0 %v255
  %v1222 = vpop.f32.mrf.mxu0
  %v1223 = vadd.f32 0.0, %v1222
  %v1224 = vpop.f32.mrf.mxu0
  %1225 = vmatprep.mubr.f32.mxu0 %v258
  %1226 = vmatmul.mubr.f32.gmra.mxu0 %v257
  %v1227 = vpop.f32.mrf.mxu0
  %v1228 = vadd.f32 0.0, %v1227
  %v1229 = vpop.f32.mrf.mxu0
  %1230 = vmatprep.mubr.f32.mxu0 %v260
  %1231 = vmatmul.mubr.f32.gmra.mxu0 %v259
  %v1232 = vpop.f32.mrf.mxu0
  %v1233 = vadd.f32 0.0, %v1232
  %v1234 = vpop.f32.mrf.mxu0
  %1235 = vmatprep.mubr.f32.mxu0 %v262
  %1236 = vmatmul.mubr.f32.gmra.mxu0 %v261
  %v1237 = vpop.f32.mrf.mxu0
  %v1238 = vadd.f32 0.0, %v1237
  %v1239 = vpop.f32.mrf.mxu0
  %1240 = vmatprep.mubr.f32.mxu0 %v264
  %1241 = vmatmul.mubr.f32.gmra.mxu0 %v263
  %v1242 = vpop.f32.mrf.mxu0
  %v1243 = vadd.f32 0.0, %v1242
  %v1244 = vpop.f32.mrf.mxu0
  %1245 = vmatprep.mubr.f32.mxu0 %v266
  %1246 = vmatmul.mubr.f32.gmra.mxu0 %v265
  %v1247 = vpop.f32.mrf.mxu0
  %v1248 = vadd.f32 0.0, %v1247
  %v1249 = vpop.f32.mrf.mxu0
  %1250 = vmatprep.mubr.f32.mxu0 %v268
  %1251 = vmatmul.mubr.f32.gmra.mxu0 %v267
  %v1252 = vpop.f32.mrf.mxu0
  %v1253 = vadd.f32 0.0, %v1252
  %v1254 = vpop.f32.mrf.mxu0
  %1255 = vmatprep.mubr.f32.mxu0 %v270
  %1256 = vmatmul.mubr.f32.gmra.mxu0 %v269
  %v1257 = vpop.f32.mrf.mxu0
  %v1258 = vadd.f32 0.0, %v1257
  %v1259 = vpop.f32.mrf.mxu0
  %1260 = vmatprep.mubr.f32.mxu0 %v272
  %1261 = vmatmul.mubr.f32.gmra.mxu0 %v271
  %v1262 = vpop.f32.mrf.mxu0
  %v1263 = vadd.f32 0.0, %v1262
  %v1264 = vpop.f32.mrf.mxu0
  %1265 = vmatprep.mubr.f32.mxu0 %v274
  %1266 = vmatmul.mubr.f32.gmra.mxu0 %v273
  %v1267 = vpop.f32.mrf.mxu0
  %v1268 = vadd.f32 0.0, %v1267
  %v1269 = vpop.f32.mrf.mxu0
  %1270 = vmatprep.mubr.f32.mxu0 %v276
  %1271 = vmatmul.mubr.f32.gmra.mxu0 %v275
  %v1272 = vpop.f32.mrf.mxu0
  %v1273 = vadd.f32 0.0, %v1272
  %v1274 = vpop.f32.mrf.mxu0
  %1275 = vmatprep.mubr.f32.mxu0 %v278
  %1276 = vmatmul.mubr.f32.gmra.mxu0 %v277
  %v1277 = vpop.f32.mrf.mxu0
  %v1278 = vadd.f32 0.0, %v1277
  %v1279 = vpop.f32.mrf.mxu0
  %1280 = vmatprep.mubr.f32.mxu0 %v280
  %1281 = vmatmul.mubr.f32.gmra.mxu0 %v279
  %v1282 = vpop.f32.mrf.mxu0
  %v1283 = vadd.f32 0.0, %v1282
  %v1284 = vpop.f32.mrf.mxu0
  %1285 = vmatprep.mubr.f32.mxu0 %v282
  %1286 = vmatmul.mubr.f32.gmra.mxu0 %v281
  %v1287 = vpop.f32.mrf.mxu0
  %v1288 = vadd.f32 0.0, %v1287
  %v1289 = vpop.f32.mrf.mxu0
  %1290 = vmatprep.mubr.f32.mxu0 %v284
  %1291 = vmatmul.mubr.f32.gmra.mxu0 %v283
  %v1292 = vpop.f32.mrf.mxu0
  %v1293 = vadd.f32 0.0, %v1292
  %v1294 = vpop.f32.mrf.mxu0
  %1295 = vmatprep.mubr.f32.mxu0 %v286
  %1296 = vmatmul.mubr.f32.gmra.mxu0 %v285
  %v1297 = vpop.f32.mrf.mxu0
  %v1298 = vadd.f32 0.0, %v1297
  %v1299 = vpop.f32.mrf.mxu0
  %1300 = vmatprep.mubr.f32.mxu0 %v288
  %1301 = vmatmul.mubr.f32.gmra.mxu0 %v287
  %v1302 = vpop.f32.mrf.mxu0
  %v1303 = vadd.f32 0.0, %v1302
  %v1304 = vpop.f32.mrf.mxu0
  %1305 = vmatprep.mubr.f32.mxu0 %v290
  %1306 = vmatmul.mubr.f32.gmra.mxu0 %v289
  %v1307 = vpop.f32.mrf.mxu0
  %v1308 = vadd.f32 0.0, %v1307
  %v1309 = vpop.f32.mrf.mxu0
  %1310 = vmatprep.mubr.f32.mxu0 %v292
  %1311 = vmatmul.mubr.f32.gmra.mxu0 %v291
  %v1312 = vpop.f32.mrf.mxu0
  %v1313 = vadd.f32 0.0, %v1312
  %v1314 = vpop.f32.mrf.mxu0
  %1315 = vmatprep.mubr.f32.mxu0 %v294
  %1316 = vmatmul.mubr.f32.gmra.mxu0 %v293
  %v1317 = vpop.f32.mrf.mxu0
  %v1318 = vadd.f32 0.0, %v1317
  %v1319 = vpop.f32.mrf.mxu0
  %1320 = vmatprep.mubr.f32.mxu0 %v296
  %1321 = vmatmul.mubr.f32.gmra.mxu0 %v295
  %v1322 = vpop.f32.mrf.mxu0
  %v1323 = vadd.f32 0.0, %v1322
  %v1324 = vpop.f32.mrf.mxu0
  %1325 = vmatprep.mubr.f32.mxu0 %v298
  %1326 = vmatmul.mubr.f32.gmra.mxu0 %v297
  %v1327 = vpop.f32.mrf.mxu0
  %v1328 = vadd.f32 0.0, %v1327
  %v1329 = vpop.f32.mrf.mxu0
  %1330 = vmatprep.mubr.f32.mxu0 %v300
  %1331 = vmatmul.mubr.f32.gmra.mxu0 %v299
  %v1332 = vpop.f32.mrf.mxu0
  %v1333 = vadd.f32 0.0, %v1332
  %v1334 = vpop.f32.mrf.mxu0
  %1335 = vmatprep.mubr.f32.mxu0 %v302
  %1336 = vmatmul.mubr.f32.gmra.mxu0 %v301
  %v1337 = vpop.f32.mrf.mxu0
  %v1338 = vadd.f32 0.0, %v1337
  %v1339 = vpop.f32.mrf.mxu0
  %1340 = vmatprep.mubr.f32.mxu0 %v304
  %1341 = vmatmul.mubr.f32.gmra.mxu0 %v303
  %v1342 = vpop.f32.mrf.mxu0
  %v1343 = vadd.f32 0.0, %v1342
  %v1344 = vpop.f32.mrf.mxu0
  %1345 = vmatprep.mubr.f32.mxu0 %v306
  %1346 = vmatmul.mubr.f32.gmra.mxu0 %v305
  %v1347 = vpop.f32.mrf.mxu0
  %v1348 = vadd.f32 0.0, %v1347
  %v1349 = vpop.f32.mrf.mxu0
  %1350 = vmatprep.mubr.f32.mxu0 %v308
  %1351 = vmatmul.mubr.f32.gmra.mxu0 %v307
  %v1352 = vpop.f32.mrf.mxu0
  %v1353 = vadd.f32 0.0, %v1352
  %v1354 = vpop.f32.mrf.mxu0
  %1355 = vmatprep.mubr.f32.mxu0 %v310
  %1356 = vmatmul.mubr.f32.gmra.mxu0 %v309
  %v1357 = vpop.f32.mrf.mxu0
  %v1358 = vadd.f32 0.0, %v1357
  %v1359 = vpop.f32.mrf.mxu0
  %1360 = vmatprep.mubr.f32.mxu0 %v312
  %1361 = vmatmul.mubr.f32.gmra.mxu0 %v311
  %v1362 = vpop.f32.mrf.mxu0
  %v1363 = vadd.f32 0.0, %v1362
  %v1364 = vpop.f32.mrf.mxu0
  %1365 = vmatprep.mubr.f32.mxu0 %v314
  %1366 = vmatmul.mubr.f32.gmra.mxu0 %v313
  %v1367 = vpop.f32.mrf.mxu0
  %v1368 = vadd.f32 0.0, %v1367
  %v1369 = vpop.f32.mrf.mxu0
  %1370 = vmatprep.mubr.f32.mxu0 %v316
  %1371 = vmatmul.mubr.f32.gmra.mxu0 %v315
  %v1372 = vpop.f32.mrf.mxu0
  %v1373 = vadd.f32 0.0, %v1372
  %v1374 = vpop.f32.mrf.mxu0
  %1375 = vmatprep.mubr.f32.mxu0 %v318
  %1376 = vmatmul.mubr.f32.gmra.mxu0 %v317
  %v1377 = vpop.f32.mrf.mxu0
  %v1378 = vadd.f32 0.0, %v1377
  %v1379 = vpop.f32.mrf.mxu0
  %1380 = vmatprep.mubr.f32.mxu0 %v320
  %1381 = vmatmul.mubr.f32.gmra.mxu0 %v319
  %v1382 = vpop.f32.mrf.mxu0
  %v1383 = vadd.f32 0.0, %v1382
  %v1384 = vpop.f32.mrf.mxu0
  %1385 = vmatprep.mubr.f32.mxu0 %v322
  %1386 = vmatmul.mubr.f32.gmra.mxu0 %v321
  %v1387 = vpop.f32.mrf.mxu0
  %v1388 = vadd.f32 0.0, %v1387
  %v1389 = vpop.f32.mrf.mxu0
  %1390 = vmatprep.mubr.f32.mxu0 %v324
  %1391 = vmatmul.mubr.f32.gmra.mxu0 %v323
  %v1392 = vpop.f32.mrf.mxu0
  %v1393 = vadd.f32 0.0, %v1392
  %v1394 = vpop.f32.mrf.mxu0
  %1395 = vmatprep.mubr.f32.mxu0 %v326
  %1396 = vmatmul.mubr.f32.gmra.mxu0 %v325
  %v1397 = vpop.f32.mrf.mxu0
  %v1398 = vadd.f32 0.0, %v1397
  %v1399 = vpop.f32.mrf.mxu0
  %1400 = vmatprep.mubr.f32.mxu0 %v328
  %1401 = vmatmul.mubr.f32.gmra.mxu0 %v327
  %v1402 = vpop.f32.mrf.mxu0
  %v1403 = vadd.f32 0.0, %v1402
  %v1404 = vpop.f32.mrf.mxu0
  %1405 = vmatprep.mubr.f32.mxu0 %v330
  %1406 = vmatmul.mubr.f32.gmra.mxu0 %v329
  %v1407 = vpop.f32.mrf.mxu0
  %v1408 = vadd.f32 0.0, %v1407
  %v1409 = vpop.f32.mrf.mxu0
  %1410 = vmatprep.mubr.f32.mxu0 %v332
  %1411 = vmatmul.mubr.f32.gmra.mxu0 %v331
  %v1412 = vpop.f32.mrf.mxu0
  %v1413 = vadd.f32 0.0, %v1412
  %v1414 = vpop.f32.mrf.mxu0
  %1415 = vmatprep.mubr.f32.mxu0 %v334
  %1416 = vmatmul.mubr.f32.gmra.mxu0 %v333
  %v1417 = vpop.f32.mrf.mxu0
  %v1418 = vadd.f32 0.0, %v1417
  %v1419 = vpop.f32.mrf.mxu0
  %1420 = vmatprep.mubr.f32.mxu0 %v336
  %1421 = vmatmul.mubr.f32.gmra.mxu0 %v335
  %v1422 = vpop.f32.mrf.mxu0
  %v1423 = vadd.f32 0.0, %v1422
  %v1424 = vpop.f32.mrf.mxu0
  %1425 = vmatprep.mubr.f32.mxu0 %v338
  %1426 = vmatmul.mubr.f32.gmra.mxu0 %v337
  %v1427 = vpop.f32.mrf.mxu0
  %v1428 = vadd.f32 0.0, %v1427
  %v1429 = vpop.f32.mrf.mxu0
  %1430 = vmatprep.mubr.f32.mxu0 %v340
  %1431 = vmatmul.mubr.f32.gmra.mxu0 %v339
  %v1432 = vpop.f32.mrf.mxu0
  %v1433 = vadd.f32 0.0, %v1432
  %v1434 = vpop.f32.mrf.mxu0
  %1435 = vmatprep.mubr.f32.mxu0 %v342
  %1436 = vmatmul.mubr.f32.gmra.mxu0 %v341
  %v1437 = vpop.f32.mrf.mxu0
  %v1438 = vadd.f32 0.0, %v1437
  %v1439 = vpop.f32.mrf.mxu0
  %1440 = vmatprep.mubr.f32.mxu0 %v344
  %1441 = vmatmul.mubr.f32.gmra.mxu0 %v343
  %v1442 = vpop.f32.mrf.mxu0
  %v1443 = vadd.f32 0.0, %v1442
  %v1444 = vpop.f32.mrf.mxu0
  %1445 = vmatprep.mubr.f32.mxu0 %v346
  %1446 = vmatmul.mubr.f32.gmra.mxu0 %v345
  %v1447 = vpop.f32.mrf.mxu0
  %v1448 = vadd.f32 0.0, %v1447
  %v1449 = vpop.f32.mrf.mxu0
  %1450 = vmatprep.mubr.f32.mxu0 %v348
  %1451 = vmatmul.mubr.f32.gmra.mxu0 %v347
  %v1452 = vpop.f32.mrf.mxu0
  %v1453 = vadd.f32 0.0, %v1452
  %v1454 = vpop.f32.mrf.mxu0
  %1455 = vmatprep.mubr.f32.mxu0 %v350
  %1456 = vmatmul.mubr.f32.gmra.mxu0 %v349
  %v1457 = vpop.f32.mrf.mxu0
  %v1458 = vadd.f32 0.0, %v1457
  %v1459 = vpop.f32.mrf.mxu0
  %1460 = vmatprep.mubr.f32.mxu0 %v352
  %1461 = vmatmul.mubr.f32.gmra.mxu0 %v351
  %v1462 = vpop.f32.mrf.mxu0
  %v1463 = vadd.f32 0.0, %v1462
  %v1464 = vpop.f32.mrf.mxu0
  %1465 = vmatprep.mubr.f32.mxu0 %v354
  %1466 = vmatmul.mubr.f32.gmra.mxu0 %v353
  %v1467 = vpop.f32.mrf.mxu0
  %v1468 = vadd.f32 0.0, %v1467
  %v1469 = vpop.f32.mrf.mxu0
  %1470 = vmatprep.mubr.f32.mxu0 %v356
  %1471 = vmatmul.mubr.f32.gmra.mxu0 %v355
  %v1472 = vpop.f32.mrf.mxu0
  %v1473 = vadd.f32 0.0, %v1472
  %v1474 = vpop.f32.mrf.mxu0
  %1475 = vmatprep.mubr.f32.mxu0 %v358
  %1476 = vmatmul.mubr.f32.gmra.mxu0 %v357
  %v1477 = vpop.f32.mrf.mxu0
  %v1478 = vadd.f32 0.0, %v1477
  %v1479 = vpop.f32.mrf.mxu0
  %1480 = vmatprep.mubr.f32.mxu0 %v360
  %1481 = vmatmul.mubr.f32.gmra.mxu0 %v359
  %v1482 = vpop.f32.mrf.mxu0
  %v1483 = vadd.f32 0.0, %v1482
  %v1484 = vpop.f32.mrf.mxu0
  %1485 = vmatprep.mubr.f32.mxu0 %v362
  %1486 = vmatmul.mubr.f32.gmra.mxu0 %v361
  %v1487 = vpop.f32.mrf.mxu0
  %v1488 = vadd.f32 0.0, %v1487
  %v1489 = vpop.f32.mrf.mxu0
  %1490 = vmatprep.mubr.f32.mxu0 %v364
  %1491 = vmatmul.mubr.f32.gmra.mxu0 %v363
  %v1492 = vpop.f32.mrf.mxu0
  %v1493 = vadd.f32 0.0, %v1492
  %v1494 = vpop.f32.mrf.mxu0
  %1495 = vmatprep.mubr.f32.mxu0 %v366
  %1496 = vmatmul.mubr.f32.gmra.mxu0 %v365
  %v1497 = vpop.f32.mrf.mxu0
  %v1498 = vadd.f32 0.0, %v1497
  %v1499 = vpop.f32.mrf.mxu0
  %1500 = vmatprep.mubr.f32.mxu0 %v368
  %1501 = vmatmul.mubr.f32.gmra.mxu0 %v367
  %v1502 = vpop.f32.mrf.mxu0
  %v1503 = vadd.f32 0.0, %v1502
  %v1504 = vpop.f32.mrf.mxu0
  %1505 = vmatprep.mubr.f32.mxu0 %v370
  %1506 = vmatmul.mubr.f32.gmra.mxu0 %v369
  %v1507 = vpop.f32.mrf.mxu0
  %v1508 = vadd.f32 0.0, %v1507
  %v1509 = vpop.f32.mrf.mxu0
  %1510 = vmatprep.mubr.f32.mxu0 %v372
  %1511 = vmatmul.mubr.f32.gmra.mxu0 %v371
  %v1512 = vpop.f32.mrf.mxu0
  %v1513 = vadd.f32 0.0, %v1512
  %v1514 = vpop.f32.mrf.mxu0
  %1515 = vmatprep.mubr.f32.mxu0 %v374
  %1516 = vmatmul.mubr.f32.gmra.mxu0 %v373
  %v1517 = vpop.f32.mrf.mxu0
  %v1518 = vadd.f32 0.0, %v1517
  %v1519 = vpop.f32.mrf.mxu0
  %1520 = vmatprep.mubr.f32.mxu0 %v376
  %1521 = vmatmul.mubr.f32.gmra.mxu0 %v375
  %v1522 = vpop.f32.mrf.mxu0
  %v1523 = vadd.f32 0.0, %v1522
  %v1524 = vpop.f32.mrf.mxu0
  %1525 = vmatprep.mubr.f32.mxu0 %v378
  %1526 = vmatmul.mubr.f32.gmra.mxu0 %v377
  %v1527 = vpop.f32.mrf.mxu0
  %v1528 = vadd.f32 0.0, %v1527
  %v1529 = vpop.f32.mrf.mxu0
  %1530 = vmatprep.mubr.f32.mxu0 %v380
  %1531 = vmatmul.mubr.f32.gmra.mxu0 %v379
  %v1532 = vpop.f32.mrf.mxu0
  %v1533 = vadd.f32 0.0, %v1532
  %v1534 = vpop.f32.mrf.mxu0
  %1535 = vmatprep.mubr.f32.mxu0 %v382
  %1536 = vmatmul.mubr.f32.gmra.mxu0 %v381
  %v1537 = vpop.f32.mrf.mxu0
  %v1538 = vadd.f32 0.0, %v1537
  %v1539 = vpop.f32.mrf.mxu0
  %1540 = vmatprep.mubr.f32.mxu0 %v384
  %1541 = vmatmul.mubr.f32.gmra.mxu0 %v383
  %v1542 = vpop.f32.mrf.mxu0
  %v1543 = vadd.f32 0.0, %v1542
  %v1544 = vpop.f32.mrf.mxu0
  %1545 = vmatprep.mubr.f32.mxu0 %v386
  %1546 = vmatmul.mubr.f32.gmra.mxu0 %v385
  %v1547 = vpop.f32.mrf.mxu0
  %v1548 = vadd.f32 0.0, %v1547
  %v1549 = vpop.f32.mrf.mxu0
  %1550 = vmatprep.mubr.f32.mxu0 %v388
  %1551 = vmatmul.mubr.f32.gmra.mxu0 %v387
  %v1552 = vpop.f32.mrf.mxu0
  %v1553 = vadd.f32 0.0, %v1552
  %v1554 = vpop.f32.mrf.mxu0
  %1555 = vmatprep.mubr.f32.mxu0 %v390
  %1556 = vmatmul.mubr.f32.gmra.mxu0 %v389
  %v1557 = vpop.f32.mrf.mxu0
  %v1558 = vadd.f32 0.0, %v1557
  %v1559 = vpop.f32.mrf.mxu0
  %1560 = vmatprep.mubr.f32.mxu0 %v392
  %1561 = vmatmul.mubr.f32.gmra.mxu0 %v391
  %v1562 = vpop.f32.mrf.mxu0
  %v1563 = vadd.f32 0.0, %v1562
  %v1564 = vpop.f32.mrf.mxu0
  %1565 = vmatprep.mubr.f32.mxu0 %v394
  %1566 = vmatmul.mubr.f32.gmra.mxu0 %v393
  %v1567 = vpop.f32.mrf.mxu0
  %v1568 = vadd.f32 0.0, %v1567
  %v1569 = vpop.f32.mrf.mxu0
  %1570 = vmatprep.mubr.f32.mxu0 %v396
  %1571 = vmatmul.mubr.f32.gmra.mxu0 %v395
  %v1572 = vpop.f32.mrf.mxu0
  %v1573 = vadd.f32 0.0, %v1572
  %v1574 = vpop.f32.mrf.mxu0
  %1575 = vmatprep.mubr.f32.mxu0 %v398
  %1576 = vmatmul.mubr.f32.gmra.mxu0 %v397
  %v1577 = vpop.f32.mrf.mxu0
  %v1578 = vadd.f32 0.0, %v1577
  %v1579 = vpop.f32.mrf.mxu0
  %1580 = vmatprep.mubr.f32.mxu0 %v400
  %1581 = vmatmul.mubr.f32.gmra.mxu0 %v399
  %v1582 = vpop.f32.mrf.mxu0
  %v1583 = vadd.f32 0.0, %v1582
  %v1584 = vpop.f32.mrf.mxu0
  %1585 = vmatprep.mubr.f32.mxu0 %v402
  %1586 = vmatmul.mubr.f32.gmra.mxu0 %v401
  %v1587 = vpop.f32.mrf.mxu0
  %v1588 = vadd.f32 0.0, %v1587
  %v1589 = vpop.f32.mrf.mxu0
  %1590 = vmatprep.mubr.f32.mxu0 %v404
  %1591 = vmatmul.mubr.f32.gmra.mxu0 %v403
  %v1592 = vpop.f32.mrf.mxu0
  %v1593 = vadd.f32 0.0, %v1592
  %v1594 = vpop.f32.mrf.mxu0
  %1595 = vmatprep.mubr.f32.mxu0 %v406
  %1596 = vmatmul.mubr.f32.gmra.mxu0 %v405
  %v1597 = vpop.f32.mrf.mxu0
  %v1598 = vadd.f32 0.0, %v1597
  %v1599 = vpop.f32.mrf.mxu0
  %1600 = vmatprep.mubr.f32.mxu0 %v408
  %1601 = vmatmul.mubr.f32.gmra.mxu0 %v407
  %v1602 = vpop.f32.mrf.mxu0
  %v1603 = vadd.f32 0.0, %v1602
  %v1604 = vpop.f32.mrf.mxu0
  %1605 = vmatprep.mubr.f32.mxu0 %v410
  %1606 = vmatmul.mubr.f32.gmra.mxu0 %v409
  %v1607 = vpop.f32.mrf.mxu0
  %v1608 = vadd.f32 0.0, %v1607
  %v1609 = vpop.f32.mrf.mxu0
  %1610 = vmatprep.mubr.f32.mxu0 %v412
  %1611 = vmatmul.mubr.f32.gmra.mxu0 %v411
  %v1612 = vpop.f32.mrf.mxu0
  %v1613 = vadd.f32 0.0, %v1612
  %v1614 = vpop.f32.mrf.mxu0
  %1615 = vmatprep.mubr.f32.mxu0 %v414
  %1616 = vmatmul.mubr.f32.gmra.mxu0 %v413
  %v1617 = vpop.f32.mrf.mxu0
  %v1618 = vadd.f32 0.0, %v1617
  %v1619 = vpop.f32.mrf.mxu0
  %1620 = vmatprep.mubr.f32.mxu0 %v416
  %1621 = vmatmul.mubr.f32.gmra.mxu0 %v415
  %v1622 = vpop.f32.mrf.mxu0
  %v1623 = vadd.f32 0.0, %v1622
  %v1624 = vpop.f32.mrf.mxu0
  %1625 = vmatprep.mubr.f32.mxu0 %v418
  %1626 = vmatmul.mubr.f32.gmra.mxu0 %v417
  %v1627 = vpop.f32.mrf.mxu0
  %v1628 = vadd.f32 0.0, %v1627
  %v1629 = vpop.f32.mrf.mxu0
  %1630 = vmatprep.mubr.f32.mxu0 %v420
  %1631 = vmatmul.mubr.f32.gmra.mxu0 %v419
  %v1632 = vpop.f32.mrf.mxu0
  %v1633 = vadd.f32 0.0, %v1632
  %v1634 = vpop.f32.mrf.mxu0
  %1635 = vmatprep.mubr.f32.mxu0 %v422
  %1636 = vmatmul.mubr.f32.gmra.mxu0 %v421
  %v1637 = vpop.f32.mrf.mxu0
  %v1638 = vadd.f32 0.0, %v1637
  %v1639 = vpop.f32.mrf.mxu0
  %1640 = vmatprep.mubr.f32.mxu0 %v424
  %1641 = vmatmul.mubr.f32.gmra.mxu0 %v423
  %v1642 = vpop.f32.mrf.mxu0
  %v1643 = vadd.f32 0.0, %v1642
  %v1644 = vpop.f32.mrf.mxu0
  %1645 = vmatprep.mubr.f32.mxu0 %v426
  %1646 = vmatmul.mubr.f32.gmra.mxu0 %v425
  %v1647 = vpop.f32.mrf.mxu0
  %v1648 = vadd.f32 0.0, %v1647
  %v1649 = vpop.f32.mrf.mxu0
  %1650 = vmatprep.mubr.f32.mxu0 %v428
  %1651 = vmatmul.mubr.f32.gmra.mxu0 %v427
  %v1652 = vpop.f32.mrf.mxu0
  %v1653 = vadd.f32 0.0, %v1652
  %v1654 = vpop.f32.mrf.mxu0
  %1655 = vmatprep.mubr.f32.mxu0 %v430
  %1656 = vmatmul.mubr.f32.gmra.mxu0 %v429
  %v1657 = vpop.f32.mrf.mxu0
  %v1658 = vadd.f32 0.0, %v1657
  %v1659 = vpop.f32.mrf.mxu0
  %1660 = vmatprep.mubr.f32.mxu0 %v432
  %1661 = vmatmul.mubr.f32.gmra.mxu0 %v431
  %v1662 = vpop.f32.mrf.mxu0
  %v1663 = vadd.f32 0.0, %v1662
  %v1664 = vpop.f32.mrf.mxu0
  %1665 = vmatprep.mubr.f32.mxu0 %v434
  %1666 = vmatmul.mubr.f32.gmra.mxu0 %v433
  %v1667 = vpop.f32.mrf.mxu0
  %v1668 = vadd.f32 0.0, %v1667
  %v1669 = vpop.f32.mrf.mxu0
  %1670 = vmatprep.mubr.f32.mxu0 %v436
  %1671 = vmatmul.mubr.f32.gmra.mxu0 %v435
  %v1672 = vpop.f32.mrf.mxu0
  %v1673 = vadd.f32 0.0, %v1672
  %v1674 = vpop.f32.mrf.mxu0
  %1675 = vmatprep.mubr.f32.mxu0 %v438
  %1676 = vmatmul.mubr.f32.gmra.mxu0 %v437
  %v1677 = vpop.f32.mrf.mxu0
  %v1678 = vadd.f32 0.0, %v1677
  %v1679 = vpop.f32.mrf.mxu0
  %1680 = vmatprep.mubr.f32.mxu0 %v440
  %1681 = vmatmul.mubr.f32.gmra.mxu0 %v439
  %v1682 = vpop.f32.mrf.mxu0
  %v1683 = vadd.f32 0.0, %v1682
  %v1684 = vpop.f32.mrf.mxu0
  %1685 = vmatprep.mubr.f32.mxu0 %v442
  %1686 = vmatmul.mubr.f32.gmra.mxu0 %v441
  %v1687 = vpop.f32.mrf.mxu0
  %v1688 = vadd.f32 0.0, %v1687
  %v1689 = vpop.f32.mrf.mxu0
  %1690 = vmatprep.mubr.f32.mxu0 %v444
  %1691 = vmatmul.mubr.f32.gmra.mxu0 %v443
  %v1692 = vpop.f32.mrf.mxu0
  %v1693 = vadd.f32 0.0, %v1692
  %v1694 = vpop.f32.mrf.mxu0
  %1695 = vmatprep.mubr.f32.mxu0 %v446
  %1696 = vmatmul.mubr.f32.gmra.mxu0 %v445
  %v1697 = vpop.f32.mrf.mxu0
  %v1698 = vadd.f32 0.0, %v1697
  %v1699 = vpop.f32.mrf.mxu0
  %1700 = vmatprep.mubr.f32.mxu0 %v448
  %1701 = vmatmul.mubr.f32.gmra.mxu0 %v447
  %v1702 = vpop.f32.mrf.mxu0
  %v1703 = vadd.f32 0.0, %v1702
  %v1704 = vpop.f32.mrf.mxu0
  %1705 = vmatprep.mubr.f32.mxu0 %v450
  %1706 = vmatmul.mubr.f32.gmra.mxu0 %v449
  %v1707 = vpop.f32.mrf.mxu0
  %v1708 = vadd.f32 0.0, %v1707
  %v1709 = vpop.f32.mrf.mxu0
  %1710 = vmatprep.mubr.f32.mxu0 %v452
  %1711 = vmatmul.mubr.f32.gmra.mxu0 %v451
  %v1712 = vpop.f32.mrf.mxu0
  %v1713 = vadd.f32 0.0, %v1712
  %v1714 = vpop.f32.mrf.mxu0
  %1715 = vmatprep.mubr.f32.mxu0 %v454
  %1716 = vmatmul.mubr.f32.gmra.mxu0 %v453
  %v1717 = vpop.f32.mrf.mxu0
  %v1718 = vadd.f32 0.0, %v1717
  %v1719 = vpop.f32.mrf.mxu0
  %1720 = vmatprep.mubr.f32.mxu0 %v456
  %1721 = vmatmul.mubr.f32.gmra.mxu0 %v455
  %v1722 = vpop.f32.mrf.mxu0
  %v1723 = vadd.f32 0.0, %v1722
  %v1724 = vpop.f32.mrf.mxu0
  %1725 = vmatprep.mubr.f32.mxu0 %v458
  %1726 = vmatmul.mubr.f32.gmra.mxu0 %v457
  %v1727 = vpop.f32.mrf.mxu0
  %v1728 = vadd.f32 0.0, %v1727
  %v1729 = vpop.f32.mrf.mxu0
  %1730 = vmatprep.mubr.f32.mxu0 %v460
  %1731 = vmatmul.mubr.f32.gmra.mxu0 %v459
  %v1732 = vpop.f32.mrf.mxu0
  %v1733 = vadd.f32 0.0, %v1732
  %v1734 = vpop.f32.mrf.mxu0
  %1735 = vmatprep.mubr.f32.mxu0 %v462
  %1736 = vmatmul.mubr.f32.gmra.mxu0 %v461
  %v1737 = vpop.f32.mrf.mxu0
  %v1738 = vadd.f32 0.0, %v1737
  %v1739 = vpop.f32.mrf.mxu0
  %1740 = vmatprep.mubr.f32.mxu0 %v464
  %1741 = vmatmul.mubr.f32.gmra.mxu0 %v463
  %v1742 = vpop.f32.mrf.mxu0
  %v1743 = vadd.f32 0.0, %v1742
  %v1744 = vpop.f32.mrf.mxu0
  %1745 = vmatprep.mubr.f32.mxu0 %v466
  %1746 = vmatmul.mubr.f32.gmra.mxu0 %v465
  %v1747 = vpop.f32.mrf.mxu0
  %v1748 = vadd.f32 0.0, %v1747
  %v1749 = vpop.f32.mrf.mxu0
  %1750 = vmatprep.mubr.f32.mxu0 %v468
  %1751 = vmatmul.mubr.f32.gmra.mxu0 %v467
  %v1752 = vpop.f32.mrf.mxu0
  %v1753 = vadd.f32 0.0, %v1752
  %v1754 = vpop.f32.mrf.mxu0
  %1755 = vmatprep.mubr.f32.mxu0 %v470
  %1756 = vmatmul.mubr.f32.gmra.mxu0 %v469
  %v1757 = vpop.f32.mrf.mxu0
  %v1758 = vadd.f32 0.0, %v1757
  %v1759 = vpop.f32.mrf.mxu0
  %1760 = vmatprep.mubr.f32.mxu0 %v472
  %1761 = vmatmul.mubr.f32.gmra.mxu0 %v471
  %v1762 = vpop.f32.mrf.mxu0
  %v1763 = vadd.f32 0.0, %v1762
  %v1764 = vpop.f32.mrf.mxu0
  %1765 = vmatprep.mubr.f32.mxu0 %v474
  %1766 = vmatmul.mubr.f32.gmra.mxu0 %v473
  %v1767 = vpop.f32.mrf.mxu0
  %v1768 = vadd.f32 0.0, %v1767
  %v1769 = vpop.f32.mrf.mxu0
  %1770 = vmatprep.mubr.f32.mxu0 %v476
  %1771 = vmatmul.mubr.f32.gmra.mxu0 %v475
  %v1772 = vpop.f32.mrf.mxu0
  %v1773 = vadd.f32 0.0, %v1772
  %v1774 = vpop.f32.mrf.mxu0
  %1775 = vmatprep.mubr.f32.mxu0 %v478
  %1776 = vmatmul.mubr.f32.gmra.mxu0 %v477
  %v1777 = vpop.f32.mrf.mxu0
  %v1778 = vadd.f32 0.0, %v1777
  %v1779 = vpop.f32.mrf.mxu0
  %1780 = vmatprep.mubr.f32.mxu0 %v480
  %1781 = vmatmul.mubr.f32.gmra.mxu0 %v479
  %v1782 = vpop.f32.mrf.mxu0
  %v1783 = vadd.f32 0.0, %v1782
  %v1784 = vpop.f32.mrf.mxu0
  %1785 = vmatprep.mubr.f32.mxu0 %v482
  %1786 = vmatmul.mubr.f32.gmra.mxu0 %v481
  %v1787 = vpop.f32.mrf.mxu0
  %v1788 = vadd.f32 0.0, %v1787
  %v1789 = vpop.f32.mrf.mxu0
  %1790 = vmatprep.mubr.f32.mxu0 %v484
  %1791 = vmatmul.mubr.f32.gmra.mxu0 %v483
  %v1792 = vpop.f32.mrf.mxu0
  %v1793 = vadd.f32 0.0, %v1792
  %v1794 = vpop.f32.mrf.mxu0
  %1795 = vmatprep.mubr.f32.mxu0 %v486
  %1796 = vmatmul.mubr.f32.gmra.mxu0 %v485
  %v1797 = vpop.f32.mrf.mxu0
  %v1798 = vadd.f32 0.0, %v1797
  %v1799 = vpop.f32.mrf.mxu0
  %1800 = vmatprep.mubr.f32.mxu0 %v488
  %1801 = vmatmul.mubr.f32.gmra.mxu0 %v487
  %v1802 = vpop.f32.mrf.mxu0
  %v1803 = vadd.f32 0.0, %v1802
  %v1804 = vpop.f32.mrf.mxu0
  %1805 = vmatprep.mubr.f32.mxu0 %v490
  %1806 = vmatmul.mubr.f32.gmra.mxu0 %v489
  %v1807 = vpop.f32.mrf.mxu0
  %v1808 = vadd.f32 0.0, %v1807
  %v1809 = vpop.f32.mrf.mxu0
  %1810 = vmatprep.mubr.f32.mxu0 %v492
  %1811 = vmatmul.mubr.f32.gmra.mxu0 %v491
  %v1812 = vpop.f32.mrf.mxu0
  %v1813 = vadd.f32 0.0, %v1812
  %v1814 = vpop.f32.mrf.mxu0
  %1815 = vmatprep.mubr.f32.mxu0 %v494
  %1816 = vmatmul.mubr.f32.gmra.mxu0 %v493
  %v1817 = vpop.f32.mrf.mxu0
  %v1818 = vadd.f32 0.0, %v1817
  %v1819 = vpop.f32.mrf.mxu0
  %1820 = vmatprep.mubr.f32.mxu0 %v496
  %1821 = vmatmul.mubr.f32.gmra.mxu0 %v495
  %v1822 = vpop.f32.mrf.mxu0
  %v1823 = vadd.f32 0.0, %v1822
  %v1824 = vpop.f32.mrf.mxu0
  %1825 = vmatprep.mubr.f32.mxu0 %v498
  %1826 = vmatmul.mubr.f32.gmra.mxu0 %v497
  %v1827 = vpop.f32.mrf.mxu0
  %v1828 = vadd.f32 0.0, %v1827
  %v1829 = vpop.f32.mrf.mxu0
  %1830 = vmatprep.mubr.f32.mxu0 %v500
  %1831 = vmatmul.mubr.f32.gmra.mxu0 %v499
  %v1832 = vpop.f32.mrf.mxu0
  %v1833 = vadd.f32 0.0, %v1832
  %v1834 = vpop.f32.mrf.mxu0
  %1835 = vmatprep.mubr.f32.mxu0 %v502
  %1836 = vmatmul.mubr.f32.gmra.mxu0 %v501
  %v1837 = vpop.f32.mrf.mxu0
  %v1838 = vadd.f32 0.0, %v1837
  %v1839 = vpop.f32.mrf.mxu0
  %1840 = vmatprep.mubr.f32.mxu0 %v504
  %1841 = vmatmul.mubr.f32.gmra.mxu0 %v503
  %v1842 = vpop.f32.mrf.mxu0
  %v1843 = vadd.f32 0.0, %v1842
  %v1844 = vpop.f32.mrf.mxu0
  %1845 = vmatprep.mubr.f32.mxu0 %v506
  %1846 = vmatmul.mubr.f32.gmra.mxu0 %v505
  %v1847 = vpop.f32.mrf.mxu0
  %v1848 = vadd.f32 0.0, %v1847
  %v1849 = vpop.f32.mrf.mxu0
  %1850 = vmatprep.mubr.f32.mxu0 %v508
  %1851 = vmatmul.mubr.f32.gmra.mxu0 %v507
  %v1852 = vpop.f32.mrf.mxu0
  %v1853 = vadd.f32 0.0, %v1852
  %v1854 = vpop.f32.mrf.mxu0
  %1855 = vmatprep.mubr.f32.mxu0 %v510
  %1856 = vmatmul.mubr.f32.gmra.mxu0 %v509
  %v1857 = vpop.f32.mrf.mxu0
  %v1858 = vadd.f32 0.0, %v1857
  %v1859 = vpop.f32.mrf.mxu0
  %1860 = vmatprep.mubr.f32.mxu0 %v512
  %1861 = vmatmul.mubr.f32.gmra.mxu0 %v511
  %v1862 = vpop.f32.mrf.mxu0
  %v1863 = vadd.f32 0.0, %v1862
  %v1864 = vpop.f32.mrf.mxu0
  %1865 = vmatprep.mubr.f32.mxu0 %v514
  %1866 = vmatmul.mubr.f32.gmra.mxu0 %v513
  %v1867 = vpop.f32.mrf.mxu0
  %v1868 = vadd.f32 0.0, %v1867
  %v1869 = vpop.f32.mrf.mxu0
  %1870 = vmatprep.mubr.f32.mxu0 %v516
  %1871 = vmatmul.mubr.f32.gmra.mxu0 %v515
  %v1872 = vpop.f32.mrf.mxu0
  %v1873 = vadd.f32 0.0, %v1872
  %v1874 = vpop.f32.mrf.mxu0
  %1875 = vmatprep.mubr.f32.mxu0 %v518
  %1876 = vmatmul.mubr.f32.gmra.mxu0 %v517
  %v1877 = vpop.f32.mrf.mxu0
  %v1878 = vadd.f32 0.0, %v1877
  %v1879 = vpop.f32.mrf.mxu0
  %1880 = vmatprep.mubr.f32.mxu0 %v520
  %1881 = vmatmul.mubr.f32.gmra.mxu0 %v519
  %v1882 = vpop.f32.mrf.mxu0
  %v1883 = vadd.f32 0.0, %v1882
  %v1884 = vpop.f32.mrf.mxu0
  %1885 = vmatprep.mubr.f32.mxu0 %v522
  %1886 = vmatmul.mubr.f32.gmra.mxu0 %v521
  %v1887 = vpop.f32.mrf.mxu0
  %v1888 = vadd.f32 0.0, %v1887
  %v1889 = vpop.f32.mrf.mxu0
  %1890 = vmatprep.mubr.f32.mxu0 %v524
  %1891 = vmatmul.mubr.f32.gmra.mxu0 %v523
  %v1892 = vpop.f32.mrf.mxu0
  %v1893 = vadd.f32 0.0, %v1892
  %v1894 = vpop.f32.mrf.mxu0
  %1895 = vmatprep.mubr.f32.mxu0 %v526
  %1896 = vmatmul.mubr.f32.gmra.mxu0 %v525
  %v1897 = vpop.f32.mrf.mxu0
  %v1898 = vadd.f32 0.0, %v1897
  %v1899 = vpop.f32.mrf.mxu0
  %1900 = vmatprep.mubr.f32.mxu0 %v528
  %1901 = vmatmul.mubr.f32.gmra.mxu0 %v527
  %v1902 = vpop.f32.mrf.mxu0
  %v1903 = vadd.f32 0.0, %v1902
  %v1904 = vpop.f32.mrf.mxu0
  %1905 = vdwg.mxu0
  %vm1906 = vcmask 64512
  %v1907 = vsel %vm1906, %v628, 0.0
  %v1908 = vsel %vm1906, %v633, 0.0
  %v1909 = vadd.f32 %v1907, %v1908
  %v1910 = vsel %vm1906, %v638, 0.0
  %v1911 = vadd.f32 %v1909, %v1910
  %v1912 = vsel %vm1906, %v643, 0.0
  %v1913 = vadd.f32 %v1911, %v1912
  %v1914 = vsel %vm1906, %v648, 0.0
  %v1915 = vadd.f32 %v1913, %v1914
  %v1916 = vsel %vm1906, %v653, 0.0
  %v1917 = vadd.f32 %v1915, %v1916
  %v1918 = vsel %vm1906, %v658, 0.0
  %v1919 = vadd.f32 %v1917, %v1918
  %v1920 = vsel %vm1906, %v663, 0.0
  %v1921 = vadd.f32 %v1919, %v1920
  %v1922 = vsel %vm1906, %v668, 0.0
  %v1923 = vadd.f32 %v1921, %v1922
  %v1924 = vsel %vm1906, %v673, 0.0
  %v1925 = vadd.f32 %v1923, %v1924
  %v1926 = vsel %vm1906, %v678, 0.0
  %v1927 = vadd.f32 %v1925, %v1926
  %v1928 = vsel %vm1906, %v683, 0.0
  %v1929 = vadd.f32 %v1927, %v1928
  %v1930 = vsel %vm1906, %v688, 0.0
  %v1931 = vadd.f32 %v1929, %v1930
  %v1932 = vsel %vm1906, %v693, 0.0
  %v1933 = vadd.f32 %v1931, %v1932
  %v1934 = vsel %vm1906, %v698, 0.0
  %v1935 = vadd.f32 %v1933, %v1934
  %v1936 = vsel %vm1906, %v703, 0.0
  %v1937 = vadd.f32 %v1935, %v1936
  %v1938 = vsel %vm1906, %v708, 0.0
  %v1939 = vadd.f32 %v1937, %v1938
  %v1940 = vsel %vm1906, %v713, 0.0
  %v1941 = vadd.f32 %v1939, %v1940
  %v1942 = vsel %vm1906, %v718, 0.0
  %v1943 = vadd.f32 %v1941, %v1942
  %v1944 = vsel %vm1906, %v723, 0.0
  %v1945 = vadd.f32 %v1943, %v1944
  %v1946 = vsel %vm1906, %v728, 0.0
  %v1947 = vadd.f32 %v1945, %v1946
  %v1948 = vsel %vm1906, %v733, 0.0
  %v1949 = vadd.f32 %v1947, %v1948
  %v1950 = vsel %vm1906, %v738, 0.0
  %v1951 = vadd.f32 %v1949, %v1950
  %v1952 = vsel %vm1906, %v743, 0.0
  %v1953 = vadd.f32 %v1951, %v1952
  %v1954 = vsel %vm1906, %v748, 0.0
  %v1955 = vadd.f32 %v1953, %v1954
  %v1956 = vsel %vm1906, %v753, 0.0
  %v1957 = vadd.f32 %v1955, %v1956
  %v1958 = vsel %vm1906, %v758, 0.0
  %v1959 = vadd.f32 %v1957, %v1958
  %v1960 = vsel %vm1906, %v763, 0.0
  %v1961 = vadd.f32 %v1959, %v1960
  %v1962 = vsel %vm1906, %v768, 0.0
  %v1963 = vadd.f32 %v1961, %v1962
  %v1964 = vsel %vm1906, %v773, 0.0
  %v1965 = vadd.f32 %v1963, %v1964
  %v1966 = vsel %vm1906, %v778, 0.0
  %v1967 = vadd.f32 %v1965, %v1966
  %v1968 = vsel %vm1906, %v783, 0.0
  %v1969 = vadd.f32 %v1967, %v1968
  %v1970 = vsel %vm1906, %v788, 0.0
  %v1971 = vadd.f32 %v1969, %v1970
  %v1972 = vsel %vm1906, %v793, 0.0
  %v1973 = vadd.f32 %v1971, %v1972
  %v1974 = vsel %vm1906, %v798, 0.0
  %v1975 = vadd.f32 %v1973, %v1974
  %v1976 = vsel %vm1906, %v803, 0.0
  %v1977 = vadd.f32 %v1975, %v1976
  %v1978 = vsel %vm1906, %v808, 0.0
  %v1979 = vadd.f32 %v1977, %v1978
  %v1980 = vsel %vm1906, %v813, 0.0
  %v1981 = vadd.f32 %v1979, %v1980
  %v1982 = vsel %vm1906, %v818, 0.0
  %v1983 = vadd.f32 %v1981, %v1982
  %v1984 = vsel %vm1906, %v823, 0.0
  %v1985 = vadd.f32 %v1983, %v1984
  %v1986 = vsel %vm1906, %v828, 0.0
  %v1987 = vadd.f32 %v1985, %v1986
  %v1988 = vsel %vm1906, %v833, 0.0
  %v1989 = vadd.f32 %v1987, %v1988
  %v1990 = vsel %vm1906, %v838, 0.0
  %v1991 = vadd.f32 %v1989, %v1990
  %v1992 = vsel %vm1906, %v843, 0.0
  %v1993 = vadd.f32 %v1991, %v1992
  %v1994 = vsel %vm1906, %v848, 0.0
  %v1995 = vadd.f32 %v1993, %v1994
  %v1996 = vsel %vm1906, %v853, 0.0
  %v1997 = vadd.f32 %v1995, %v1996
  %v1998 = vsel %vm1906, %v858, 0.0
  %v1999 = vadd.f32 %v1997, %v1998
  %v2000 = vsel %vm1906, %v863, 0.0
  %v2001 = vadd.f32 %v1999, %v2000
  %v2002 = vsel %vm1906, %v868, 0.0
  %v2003 = vadd.f32 %v2001, %v2002
  %v2004 = vsel %vm1906, %v873, 0.0
  %v2005 = vadd.f32 %v2003, %v2004
  %v2006 = vsel %vm1906, %v878, 0.0
  %v2007 = vadd.f32 %v2005, %v2006
  %v2008 = vsel %vm1906, %v883, 0.0
  %v2009 = vadd.f32 %v2007, %v2008
  %v2010 = vsel %vm1906, %v888, 0.0
  %v2011 = vadd.f32 %v2009, %v2010
  %v2012 = vsel %vm1906, %v893, 0.0
  %v2013 = vadd.f32 %v2011, %v2012
  %v2014 = vsel %vm1906, %v898, 0.0
  %v2015 = vadd.f32 %v2013, %v2014
  %v2016 = vsel %vm1906, %v903, 0.0
  %v2017 = vadd.f32 %v2015, %v2016
  %v2018 = vsel %vm1906, %v908, 0.0
  %v2019 = vadd.f32 %v2017, %v2018
  %v2020 = vsel %vm1906, %v913, 0.0
  %v2021 = vadd.f32 %v2019, %v2020
  %v2022 = vsel %vm1906, %v918, 0.0
  %v2023 = vadd.f32 %v2021, %v2022
  %v2024 = vsel %vm1906, %v923, 0.0
  %v2025 = vadd.f32 %v2023, %v2024
  %v2026 = vsel %vm1906, %v928, 0.0
  %v2027 = vadd.f32 %v2025, %v2026
  %v2028 = vsel %vm1906, %v933, 0.0
  %v2029 = vadd.f32 %v2027, %v2028
  %v2030 = vsel %vm1906, %v938, 0.0
  %v2031 = vadd.f32 %v2029, %v2030
  %v2032 = vsel %vm1906, %v943, 0.0
  %v2033 = vadd.f32 %v2031, %v2032
  %v2034 = vsel %vm1906, %v948, 0.0
  %v2035 = vadd.f32 %v2033, %v2034
  %v2036 = vsel %vm1906, %v953, 0.0
  %v2037 = vadd.f32 %v2035, %v2036
  %v2038 = vsel %vm1906, %v958, 0.0
  %v2039 = vadd.f32 %v2037, %v2038
  %v2040 = vsel %vm1906, %v963, 0.0
  %v2041 = vadd.f32 %v2039, %v2040
  %v2042 = vsel %vm1906, %v968, 0.0
  %v2043 = vadd.f32 %v2041, %v2042
  %v2044 = vsel %vm1906, %v973, 0.0
  %v2045 = vadd.f32 %v2043, %v2044
  %v2046 = vsel %vm1906, %v978, 0.0
  %v2047 = vadd.f32 %v2045, %v2046
  %v2048 = vsel %vm1906, %v983, 0.0
  %v2049 = vadd.f32 %v2047, %v2048
  %v2050 = vsel %vm1906, %v988, 0.0
  %v2051 = vadd.f32 %v2049, %v2050
  %v2052 = vsel %vm1906, %v993, 0.0
  %v2053 = vadd.f32 %v2051, %v2052
  %v2054 = vsel %vm1906, %v998, 0.0
  %v2055 = vadd.f32 %v2053, %v2054
  %v2056 = vsel %vm1906, %v1003, 0.0
  %v2057 = vadd.f32 %v2055, %v2056
  %v2058 = vsel %vm1906, %v1008, 0.0
  %v2059 = vadd.f32 %v2057, %v2058
  %v2060 = vsel %vm1906, %v1013, 0.0
  %v2061 = vadd.f32 %v2059, %v2060
  %v2062 = vsel %vm1906, %v1018, 0.0
  %v2063 = vadd.f32 %v2061, %v2062
  %v2064 = vsel %vm1906, %v1023, 0.0
  %v2065 = vadd.f32 %v2063, %v2064
  %v2066 = vsel %vm1906, %v1028, 0.0
  %v2067 = vadd.f32 %v2065, %v2066
  %v2068 = vsel %vm1906, %v1033, 0.0
  %v2069 = vadd.f32 %v2067, %v2068
  %v2070 = vsel %vm1906, %v1038, 0.0
  %v2071 = vadd.f32 %v2069, %v2070
  %v2072 = vsel %vm1906, %v1043, 0.0
  %v2073 = vadd.f32 %v2071, %v2072
  %v2074 = vsel %vm1906, %v1048, 0.0
  %v2075 = vadd.f32 %v2073, %v2074
  %v2076 = vsel %vm1906, %v1053, 0.0
  %v2077 = vadd.f32 %v2075, %v2076
  %v2078 = vsel %vm1906, %v1058, 0.0
  %v2079 = vadd.f32 %v2077, %v2078
  %v2080 = vsel %vm1906, %v1063, 0.0
  %v2081 = vadd.f32 %v2079, %v2080
  %v2082 = vsel %vm1906, %v1068, 0.0
  %v2083 = vadd.f32 %v2081, %v2082
  %v2084 = vsel %vm1906, %v1073, 0.0
  %v2085 = vadd.f32 %v2083, %v2084
  %v2086 = vsel %vm1906, %v1078, 0.0
  %v2087 = vadd.f32 %v2085, %v2086
  %v2088 = vsel %vm1906, %v1083, 0.0
  %v2089 = vadd.f32 %v2087, %v2088
  %v2090 = vsel %vm1906, %v1088, 0.0
  %v2091 = vadd.f32 %v2089, %v2090
  %v2092 = vsel %vm1906, %v1093, 0.0
  %v2093 = vadd.f32 %v2091, %v2092
  %v2094 = vsel %vm1906, %v1098, 0.0
  %v2095 = vadd.f32 %v2093, %v2094
  %v2096 = vsel %vm1906, %v1103, 0.0
  %v2097 = vadd.f32 %v2095, %v2096
  %v2098 = vsel %vm1906, %v1108, 0.0
  %v2099 = vadd.f32 %v2097, %v2098
  %v2100 = vsel %vm1906, %v1113, 0.0
  %v2101 = vadd.f32 %v2099, %v2100
  %v2102 = vsel %vm1906, %v1118, 0.0
  %v2103 = vadd.f32 %v2101, %v2102
  %v2104 = vsel %vm1906, %v1123, 0.0
  %v2105 = vadd.f32 %v2103, %v2104
  %v2106 = vsel %vm1906, %v1128, 0.0
  %v2107 = vadd.f32 %v2105, %v2106
  %v2108 = vsel %vm1906, %v1133, 0.0
  %v2109 = vadd.f32 %v2107, %v2108
  %v2110 = vsel %vm1906, %v1138, 0.0
  %v2111 = vadd.f32 %v2109, %v2110
  %v2112 = vsel %vm1906, %v1143, 0.0
  %v2113 = vadd.f32 %v2111, %v2112
  %v2114 = vsel %vm1906, %v1148, 0.0
  %v2115 = vadd.f32 %v2113, %v2114
  %v2116 = vsel %vm1906, %v1153, 0.0
  %v2117 = vadd.f32 %v2115, %v2116
  %v2118 = vsel %vm1906, %v1158, 0.0
  %v2119 = vadd.f32 %v2117, %v2118
  %v2120 = vsel %vm1906, %v1163, 0.0
  %v2121 = vadd.f32 %v2119, %v2120
  %v2122 = vsel %vm1906, %v1168, 0.0
  %v2123 = vadd.f32 %v2121, %v2122
  %v2124 = vsel %vm1906, %v1173, 0.0
  %v2125 = vadd.f32 %v2123, %v2124
  %v2126 = vsel %vm1906, %v1178, 0.0
  %v2127 = vadd.f32 %v2125, %v2126
  %v2128 = vsel %vm1906, %v1183, 0.0
  %v2129 = vadd.f32 %v2127, %v2128
  %v2130 = vsel %vm1906, %v1188, 0.0
  %v2131 = vadd.f32 %v2129, %v2130
  %v2132 = vsel %vm1906, %v1193, 0.0
  %v2133 = vadd.f32 %v2131, %v2132
  %v2134 = vsel %vm1906, %v1198, 0.0
  %v2135 = vadd.f32 %v2133, %v2134
  %v2136 = vsel %vm1906, %v1203, 0.0
  %v2137 = vadd.f32 %v2135, %v2136
  %v2138 = vsel %vm1906, %v1208, 0.0
  %v2139 = vadd.f32 %v2137, %v2138
  %v2140 = vsel %vm1906, %v1213, 0.0
  %v2141 = vadd.f32 %v2139, %v2140
  %v2142 = vsel %vm1906, %v1218, 0.0
  %v2143 = vadd.f32 %v2141, %v2142
  %v2144 = vsel %vm1906, %v1223, 0.0
  %v2145 = vadd.f32 %v2143, %v2144
  %v2146 = vsel %vm1906, %v1228, 0.0
  %v2147 = vadd.f32 %v2145, %v2146
  %v2148 = vsel %vm1906, %v1233, 0.0
  %v2149 = vadd.f32 %v2147, %v2148
  %v2150 = vsel %vm1906, %v1238, 0.0
  %v2151 = vadd.f32 %v2149, %v2150
  %v2152 = vsel %vm1906, %v1243, 0.0
  %v2153 = vadd.f32 %v2151, %v2152
  %v2154 = vsel %vm1906, %v1248, 0.0
  %v2155 = vadd.f32 %v2153, %v2154
  %v2156 = vsel %vm1906, %v1253, 0.0
  %v2157 = vadd.f32 %v2155, %v2156
  %v2158 = vsel %vm1906, %v1258, 0.0
  %v2159 = vadd.f32 %v2157, %v2158
  %v2160 = vsel %vm1906, %v1263, 0.0
  %v2161 = vadd.f32 %v2159, %v2160
  %v2162 = vsel %vm1906, %v1268, 0.0
  %v2163 = vadd.f32 %v2161, %v2162
  %v2164 = vsel %vm1906, %v1273, 0.0
  %v2165 = vadd.f32 %v2163, %v2164
  %v2166 = vsel %vm1906, %v1278, 0.0
  %v2167 = vadd.f32 %v2165, %v2166
  %v2168 = vsel %vm1906, %v1283, 0.0
  %v2169 = vadd.f32 %v2167, %v2168
  %v2170 = vsel %vm1906, %v1288, 0.0
  %v2171 = vadd.f32 %v2169, %v2170
  %v2172 = vsel %vm1906, %v1293, 0.0
  %v2173 = vadd.f32 %v2171, %v2172
  %v2174 = vsel %vm1906, %v1298, 0.0
  %v2175 = vadd.f32 %v2173, %v2174
  %v2176 = vsel %vm1906, %v1303, 0.0
  %v2177 = vadd.f32 %v2175, %v2176
  %v2178 = vsel %vm1906, %v1308, 0.0
  %v2179 = vadd.f32 %v2177, %v2178
  %v2180 = vsel %vm1906, %v1313, 0.0
  %v2181 = vadd.f32 %v2179, %v2180
  %v2182 = vsel %vm1906, %v1318, 0.0
  %v2183 = vadd.f32 %v2181, %v2182
  %v2184 = vsel %vm1906, %v1323, 0.0
  %v2185 = vadd.f32 %v2183, %v2184
  %v2186 = vsel %vm1906, %v1328, 0.0
  %v2187 = vadd.f32 %v2185, %v2186
  %v2188 = vsel %vm1906, %v1333, 0.0
  %v2189 = vadd.f32 %v2187, %v2188
  %v2190 = vsel %vm1906, %v1338, 0.0
  %v2191 = vadd.f32 %v2189, %v2190
  %v2192 = vsel %vm1906, %v1343, 0.0
  %v2193 = vadd.f32 %v2191, %v2192
  %v2194 = vsel %vm1906, %v1348, 0.0
  %v2195 = vadd.f32 %v2193, %v2194
  %v2196 = vsel %vm1906, %v1353, 0.0
  %v2197 = vadd.f32 %v2195, %v2196
  %v2198 = vsel %vm1906, %v1358, 0.0
  %v2199 = vadd.f32 %v2197, %v2198
  %v2200 = vsel %vm1906, %v1363, 0.0
  %v2201 = vadd.f32 %v2199, %v2200
  %v2202 = vsel %vm1906, %v1368, 0.0
  %v2203 = vadd.f32 %v2201, %v2202
  %v2204 = vsel %vm1906, %v1373, 0.0
  %v2205 = vadd.f32 %v2203, %v2204
  %v2206 = vsel %vm1906, %v1378, 0.0
  %v2207 = vadd.f32 %v2205, %v2206
  %v2208 = vsel %vm1906, %v1383, 0.0
  %v2209 = vadd.f32 %v2207, %v2208
  %v2210 = vsel %vm1906, %v1388, 0.0
  %v2211 = vadd.f32 %v2209, %v2210
  %v2212 = vsel %vm1906, %v1393, 0.0
  %v2213 = vadd.f32 %v2211, %v2212
  %v2214 = vsel %vm1906, %v1398, 0.0
  %v2215 = vadd.f32 %v2213, %v2214
  %v2216 = vsel %vm1906, %v1403, 0.0
  %v2217 = vadd.f32 %v2215, %v2216
  %v2218 = vsel %vm1906, %v1408, 0.0
  %v2219 = vadd.f32 %v2217, %v2218
  %v2220 = vsel %vm1906, %v1413, 0.0
  %v2221 = vadd.f32 %v2219, %v2220
  %v2222 = vsel %vm1906, %v1418, 0.0
  %v2223 = vadd.f32 %v2221, %v2222
  %v2224 = vsel %vm1906, %v1423, 0.0
  %v2225 = vadd.f32 %v2223, %v2224
  %v2226 = vsel %vm1906, %v1428, 0.0
  %v2227 = vadd.f32 %v2225, %v2226
  %v2228 = vsel %vm1906, %v1433, 0.0
  %v2229 = vadd.f32 %v2227, %v2228
  %v2230 = vsel %vm1906, %v1438, 0.0
  %v2231 = vadd.f32 %v2229, %v2230
  %v2232 = vsel %vm1906, %v1443, 0.0
  %v2233 = vadd.f32 %v2231, %v2232
  %v2234 = vsel %vm1906, %v1448, 0.0
  %v2235 = vadd.f32 %v2233, %v2234
  %v2236 = vsel %vm1906, %v1453, 0.0
  %v2237 = vadd.f32 %v2235, %v2236
  %v2238 = vsel %vm1906, %v1458, 0.0
  %v2239 = vadd.f32 %v2237, %v2238
  %v2240 = vsel %vm1906, %v1463, 0.0
  %v2241 = vadd.f32 %v2239, %v2240
  %v2242 = vsel %vm1906, %v1468, 0.0
  %v2243 = vadd.f32 %v2241, %v2242
  %v2244 = vsel %vm1906, %v1473, 0.0
  %v2245 = vadd.f32 %v2243, %v2244
  %v2246 = vsel %vm1906, %v1478, 0.0
  %v2247 = vadd.f32 %v2245, %v2246
  %v2248 = vsel %vm1906, %v1483, 0.0
  %v2249 = vadd.f32 %v2247, %v2248
  %v2250 = vsel %vm1906, %v1488, 0.0
  %v2251 = vadd.f32 %v2249, %v2250
  %v2252 = vsel %vm1906, %v1493, 0.0
  %v2253 = vadd.f32 %v2251, %v2252
  %v2254 = vsel %vm1906, %v1498, 0.0
  %v2255 = vadd.f32 %v2253, %v2254
  %v2256 = vsel %vm1906, %v1503, 0.0
  %v2257 = vadd.f32 %v2255, %v2256
  %v2258 = vsel %vm1906, %v1508, 0.0
  %v2259 = vadd.f32 %v2257, %v2258
  %v2260 = vsel %vm1906, %v1513, 0.0
  %v2261 = vadd.f32 %v2259, %v2260
  %v2262 = vsel %vm1906, %v1518, 0.0
  %v2263 = vadd.f32 %v2261, %v2262
  %v2264 = vsel %vm1906, %v1523, 0.0
  %v2265 = vadd.f32 %v2263, %v2264
  %v2266 = vsel %vm1906, %v1528, 0.0
  %v2267 = vadd.f32 %v2265, %v2266
  %v2268 = vsel %vm1906, %v1533, 0.0
  %v2269 = vadd.f32 %v2267, %v2268
  %v2270 = vsel %vm1906, %v1538, 0.0
  %v2271 = vadd.f32 %v2269, %v2270
  %v2272 = vsel %vm1906, %v1543, 0.0
  %v2273 = vadd.f32 %v2271, %v2272
  %v2274 = vsel %vm1906, %v1548, 0.0
  %v2275 = vadd.f32 %v2273, %v2274
  %v2276 = vsel %vm1906, %v1553, 0.0
  %v2277 = vadd.f32 %v2275, %v2276
  %v2278 = vsel %vm1906, %v1558, 0.0
  %v2279 = vadd.f32 %v2277, %v2278
  %v2280 = vsel %vm1906, %v1563, 0.0
  %v2281 = vadd.f32 %v2279, %v2280
  %v2282 = vsel %vm1906, %v1568, 0.0
  %v2283 = vadd.f32 %v2281, %v2282
  %v2284 = vsel %vm1906, %v1573, 0.0
  %v2285 = vadd.f32 %v2283, %v2284
  %v2286 = vsel %vm1906, %v1578, 0.0
  %v2287 = vadd.f32 %v2285, %v2286
  %v2288 = vsel %vm1906, %v1583, 0.0
  %v2289 = vadd.f32 %v2287, %v2288
  %v2290 = vsel %vm1906, %v1588, 0.0
  %v2291 = vadd.f32 %v2289, %v2290
  %v2292 = vsel %vm1906, %v1593, 0.0
  %v2293 = vadd.f32 %v2291, %v2292
  %v2294 = vsel %vm1906, %v1598, 0.0
  %v2295 = vadd.f32 %v2293, %v2294
  %v2296 = vsel %vm1906, %v1603, 0.0
  %v2297 = vadd.f32 %v2295, %v2296
  %v2298 = vsel %vm1906, %v1608, 0.0
  %v2299 = vadd.f32 %v2297, %v2298
  %v2300 = vsel %vm1906, %v1613, 0.0
  %v2301 = vadd.f32 %v2299, %v2300
  %v2302 = vsel %vm1906, %v1618, 0.0
  %v2303 = vadd.f32 %v2301, %v2302
  %v2304 = vsel %vm1906, %v1623, 0.0
  %v2305 = vadd.f32 %v2303, %v2304
  %v2306 = vsel %vm1906, %v1628, 0.0
  %v2307 = vadd.f32 %v2305, %v2306
  %v2308 = vsel %vm1906, %v1633, 0.0
  %v2309 = vadd.f32 %v2307, %v2308
  %v2310 = vsel %vm1906, %v1638, 0.0
  %v2311 = vadd.f32 %v2309, %v2310
  %v2312 = vsel %vm1906, %v1643, 0.0
  %v2313 = vadd.f32 %v2311, %v2312
  %v2314 = vsel %vm1906, %v1648, 0.0
  %v2315 = vadd.f32 %v2313, %v2314
  %v2316 = vsel %vm1906, %v1653, 0.0
  %v2317 = vadd.f32 %v2315, %v2316
  %v2318 = vsel %vm1906, %v1658, 0.0
  %v2319 = vadd.f32 %v2317, %v2318
  %v2320 = vsel %vm1906, %v1663, 0.0
  %v2321 = vadd.f32 %v2319, %v2320
  %v2322 = vsel %vm1906, %v1668, 0.0
  %v2323 = vadd.f32 %v2321, %v2322
  %v2324 = vsel %vm1906, %v1673, 0.0
  %v2325 = vadd.f32 %v2323, %v2324
  %v2326 = vsel %vm1906, %v1678, 0.0
  %v2327 = vadd.f32 %v2325, %v2326
  %v2328 = vsel %vm1906, %v1683, 0.0
  %v2329 = vadd.f32 %v2327, %v2328
  %v2330 = vsel %vm1906, %v1688, 0.0
  %v2331 = vadd.f32 %v2329, %v2330
  %v2332 = vsel %vm1906, %v1693, 0.0
  %v2333 = vadd.f32 %v2331, %v2332
  %v2334 = vsel %vm1906, %v1698, 0.0
  %v2335 = vadd.f32 %v2333, %v2334
  %v2336 = vsel %vm1906, %v1703, 0.0
  %v2337 = vadd.f32 %v2335, %v2336
  %v2338 = vsel %vm1906, %v1708, 0.0
  %v2339 = vadd.f32 %v2337, %v2338
  %v2340 = vsel %vm1906, %v1713, 0.0
  %v2341 = vadd.f32 %v2339, %v2340
  %v2342 = vsel %vm1906, %v1718, 0.0
  %v2343 = vadd.f32 %v2341, %v2342
  %v2344 = vsel %vm1906, %v1723, 0.0
  %v2345 = vadd.f32 %v2343, %v2344
  %v2346 = vsel %vm1906, %v1728, 0.0
  %v2347 = vadd.f32 %v2345, %v2346
  %v2348 = vsel %vm1906, %v1733, 0.0
  %v2349 = vadd.f32 %v2347, %v2348
  %v2350 = vsel %vm1906, %v1738, 0.0
  %v2351 = vadd.f32 %v2349, %v2350
  %v2352 = vsel %vm1906, %v1743, 0.0
  %v2353 = vadd.f32 %v2351, %v2352
  %v2354 = vsel %vm1906, %v1748, 0.0
  %v2355 = vadd.f32 %v2353, %v2354
  %v2356 = vsel %vm1906, %v1753, 0.0
  %v2357 = vadd.f32 %v2355, %v2356
  %v2358 = vsel %vm1906, %v1758, 0.0
  %v2359 = vadd.f32 %v2357, %v2358
  %v2360 = vsel %vm1906, %v1763, 0.0
  %v2361 = vadd.f32 %v2359, %v2360
  %v2362 = vsel %vm1906, %v1768, 0.0
  %v2363 = vadd.f32 %v2361, %v2362
  %v2364 = vsel %vm1906, %v1773, 0.0
  %v2365 = vadd.f32 %v2363, %v2364
  %v2366 = vsel %vm1906, %v1778, 0.0
  %v2367 = vadd.f32 %v2365, %v2366
  %v2368 = vsel %vm1906, %v1783, 0.0
  %v2369 = vadd.f32 %v2367, %v2368
  %v2370 = vsel %vm1906, %v1788, 0.0
  %v2371 = vadd.f32 %v2369, %v2370
  %v2372 = vsel %vm1906, %v1793, 0.0
  %v2373 = vadd.f32 %v2371, %v2372
  %v2374 = vsel %vm1906, %v1798, 0.0
  %v2375 = vadd.f32 %v2373, %v2374
  %v2376 = vsel %vm1906, %v1803, 0.0
  %v2377 = vadd.f32 %v2375, %v2376
  %v2378 = vsel %vm1906, %v1808, 0.0
  %v2379 = vadd.f32 %v2377, %v2378
  %v2380 = vsel %vm1906, %v1813, 0.0
  %v2381 = vadd.f32 %v2379, %v2380
  %v2382 = vsel %vm1906, %v1818, 0.0
  %v2383 = vadd.f32 %v2381, %v2382
  %v2384 = vsel %vm1906, %v1823, 0.0
  %v2385 = vadd.f32 %v2383, %v2384
  %v2386 = vsel %vm1906, %v1828, 0.0
  %v2387 = vadd.f32 %v2385, %v2386
  %v2388 = vsel %vm1906, %v1833, 0.0
  %v2389 = vadd.f32 %v2387, %v2388
  %v2390 = vsel %vm1906, %v1838, 0.0
  %v2391 = vadd.f32 %v2389, %v2390
  %v2392 = vsel %vm1906, %v1843, 0.0
  %v2393 = vadd.f32 %v2391, %v2392
  %v2394 = vsel %vm1906, %v1848, 0.0
  %v2395 = vadd.f32 %v2393, %v2394
  %v2396 = vsel %vm1906, %v1853, 0.0
  %v2397 = vadd.f32 %v2395, %v2396
  %v2398 = vsel %vm1906, %v1858, 0.0
  %v2399 = vadd.f32 %v2397, %v2398
  %v2400 = vsel %vm1906, %v1863, 0.0
  %v2401 = vadd.f32 %v2399, %v2400
  %v2402 = vsel %vm1906, %v1868, 0.0
  %v2403 = vadd.f32 %v2401, %v2402
  %v2404 = vsel %vm1906, %v1873, 0.0
  %v2405 = vadd.f32 %v2403, %v2404
  %v2406 = vsel %vm1906, %v1878, 0.0
  %v2407 = vadd.f32 %v2405, %v2406
  %v2408 = vsel %vm1906, %v1883, 0.0
  %v2409 = vadd.f32 %v2407, %v2408
  %v2410 = vsel %vm1906, %v1888, 0.0
  %v2411 = vadd.f32 %v2409, %v2410
  %v2412 = vsel %vm1906, %v1893, 0.0
  %v2413 = vadd.f32 %v2411, %v2412
  %v2414 = vsel %vm1906, %v1898, 0.0
  %v2415 = vadd.f32 %v2413, %v2414
  %v2416 = vsel %vm1906, %v1903, 0.0
  %v2417 = vadd.f32 %v2415, %v2416
  %v2418 = vrot.slane %v2417, 4
  %v2419 = vadd.f32 %v2417, %v2418
  %v2420 = vrot.slane %v2419, 2
  %v2421 = vadd.f32 %v2419, %v2420
  %v2422 = vrot.slane %v2421, 1
  %v2423 = vadd.f32 %v2421, %v2422
  %v2424 = vrcp.pop 2048.0
  %v2425 = vmul.f32 %v2423, %v2424
  %v2426 = vsub.f32 %v628, %v2425
  %v2427 = vsub.f32 %v633, %v2425
  %v2428 = vsub.f32 %v638, %v2425
  %v2429 = vsub.f32 %v643, %v2425
  %v2430 = vsub.f32 %v648, %v2425
  %v2431 = vsub.f32 %v653, %v2425
  %v2432 = vsub.f32 %v658, %v2425
  %v2433 = vsub.f32 %v663, %v2425
  %v2434 = vsub.f32 %v668, %v2425
  %v2435 = vsub.f32 %v673, %v2425
  %v2436 = vsub.f32 %v678, %v2425
  %v2437 = vsub.f32 %v683, %v2425
  %v2438 = vsub.f32 %v688, %v2425
  %v2439 = vsub.f32 %v693, %v2425
  %v2440 = vsub.f32 %v698, %v2425
  %v2441 = vsub.f32 %v703, %v2425
  %v2442 = vsub.f32 %v708, %v2425
  %v2443 = vsub.f32 %v713, %v2425
  %v2444 = vsub.f32 %v718, %v2425
  %v2445 = vsub.f32 %v723, %v2425
  %v2446 = vsub.f32 %v728, %v2425
  %v2447 = vsub.f32 %v733, %v2425
  %v2448 = vsub.f32 %v738, %v2425
  %v2449 = vsub.f32 %v743, %v2425
  %v2450 = vsub.f32 %v748, %v2425
  %v2451 = vsub.f32 %v753, %v2425
  %v2452 = vsub.f32 %v758, %v2425
  %v2453 = vsub.f32 %v763, %v2425
  %v2454 = vsub.f32 %v768, %v2425
  %v2455 = vsub.f32 %v773, %v2425
  %v2456 = vsub.f32 %v778, %v2425
  %v2457 = vsub.f32 %v783, %v2425
  %v2458 = vsub.f32 %v788, %v2425
  %v2459 = vsub.f32 %v793, %v2425
  %v2460 = vsub.f32 %v798, %v2425
  %v2461 = vsub.f32 %v803, %v2425
  %v2462 = vsub.f32 %v808, %v2425
  %v2463 = vsub.f32 %v813, %v2425
  %v2464 = vsub.f32 %v818, %v2425
  %v2465 = vsub.f32 %v823, %v2425
  %v2466 = vsub.f32 %v828, %v2425
  %v2467 = vsub.f32 %v833, %v2425
  %v2468 = vsub.f32 %v838, %v2425
  %v2469 = vsub.f32 %v843, %v2425
  %v2470 = vsub.f32 %v848, %v2425
  %v2471 = vsub.f32 %v853, %v2425
  %v2472 = vsub.f32 %v858, %v2425
  %v2473 = vsub.f32 %v863, %v2425
  %v2474 = vsub.f32 %v868, %v2425
  %v2475 = vsub.f32 %v873, %v2425
  %v2476 = vsub.f32 %v878, %v2425
  %v2477 = vsub.f32 %v883, %v2425
  %v2478 = vsub.f32 %v888, %v2425
  %v2479 = vsub.f32 %v893, %v2425
  %v2480 = vsub.f32 %v898, %v2425
  %v2481 = vsub.f32 %v903, %v2425
  %v2482 = vsub.f32 %v908, %v2425
  %v2483 = vsub.f32 %v913, %v2425
  %v2484 = vsub.f32 %v918, %v2425
  %v2485 = vsub.f32 %v923, %v2425
  %v2486 = vsub.f32 %v928, %v2425
  %v2487 = vsub.f32 %v933, %v2425
  %v2488 = vsub.f32 %v938, %v2425
  %v2489 = vsub.f32 %v943, %v2425
  %v2490 = vsub.f32 %v948, %v2425
  %v2491 = vsub.f32 %v953, %v2425
  %v2492 = vsub.f32 %v958, %v2425
  %v2493 = vsub.f32 %v963, %v2425
  %v2494 = vsub.f32 %v968, %v2425
  %v2495 = vsub.f32 %v973, %v2425
  %v2496 = vsub.f32 %v978, %v2425
  %v2497 = vsub.f32 %v983, %v2425
  %v2498 = vsub.f32 %v988, %v2425
  %v2499 = vsub.f32 %v993, %v2425
  %v2500 = vsub.f32 %v998, %v2425
  %v2501 = vsub.f32 %v1003, %v2425
  %v2502 = vsub.f32 %v1008, %v2425
  %v2503 = vsub.f32 %v1013, %v2425
  %v2504 = vsub.f32 %v1018, %v2425
  %v2505 = vsub.f32 %v1023, %v2425
  %v2506 = vsub.f32 %v1028, %v2425
  %v2507 = vsub.f32 %v1033, %v2425
  %v2508 = vsub.f32 %v1038, %v2425
  %v2509 = vsub.f32 %v1043, %v2425
  %v2510 = vsub.f32 %v1048, %v2425
  %v2511 = vsub.f32 %v1053, %v2425
  %v2512 = vsub.f32 %v1058, %v2425
  %v2513 = vsub.f32 %v1063, %v2425
  %v2514 = vsub.f32 %v1068, %v2425
  %v2515 = vsub.f32 %v1073, %v2425
  %v2516 = vsub.f32 %v1078, %v2425
  %v2517 = vsub.f32 %v1083, %v2425
  %v2518 = vsub.f32 %v1088, %v2425
  %v2519 = vsub.f32 %v1093, %v2425
  %v2520 = vsub.f32 %v1098, %v2425
  %v2521 = vsub.f32 %v1103, %v2425
  %v2522 = vsub.f32 %v1108, %v2425
  %v2523 = vsub.f32 %v1113, %v2425
  %v2524 = vsub.f32 %v1118, %v2425
  %v2525 = vsub.f32 %v1123, %v2425
  %v2526 = vsub.f32 %v1128, %v2425
  %v2527 = vsub.f32 %v1133, %v2425
  %v2528 = vsub.f32 %v1138, %v2425
  %v2529 = vsub.f32 %v1143, %v2425
  %v2530 = vsub.f32 %v1148, %v2425
  %v2531 = vsub.f32 %v1153, %v2425
  %v2532 = vsub.f32 %v1158, %v2425
  %v2533 = vsub.f32 %v1163, %v2425
  %v2534 = vsub.f32 %v1168, %v2425
  %v2535 = vsub.f32 %v1173, %v2425
  %v2536 = vsub.f32 %v1178, %v2425
  %v2537 = vsub.f32 %v1183, %v2425
  %v2538 = vsub.f32 %v1188, %v2425
  %v2539 = vsub.f32 %v1193, %v2425
  %v2540 = vsub.f32 %v1198, %v2425
  %v2541 = vsub.f32 %v1203, %v2425
  %v2542 = vsub.f32 %v1208, %v2425
  %v2543 = vsub.f32 %v1213, %v2425
  %v2544 = vsub.f32 %v1218, %v2425
  %v2545 = vsub.f32 %v1223, %v2425
  %v2546 = vsub.f32 %v1228, %v2425
  %v2547 = vsub.f32 %v1233, %v2425
  %v2548 = vsub.f32 %v1238, %v2425
  %v2549 = vsub.f32 %v1243, %v2425
  %v2550 = vsub.f32 %v1248, %v2425
  %v2551 = vsub.f32 %v1253, %v2425
  %v2552 = vsub.f32 %v1258, %v2425
  %v2553 = vsub.f32 %v1263, %v2425
  %v2554 = vsub.f32 %v1268, %v2425
  %v2555 = vsub.f32 %v1273, %v2425
  %v2556 = vsub.f32 %v1278, %v2425
  %v2557 = vsub.f32 %v1283, %v2425
  %v2558 = vsub.f32 %v1288, %v2425
  %v2559 = vsub.f32 %v1293, %v2425
  %v2560 = vsub.f32 %v1298, %v2425
  %v2561 = vsub.f32 %v1303, %v2425
  %v2562 = vsub.f32 %v1308, %v2425
  %v2563 = vsub.f32 %v1313, %v2425
  %v2564 = vsub.f32 %v1318, %v2425
  %v2565 = vsub.f32 %v1323, %v2425
  %v2566 = vsub.f32 %v1328, %v2425
  %v2567 = vsub.f32 %v1333, %v2425
  %v2568 = vsub.f32 %v1338, %v2425
  %v2569 = vsub.f32 %v1343, %v2425
  %v2570 = vsub.f32 %v1348, %v2425
  %v2571 = vsub.f32 %v1353, %v2425
  %v2572 = vsub.f32 %v1358, %v2425
  %v2573 = vsub.f32 %v1363, %v2425
  %v2574 = vsub.f32 %v1368, %v2425
  %v2575 = vsub.f32 %v1373, %v2425
  %v2576 = vsub.f32 %v1378, %v2425
  %v2577 = vsub.f32 %v1383, %v2425
  %v2578 = vsub.f32 %v1388, %v2425
  %v2579 = vsub.f32 %v1393, %v2425
  %v2580 = vsub.f32 %v1398, %v2425
  %v2581 = vsub.f32 %v1403, %v2425
  %v2582 = vsub.f32 %v1408, %v2425
  %v2583 = vsub.f32 %v1413, %v2425
  %v2584 = vsub.f32 %v1418, %v2425
  %v2585 = vsub.f32 %v1423, %v2425
  %v2586 = vsub.f32 %v1428, %v2425
  %v2587 = vsub.f32 %v1433, %v2425
  %v2588 = vsub.f32 %v1438, %v2425
  %v2589 = vsub.f32 %v1443, %v2425
  %v2590 = vsub.f32 %v1448, %v2425
  %v2591 = vsub.f32 %v1453, %v2425
  %v2592 = vsub.f32 %v1458, %v2425
  %v2593 = vsub.f32 %v1463, %v2425
  %v2594 = vsub.f32 %v1468, %v2425
  %v2595 = vsub.f32 %v1473, %v2425
  %v2596 = vsub.f32 %v1478, %v2425
  %v2597 = vsub.f32 %v1483, %v2425
  %v2598 = vsub.f32 %v1488, %v2425
  %v2599 = vsub.f32 %v1493, %v2425
  %v2600 = vsub.f32 %v1498, %v2425
  %v2601 = vsub.f32 %v1503, %v2425
  %v2602 = vsub.f32 %v1508, %v2425
  %v2603 = vsub.f32 %v1513, %v2425
  %v2604 = vsub.f32 %v1518, %v2425
  %v2605 = vsub.f32 %v1523, %v2425
  %v2606 = vsub.f32 %v1528, %v2425
  %v2607 = vsub.f32 %v1533, %v2425
  %v2608 = vsub.f32 %v1538, %v2425
  %v2609 = vsub.f32 %v1543, %v2425
  %v2610 = vsub.f32 %v1548, %v2425
  %v2611 = vsub.f32 %v1553, %v2425
  %v2612 = vsub.f32 %v1558, %v2425
  %v2613 = vsub.f32 %v1563, %v2425
  %v2614 = vsub.f32 %v1568, %v2425
  %v2615 = vsub.f32 %v1573, %v2425
  %v2616 = vsub.f32 %v1578, %v2425
  %v2617 = vsub.f32 %v1583, %v2425
  %v2618 = vsub.f32 %v1588, %v2425
  %v2619 = vsub.f32 %v1593, %v2425
  %v2620 = vsub.f32 %v1598, %v2425
  %v2621 = vsub.f32 %v1603, %v2425
  %v2622 = vsub.f32 %v1608, %v2425
  %v2623 = vsub.f32 %v1613, %v2425
  %v2624 = vsub.f32 %v1618, %v2425
  %v2625 = vsub.f32 %v1623, %v2425
  %v2626 = vsub.f32 %v1628, %v2425
  %v2627 = vsub.f32 %v1633, %v2425
  %v2628 = vsub.f32 %v1638, %v2425
  %v2629 = vsub.f32 %v1643, %v2425
  %v2630 = vsub.f32 %v1648, %v2425
  %v2631 = vsub.f32 %v1653, %v2425
  %v2632 = vsub.f32 %v1658, %v2425
  %v2633 = vsub.f32 %v1663, %v2425
  %v2634 = vsub.f32 %v1668, %v2425
  %v2635 = vsub.f32 %v1673, %v2425
  %v2636 = vsub.f32 %v1678, %v2425
  %v2637 = vsub.f32 %v1683, %v2425
  %v2638 = vsub.f32 %v1688, %v2425
  %v2639 = vsub.f32 %v1693, %v2425
  %v2640 = vsub.f32 %v1698, %v2425
  %v2641 = vsub.f32 %v1703, %v2425
  %v2642 = vsub.f32 %v1708, %v2425
  %v2643 = vsub.f32 %v1713, %v2425
  %v2644 = vsub.f32 %v1718, %v2425
  %v2645 = vsub.f32 %v1723, %v2425
  %v2646 = vsub.f32 %v1728, %v2425
  %v2647 = vsub.f32 %v1733, %v2425
  %v2648 = vsub.f32 %v1738, %v2425
  %v2649 = vsub.f32 %v1743, %v2425
  %v2650 = vsub.f32 %v1748, %v2425
  %v2651 = vsub.f32 %v1753, %v2425
  %v2652 = vsub.f32 %v1758, %v2425
  %v2653 = vsub.f32 %v1763, %v2425
  %v2654 = vsub.f32 %v1768, %v2425
  %v2655 = vsub.f32 %v1773, %v2425
  %v2656 = vsub.f32 %v1778, %v2425
  %v2657 = vsub.f32 %v1783, %v2425
  %v2658 = vsub.f32 %v1788, %v2425
  %v2659 = vsub.f32 %v1793, %v2425
  %v2660 = vsub.f32 %v1798, %v2425
  %v2661 = vsub.f32 %v1803, %v2425
  %v2662 = vsub.f32 %v1808, %v2425
  %v2663 = vsub.f32 %v1813, %v2425
  %v2664 = vsub.f32 %v1818, %v2425
  %v2665 = vsub.f32 %v1823, %v2425
  %v2666 = vsub.f32 %v1828, %v2425
  %v2667 = vsub.f32 %v1833, %v2425
  %v2668 = vsub.f32 %v1838, %v2425
  %v2669 = vsub.f32 %v1843, %v2425
  %v2670 = vsub.f32 %v1848, %v2425
  %v2671 = vsub.f32 %v1853, %v2425
  %v2672 = vsub.f32 %v1858, %v2425
  %v2673 = vsub.f32 %v1863, %v2425
  %v2674 = vsub.f32 %v1868, %v2425
  %v2675 = vsub.f32 %v1873, %v2425
  %v2676 = vsub.f32 %v1878, %v2425
  %v2677 = vsub.f32 %v1883, %v2425
  %v2678 = vsub.f32 %v1888, %v2425
  %v2679 = vsub.f32 %v1893, %v2425
  %v2680 = vsub.f32 %v1898, %v2425
  %v2681 = vsub.f32 %v1903, %v2425
  %v2682 = vmul.f32 %v2426, %v2426
  %v2683 = vmul.f32 %v2427, %v2427
  %v2684 = vmul.f32 %v2428, %v2428
  %v2685 = vmul.f32 %v2429, %v2429
  %v2686 = vmul.f32 %v2430, %v2430
  %v2687 = vmul.f32 %v2431, %v2431
  %v2688 = vmul.f32 %v2432, %v2432
  %v2689 = vmul.f32 %v2433, %v2433
  %v2690 = vmul.f32 %v2434, %v2434
  %v2691 = vmul.f32 %v2435, %v2435
  %v2692 = vmul.f32 %v2436, %v2436
  %v2693 = vmul.f32 %v2437, %v2437
  %v2694 = vmul.f32 %v2438, %v2438
  %v2695 = vmul.f32 %v2439, %v2439
  %v2696 = vmul.f32 %v2440, %v2440
  %v2697 = vmul.f32 %v2441, %v2441
  %v2698 = vmul.f32 %v2442, %v2442
  %v2699 = vmul.f32 %v2443, %v2443
  %v2700 = vmul.f32 %v2444, %v2444
  %v2701 = vmul.f32 %v2445, %v2445
  %v2702 = vmul.f32 %v2446, %v2446
  %v2703 = vmul.f32 %v2447, %v2447
  %v2704 = vmul.f32 %v2448, %v2448
  %v2705 = vmul.f32 %v2449, %v2449
  %v2706 = vmul.f32 %v2450, %v2450
  %v2707 = vmul.f32 %v2451, %v2451
  %v2708 = vmul.f32 %v2452, %v2452
  %v2709 = vmul.f32 %v2453, %v2453
  %v2710 = vmul.f32 %v2454, %v2454
  %v2711 = vmul.f32 %v2455, %v2455
  %v2712 = vmul.f32 %v2456, %v2456
  %v2713 = vmul.f32 %v2457, %v2457
  %v2714 = vmul.f32 %v2458, %v2458
  %v2715 = vmul.f32 %v2459, %v2459
  %v2716 = vmul.f32 %v2460, %v2460
  %v2717 = vmul.f32 %v2461, %v2461
  %v2718 = vmul.f32 %v2462, %v2462
  %v2719 = vmul.f32 %v2463, %v2463
  %v2720 = vmul.f32 %v2464, %v2464
  %v2721 = vmul.f32 %v2465, %v2465
  %v2722 = vmul.f32 %v2466, %v2466
  %v2723 = vmul.f32 %v2467, %v2467
  %v2724 = vmul.f32 %v2468, %v2468
  %v2725 = vmul.f32 %v2469, %v2469
  %v2726 = vmul.f32 %v2470, %v2470
  %v2727 = vmul.f32 %v2471, %v2471
  %v2728 = vmul.f32 %v2472, %v2472
  %v2729 = vmul.f32 %v2473, %v2473
  %v2730 = vmul.f32 %v2474, %v2474
  %v2731 = vmul.f32 %v2475, %v2475
  %v2732 = vmul.f32 %v2476, %v2476
  %v2733 = vmul.f32 %v2477, %v2477
  %v2734 = vmul.f32 %v2478, %v2478
  %v2735 = vmul.f32 %v2479, %v2479
  %v2736 = vmul.f32 %v2480, %v2480
  %v2737 = vmul.f32 %v2481, %v2481
  %v2738 = vmul.f32 %v2482, %v2482
  %v2739 = vmul.f32 %v2483, %v2483
  %v2740 = vmul.f32 %v2484, %v2484
  %v2741 = vmul.f32 %v2485, %v2485
  %v2742 = vmul.f32 %v2486, %v2486
  %v2743 = vmul.f32 %v2487, %v2487
  %v2744 = vmul.f32 %v2488, %v2488
  %v2745 = vmul.f32 %v2489, %v2489
  %v2746 = vmul.f32 %v2490, %v2490
  %v2747 = vmul.f32 %v2491, %v2491
  %v2748 = vmul.f32 %v2492, %v2492
  %v2749 = vmul.f32 %v2493, %v2493
  %v2750 = vmul.f32 %v2494, %v2494
  %v2751 = vmul.f32 %v2495, %v2495
  %v2752 = vmul.f32 %v2496, %v2496
  %v2753 = vmul.f32 %v2497, %v2497
  %v2754 = vmul.f32 %v2498, %v2498
  %v2755 = vmul.f32 %v2499, %v2499
  %v2756 = vmul.f32 %v2500, %v2500
  %v2757 = vmul.f32 %v2501, %v2501
  %v2758 = vmul.f32 %v2502, %v2502
  %v2759 = vmul.f32 %v2503, %v2503
  %v2760 = vmul.f32 %v2504, %v2504
  %v2761 = vmul.f32 %v2505, %v2505
  %v2762 = vmul.f32 %v2506, %v2506
  %v2763 = vmul.f32 %v2507, %v2507
  %v2764 = vmul.f32 %v2508, %v2508
  %v2765 = vmul.f32 %v2509, %v2509
  %v2766 = vmul.f32 %v2510, %v2510
  %v2767 = vmul.f32 %v2511, %v2511
  %v2768 = vmul.f32 %v2512, %v2512
  %v2769 = vmul.f32 %v2513, %v2513
  %v2770 = vmul.f32 %v2514, %v2514
  %v2771 = vmul.f32 %v2515, %v2515
  %v2772 = vmul.f32 %v2516, %v2516
  %v2773 = vmul.f32 %v2517, %v2517
  %v2774 = vmul.f32 %v2518, %v2518
  %v2775 = vmul.f32 %v2519, %v2519
  %v2776 = vmul.f32 %v2520, %v2520
  %v2777 = vmul.f32 %v2521, %v2521
  %v2778 = vmul.f32 %v2522, %v2522
  %v2779 = vmul.f32 %v2523, %v2523
  %v2780 = vmul.f32 %v2524, %v2524
  %v2781 = vmul.f32 %v2525, %v2525
  %v2782 = vmul.f32 %v2526, %v2526
  %v2783 = vmul.f32 %v2527, %v2527
  %v2784 = vmul.f32 %v2528, %v2528
  %v2785 = vmul.f32 %v2529, %v2529
  %v2786 = vmul.f32 %v2530, %v2530
  %v2787 = vmul.f32 %v2531, %v2531
  %v2788 = vmul.f32 %v2532, %v2532
  %v2789 = vmul.f32 %v2533, %v2533
  %v2790 = vmul.f32 %v2534, %v2534
  %v2791 = vmul.f32 %v2535, %v2535
  %v2792 = vmul.f32 %v2536, %v2536
  %v2793 = vmul.f32 %v2537, %v2537
  %v2794 = vmul.f32 %v2538, %v2538
  %v2795 = vmul.f32 %v2539, %v2539
  %v2796 = vmul.f32 %v2540, %v2540
  %v2797 = vmul.f32 %v2541, %v2541
  %v2798 = vmul.f32 %v2542, %v2542
  %v2799 = vmul.f32 %v2543, %v2543
  %v2800 = vmul.f32 %v2544, %v2544
  %v2801 = vmul.f32 %v2545, %v2545
  %v2802 = vmul.f32 %v2546, %v2546
  %v2803 = vmul.f32 %v2547, %v2547
  %v2804 = vmul.f32 %v2548, %v2548
  %v2805 = vmul.f32 %v2549, %v2549
  %v2806 = vmul.f32 %v2550, %v2550
  %v2807 = vmul.f32 %v2551, %v2551
  %v2808 = vmul.f32 %v2552, %v2552
  %v2809 = vmul.f32 %v2553, %v2553
  %v2810 = vmul.f32 %v2554, %v2554
  %v2811 = vmul.f32 %v2555, %v2555
  %v2812 = vmul.f32 %v2556, %v2556
  %v2813 = vmul.f32 %v2557, %v2557
  %v2814 = vmul.f32 %v2558, %v2558
  %v2815 = vmul.f32 %v2559, %v2559
  %v2816 = vmul.f32 %v2560, %v2560
  %v2817 = vmul.f32 %v2561, %v2561
  %v2818 = vmul.f32 %v2562, %v2562
  %v2819 = vmul.f32 %v2563, %v2563
  %v2820 = vmul.f32 %v2564, %v2564
  %v2821 = vmul.f32 %v2565, %v2565
  %v2822 = vmul.f32 %v2566, %v2566
  %v2823 = vmul.f32 %v2567, %v2567
  %v2824 = vmul.f32 %v2568, %v2568
  %v2825 = vmul.f32 %v2569, %v2569
  %v2826 = vmul.f32 %v2570, %v2570
  %v2827 = vmul.f32 %v2571, %v2571
  %v2828 = vmul.f32 %v2572, %v2572
  %v2829 = vmul.f32 %v2573, %v2573
  %v2830 = vmul.f32 %v2574, %v2574
  %v2831 = vmul.f32 %v2575, %v2575
  %v2832 = vmul.f32 %v2576, %v2576
  %v2833 = vmul.f32 %v2577, %v2577
  %v2834 = vmul.f32 %v2578, %v2578
  %v2835 = vmul.f32 %v2579, %v2579
  %v2836 = vmul.f32 %v2580, %v2580
  %v2837 = vmul.f32 %v2581, %v2581
  %v2838 = vmul.f32 %v2582, %v2582
  %v2839 = vmul.f32 %v2583, %v2583
  %v2840 = vmul.f32 %v2584, %v2584
  %v2841 = vmul.f32 %v2585, %v2585
  %v2842 = vmul.f32 %v2586, %v2586
  %v2843 = vmul.f32 %v2587, %v2587
  %v2844 = vmul.f32 %v2588, %v2588
  %v2845 = vmul.f32 %v2589, %v2589
  %v2846 = vmul.f32 %v2590, %v2590
  %v2847 = vmul.f32 %v2591, %v2591
  %v2848 = vmul.f32 %v2592, %v2592
  %v2849 = vmul.f32 %v2593, %v2593
  %v2850 = vmul.f32 %v2594, %v2594
  %v2851 = vmul.f32 %v2595, %v2595
  %v2852 = vmul.f32 %v2596, %v2596
  %v2853 = vmul.f32 %v2597, %v2597
  %v2854 = vmul.f32 %v2598, %v2598
  %v2855 = vmul.f32 %v2599, %v2599
  %v2856 = vmul.f32 %v2600, %v2600
  %v2857 = vmul.f32 %v2601, %v2601
  %v2858 = vmul.f32 %v2602, %v2602
  %v2859 = vmul.f32 %v2603, %v2603
  %v2860 = vmul.f32 %v2604, %v2604
  %v2861 = vmul.f32 %v2605, %v2605
  %v2862 = vmul.f32 %v2606, %v2606
  %v2863 = vmul.f32 %v2607, %v2607
  %v2864 = vmul.f32 %v2608, %v2608
  %v2865 = vmul.f32 %v2609, %v2609
  %v2866 = vmul.f32 %v2610, %v2610
  %v2867 = vmul.f32 %v2611, %v2611
  %v2868 = vmul.f32 %v2612, %v2612
  %v2869 = vmul.f32 %v2613, %v2613
  %v2870 = vmul.f32 %v2614, %v2614
  %v2871 = vmul.f32 %v2615, %v2615
  %v2872 = vmul.f32 %v2616, %v2616
  %v2873 = vmul.f32 %v2617, %v2617
  %v2874 = vmul.f32 %v2618, %v2618
  %v2875 = vmul.f32 %v2619, %v2619
  %v2876 = vmul.f32 %v2620, %v2620
  %v2877 = vmul.f32 %v2621, %v2621
  %v2878 = vmul.f32 %v2622, %v2622
  %v2879 = vmul.f32 %v2623, %v2623
  %v2880 = vmul.f32 %v2624, %v2624
  %v2881 = vmul.f32 %v2625, %v2625
  %v2882 = vmul.f32 %v2626, %v2626
  %v2883 = vmul.f32 %v2627, %v2627
  %v2884 = vmul.f32 %v2628, %v2628
  %v2885 = vmul.f32 %v2629, %v2629
  %v2886 = vmul.f32 %v2630, %v2630
  %v2887 = vmul.f32 %v2631, %v2631
  %v2888 = vmul.f32 %v2632, %v2632
  %v2889 = vmul.f32 %v2633, %v2633
  %v2890 = vmul.f32 %v2634, %v2634
  %v2891 = vmul.f32 %v2635, %v2635
  %v2892 = vmul.f32 %v2636, %v2636
  %v2893 = vmul.f32 %v2637, %v2637
  %v2894 = vmul.f32 %v2638, %v2638
  %v2895 = vmul.f32 %v2639, %v2639
  %v2896 = vmul.f32 %v2640, %v2640
  %v2897 = vmul.f32 %v2641, %v2641
  %v2898 = vmul.f32 %v2642, %v2642
  %v2899 = vmul.f32 %v2643, %v2643
  %v2900 = vmul.f32 %v2644, %v2644
  %v2901 = vmul.f32 %v2645, %v2645
  %v2902 = vmul.f32 %v2646, %v2646
  %v2903 = vmul.f32 %v2647, %v2647
  %v2904 = vmul.f32 %v2648, %v2648
  %v2905 = vmul.f32 %v2649, %v2649
  %v2906 = vmul.f32 %v2650, %v2650
  %v2907 = vmul.f32 %v2651, %v2651
  %v2908 = vmul.f32 %v2652, %v2652
  %v2909 = vmul.f32 %v2653, %v2653
  %v2910 = vmul.f32 %v2654, %v2654
  %v2911 = vmul.f32 %v2655, %v2655
  %v2912 = vmul.f32 %v2656, %v2656
  %v2913 = vmul.f32 %v2657, %v2657
  %v2914 = vmul.f32 %v2658, %v2658
  %v2915 = vmul.f32 %v2659, %v2659
  %v2916 = vmul.f32 %v2660, %v2660
  %v2917 = vmul.f32 %v2661, %v2661
  %v2918 = vmul.f32 %v2662, %v2662
  %v2919 = vmul.f32 %v2663, %v2663
  %v2920 = vmul.f32 %v2664, %v2664
  %v2921 = vmul.f32 %v2665, %v2665
  %v2922 = vmul.f32 %v2666, %v2666
  %v2923 = vmul.f32 %v2667, %v2667
  %v2924 = vmul.f32 %v2668, %v2668
  %v2925 = vmul.f32 %v2669, %v2669
  %v2926 = vmul.f32 %v2670, %v2670
  %v2927 = vmul.f32 %v2671, %v2671
  %v2928 = vmul.f32 %v2672, %v2672
  %v2929 = vmul.f32 %v2673, %v2673
  %v2930 = vmul.f32 %v2674, %v2674
  %v2931 = vmul.f32 %v2675, %v2675
  %v2932 = vmul.f32 %v2676, %v2676
  %v2933 = vmul.f32 %v2677, %v2677
  %v2934 = vmul.f32 %v2678, %v2678
  %v2935 = vmul.f32 %v2679, %v2679
  %v2936 = vmul.f32 %v2680, %v2680
  %v2937 = vmul.f32 %v2681, %v2681
  %v2938 = vsel %vm1906, %v2682, 0.0
  %v2939 = vsel %vm1906, %v2683, 0.0
  %v2940 = vadd.f32 %v2938, %v2939
  %v2941 = vsel %vm1906, %v2684, 0.0
  %v2942 = vadd.f32 %v2940, %v2941
  %v2943 = vsel %vm1906, %v2685, 0.0
  %v2944 = vadd.f32 %v2942, %v2943
  %v2945 = vsel %vm1906, %v2686, 0.0
  %v2946 = vadd.f32 %v2944, %v2945
  %v2947 = vsel %vm1906, %v2687, 0.0
  %v2948 = vadd.f32 %v2946, %v2947
  %v2949 = vsel %vm1906, %v2688, 0.0
  %v2950 = vadd.f32 %v2948, %v2949
  %v2951 = vsel %vm1906, %v2689, 0.0
  %v2952 = vadd.f32 %v2950, %v2951
  %v2953 = vsel %vm1906, %v2690, 0.0
  %v2954 = vadd.f32 %v2952, %v2953
  %v2955 = vsel %vm1906, %v2691, 0.0
  %v2956 = vadd.f32 %v2954, %v2955
  %v2957 = vsel %vm1906, %v2692, 0.0
  %v2958 = vadd.f32 %v2956, %v2957
  %v2959 = vsel %vm1906, %v2693, 0.0
  %v2960 = vadd.f32 %v2958, %v2959
  %v2961 = vsel %vm1906, %v2694, 0.0
  %v2962 = vadd.f32 %v2960, %v2961
  %v2963 = vsel %vm1906, %v2695, 0.0
  %v2964 = vadd.f32 %v2962, %v2963
  %v2965 = vsel %vm1906, %v2696, 0.0
  %v2966 = vadd.f32 %v2964, %v2965
  %v2967 = vsel %vm1906, %v2697, 0.0
  %v2968 = vadd.f32 %v2966, %v2967
  %v2969 = vsel %vm1906, %v2698, 0.0
  %v2970 = vadd.f32 %v2968, %v2969
  %v2971 = vsel %vm1906, %v2699, 0.0
  %v2972 = vadd.f32 %v2970, %v2971
  %v2973 = vsel %vm1906, %v2700, 0.0
  %v2974 = vadd.f32 %v2972, %v2973
  %v2975 = vsel %vm1906, %v2701, 0.0
  %v2976 = vadd.f32 %v2974, %v2975
  %v2977 = vsel %vm1906, %v2702, 0.0
  %v2978 = vadd.f32 %v2976, %v2977
  %v2979 = vsel %vm1906, %v2703, 0.0
  %v2980 = vadd.f32 %v2978, %v2979
  %v2981 = vsel %vm1906, %v2704, 0.0
  %v2982 = vadd.f32 %v2980, %v2981
  %v2983 = vsel %vm1906, %v2705, 0.0
  %v2984 = vadd.f32 %v2982, %v2983
  %v2985 = vsel %vm1906, %v2706, 0.0
  %v2986 = vadd.f32 %v2984, %v2985
  %v2987 = vsel %vm1906, %v2707, 0.0
  %v2988 = vadd.f32 %v2986, %v2987
  %v2989 = vsel %vm1906, %v2708, 0.0
  %v2990 = vadd.f32 %v2988, %v2989
  %v2991 = vsel %vm1906, %v2709, 0.0
  %v2992 = vadd.f32 %v2990, %v2991
  %v2993 = vsel %vm1906, %v2710, 0.0
  %v2994 = vadd.f32 %v2992, %v2993
  %v2995 = vsel %vm1906, %v2711, 0.0
  %v2996 = vadd.f32 %v2994, %v2995
  %v2997 = vsel %vm1906, %v2712, 0.0
  %v2998 = vadd.f32 %v2996, %v2997
  %v2999 = vsel %vm1906, %v2713, 0.0
  %v3000 = vadd.f32 %v2998, %v2999
  %v3001 = vsel %vm1906, %v2714, 0.0
  %v3002 = vadd.f32 %v3000, %v3001
  %v3003 = vsel %vm1906, %v2715, 0.0
  %v3004 = vadd.f32 %v3002, %v3003
  %v3005 = vsel %vm1906, %v2716, 0.0
  %v3006 = vadd.f32 %v3004, %v3005
  %v3007 = vsel %vm1906, %v2717, 0.0
  %v3008 = vadd.f32 %v3006, %v3007
  %v3009 = vsel %vm1906, %v2718, 0.0
  %v3010 = vadd.f32 %v3008, %v3009
  %v3011 = vsel %vm1906, %v2719, 0.0
  %v3012 = vadd.f32 %v3010, %v3011
  %v3013 = vsel %vm1906, %v2720, 0.0
  %v3014 = vadd.f32 %v3012, %v3013
  %v3015 = vsel %vm1906, %v2721, 0.0
  %v3016 = vadd.f32 %v3014, %v3015
  %v3017 = vsel %vm1906, %v2722, 0.0
  %v3018 = vadd.f32 %v3016, %v3017
  %v3019 = vsel %vm1906, %v2723, 0.0
  %v3020 = vadd.f32 %v3018, %v3019
  %v3021 = vsel %vm1906, %v2724, 0.0
  %v3022 = vadd.f32 %v3020, %v3021
  %v3023 = vsel %vm1906, %v2725, 0.0
  %v3024 = vadd.f32 %v3022, %v3023
  %v3025 = vsel %vm1906, %v2726, 0.0
  %v3026 = vadd.f32 %v3024, %v3025
  %v3027 = vsel %vm1906, %v2727, 0.0
  %v3028 = vadd.f32 %v3026, %v3027
  %v3029 = vsel %vm1906, %v2728, 0.0
  %v3030 = vadd.f32 %v3028, %v3029
  %v3031 = vsel %vm1906, %v2729, 0.0
  %v3032 = vadd.f32 %v3030, %v3031
  %v3033 = vsel %vm1906, %v2730, 0.0
  %v3034 = vadd.f32 %v3032, %v3033
  %v3035 = vsel %vm1906, %v2731, 0.0
  %v3036 = vadd.f32 %v3034, %v3035
  %v3037 = vsel %vm1906, %v2732, 0.0
  %v3038 = vadd.f32 %v3036, %v3037
  %v3039 = vsel %vm1906, %v2733, 0.0
  %v3040 = vadd.f32 %v3038, %v3039
  %v3041 = vsel %vm1906, %v2734, 0.0
  %v3042 = vadd.f32 %v3040, %v3041
  %v3043 = vsel %vm1906, %v2735, 0.0
  %v3044 = vadd.f32 %v3042, %v3043
  %v3045 = vsel %vm1906, %v2736, 0.0
  %v3046 = vadd.f32 %v3044, %v3045
  %v3047 = vsel %vm1906, %v2737, 0.0
  %v3048 = vadd.f32 %v3046, %v3047
  %v3049 = vsel %vm1906, %v2738, 0.0
  %v3050 = vadd.f32 %v3048, %v3049
  %v3051 = vsel %vm1906, %v2739, 0.0
  %v3052 = vadd.f32 %v3050, %v3051
  %v3053 = vsel %vm1906, %v2740, 0.0
  %v3054 = vadd.f32 %v3052, %v3053
  %v3055 = vsel %vm1906, %v2741, 0.0
  %v3056 = vadd.f32 %v3054, %v3055
  %v3057 = vsel %vm1906, %v2742, 0.0
  %v3058 = vadd.f32 %v3056, %v3057
  %v3059 = vsel %vm1906, %v2743, 0.0
  %v3060 = vadd.f32 %v3058, %v3059
  %v3061 = vsel %vm1906, %v2744, 0.0
  %v3062 = vadd.f32 %v3060, %v3061
  %v3063 = vsel %vm1906, %v2745, 0.0
  %v3064 = vadd.f32 %v3062, %v3063
  %v3065 = vsel %vm1906, %v2746, 0.0
  %v3066 = vadd.f32 %v3064, %v3065
  %v3067 = vsel %vm1906, %v2747, 0.0
  %v3068 = vadd.f32 %v3066, %v3067
  %v3069 = vsel %vm1906, %v2748, 0.0
  %v3070 = vadd.f32 %v3068, %v3069
  %v3071 = vsel %vm1906, %v2749, 0.0
  %v3072 = vadd.f32 %v3070, %v3071
  %v3073 = vsel %vm1906, %v2750, 0.0
  %v3074 = vadd.f32 %v3072, %v3073
  %v3075 = vsel %vm1906, %v2751, 0.0
  %v3076 = vadd.f32 %v3074, %v3075
  %v3077 = vsel %vm1906, %v2752, 0.0
  %v3078 = vadd.f32 %v3076, %v3077
  %v3079 = vsel %vm1906, %v2753, 0.0
  %v3080 = vadd.f32 %v3078, %v3079
  %v3081 = vsel %vm1906, %v2754, 0.0
  %v3082 = vadd.f32 %v3080, %v3081
  %v3083 = vsel %vm1906, %v2755, 0.0
  %v3084 = vadd.f32 %v3082, %v3083
  %v3085 = vsel %vm1906, %v2756, 0.0
  %v3086 = vadd.f32 %v3084, %v3085
  %v3087 = vsel %vm1906, %v2757, 0.0
  %v3088 = vadd.f32 %v3086, %v3087
  %v3089 = vsel %vm1906, %v2758, 0.0
  %v3090 = vadd.f32 %v3088, %v3089
  %v3091 = vsel %vm1906, %v2759, 0.0
  %v3092 = vadd.f32 %v3090, %v3091
  %v3093 = vsel %vm1906, %v2760, 0.0
  %v3094 = vadd.f32 %v3092, %v3093
  %v3095 = vsel %vm1906, %v2761, 0.0
  %v3096 = vadd.f32 %v3094, %v3095
  %v3097 = vsel %vm1906, %v2762, 0.0
  %v3098 = vadd.f32 %v3096, %v3097
  %v3099 = vsel %vm1906, %v2763, 0.0
  %v3100 = vadd.f32 %v3098, %v3099
  %v3101 = vsel %vm1906, %v2764, 0.0
  %v3102 = vadd.f32 %v3100, %v3101
  %v3103 = vsel %vm1906, %v2765, 0.0
  %v3104 = vadd.f32 %v3102, %v3103
  %v3105 = vsel %vm1906, %v2766, 0.0
  %v3106 = vadd.f32 %v3104, %v3105
  %v3107 = vsel %vm1906, %v2767, 0.0
  %v3108 = vadd.f32 %v3106, %v3107
  %v3109 = vsel %vm1906, %v2768, 0.0
  %v3110 = vadd.f32 %v3108, %v3109
  %v3111 = vsel %vm1906, %v2769, 0.0
  %v3112 = vadd.f32 %v3110, %v3111
  %v3113 = vsel %vm1906, %v2770, 0.0
  %v3114 = vadd.f32 %v3112, %v3113
  %v3115 = vsel %vm1906, %v2771, 0.0
  %v3116 = vadd.f32 %v3114, %v3115
  %v3117 = vsel %vm1906, %v2772, 0.0
  %v3118 = vadd.f32 %v3116, %v3117
  %v3119 = vsel %vm1906, %v2773, 0.0
  %v3120 = vadd.f32 %v3118, %v3119
  %v3121 = vsel %vm1906, %v2774, 0.0
  %v3122 = vadd.f32 %v3120, %v3121
  %v3123 = vsel %vm1906, %v2775, 0.0
  %v3124 = vadd.f32 %v3122, %v3123
  %v3125 = vsel %vm1906, %v2776, 0.0
  %v3126 = vadd.f32 %v3124, %v3125
  %v3127 = vsel %vm1906, %v2777, 0.0
  %v3128 = vadd.f32 %v3126, %v3127
  %v3129 = vsel %vm1906, %v2778, 0.0
  %v3130 = vadd.f32 %v3128, %v3129
  %v3131 = vsel %vm1906, %v2779, 0.0
  %v3132 = vadd.f32 %v3130, %v3131
  %v3133 = vsel %vm1906, %v2780, 0.0
  %v3134 = vadd.f32 %v3132, %v3133
  %v3135 = vsel %vm1906, %v2781, 0.0
  %v3136 = vadd.f32 %v3134, %v3135
  %v3137 = vsel %vm1906, %v2782, 0.0
  %v3138 = vadd.f32 %v3136, %v3137
  %v3139 = vsel %vm1906, %v2783, 0.0
  %v3140 = vadd.f32 %v3138, %v3139
  %v3141 = vsel %vm1906, %v2784, 0.0
  %v3142 = vadd.f32 %v3140, %v3141
  %v3143 = vsel %vm1906, %v2785, 0.0
  %v3144 = vadd.f32 %v3142, %v3143
  %v3145 = vsel %vm1906, %v2786, 0.0
  %v3146 = vadd.f32 %v3144, %v3145
  %v3147 = vsel %vm1906, %v2787, 0.0
  %v3148 = vadd.f32 %v3146, %v3147
  %v3149 = vsel %vm1906, %v2788, 0.0
  %v3150 = vadd.f32 %v3148, %v3149
  %v3151 = vsel %vm1906, %v2789, 0.0
  %v3152 = vadd.f32 %v3150, %v3151
  %v3153 = vsel %vm1906, %v2790, 0.0
  %v3154 = vadd.f32 %v3152, %v3153
  %v3155 = vsel %vm1906, %v2791, 0.0
  %v3156 = vadd.f32 %v3154, %v3155
  %v3157 = vsel %vm1906, %v2792, 0.0
  %v3158 = vadd.f32 %v3156, %v3157
  %v3159 = vsel %vm1906, %v2793, 0.0
  %v3160 = vadd.f32 %v3158, %v3159
  %v3161 = vsel %vm1906, %v2794, 0.0
  %v3162 = vadd.f32 %v3160, %v3161
  %v3163 = vsel %vm1906, %v2795, 0.0
  %v3164 = vadd.f32 %v3162, %v3163
  %v3165 = vsel %vm1906, %v2796, 0.0
  %v3166 = vadd.f32 %v3164, %v3165
  %v3167 = vsel %vm1906, %v2797, 0.0
  %v3168 = vadd.f32 %v3166, %v3167
  %v3169 = vsel %vm1906, %v2798, 0.0
  %v3170 = vadd.f32 %v3168, %v3169
  %v3171 = vsel %vm1906, %v2799, 0.0
  %v3172 = vadd.f32 %v3170, %v3171
  %v3173 = vsel %vm1906, %v2800, 0.0
  %v3174 = vadd.f32 %v3172, %v3173
  %v3175 = vsel %vm1906, %v2801, 0.0
  %v3176 = vadd.f32 %v3174, %v3175
  %v3177 = vsel %vm1906, %v2802, 0.0
  %v3178 = vadd.f32 %v3176, %v3177
  %v3179 = vsel %vm1906, %v2803, 0.0
  %v3180 = vadd.f32 %v3178, %v3179
  %v3181 = vsel %vm1906, %v2804, 0.0
  %v3182 = vadd.f32 %v3180, %v3181
  %v3183 = vsel %vm1906, %v2805, 0.0
  %v3184 = vadd.f32 %v3182, %v3183
  %v3185 = vsel %vm1906, %v2806, 0.0
  %v3186 = vadd.f32 %v3184, %v3185
  %v3187 = vsel %vm1906, %v2807, 0.0
  %v3188 = vadd.f32 %v3186, %v3187
  %v3189 = vsel %vm1906, %v2808, 0.0
  %v3190 = vadd.f32 %v3188, %v3189
  %v3191 = vsel %vm1906, %v2809, 0.0
  %v3192 = vadd.f32 %v3190, %v3191
  %v3193 = vsel %vm1906, %v2810, 0.0
  %v3194 = vadd.f32 %v3192, %v3193
  %v3195 = vsel %vm1906, %v2811, 0.0
  %v3196 = vadd.f32 %v3194, %v3195
  %v3197 = vsel %vm1906, %v2812, 0.0
  %v3198 = vadd.f32 %v3196, %v3197
  %v3199 = vsel %vm1906, %v2813, 0.0
  %v3200 = vadd.f32 %v3198, %v3199
  %v3201 = vsel %vm1906, %v2814, 0.0
  %v3202 = vadd.f32 %v3200, %v3201
  %v3203 = vsel %vm1906, %v2815, 0.0
  %v3204 = vadd.f32 %v3202, %v3203
  %v3205 = vsel %vm1906, %v2816, 0.0
  %v3206 = vadd.f32 %v3204, %v3205
  %v3207 = vsel %vm1906, %v2817, 0.0
  %v3208 = vadd.f32 %v3206, %v3207
  %v3209 = vsel %vm1906, %v2818, 0.0
  %v3210 = vadd.f32 %v3208, %v3209
  %v3211 = vsel %vm1906, %v2819, 0.0
  %v3212 = vadd.f32 %v3210, %v3211
  %v3213 = vsel %vm1906, %v2820, 0.0
  %v3214 = vadd.f32 %v3212, %v3213
  %v3215 = vsel %vm1906, %v2821, 0.0
  %v3216 = vadd.f32 %v3214, %v3215
  %v3217 = vsel %vm1906, %v2822, 0.0
  %v3218 = vadd.f32 %v3216, %v3217
  %v3219 = vsel %vm1906, %v2823, 0.0
  %v3220 = vadd.f32 %v3218, %v3219
  %v3221 = vsel %vm1906, %v2824, 0.0
  %v3222 = vadd.f32 %v3220, %v3221
  %v3223 = vsel %vm1906, %v2825, 0.0
  %v3224 = vadd.f32 %v3222, %v3223
  %v3225 = vsel %vm1906, %v2826, 0.0
  %v3226 = vadd.f32 %v3224, %v3225
  %v3227 = vsel %vm1906, %v2827, 0.0
  %v3228 = vadd.f32 %v3226, %v3227
  %v3229 = vsel %vm1906, %v2828, 0.0
  %v3230 = vadd.f32 %v3228, %v3229
  %v3231 = vsel %vm1906, %v2829, 0.0
  %v3232 = vadd.f32 %v3230, %v3231
  %v3233 = vsel %vm1906, %v2830, 0.0
  %v3234 = vadd.f32 %v3232, %v3233
  %v3235 = vsel %vm1906, %v2831, 0.0
  %v3236 = vadd.f32 %v3234, %v3235
  %v3237 = vsel %vm1906, %v2832, 0.0
  %v3238 = vadd.f32 %v3236, %v3237
  %v3239 = vsel %vm1906, %v2833, 0.0
  %v3240 = vadd.f32 %v3238, %v3239
  %v3241 = vsel %vm1906, %v2834, 0.0
  %v3242 = vadd.f32 %v3240, %v3241
  %v3243 = vsel %vm1906, %v2835, 0.0
  %v3244 = vadd.f32 %v3242, %v3243
  %v3245 = vsel %vm1906, %v2836, 0.0
  %v3246 = vadd.f32 %v3244, %v3245
  %v3247 = vsel %vm1906, %v2837, 0.0
  %v3248 = vadd.f32 %v3246, %v3247
  %v3249 = vsel %vm1906, %v2838, 0.0
  %v3250 = vadd.f32 %v3248, %v3249
  %v3251 = vsel %vm1906, %v2839, 0.0
  %v3252 = vadd.f32 %v3250, %v3251
  %v3253 = vsel %vm1906, %v2840, 0.0
  %v3254 = vadd.f32 %v3252, %v3253
  %v3255 = vsel %vm1906, %v2841, 0.0
  %v3256 = vadd.f32 %v3254, %v3255
  %v3257 = vsel %vm1906, %v2842, 0.0
  %v3258 = vadd.f32 %v3256, %v3257
  %v3259 = vsel %vm1906, %v2843, 0.0
  %v3260 = vadd.f32 %v3258, %v3259
  %v3261 = vsel %vm1906, %v2844, 0.0
  %v3262 = vadd.f32 %v3260, %v3261
  %v3263 = vsel %vm1906, %v2845, 0.0
  %v3264 = vadd.f32 %v3262, %v3263
  %v3265 = vsel %vm1906, %v2846, 0.0
  %v3266 = vadd.f32 %v3264, %v3265
  %v3267 = vsel %vm1906, %v2847, 0.0
  %v3268 = vadd.f32 %v3266, %v3267
  %v3269 = vsel %vm1906, %v2848, 0.0
  %v3270 = vadd.f32 %v3268, %v3269
  %v3271 = vsel %vm1906, %v2849, 0.0
  %v3272 = vadd.f32 %v3270, %v3271
  %v3273 = vsel %vm1906, %v2850, 0.0
  %v3274 = vadd.f32 %v3272, %v3273
  %v3275 = vsel %vm1906, %v2851, 0.0
  %v3276 = vadd.f32 %v3274, %v3275
  %v3277 = vsel %vm1906, %v2852, 0.0
  %v3278 = vadd.f32 %v3276, %v3277
  %v3279 = vsel %vm1906, %v2853, 0.0
  %v3280 = vadd.f32 %v3278, %v3279
  %v3281 = vsel %vm1906, %v2854, 0.0
  %v3282 = vadd.f32 %v3280, %v3281
  %v3283 = vsel %vm1906, %v2855, 0.0
  %v3284 = vadd.f32 %v3282, %v3283
  %v3285 = vsel %vm1906, %v2856, 0.0
  %v3286 = vadd.f32 %v3284, %v3285
  %v3287 = vsel %vm1906, %v2857, 0.0
  %v3288 = vadd.f32 %v3286, %v3287
  %v3289 = vsel %vm1906, %v2858, 0.0
  %v3290 = vadd.f32 %v3288, %v3289
  %v3291 = vsel %vm1906, %v2859, 0.0
  %v3292 = vadd.f32 %v3290, %v3291
  %v3293 = vsel %vm1906, %v2860, 0.0
  %v3294 = vadd.f32 %v3292, %v3293
  %v3295 = vsel %vm1906, %v2861, 0.0
  %v3296 = vadd.f32 %v3294, %v3295
  %v3297 = vsel %vm1906, %v2862, 0.0
  %v3298 = vadd.f32 %v3296, %v3297
  %v3299 = vsel %vm1906, %v2863, 0.0
  %v3300 = vadd.f32 %v3298, %v3299
  %v3301 = vsel %vm1906, %v2864, 0.0
  %v3302 = vadd.f32 %v3300, %v3301
  %v3303 = vsel %vm1906, %v2865, 0.0
  %v3304 = vadd.f32 %v3302, %v3303
  %v3305 = vsel %vm1906, %v2866, 0.0
  %v3306 = vadd.f32 %v3304, %v3305
  %v3307 = vsel %vm1906, %v2867, 0.0
  %v3308 = vadd.f32 %v3306, %v3307
  %v3309 = vsel %vm1906, %v2868, 0.0
  %v3310 = vadd.f32 %v3308, %v3309
  %v3311 = vsel %vm1906, %v2869, 0.0
  %v3312 = vadd.f32 %v3310, %v3311
  %v3313 = vsel %vm1906, %v2870, 0.0
  %v3314 = vadd.f32 %v3312, %v3313
  %v3315 = vsel %vm1906, %v2871, 0.0
  %v3316 = vadd.f32 %v3314, %v3315
  %v3317 = vsel %vm1906, %v2872, 0.0
  %v3318 = vadd.f32 %v3316, %v3317
  %v3319 = vsel %vm1906, %v2873, 0.0
  %v3320 = vadd.f32 %v3318, %v3319
  %v3321 = vsel %vm1906, %v2874, 0.0
  %v3322 = vadd.f32 %v3320, %v3321
  %v3323 = vsel %vm1906, %v2875, 0.0
  %v3324 = vadd.f32 %v3322, %v3323
  %v3325 = vsel %vm1906, %v2876, 0.0
  %v3326 = vadd.f32 %v3324, %v3325
  %v3327 = vsel %vm1906, %v2877, 0.0
  %v3328 = vadd.f32 %v3326, %v3327
  %v3329 = vsel %vm1906, %v2878, 0.0
  %v3330 = vadd.f32 %v3328, %v3329
  %v3331 = vsel %vm1906, %v2879, 0.0
  %v3332 = vadd.f32 %v3330, %v3331
  %v3333 = vsel %vm1906, %v2880, 0.0
  %v3334 = vadd.f32 %v3332, %v3333
  %v3335 = vsel %vm1906, %v2881, 0.0
  %v3336 = vadd.f32 %v3334, %v3335
  %v3337 = vsel %vm1906, %v2882, 0.0
  %v3338 = vadd.f32 %v3336, %v3337
  %v3339 = vsel %vm1906, %v2883, 0.0
  %v3340 = vadd.f32 %v3338, %v3339
  %v3341 = vsel %vm1906, %v2884, 0.0
  %v3342 = vadd.f32 %v3340, %v3341
  %v3343 = vsel %vm1906, %v2885, 0.0
  %v3344 = vadd.f32 %v3342, %v3343
  %v3345 = vsel %vm1906, %v2886, 0.0
  %v3346 = vadd.f32 %v3344, %v3345
  %v3347 = vsel %vm1906, %v2887, 0.0
  %v3348 = vadd.f32 %v3346, %v3347
  %v3349 = vsel %vm1906, %v2888, 0.0
  %v3350 = vadd.f32 %v3348, %v3349
  %v3351 = vsel %vm1906, %v2889, 0.0
  %v3352 = vadd.f32 %v3350, %v3351
  %v3353 = vsel %vm1906, %v2890, 0.0
  %v3354 = vadd.f32 %v3352, %v3353
  %v3355 = vsel %vm1906, %v2891, 0.0
  %v3356 = vadd.f32 %v3354, %v3355
  %v3357 = vsel %vm1906, %v2892, 0.0
  %v3358 = vadd.f32 %v3356, %v3357
  %v3359 = vsel %vm1906, %v2893, 0.0
  %v3360 = vadd.f32 %v3358, %v3359
  %v3361 = vsel %vm1906, %v2894, 0.0
  %v3362 = vadd.f32 %v3360, %v3361
  %v3363 = vsel %vm1906, %v2895, 0.0
  %v3364 = vadd.f32 %v3362, %v3363
  %v3365 = vsel %vm1906, %v2896, 0.0
  %v3366 = vadd.f32 %v3364, %v3365
  %v3367 = vsel %vm1906, %v2897, 0.0
  %v3368 = vadd.f32 %v3366, %v3367
  %v3369 = vsel %vm1906, %v2898, 0.0
  %v3370 = vadd.f32 %v3368, %v3369
  %v3371 = vsel %vm1906, %v2899, 0.0
  %v3372 = vadd.f32 %v3370, %v3371
  %v3373 = vsel %vm1906, %v2900, 0.0
  %v3374 = vadd.f32 %v3372, %v3373
  %v3375 = vsel %vm1906, %v2901, 0.0
  %v3376 = vadd.f32 %v3374, %v3375
  %v3377 = vsel %vm1906, %v2902, 0.0
  %v3378 = vadd.f32 %v3376, %v3377
  %v3379 = vsel %vm1906, %v2903, 0.0
  %v3380 = vadd.f32 %v3378, %v3379
  %v3381 = vsel %vm1906, %v2904, 0.0
  %v3382 = vadd.f32 %v3380, %v3381
  %v3383 = vsel %vm1906, %v2905, 0.0
  %v3384 = vadd.f32 %v3382, %v3383
  %v3385 = vsel %vm1906, %v2906, 0.0
  %v3386 = vadd.f32 %v3384, %v3385
  %v3387 = vsel %vm1906, %v2907, 0.0
  %v3388 = vadd.f32 %v3386, %v3387
  %v3389 = vsel %vm1906, %v2908, 0.0
  %v3390 = vadd.f32 %v3388, %v3389
  %v3391 = vsel %vm1906, %v2909, 0.0
  %v3392 = vadd.f32 %v3390, %v3391
  %v3393 = vsel %vm1906, %v2910, 0.0
  %v3394 = vadd.f32 %v3392, %v3393
  %v3395 = vsel %vm1906, %v2911, 0.0
  %v3396 = vadd.f32 %v3394, %v3395
  %v3397 = vsel %vm1906, %v2912, 0.0
  %v3398 = vadd.f32 %v3396, %v3397
  %v3399 = vsel %vm1906, %v2913, 0.0
  %v3400 = vadd.f32 %v3398, %v3399
  %v3401 = vsel %vm1906, %v2914, 0.0
  %v3402 = vadd.f32 %v3400, %v3401
  %v3403 = vsel %vm1906, %v2915, 0.0
  %v3404 = vadd.f32 %v3402, %v3403
  %v3405 = vsel %vm1906, %v2916, 0.0
  %v3406 = vadd.f32 %v3404, %v3405
  %v3407 = vsel %vm1906, %v2917, 0.0
  %v3408 = vadd.f32 %v3406, %v3407
  %v3409 = vsel %vm1906, %v2918, 0.0
  %v3410 = vadd.f32 %v3408, %v3409
  %v3411 = vsel %vm1906, %v2919, 0.0
  %v3412 = vadd.f32 %v3410, %v3411
  %v3413 = vsel %vm1906, %v2920, 0.0
  %v3414 = vadd.f32 %v3412, %v3413
  %v3415 = vsel %vm1906, %v2921, 0.0
  %v3416 = vadd.f32 %v3414, %v3415
  %v3417 = vsel %vm1906, %v2922, 0.0
  %v3418 = vadd.f32 %v3416, %v3417
  %v3419 = vsel %vm1906, %v2923, 0.0
  %v3420 = vadd.f32 %v3418, %v3419
  %v3421 = vsel %vm1906, %v2924, 0.0
  %v3422 = vadd.f32 %v3420, %v3421
  %v3423 = vsel %vm1906, %v2925, 0.0
  %v3424 = vadd.f32 %v3422, %v3423
  %v3425 = vsel %vm1906, %v2926, 0.0
  %v3426 = vadd.f32 %v3424, %v3425
  %v3427 = vsel %vm1906, %v2927, 0.0
  %v3428 = vadd.f32 %v3426, %v3427
  %v3429 = vsel %vm1906, %v2928, 0.0
  %v3430 = vadd.f32 %v3428, %v3429
  %v3431 = vsel %vm1906, %v2929, 0.0
  %v3432 = vadd.f32 %v3430, %v3431
  %v3433 = vsel %vm1906, %v2930, 0.0
  %v3434 = vadd.f32 %v3432, %v3433
  %v3435 = vsel %vm1906, %v2931, 0.0
  %v3436 = vadd.f32 %v3434, %v3435
  %v3437 = vsel %vm1906, %v2932, 0.0
  %v3438 = vadd.f32 %v3436, %v3437
  %v3439 = vsel %vm1906, %v2933, 0.0
  %v3440 = vadd.f32 %v3438, %v3439
  %v3441 = vsel %vm1906, %v2934, 0.0
  %v3442 = vadd.f32 %v3440, %v3441
  %v3443 = vsel %vm1906, %v2935, 0.0
  %v3444 = vadd.f32 %v3442, %v3443
  %v3445 = vsel %vm1906, %v2936, 0.0
  %v3446 = vadd.f32 %v3444, %v3445
  %v3447 = vsel %vm1906, %v2937, 0.0
  %v3448 = vadd.f32 %v3446, %v3447
  %v3449 = vrot.slane %v3448, 4
  %v3450 = vadd.f32 %v3448, %v3449
  %v3451 = vrot.slane %v3450, 2
  %v3452 = vadd.f32 %v3450, %v3451
  %v3453 = vrot.slane %v3452, 1
  %v3454 = vadd.f32 %v3452, %v3453
  %v3455 = vmul.f32 %v3454, %v2424
  %v3456 = vadd.f32 %v3455, 1e-05
  %v3457 = vrsqrt.pop %v3456
  %v3458 = vld [vmem:[%s2] sm:$0x1]
  %v3459 = vmul.f32 %v3457, %v3458
  %v3460 = vlaneseq
  %v3461 = vshrl.u32 %v3460, 7
  %v3462 = vsub.s32 0, %v3461
  %v3463 = vrot.slane %v3459, %v3462
  %v3464 = vmul.f32 %v2426, %v3463
  %v3465 = vmul.f32 %v2427, %v3463
  %v3466 = vmul.f32 %v2428, %v3463
  %v3467 = vmul.f32 %v2429, %v3463
  %v3468 = vmul.f32 %v2430, %v3463
  %v3469 = vmul.f32 %v2431, %v3463
  %v3470 = vmul.f32 %v2432, %v3463
  %v3471 = vmul.f32 %v2433, %v3463
  %v3472 = vmul.f32 %v2434, %v3463
  %v3473 = vmul.f32 %v2435, %v3463
  %v3474 = vmul.f32 %v2436, %v3463
  %v3475 = vmul.f32 %v2437, %v3463
  %v3476 = vmul.f32 %v2438, %v3463
  %v3477 = vmul.f32 %v2439, %v3463
  %v3478 = vmul.f32 %v2440, %v3463
  %v3479 = vmul.f32 %v2441, %v3463
  %v3480 = vmul.f32 %v2442, %v3463
  %v3481 = vmul.f32 %v2443, %v3463
  %v3482 = vmul.f32 %v2444, %v3463
  %v3483 = vmul.f32 %v2445, %v3463
  %v3484 = vmul.f32 %v2446, %v3463
  %v3485 = vmul.f32 %v2447, %v3463
  %v3486 = vmul.f32 %v2448, %v3463
  %v3487 = vmul.f32 %v2449, %v3463
  %v3488 = vmul.f32 %v2450, %v3463
  %v3489 = vmul.f32 %v2451, %v3463
  %v3490 = vmul.f32 %v2452, %v3463
  %v3491 = vmul.f32 %v2453, %v3463
  %v3492 = vmul.f32 %v2454, %v3463
  %v3493 = vmul.f32 %v2455, %v3463
  %v3494 = vmul.f32 %v2456, %v3463
  %v3495 = vmul.f32 %v2457, %v3463
  %v3496 = vmul.f32 %v2458, %v3463
  %v3497 = vmul.f32 %v2459, %v3463
  %v3498 = vmul.f32 %v2460, %v3463
  %v3499 = vmul.f32 %v2461, %v3463
  %v3500 = vmul.f32 %v2462, %v3463
  %v3501 = vmul.f32 %v2463, %v3463
  %v3502 = vmul.f32 %v2464, %v3463
  %v3503 = vmul.f32 %v2465, %v3463
  %v3504 = vmul.f32 %v2466, %v3463
  %v3505 = vmul.f32 %v2467, %v3463
  %v3506 = vmul.f32 %v2468, %v3463
  %v3507 = vmul.f32 %v2469, %v3463
  %v3508 = vmul.f32 %v2470, %v3463
  %v3509 = vmul.f32 %v2471, %v3463
  %v3510 = vmul.f32 %v2472, %v3463
  %v3511 = vmul.f32 %v2473, %v3463
  %v3512 = vmul.f32 %v2474, %v3463
  %v3513 = vmul.f32 %v2475, %v3463
  %v3514 = vmul.f32 %v2476, %v3463
  %v3515 = vmul.f32 %v2477, %v3463
  %v3516 = vmul.f32 %v2478, %v3463
  %v3517 = vmul.f32 %v2479, %v3463
  %v3518 = vmul.f32 %v2480, %v3463
  %v3519 = vmul.f32 %v2481, %v3463
  %v3520 = vmul.f32 %v2482, %v3463
  %v3521 = vmul.f32 %v2483, %v3463
  %v3522 = vmul.f32 %v2484, %v3463
  %v3523 = vmul.f32 %v2485, %v3463
  %v3524 = vmul.f32 %v2486, %v3463
  %v3525 = vmul.f32 %v2487, %v3463
  %v3526 = vmul.f32 %v2488, %v3463
  %v3527 = vmul.f32 %v2489, %v3463
  %v3528 = vmul.f32 %v2490, %v3463
  %v3529 = vmul.f32 %v2491, %v3463
  %v3530 = vmul.f32 %v2492, %v3463
  %v3531 = vmul.f32 %v2493, %v3463
  %v3532 = vmul.f32 %v2494, %v3463
  %v3533 = vmul.f32 %v2495, %v3463
  %v3534 = vmul.f32 %v2496, %v3463
  %v3535 = vmul.f32 %v2497, %v3463
  %v3536 = vmul.f32 %v2498, %v3463
  %v3537 = vmul.f32 %v2499, %v3463
  %v3538 = vmul.f32 %v2500, %v3463
  %v3539 = vmul.f32 %v2501, %v3463
  %v3540 = vmul.f32 %v2502, %v3463
  %v3541 = vmul.f32 %v2503, %v3463
  %v3542 = vmul.f32 %v2504, %v3463
  %v3543 = vmul.f32 %v2505, %v3463
  %v3544 = vmul.f32 %v2506, %v3463
  %v3545 = vmul.f32 %v2507, %v3463
  %v3546 = vmul.f32 %v2508, %v3463
  %v3547 = vmul.f32 %v2509, %v3463
  %v3548 = vmul.f32 %v2510, %v3463
  %v3549 = vmul.f32 %v2511, %v3463
  %v3550 = vmul.f32 %v2512, %v3463
  %v3551 = vmul.f32 %v2513, %v3463
  %v3552 = vmul.f32 %v2514, %v3463
  %v3553 = vmul.f32 %v2515, %v3463
  %v3554 = vmul.f32 %v2516, %v3463
  %v3555 = vmul.f32 %v2517, %v3463
  %v3556 = vmul.f32 %v2518, %v3463
  %v3557 = vmul.f32 %v2519, %v3463
  %v3558 = vmul.f32 %v2520, %v3463
  %v3559 = vmul.f32 %v2521, %v3463
  %v3560 = vmul.f32 %v2522, %v3463
  %v3561 = vmul.f32 %v2523, %v3463
  %v3562 = vmul.f32 %v2524, %v3463
  %v3563 = vmul.f32 %v2525, %v3463
  %v3564 = vmul.f32 %v2526, %v3463
  %v3565 = vmul.f32 %v2527, %v3463
  %v3566 = vmul.f32 %v2528, %v3463
  %v3567 = vmul.f32 %v2529, %v3463
  %v3568 = vmul.f32 %v2530, %v3463
  %v3569 = vmul.f32 %v2531, %v3463
  %v3570 = vmul.f32 %v2532, %v3463
  %v3571 = vmul.f32 %v2533, %v3463
  %v3572 = vmul.f32 %v2534, %v3463
  %v3573 = vmul.f32 %v2535, %v3463
  %v3574 = vmul.f32 %v2536, %v3463
  %v3575 = vmul.f32 %v2537, %v3463
  %v3576 = vmul.f32 %v2538, %v3463
  %v3577 = vmul.f32 %v2539, %v3463
  %v3578 = vmul.f32 %v2540, %v3463
  %v3579 = vmul.f32 %v2541, %v3463
  %v3580 = vmul.f32 %v2542, %v3463
  %v3581 = vmul.f32 %v2543, %v3463
  %v3582 = vmul.f32 %v2544, %v3463
  %v3583 = vmul.f32 %v2545, %v3463
  %v3584 = vmul.f32 %v2546, %v3463
  %v3585 = vmul.f32 %v2547, %v3463
  %v3586 = vmul.f32 %v2548, %v3463
  %v3587 = vmul.f32 %v2549, %v3463
  %v3588 = vmul.f32 %v2550, %v3463
  %v3589 = vmul.f32 %v2551, %v3463
  %v3590 = vmul.f32 %v2552, %v3463
  %v3591 = vmul.f32 %v2553, %v3463
  %v3592 = vmul.f32 %v2554, %v3463
  %v3593 = vmul.f32 %v2555, %v3463
  %v3594 = vmul.f32 %v2556, %v3463
  %v3595 = vmul.f32 %v2557, %v3463
  %v3596 = vmul.f32 %v2558, %v3463
  %v3597 = vmul.f32 %v2559, %v3463
  %v3598 = vmul.f32 %v2560, %v3463
  %v3599 = vmul.f32 %v2561, %v3463
  %v3600 = vmul.f32 %v2562, %v3463
  %v3601 = vmul.f32 %v2563, %v3463
  %v3602 = vmul.f32 %v2564, %v3463
  %v3603 = vmul.f32 %v2565, %v3463
  %v3604 = vmul.f32 %v2566, %v3463
  %v3605 = vmul.f32 %v2567, %v3463
  %v3606 = vmul.f32 %v2568, %v3463
  %v3607 = vmul.f32 %v2569, %v3463
  %v3608 = vmul.f32 %v2570, %v3463
  %v3609 = vmul.f32 %v2571, %v3463
  %v3610 = vmul.f32 %v2572, %v3463
  %v3611 = vmul.f32 %v2573, %v3463
  %v3612 = vmul.f32 %v2574, %v3463
  %v3613 = vmul.f32 %v2575, %v3463
  %v3614 = vmul.f32 %v2576, %v3463
  %v3615 = vmul.f32 %v2577, %v3463
  %v3616 = vmul.f32 %v2578, %v3463
  %v3617 = vmul.f32 %v2579, %v3463
  %v3618 = vmul.f32 %v2580, %v3463
  %v3619 = vmul.f32 %v2581, %v3463
  %v3620 = vmul.f32 %v2582, %v3463
  %v3621 = vmul.f32 %v2583, %v3463
  %v3622 = vmul.f32 %v2584, %v3463
  %v3623 = vmul.f32 %v2585, %v3463
  %v3624 = vmul.f32 %v2586, %v3463
  %v3625 = vmul.f32 %v2587, %v3463
  %v3626 = vmul.f32 %v2588, %v3463
  %v3627 = vmul.f32 %v2589, %v3463
  %v3628 = vmul.f32 %v2590, %v3463
  %v3629 = vmul.f32 %v2591, %v3463
  %v3630 = vmul.f32 %v2592, %v3463
  %v3631 = vmul.f32 %v2593, %v3463
  %v3632 = vmul.f32 %v2594, %v3463
  %v3633 = vmul.f32 %v2595, %v3463
  %v3634 = vmul.f32 %v2596, %v3463
  %v3635 = vmul.f32 %v2597, %v3463
  %v3636 = vmul.f32 %v2598, %v3463
  %v3637 = vmul.f32 %v2599, %v3463
  %v3638 = vmul.f32 %v2600, %v3463
  %v3639 = vmul.f32 %v2601, %v3463
  %v3640 = vmul.f32 %v2602, %v3463
  %v3641 = vmul.f32 %v2603, %v3463
  %v3642 = vmul.f32 %v2604, %v3463
  %v3643 = vmul.f32 %v2605, %v3463
  %v3644 = vmul.f32 %v2606, %v3463
  %v3645 = vmul.f32 %v2607, %v3463
  %v3646 = vmul.f32 %v2608, %v3463
  %v3647 = vmul.f32 %v2609, %v3463
  %v3648 = vmul.f32 %v2610, %v3463
  %v3649 = vmul.f32 %v2611, %v3463
  %v3650 = vmul.f32 %v2612, %v3463
  %v3651 = vmul.f32 %v2613, %v3463
  %v3652 = vmul.f32 %v2614, %v3463
  %v3653 = vmul.f32 %v2615, %v3463
  %v3654 = vmul.f32 %v2616, %v3463
  %v3655 = vmul.f32 %v2617, %v3463
  %v3656 = vmul.f32 %v2618, %v3463
  %v3657 = vmul.f32 %v2619, %v3463
  %v3658 = vmul.f32 %v2620, %v3463
  %v3659 = vmul.f32 %v2621, %v3463
  %v3660 = vmul.f32 %v2622, %v3463
  %v3661 = vmul.f32 %v2623, %v3463
  %v3662 = vmul.f32 %v2624, %v3463
  %v3663 = vmul.f32 %v2625, %v3463
  %v3664 = vmul.f32 %v2626, %v3463
  %v3665 = vmul.f32 %v2627, %v3463
  %v3666 = vmul.f32 %v2628, %v3463
  %v3667 = vmul.f32 %v2629, %v3463
  %v3668 = vmul.f32 %v2630, %v3463
  %v3669 = vmul.f32 %v2631, %v3463
  %v3670 = vmul.f32 %v2632, %v3463
  %v3671 = vmul.f32 %v2633, %v3463
  %v3672 = vmul.f32 %v2634, %v3463
  %v3673 = vmul.f32 %v2635, %v3463
  %v3674 = vmul.f32 %v2636, %v3463
  %v3675 = vmul.f32 %v2637, %v3463
  %v3676 = vmul.f32 %v2638, %v3463
  %v3677 = vmul.f32 %v2639, %v3463
  %v3678 = vmul.f32 %v2640, %v3463
  %v3679 = vmul.f32 %v2641, %v3463
  %v3680 = vmul.f32 %v2642, %v3463
  %v3681 = vmul.f32 %v2643, %v3463
  %v3682 = vmul.f32 %v2644, %v3463
  %v3683 = vmul.f32 %v2645, %v3463
  %v3684 = vmul.f32 %v2646, %v3463
  %v3685 = vmul.f32 %v2647, %v3463
  %v3686 = vmul.f32 %v2648, %v3463
  %v3687 = vmul.f32 %v2649, %v3463
  %v3688 = vmul.f32 %v2650, %v3463
  %v3689 = vmul.f32 %v2651, %v3463
  %v3690 = vmul.f32 %v2652, %v3463
  %v3691 = vmul.f32 %v2653, %v3463
  %v3692 = vmul.f32 %v2654, %v3463
  %v3693 = vmul.f32 %v2655, %v3463
  %v3694 = vmul.f32 %v2656, %v3463
  %v3695 = vmul.f32 %v2657, %v3463
  %v3696 = vmul.f32 %v2658, %v3463
  %v3697 = vmul.f32 %v2659, %v3463
  %v3698 = vmul.f32 %v2660, %v3463
  %v3699 = vmul.f32 %v2661, %v3463
  %v3700 = vmul.f32 %v2662, %v3463
  %v3701 = vmul.f32 %v2663, %v3463
  %v3702 = vmul.f32 %v2664, %v3463
  %v3703 = vmul.f32 %v2665, %v3463
  %v3704 = vmul.f32 %v2666, %v3463
  %v3705 = vmul.f32 %v2667, %v3463
  %v3706 = vmul.f32 %v2668, %v3463
  %v3707 = vmul.f32 %v2669, %v3463
  %v3708 = vmul.f32 %v2670, %v3463
  %v3709 = vmul.f32 %v2671, %v3463
  %v3710 = vmul.f32 %v2672, %v3463
  %v3711 = vmul.f32 %v2673, %v3463
  %v3712 = vmul.f32 %v2674, %v3463
  %v3713 = vmul.f32 %v2675, %v3463
  %v3714 = vmul.f32 %v2676, %v3463
  %v3715 = vmul.f32 %v2677, %v3463
  %v3716 = vmul.f32 %v2678, %v3463
  %v3717 = vmul.f32 %v2679, %v3463
  %v3718 = vmul.f32 %v2680, %v3463
  %v3719 = vmul.f32 %v2681, %v3463
  %v3720 = vld [vmem:[%s3] sm:$0x1]
  %v3722 = vlaneseq
  %v3723 = vshrl.u32 %v3722, 7
  %v3724 = vsub.s32 0, %v3723
  %v3725 = vrot.slane %v3720, %v3724
  %v3727 = vadd.f32 %v3464, %v3725
  %v3728 = vadd.f32 %v3465, %v3725
  %v3729 = vadd.f32 %v3466, %v3725
  %v3730 = vadd.f32 %v3467, %v3725
  %v3731 = vadd.f32 %v3468, %v3725
  %v3732 = vadd.f32 %v3469, %v3725
  %v3733 = vadd.f32 %v3470, %v3725
  %v3734 = vadd.f32 %v3471, %v3725
  %v3735 = vadd.f32 %v3472, %v3725
  %v3736 = vadd.f32 %v3473, %v3725
  %v3737 = vadd.f32 %v3474, %v3725
  %v3738 = vadd.f32 %v3475, %v3725
  %v3739 = vadd.f32 %v3476, %v3725
  %v3740 = vadd.f32 %v3477, %v3725
  %v3741 = vadd.f32 %v3478, %v3725
  %v3742 = vadd.f32 %v3479, %v3725
  %v3743 = vadd.f32 %v3480, %v3725
  %v3744 = vadd.f32 %v3481, %v3725
  %v3745 = vadd.f32 %v3482, %v3725
  %v3746 = vadd.f32 %v3483, %v3725
  %v3747 = vadd.f32 %v3484, %v3725
  %v3748 = vadd.f32 %v3485, %v3725
  %v3749 = vadd.f32 %v3486, %v3725
  %v3750 = vadd.f32 %v3487, %v3725
  %v3751 = vadd.f32 %v3488, %v3725
  %v3752 = vadd.f32 %v3489, %v3725
  %v3753 = vadd.f32 %v3490, %v3725
  %v3754 = vadd.f32 %v3491, %v3725
  %v3755 = vadd.f32 %v3492, %v3725
  %v3756 = vadd.f32 %v3493, %v3725
  %v3757 = vadd.f32 %v3494, %v3725
  %v3758 = vadd.f32 %v3495, %v3725
  %v3759 = vadd.f32 %v3496, %v3725
  %v3760 = vadd.f32 %v3497, %v3725
  %v3761 = vadd.f32 %v3498, %v3725
  %v3762 = vadd.f32 %v3499, %v3725
  %v3763 = vadd.f32 %v3500, %v3725
  %v3764 = vadd.f32 %v3501, %v3725
  %v3765 = vadd.f32 %v3502, %v3725
  %v3766 = vadd.f32 %v3503, %v3725
  %v3767 = vadd.f32 %v3504, %v3725
  %v3768 = vadd.f32 %v3505, %v3725
  %v3769 = vadd.f32 %v3506, %v3725
  %v3770 = vadd.f32 %v3507, %v3725
  %v3771 = vadd.f32 %v3508, %v3725
  %v3772 = vadd.f32 %v3509, %v3725
  %v3773 = vadd.f32 %v3510, %v3725
  %v3774 = vadd.f32 %v3511, %v3725
  %v3775 = vadd.f32 %v3512, %v3725
  %v3776 = vadd.f32 %v3513, %v3725
  %v3777 = vadd.f32 %v3514, %v3725
  %v3778 = vadd.f32 %v3515, %v3725
  %v3779 = vadd.f32 %v3516, %v3725
  %v3780 = vadd.f32 %v3517, %v3725
  %v3781 = vadd.f32 %v3518, %v3725
  %v3782 = vadd.f32 %v3519, %v3725
  %v3783 = vadd.f32 %v3520, %v3725
  %v3784 = vadd.f32 %v3521, %v3725
  %v3785 = vadd.f32 %v3522, %v3725
  %v3786 = vadd.f32 %v3523, %v3725
  %v3787 = vadd.f32 %v3524, %v3725
  %v3788 = vadd.f32 %v3525, %v3725
  %v3789 = vadd.f32 %v3526, %v3725
  %v3790 = vadd.f32 %v3527, %v3725
  %v3791 = vadd.f32 %v3528, %v3725
  %v3792 = vadd.f32 %v3529, %v3725
  %v3793 = vadd.f32 %v3530, %v3725
  %v3794 = vadd.f32 %v3531, %v3725
  %v3795 = vadd.f32 %v3532, %v3725
  %v3796 = vadd.f32 %v3533, %v3725
  %v3797 = vadd.f32 %v3534, %v3725
  %v3798 = vadd.f32 %v3535, %v3725
  %v3799 = vadd.f32 %v3536, %v3725
  %v3800 = vadd.f32 %v3537, %v3725
  %v3801 = vadd.f32 %v3538, %v3725
  %v3802 = vadd.f32 %v3539, %v3725
  %v3803 = vadd.f32 %v3540, %v3725
  %v3804 = vadd.f32 %v3541, %v3725
  %v3805 = vadd.f32 %v3542, %v3725
  %v3806 = vadd.f32 %v3543, %v3725
  %v3807 = vadd.f32 %v3544, %v3725
  %v3808 = vadd.f32 %v3545, %v3725
  %v3809 = vadd.f32 %v3546, %v3725
  %v3810 = vadd.f32 %v3547, %v3725
  %v3811 = vadd.f32 %v3548, %v3725
  %v3812 = vadd.f32 %v3549, %v3725
  %v3813 = vadd.f32 %v3550, %v3725
  %v3814 = vadd.f32 %v3551, %v3725
  %v3815 = vadd.f32 %v3552, %v3725
  %v3816 = vadd.f32 %v3553, %v3725
  %v3817 = vadd.f32 %v3554, %v3725
  %v3818 = vadd.f32 %v3555, %v3725
  %v3819 = vadd.f32 %v3556, %v3725
  %v3820 = vadd.f32 %v3557, %v3725
  %v3821 = vadd.f32 %v3558, %v3725
  %v3822 = vadd.f32 %v3559, %v3725
  %v3823 = vadd.f32 %v3560, %v3725
  %v3824 = vadd.f32 %v3561, %v3725
  %v3825 = vadd.f32 %v3562, %v3725
  %v3826 = vadd.f32 %v3563, %v3725
  %v3827 = vadd.f32 %v3564, %v3725
  %v3828 = vadd.f32 %v3565, %v3725
  %v3829 = vadd.f32 %v3566, %v3725
  %v3830 = vadd.f32 %v3567, %v3725
  %v3831 = vadd.f32 %v3568, %v3725
  %v3832 = vadd.f32 %v3569, %v3725
  %v3833 = vadd.f32 %v3570, %v3725
  %v3834 = vadd.f32 %v3571, %v3725
  %v3835 = vadd.f32 %v3572, %v3725
  %v3836 = vadd.f32 %v3573, %v3725
  %v3837 = vadd.f32 %v3574, %v3725
  %v3838 = vadd.f32 %v3575, %v3725
  %v3839 = vadd.f32 %v3576, %v3725
  %v3840 = vadd.f32 %v3577, %v3725
  %v3841 = vadd.f32 %v3578, %v3725
  %v3842 = vadd.f32 %v3579, %v3725
  %v3843 = vadd.f32 %v3580, %v3725
  %v3844 = vadd.f32 %v3581, %v3725
  %v3845 = vadd.f32 %v3582, %v3725
  %v3846 = vadd.f32 %v3583, %v3725
  %v3847 = vadd.f32 %v3584, %v3725
  %v3848 = vadd.f32 %v3585, %v3725
  %v3849 = vadd.f32 %v3586, %v3725
  %v3850 = vadd.f32 %v3587, %v3725
  %v3851 = vadd.f32 %v3588, %v3725
  %v3852 = vadd.f32 %v3589, %v3725
  %v3853 = vadd.f32 %v3590, %v3725
  %v3854 = vadd.f32 %v3591, %v3725
  %v3855 = vadd.f32 %v3592, %v3725
  %v3856 = vadd.f32 %v3593, %v3725
  %v3857 = vadd.f32 %v3594, %v3725
  %v3858 = vadd.f32 %v3595, %v3725
  %v3859 = vadd.f32 %v3596, %v3725
  %v3860 = vadd.f32 %v3597, %v3725
  %v3861 = vadd.f32 %v3598, %v3725
  %v3862 = vadd.f32 %v3599, %v3725
  %v3863 = vadd.f32 %v3600, %v3725
  %v3864 = vadd.f32 %v3601, %v3725
  %v3865 = vadd.f32 %v3602, %v3725
  %v3866 = vadd.f32 %v3603, %v3725
  %v3867 = vadd.f32 %v3604, %v3725
  %v3868 = vadd.f32 %v3605, %v3725
  %v3869 = vadd.f32 %v3606, %v3725
  %v3870 = vadd.f32 %v3607, %v3725
  %v3871 = vadd.f32 %v3608, %v3725
  %v3872 = vadd.f32 %v3609, %v3725
  %v3873 = vadd.f32 %v3610, %v3725
  %v3874 = vadd.f32 %v3611, %v3725
  %v3875 = vadd.f32 %v3612, %v3725
  %v3876 = vadd.f32 %v3613, %v3725
  %v3877 = vadd.f32 %v3614, %v3725
  %v3878 = vadd.f32 %v3615, %v3725
  %v3879 = vadd.f32 %v3616, %v3725
  %v3880 = vadd.f32 %v3617, %v3725
  %v3881 = vadd.f32 %v3618, %v3725
  %v3882 = vadd.f32 %v3619, %v3725
  %v3883 = vadd.f32 %v3620, %v3725
  %v3884 = vadd.f32 %v3621, %v3725
  %v3885 = vadd.f32 %v3622, %v3725
  %v3886 = vadd.f32 %v3623, %v3725
  %v3887 = vadd.f32 %v3624, %v3725
  %v3888 = vadd.f32 %v3625, %v3725
  %v3889 = vadd.f32 %v3626, %v3725
  %v3890 = vadd.f32 %v3627, %v3725
  %v3891 = vadd.f32 %v3628, %v3725
  %v3892 = vadd.f32 %v3629, %v3725
  %v3893 = vadd.f32 %v3630, %v3725
  %v3894 = vadd.f32 %v3631, %v3725
  %v3895 = vadd.f32 %v3632, %v3725
  %v3896 = vadd.f32 %v3633, %v3725
  %v3897 = vadd.f32 %v3634, %v3725
  %v3898 = vadd.f32 %v3635, %v3725
  %v3899 = vadd.f32 %v3636, %v3725
  %v3900 = vadd.f32 %v3637, %v3725
  %v3901 = vadd.f32 %v3638, %v3725
  %v3902 = vadd.f32 %v3639, %v3725
  %v3903 = vadd.f32 %v3640, %v3725
  %v3904 = vadd.f32 %v3641, %v3725
  %v3905 = vadd.f32 %v3642, %v3725
  %v3906 = vadd.f32 %v3643, %v3725
  %v3907 = vadd.f32 %v3644, %v3725
  %v3908 = vadd.f32 %v3645, %v3725
  %v3909 = vadd.f32 %v3646, %v3725
  %v3910 = vadd.f32 %v3647, %v3725
  %v3911 = vadd.f32 %v3648, %v3725
  %v3912 = vadd.f32 %v3649, %v3725
  %v3913 = vadd.f32 %v3650, %v3725
  %v3914 = vadd.f32 %v3651, %v3725
  %v3915 = vadd.f32 %v3652, %v3725
  %v3916 = vadd.f32 %v3653, %v3725
  %v3917 = vadd.f32 %v3654, %v3725
  %v3918 = vadd.f32 %v3655, %v3725
  %v3919 = vadd.f32 %v3656, %v3725
  %v3920 = vadd.f32 %v3657, %v3725
  %v3921 = vadd.f32 %v3658, %v3725
  %v3922 = vadd.f32 %v3659, %v3725
  %v3923 = vadd.f32 %v3660, %v3725
  %v3924 = vadd.f32 %v3661, %v3725
  %v3925 = vadd.f32 %v3662, %v3725
  %v3926 = vadd.f32 %v3663, %v3725
  %v3927 = vadd.f32 %v3664, %v3725
  %v3928 = vadd.f32 %v3665, %v3725
  %v3929 = vadd.f32 %v3666, %v3725
  %v3930 = vadd.f32 %v3667, %v3725
  %v3931 = vadd.f32 %v3668, %v3725
  %v3932 = vadd.f32 %v3669, %v3725
  %v3933 = vadd.f32 %v3670, %v3725
  %v3934 = vadd.f32 %v3671, %v3725
  %v3935 = vadd.f32 %v3672, %v3725
  %v3936 = vadd.f32 %v3673, %v3725
  %v3937 = vadd.f32 %v3674, %v3725
  %v3938 = vadd.f32 %v3675, %v3725
  %v3939 = vadd.f32 %v3676, %v3725
  %v3940 = vadd.f32 %v3677, %v3725
  %v3941 = vadd.f32 %v3678, %v3725
  %v3942 = vadd.f32 %v3679, %v3725
  %v3943 = vadd.f32 %v3680, %v3725
  %v3944 = vadd.f32 %v3681, %v3725
  %v3945 = vadd.f32 %v3682, %v3725
  %v3946 = vadd.f32 %v3683, %v3725
  %v3947 = vadd.f32 %v3684, %v3725
  %v3948 = vadd.f32 %v3685, %v3725
  %v3949 = vadd.f32 %v3686, %v3725
  %v3950 = vadd.f32 %v3687, %v3725
  %v3951 = vadd.f32 %v3688, %v3725
  %v3952 = vadd.f32 %v3689, %v3725
  %v3953 = vadd.f32 %v3690, %v3725
  %v3954 = vadd.f32 %v3691, %v3725
  %v3955 = vadd.f32 %v3692, %v3725
  %v3956 = vadd.f32 %v3693, %v3725
  %v3957 = vadd.f32 %v3694, %v3725
  %v3958 = vadd.f32 %v3695, %v3725
  %v3959 = vadd.f32 %v3696, %v3725
  %v3960 = vadd.f32 %v3697, %v3725
  %v3961 = vadd.f32 %v3698, %v3725
  %v3962 = vadd.f32 %v3699, %v3725
  %v3963 = vadd.f32 %v3700, %v3725
  %v3964 = vadd.f32 %v3701, %v3725
  %v3965 = vadd.f32 %v3702, %v3725
  %v3966 = vadd.f32 %v3703, %v3725
  %v3967 = vadd.f32 %v3704, %v3725
  %v3968 = vadd.f32 %v3705, %v3725
  %v3969 = vadd.f32 %v3706, %v3725
  %v3970 = vadd.f32 %v3707, %v3725
  %v3971 = vadd.f32 %v3708, %v3725
  %v3972 = vadd.f32 %v3709, %v3725
  %v3973 = vadd.f32 %v3710, %v3725
  %v3974 = vadd.f32 %v3711, %v3725
  %v3975 = vadd.f32 %v3712, %v3725
  %v3976 = vadd.f32 %v3713, %v3725
  %v3977 = vadd.f32 %v3714, %v3725
  %v3978 = vadd.f32 %v3715, %v3725
  %v3979 = vadd.f32 %v3716, %v3725
  %v3980 = vadd.f32 %v3717, %v3725
  %v3981 = vadd.f32 %v3718, %v3725
  %v3982 = vadd.f32 %v3719, %v3725
  %v3983 = vmax.f32 %v3727, 0.0
  %v3984 = vmax.f32 %v3728, 0.0
  %v3985 = vmax.f32 %v3729, 0.0
  %v3986 = vmax.f32 %v3730, 0.0
  %v3987 = vmax.f32 %v3731, 0.0
  %v3988 = vmax.f32 %v3732, 0.0
  %v3989 = vmax.f32 %v3733, 0.0
  %v3990 = vmax.f32 %v3734, 0.0
  %v3991 = vmax.f32 %v3735, 0.0
  %v3992 = vmax.f32 %v3736, 0.0
  %v3993 = vmax.f32 %v3737, 0.0
  %v3994 = vmax.f32 %v3738, 0.0
  %v3995 = vmax.f32 %v3739, 0.0
  %v3996 = vmax.f32 %v3740, 0.0
  %v3997 = vmax.f32 %v3741, 0.0
  %v3998 = vmax.f32 %v3742, 0.0
  %v3999 = vmax.f32 %v3743, 0.0
  %v4000 = vmax.f32 %v3744, 0.0
  %v4001 = vmax.f32 %v3745, 0.0
  %v4002 = vmax.f32 %v3746, 0.0
  %v4003 = vmax.f32 %v3747, 0.0
  %v4004 = vmax.f32 %v3748, 0.0
  %v4005 = vmax.f32 %v3749, 0.0
  %v4006 = vmax.f32 %v3750, 0.0
  %v4007 = vmax.f32 %v3751, 0.0
  %v4008 = vmax.f32 %v3752, 0.0
  %v4009 = vmax.f32 %v3753, 0.0
  %v4010 = vmax.f32 %v3754, 0.0
  %v4011 = vmax.f32 %v3755, 0.0
  %v4012 = vmax.f32 %v3756, 0.0
  %v4013 = vmax.f32 %v3757, 0.0
  %v4014 = vmax.f32 %v3758, 0.0
  %v4015 = vmax.f32 %v3759, 0.0
  %v4016 = vmax.f32 %v3760, 0.0
  %v4017 = vmax.f32 %v3761, 0.0
  %v4018 = vmax.f32 %v3762, 0.0
  %v4019 = vmax.f32 %v3763, 0.0
  %v4020 = vmax.f32 %v3764, 0.0
  %v4021 = vmax.f32 %v3765, 0.0
  %v4022 = vmax.f32 %v3766, 0.0
  %v4023 = vmax.f32 %v3767, 0.0
  %v4024 = vmax.f32 %v3768, 0.0
  %v4025 = vmax.f32 %v3769, 0.0
  %v4026 = vmax.f32 %v3770, 0.0
  %v4027 = vmax.f32 %v3771, 0.0
  %v4028 = vmax.f32 %v3772, 0.0
  %v4029 = vmax.f32 %v3773, 0.0
  %v4030 = vmax.f32 %v3774, 0.0
  %v4031 = vmax.f32 %v3775, 0.0
  %v4032 = vmax.f32 %v3776, 0.0
  %v4033 = vmax.f32 %v3777, 0.0
  %v4034 = vmax.f32 %v3778, 0.0
  %v4035 = vmax.f32 %v3779, 0.0
  %v4036 = vmax.f32 %v3780, 0.0
  %v4037 = vmax.f32 %v3781, 0.0
  %v4038 = vmax.f32 %v3782, 0.0
  %v4039 = vmax.f32 %v3783, 0.0
  %v4040 = vmax.f32 %v3784, 0.0
  %v4041 = vmax.f32 %v3785, 0.0
  %v4042 = vmax.f32 %v3786, 0.0
  %v4043 = vmax.f32 %v3787, 0.0
  %v4044 = vmax.f32 %v3788, 0.0
  %v4045 = vmax.f32 %v3789, 0.0
  %v4046 = vmax.f32 %v3790, 0.0
  %v4047 = vmax.f32 %v3791, 0.0
  %v4048 = vmax.f32 %v3792, 0.0
  %v4049 = vmax.f32 %v3793, 0.0
  %v4050 = vmax.f32 %v3794, 0.0
  %v4051 = vmax.f32 %v3795, 0.0
  %v4052 = vmax.f32 %v3796, 0.0
  %v4053 = vmax.f32 %v3797, 0.0
  %v4054 = vmax.f32 %v3798, 0.0
  %v4055 = vmax.f32 %v3799, 0.0
  %v4056 = vmax.f32 %v3800, 0.0
  %v4057 = vmax.f32 %v3801, 0.0
  %v4058 = vmax.f32 %v3802, 0.0
  %v4059 = vmax.f32 %v3803, 0.0
  %v4060 = vmax.f32 %v3804, 0.0
  %v4061 = vmax.f32 %v3805, 0.0
  %v4062 = vmax.f32 %v3806, 0.0
  %v4063 = vmax.f32 %v3807, 0.0
  %v4064 = vmax.f32 %v3808, 0.0
  %v4065 = vmax.f32 %v3809, 0.0
  %v4066 = vmax.f32 %v3810, 0.0
  %v4067 = vmax.f32 %v3811, 0.0
  %v4068 = vmax.f32 %v3812, 0.0
  %v4069 = vmax.f32 %v3813, 0.0
  %v4070 = vmax.f32 %v3814, 0.0
  %v4071 = vmax.f32 %v3815, 0.0
  %v4072 = vmax.f32 %v3816, 0.0
  %v4073 = vmax.f32 %v3817, 0.0
  %v4074 = vmax.f32 %v3818, 0.0
  %v4075 = vmax.f32 %v3819, 0.0
  %v4076 = vmax.f32 %v3820, 0.0
  %v4077 = vmax.f32 %v3821, 0.0
  %v4078 = vmax.f32 %v3822, 0.0
  %v4079 = vmax.f32 %v3823, 0.0
  %v4080 = vmax.f32 %v3824, 0.0
  %v4081 = vmax.f32 %v3825, 0.0
  %v4082 = vmax.f32 %v3826, 0.0
  %v4083 = vmax.f32 %v3827, 0.0
  %v4084 = vmax.f32 %v3828, 0.0
  %v4085 = vmax.f32 %v3829, 0.0
  %v4086 = vmax.f32 %v3830, 0.0
  %v4087 = vmax.f32 %v3831, 0.0
  %v4088 = vmax.f32 %v3832, 0.0
  %v4089 = vmax.f32 %v3833, 0.0
  %v4090 = vmax.f32 %v3834, 0.0
  %v4091 = vmax.f32 %v3835, 0.0
  %v4092 = vmax.f32 %v3836, 0.0
  %v4093 = vmax.f32 %v3837, 0.0
  %v4094 = vmax.f32 %v3838, 0.0
  %v4095 = vmax.f32 %v3839, 0.0
  %v4096 = vmax.f32 %v3840, 0.0
  %v4097 = vmax.f32 %v3841, 0.0
  %v4098 = vmax.f32 %v3842, 0.0
  %v4099 = vmax.f32 %v3843, 0.0
  %v4100 = vmax.f32 %v3844, 0.0
  %v4101 = vmax.f32 %v3845, 0.0
  %v4102 = vmax.f32 %v3846, 0.0
  %v4103 = vmax.f32 %v3847, 0.0
  %v4104 = vmax.f32 %v3848, 0.0
  %v4105 = vmax.f32 %v3849, 0.0
  %v4106 = vmax.f32 %v3850, 0.0
  %v4107 = vmax.f32 %v3851, 0.0
  %v4108 = vmax.f32 %v3852, 0.0
  %v4109 = vmax.f32 %v3853, 0.0
  %v4110 = vmax.f32 %v3854, 0.0
  %v4111 = vmax.f32 %v3855, 0.0
  %v4112 = vmax.f32 %v3856, 0.0
  %v4113 = vmax.f32 %v3857, 0.0
  %v4114 = vmax.f32 %v3858, 0.0
  %v4115 = vmax.f32 %v3859, 0.0
  %v4116 = vmax.f32 %v3860, 0.0
  %v4117 = vmax.f32 %v3861, 0.0
  %v4118 = vmax.f32 %v3862, 0.0
  %v4119 = vmax.f32 %v3863, 0.0
  %v4120 = vmax.f32 %v3864, 0.0
  %v4121 = vmax.f32 %v3865, 0.0
  %v4122 = vmax.f32 %v3866, 0.0
  %v4123 = vmax.f32 %v3867, 0.0
  %v4124 = vmax.f32 %v3868, 0.0
  %v4125 = vmax.f32 %v3869, 0.0
  %v4126 = vmax.f32 %v3870, 0.0
  %v4127 = vmax.f32 %v3871, 0.0
  %v4128 = vmax.f32 %v3872, 0.0
  %v4129 = vmax.f32 %v3873, 0.0
  %v4130 = vmax.f32 %v3874, 0.0
  %v4131 = vmax.f32 %v3875, 0.0
  %v4132 = vmax.f32 %v3876, 0.0
  %v4133 = vmax.f32 %v3877, 0.0
  %v4134 = vmax.f32 %v3878, 0.0
  %v4135 = vmax.f32 %v3879, 0.0
  %v4136 = vmax.f32 %v3880, 0.0
  %v4137 = vmax.f32 %v3881, 0.0
  %v4138 = vmax.f32 %v3882, 0.0
  %v4139 = vmax.f32 %v3883, 0.0
  %v4140 = vmax.f32 %v3884, 0.0
  %v4141 = vmax.f32 %v3885, 0.0
  %v4142 = vmax.f32 %v3886, 0.0
  %v4143 = vmax.f32 %v3887, 0.0
  %v4144 = vmax.f32 %v3888, 0.0
  %v4145 = vmax.f32 %v3889, 0.0
  %v4146 = vmax.f32 %v3890, 0.0
  %v4147 = vmax.f32 %v3891, 0.0
  %v4148 = vmax.f32 %v3892, 0.0
  %v4149 = vmax.f32 %v3893, 0.0
  %v4150 = vmax.f32 %v3894, 0.0
  %v4151 = vmax.f32 %v3895, 0.0
  %v4152 = vmax.f32 %v3896, 0.0
  %v4153 = vmax.f32 %v3897, 0.0
  %v4154 = vmax.f32 %v3898, 0.0
  %v4155 = vmax.f32 %v3899, 0.0
  %v4156 = vmax.f32 %v3900, 0.0
  %v4157 = vmax.f32 %v3901, 0.0
  %v4158 = vmax.f32 %v3902, 0.0
  %v4159 = vmax.f32 %v3903, 0.0
  %v4160 = vmax.f32 %v3904, 0.0
  %v4161 = vmax.f32 %v3905, 0.0
  %v4162 = vmax.f32 %v3906, 0.0
  %v4163 = vmax.f32 %v3907, 0.0
  %v4164 = vmax.f32 %v3908, 0.0
  %v4165 = vmax.f32 %v3909, 0.0
  %v4166 = vmax.f32 %v3910, 0.0
  %v4167 = vmax.f32 %v3911, 0.0
  %v4168 = vmax.f32 %v3912, 0.0
  %v4169 = vmax.f32 %v3913, 0.0
  %v4170 = vmax.f32 %v3914, 0.0
  %v4171 = vmax.f32 %v3915, 0.0
  %v4172 = vmax.f32 %v3916, 0.0
  %v4173 = vmax.f32 %v3917, 0.0
  %v4174 = vmax.f32 %v3918, 0.0
  %v4175 = vmax.f32 %v3919, 0.0
  %v4176 = vmax.f32 %v3920, 0.0
  %v4177 = vmax.f32 %v3921, 0.0
  %v4178 = vmax.f32 %v3922, 0.0
  %v4179 = vmax.f32 %v3923, 0.0
  %v4180 = vmax.f32 %v3924, 0.0
  %v4181 = vmax.f32 %v3925, 0.0
  %v4182 = vmax.f32 %v3926, 0.0
  %v4183 = vmax.f32 %v3927, 0.0
  %v4184 = vmax.f32 %v3928, 0.0
  %v4185 = vmax.f32 %v3929, 0.0
  %v4186 = vmax.f32 %v3930, 0.0
  %v4187 = vmax.f32 %v3931, 0.0
  %v4188 = vmax.f32 %v3932, 0.0
  %v4189 = vmax.f32 %v3933, 0.0
  %v4190 = vmax.f32 %v3934, 0.0
  %v4191 = vmax.f32 %v3935, 0.0
  %v4192 = vmax.f32 %v3936, 0.0
  %v4193 = vmax.f32 %v3937, 0.0
  %v4194 = vmax.f32 %v3938, 0.0
  %v4195 = vmax.f32 %v3939, 0.0
  %v4196 = vmax.f32 %v3940, 0.0
  %v4197 = vmax.f32 %v3941, 0.0
  %v4198 = vmax.f32 %v3942, 0.0
  %v4199 = vmax.f32 %v3943, 0.0
  %v4200 = vmax.f32 %v3944, 0.0
  %v4201 = vmax.f32 %v3945, 0.0
  %v4202 = vmax.f32 %v3946, 0.0
  %v4203 = vmax.f32 %v3947, 0.0
  %v4204 = vmax.f32 %v3948, 0.0
  %v4205 = vmax.f32 %v3949, 0.0
  %v4206 = vmax.f32 %v3950, 0.0
  %v4207 = vmax.f32 %v3951, 0.0
  %v4208 = vmax.f32 %v3952, 0.0
  %v4209 = vmax.f32 %v3953, 0.0
  %v4210 = vmax.f32 %v3954, 0.0
  %v4211 = vmax.f32 %v3955, 0.0
  %v4212 = vmax.f32 %v3956, 0.0
  %v4213 = vmax.f32 %v3957, 0.0
  %v4214 = vmax.f32 %v3958, 0.0
  %v4215 = vmax.f32 %v3959, 0.0
  %v4216 = vmax.f32 %v3960, 0.0
  %v4217 = vmax.f32 %v3961, 0.0
  %v4218 = vmax.f32 %v3962, 0.0
  %v4219 = vmax.f32 %v3963, 0.0
  %v4220 = vmax.f32 %v3964, 0.0
  %v4221 = vmax.f32 %v3965, 0.0
  %v4222 = vmax.f32 %v3966, 0.0
  %v4223 = vmax.f32 %v3967, 0.0
  %v4224 = vmax.f32 %v3968, 0.0
  %v4225 = vmax.f32 %v3969, 0.0
  %v4226 = vmax.f32 %v3970, 0.0
  %v4227 = vmax.f32 %v3971, 0.0
  %v4228 = vmax.f32 %v3972, 0.0
  %v4229 = vmax.f32 %v3973, 0.0
  %v4230 = vmax.f32 %v3974, 0.0
  %v4231 = vmax.f32 %v3975, 0.0
  %v4232 = vmax.f32 %v3976, 0.0
  %v4233 = vmax.f32 %v3977, 0.0
  %v4234 = vmax.f32 %v3978, 0.0
  %v4235 = vmax.f32 %v3979, 0.0
  %v4236 = vmax.f32 %v3980, 0.0
  %v4237 = vmax.f32 %v3981, 0.0
  %v4238 = vmax.f32 %v3982, 0.0
  %4239 = vst.msk [vmem:[%s4] sm:$0xff] %vm1906, %v3983
  %4240 = vst.msk [vmem:[%s4 + $0x8] sm:$0xff] %vm1906, %v3984
  %4241 = vst.msk [vmem:[%s4 + $0x10] sm:$0xff] %vm1906, %v3985
  %4242 = vst.msk [vmem:[%s4 + $0x18] sm:$0xff] %vm1906, %v3986
  %4243 = vst.msk [vmem:[%s4 + $0x20] sm:$0xff] %vm1906, %v3987
  %4244 = vst.msk [vmem:[%s4 + $0x28] sm:$0xff] %vm1906, %v3988
  %4245 = vst.msk [vmem:[%s4 + $0x30] sm:$0xff] %vm1906, %v3989
  %4246 = vst.msk [vmem:[%s4 + $0x38] sm:$0xff] %vm1906, %v3990
  %4247 = vst.msk [vmem:[%s4 + $0x40] sm:$0xff] %vm1906, %v3991
  %4248 = vst.msk [vmem:[%s4 + $0x48] sm:$0xff] %vm1906, %v3992
  %4249 = vst.msk [vmem:[%s4 + $0x50] sm:$0xff] %vm1906, %v3993
  %4250 = vst.msk [vmem:[%s4 + $0x58] sm:$0xff] %vm1906, %v3994
  %4251 = vst.msk [vmem:[%s4 + $0x60] sm:$0xff] %vm1906, %v3995
  %4252 = vst.msk [vmem:[%s4 + $0x68] sm:$0xff] %vm1906, %v3996
  %4253 = vst.msk [vmem:[%s4 + $0x70] sm:$0xff] %vm1906, %v3997
  %4254 = vst.msk [vmem:[%s4 + $0x78] sm:$0xff] %vm1906, %v3998
  %4255 = vst.msk [vmem:[%s4 + $0x80] sm:$0xff] %vm1906, %v3999
  %4256 = vst.msk [vmem:[%s4 + $0x88] sm:$0xff] %vm1906, %v4000
  %4257 = vst.msk [vmem:[%s4 + $0x90] sm:$0xff] %vm1906, %v4001
  %4258 = vst.msk [vmem:[%s4 + $0x98] sm:$0xff] %vm1906, %v4002
  %4259 = vst.msk [vmem:[%s4 + $0xa0] sm:$0xff] %vm1906, %v4003
  %4260 = vst.msk [vmem:[%s4 + $0xa8] sm:$0xff] %vm1906, %v4004
  %4261 = vst.msk [vmem:[%s4 + $0xb0] sm:$0xff] %vm1906, %v4005
  %4262 = vst.msk [vmem:[%s4 + $0xb8] sm:$0xff] %vm1906, %v4006
  %4263 = vst.msk [vmem:[%s4 + $0xc0] sm:$0xff] %vm1906, %v4007
  %4264 = vst.msk [vmem:[%s4 + $0xc8] sm:$0xff] %vm1906, %v4008
  %4265 = vst.msk [vmem:[%s4 + $0xd0] sm:$0xff] %vm1906, %v4009
  %4266 = vst.msk [vmem:[%s4 + $0xd8] sm:$0xff] %vm1906, %v4010
  %4267 = vst.msk [vmem:[%s4 + $0xe0] sm:$0xff] %vm1906, %v4011
  %4268 = vst.msk [vmem:[%s4 + $0xe8] sm:$0xff] %vm1906, %v4012
  %4269 = vst.msk [vmem:[%s4 + $0xf0] sm:$0xff] %vm1906, %v4013
  %4270 = vst.msk [vmem:[%s4 + $0xf8] sm:$0xff] %vm1906, %v4014
  %4271 = vst.msk [vmem:[%s4 + $0x100] sm:$0xff] %vm1906, %v4015
  %4272 = vst.msk [vmem:[%s4 + $0x108] sm:$0xff] %vm1906, %v4016
  %4273 = vst.msk [vmem:[%s4 + $0x110] sm:$0xff] %vm1906, %v4017
  %4274 = vst.msk [vmem:[%s4 + $0x118] sm:$0xff] %vm1906, %v4018
  %4275 = vst.msk [vmem:[%s4 + $0x120] sm:$0xff] %vm1906, %v4019
  %4276 = vst.msk [vmem:[%s4 + $0x128] sm:$0xff] %vm1906, %v4020
  %4277 = vst.msk [vmem:[%s4 + $0x130] sm:$0xff] %vm1906, %v4021
  %4278 = vst.msk [vmem:[%s4 + $0x138] sm:$0xff] %vm1906, %v4022
  %4279 = vst.msk [vmem:[%s4 + $0x140] sm:$0xff] %vm1906, %v4023
  %4280 = vst.msk [vmem:[%s4 + $0x148] sm:$0xff] %vm1906, %v4024
  %4281 = vst.msk [vmem:[%s4 + $0x150] sm:$0xff] %vm1906, %v4025
  %4282 = vst.msk [vmem:[%s4 + $0x158] sm:$0xff] %vm1906, %v4026
  %4283 = vst.msk [vmem:[%s4 + $0x160] sm:$0xff] %vm1906, %v4027
  %4284 = vst.msk [vmem:[%s4 + $0x168] sm:$0xff] %vm1906, %v4028
  %4285 = vst.msk [vmem:[%s4 + $0x170] sm:$0xff] %vm1906, %v4029
  %4286 = vst.msk [vmem:[%s4 + $0x178] sm:$0xff] %vm1906, %v4030
  %4287 = vst.msk [vmem:[%s4 + $0x180] sm:$0xff] %vm1906, %v4031
  %4288 = vst.msk [vmem:[%s4 + $0x188] sm:$0xff] %vm1906, %v4032
  %4289 = vst.msk [vmem:[%s4 + $0x190] sm:$0xff] %vm1906, %v4033
  %4290 = vst.msk [vmem:[%s4 + $0x198] sm:$0xff] %vm1906, %v4034
  %4291 = vst.msk [vmem:[%s4 + $0x1a0] sm:$0xff] %vm1906, %v4035
  %4292 = vst.msk [vmem:[%s4 + $0x1a8] sm:$0xff] %vm1906, %v4036
  %4293 = vst.msk [vmem:[%s4 + $0x1b0] sm:$0xff] %vm1906, %v4037
  %4294 = vst.msk [vmem:[%s4 + $0x1b8] sm:$0xff] %vm1906, %v4038
  %4295 = vst.msk [vmem:[%s4 + $0x1c0] sm:$0xff] %vm1906, %v4039
  %4296 = vst.msk [vmem:[%s4 + $0x1c8] sm:$0xff] %vm1906, %v4040
  %4297 = vst.msk [vmem:[%s4 + $0x1d0] sm:$0xff] %vm1906, %v4041
  %4298 = vst.msk [vmem:[%s4 + $0x1d8] sm:$0xff] %vm1906, %v4042
  %4299 = vst.msk [vmem:[%s4 + $0x1e0] sm:$0xff] %vm1906, %v4043
  %4300 = vst.msk [vmem:[%s4 + $0x1e8] sm:$0xff] %vm1906, %v4044
  %4301 = vst.msk [vmem:[%s4 + $0x1f0] sm:$0xff] %vm1906, %v4045
  %4302 = vst.msk [vmem:[%s4 + $0x1f8] sm:$0xff] %vm1906, %v4046
  %4303 = vst.msk [vmem:[%s4 + $0x200] sm:$0xff] %vm1906, %v4047
  %4304 = vst.msk [vmem:[%s4 + $0x208] sm:$0xff] %vm1906, %v4048
  %4305 = vst.msk [vmem:[%s4 + $0x210] sm:$0xff] %vm1906, %v4049
  %4306 = vst.msk [vmem:[%s4 + $0x218] sm:$0xff] %vm1906, %v4050
  %4307 = vst.msk [vmem:[%s4 + $0x220] sm:$0xff] %vm1906, %v4051
  %4308 = vst.msk [vmem:[%s4 + $0x228] sm:$0xff] %vm1906, %v4052
  %4309 = vst.msk [vmem:[%s4 + $0x230] sm:$0xff] %vm1906, %v4053
  %4310 = vst.msk [vmem:[%s4 + $0x238] sm:$0xff] %vm1906, %v4054
  %4311 = vst.msk [vmem:[%s4 + $0x240] sm:$0xff] %vm1906, %v4055
  %4312 = vst.msk [vmem:[%s4 + $0x248] sm:$0xff] %vm1906, %v4056
  %4313 = vst.msk [vmem:[%s4 + $0x250] sm:$0xff] %vm1906, %v4057
  %4314 = vst.msk [vmem:[%s4 + $0x258] sm:$0xff] %vm1906, %v4058
  %4315 = vst.msk [vmem:[%s4 + $0x260] sm:$0xff] %vm1906, %v4059
  %4316 = vst.msk [vmem:[%s4 + $0x268] sm:$0xff] %vm1906, %v4060
  %4317 = vst.msk [vmem:[%s4 + $0x270] sm:$0xff] %vm1906, %v4061
  %4318 = vst.msk [vmem:[%s4 + $0x278] sm:$0xff] %vm1906, %v4062
  %4319 = vst.msk [vmem:[%s4 + $0x280] sm:$0xff] %vm1906, %v4063
  %4320 = vst.msk [vmem:[%s4 + $0x288] sm:$0xff] %vm1906, %v4064
  %4321 = vst.msk [vmem:[%s4 + $0x290] sm:$0xff] %vm1906, %v4065
  %4322 = vst.msk [vmem:[%s4 + $0x298] sm:$0xff] %vm1906, %v4066
  %4323 = vst.msk [vmem:[%s4 + $0x2a0] sm:$0xff] %vm1906, %v4067
  %4324 = vst.msk [vmem:[%s4 + $0x2a8] sm:$0xff] %vm1906, %v4068
  %4325 = vst.msk [vmem:[%s4 + $0x2b0] sm:$0xff] %vm1906, %v4069
  %4326 = vst.msk [vmem:[%s4 + $0x2b8] sm:$0xff] %vm1906, %v4070
  %4327 = vst.msk [vmem:[%s4 + $0x2c0] sm:$0xff] %vm1906, %v4071
  %4328 = vst.msk [vmem:[%s4 + $0x2c8] sm:$0xff] %vm1906, %v4072
  %4329 = vst.msk [vmem:[%s4 + $0x2d0] sm:$0xff] %vm1906, %v4073
  %4330 = vst.msk [vmem:[%s4 + $0x2d8] sm:$0xff] %vm1906, %v4074
  %4331 = vst.msk [vmem:[%s4 + $0x2e0] sm:$0xff] %vm1906, %v4075
  %4332 = vst.msk [vmem:[%s4 + $0x2e8] sm:$0xff] %vm1906, %v4076
  %4333 = vst.msk [vmem:[%s4 + $0x2f0] sm:$0xff] %vm1906, %v4077
  %4334 = vst.msk [vmem:[%s4 + $0x2f8] sm:$0xff] %vm1906, %v4078
  %4335 = vst.msk [vmem:[%s4 + $0x300] sm:$0xff] %vm1906, %v4079
  %4336 = vst.msk [vmem:[%s4 + $0x308] sm:$0xff] %vm1906, %v4080
  %4337 = vst.msk [vmem:[%s4 + $0x310] sm:$0xff] %vm1906, %v4081
  %4338 = vst.msk [vmem:[%s4 + $0x318] sm:$0xff] %vm1906, %v4082
  %4339 = vst.msk [vmem:[%s4 + $0x320] sm:$0xff] %vm1906, %v4083
  %4340 = vst.msk [vmem:[%s4 + $0x328] sm:$0xff] %vm1906, %v4084
  %4341 = vst.msk [vmem:[%s4 + $0x330] sm:$0xff] %vm1906, %v4085
  %4342 = vst.msk [vmem:[%s4 + $0x338] sm:$0xff] %vm1906, %v4086
  %4343 = vst.msk [vmem:[%s4 + $0x340] sm:$0xff] %vm1906, %v4087
  %4344 = vst.msk [vmem:[%s4 + $0x348] sm:$0xff] %vm1906, %v4088
  %4345 = vst.msk [vmem:[%s4 + $0x350] sm:$0xff] %vm1906, %v4089
  %4346 = vst.msk [vmem:[%s4 + $0x358] sm:$0xff] %vm1906, %v4090
  %4347 = vst.msk [vmem:[%s4 + $0x360] sm:$0xff] %vm1906, %v4091
  %4348 = vst.msk [vmem:[%s4 + $0x368] sm:$0xff] %vm1906, %v4092
  %4349 = vst.msk [vmem:[%s4 + $0x370] sm:$0xff] %vm1906, %v4093
  %4350 = vst.msk [vmem:[%s4 + $0x378] sm:$0xff] %vm1906, %v4094
  %4351 = vst.msk [vmem:[%s4 + $0x380] sm:$0xff] %vm1906, %v4095
  %4352 = vst.msk [vmem:[%s4 + $0x388] sm:$0xff] %vm1906, %v4096
  %4353 = vst.msk [vmem:[%s4 + $0x390] sm:$0xff] %vm1906, %v4097
  %4354 = vst.msk [vmem:[%s4 + $0x398] sm:$0xff] %vm1906, %v4098
  %4355 = vst.msk [vmem:[%s4 + $0x3a0] sm:$0xff] %vm1906, %v4099
  %4356 = vst.msk [vmem:[%s4 + $0x3a8] sm:$0xff] %vm1906, %v4100
  %4357 = vst.msk [vmem:[%s4 + $0x3b0] sm:$0xff] %vm1906, %v4101
  %4358 = vst.msk [vmem:[%s4 + $0x3b8] sm:$0xff] %vm1906, %v4102
  %4359 = vst.msk [vmem:[%s4 + $0x3c0] sm:$0xff] %vm1906, %v4103
  %4360 = vst.msk [vmem:[%s4 + $0x3c8] sm:$0xff] %vm1906, %v4104
  %4361 = vst.msk [vmem:[%s4 + $0x3d0] sm:$0xff] %vm1906, %v4105
  %4362 = vst.msk [vmem:[%s4 + $0x3d8] sm:$0xff] %vm1906, %v4106
  %4363 = vst.msk [vmem:[%s4 + $0x3e0] sm:$0xff] %vm1906, %v4107
  %4364 = vst.msk [vmem:[%s4 + $0x3e8] sm:$0xff] %vm1906, %v4108
  %4365 = vst.msk [vmem:[%s4 + $0x3f0] sm:$0xff] %vm1906, %v4109
  %4366 = vst.msk [vmem:[%s4 + $0x3f8] sm:$0xff] %vm1906, %v4110
  %4367 = vst.msk [vmem:[%s4 + $0x400] sm:$0xff] %vm1906, %v4111
  %4368 = vst.msk [vmem:[%s4 + $0x408] sm:$0xff] %vm1906, %v4112
  %4369 = vst.msk [vmem:[%s4 + $0x410] sm:$0xff] %vm1906, %v4113
  %4370 = vst.msk [vmem:[%s4 + $0x418] sm:$0xff] %vm1906, %v4114
  %4371 = vst.msk [vmem:[%s4 + $0x420] sm:$0xff] %vm1906, %v4115
  %4372 = vst.msk [vmem:[%s4 + $0x428] sm:$0xff] %vm1906, %v4116
  %4373 = vst.msk [vmem:[%s4 + $0x430] sm:$0xff] %vm1906, %v4117
  %4374 = vst.msk [vmem:[%s4 + $0x438] sm:$0xff] %vm1906, %v4118
  %4375 = vst.msk [vmem:[%s4 + $0x440] sm:$0xff] %vm1906, %v4119
  %4376 = vst.msk [vmem:[%s4 + $0x448] sm:$0xff] %vm1906, %v4120
  %4377 = vst.msk [vmem:[%s4 + $0x450] sm:$0xff] %vm1906, %v4121
  %4378 = vst.msk [vmem:[%s4 + $0x458] sm:$0xff] %vm1906, %v4122
  %4379 = vst.msk [vmem:[%s4 + $0x460] sm:$0xff] %vm1906, %v4123
  %4380 = vst.msk [vmem:[%s4 + $0x468] sm:$0xff] %vm1906, %v4124
  %4381 = vst.msk [vmem:[%s4 + $0x470] sm:$0xff] %vm1906, %v4125
  %4382 = vst.msk [vmem:[%s4 + $0x478] sm:$0xff] %vm1906, %v4126
  %4383 = vst.msk [vmem:[%s4 + $0x480] sm:$0xff] %vm1906, %v4127
  %4384 = vst.msk [vmem:[%s4 + $0x488] sm:$0xff] %vm1906, %v4128
  %4385 = vst.msk [vmem:[%s4 + $0x490] sm:$0xff] %vm1906, %v4129
  %4386 = vst.msk [vmem:[%s4 + $0x498] sm:$0xff] %vm1906, %v4130
  %4387 = vst.msk [vmem:[%s4 + $0x4a0] sm:$0xff] %vm1906, %v4131
  %4388 = vst.msk [vmem:[%s4 + $0x4a8] sm:$0xff] %vm1906, %v4132
  %4389 = vst.msk [vmem:[%s4 + $0x4b0] sm:$0xff] %vm1906, %v4133
  %4390 = vst.msk [vmem:[%s4 + $0x4b8] sm:$0xff] %vm1906, %v4134
  %4391 = vst.msk [vmem:[%s4 + $0x4c0] sm:$0xff] %vm1906, %v4135
  %4392 = vst.msk [vmem:[%s4 + $0x4c8] sm:$0xff] %vm1906, %v4136
  %4393 = vst.msk [vmem:[%s4 + $0x4d0] sm:$0xff] %vm1906, %v4137
  %4394 = vst.msk [vmem:[%s4 + $0x4d8] sm:$0xff] %vm1906, %v4138
  %4395 = vst.msk [vmem:[%s4 + $0x4e0] sm:$0xff] %vm1906, %v4139
  %4396 = vst.msk [vmem:[%s4 + $0x4e8] sm:$0xff] %vm1906, %v4140
  %4397 = vst.msk [vmem:[%s4 + $0x4f0] sm:$0xff] %vm1906, %v4141
  %4398 = vst.msk [vmem:[%s4 + $0x4f8] sm:$0xff] %vm1906, %v4142
  %4399 = vst.msk [vmem:[%s4 + $0x500] sm:$0xff] %vm1906, %v4143
  %4400 = vst.msk [vmem:[%s4 + $0x508] sm:$0xff] %vm1906, %v4144
  %4401 = vst.msk [vmem:[%s4 + $0x510] sm:$0xff] %vm1906, %v4145
  %4402 = vst.msk [vmem:[%s4 + $0x518] sm:$0xff] %vm1906, %v4146
  %4403 = vst.msk [vmem:[%s4 + $0x520] sm:$0xff] %vm1906, %v4147
  %4404 = vst.msk [vmem:[%s4 + $0x528] sm:$0xff] %vm1906, %v4148
  %4405 = vst.msk [vmem:[%s4 + $0x530] sm:$0xff] %vm1906, %v4149
  %4406 = vst.msk [vmem:[%s4 + $0x538] sm:$0xff] %vm1906, %v4150
  %4407 = vst.msk [vmem:[%s4 + $0x540] sm:$0xff] %vm1906, %v4151
  %4408 = vst.msk [vmem:[%s4 + $0x548] sm:$0xff] %vm1906, %v4152
  %4409 = vst.msk [vmem:[%s4 + $0x550] sm:$0xff] %vm1906, %v4153
  %4410 = vst.msk [vmem:[%s4 + $0x558] sm:$0xff] %vm1906, %v4154
  %4411 = vst.msk [vmem:[%s4 + $0x560] sm:$0xff] %vm1906, %v4155
  %4412 = vst.msk [vmem:[%s4 + $0x568] sm:$0xff] %vm1906, %v4156
  %4413 = vst.msk [vmem:[%s4 + $0x570] sm:$0xff] %vm1906, %v4157
  %4414 = vst.msk [vmem:[%s4 + $0x578] sm:$0xff] %vm1906, %v4158
  %4415 = vst.msk [vmem:[%s4 + $0x580] sm:$0xff] %vm1906, %v4159
  %4416 = vst.msk [vmem:[%s4 + $0x588] sm:$0xff] %vm1906, %v4160
  %4417 = vst.msk [vmem:[%s4 + $0x590] sm:$0xff] %vm1906, %v4161
  %4418 = vst.msk [vmem:[%s4 + $0x598] sm:$0xff] %vm1906, %v4162
  %4419 = vst.msk [vmem:[%s4 + $0x5a0] sm:$0xff] %vm1906, %v4163
  %4420 = vst.msk [vmem:[%s4 + $0x5a8] sm:$0xff] %vm1906, %v4164
  %4421 = vst.msk [vmem:[%s4 + $0x5b0] sm:$0xff] %vm1906, %v4165
  %4422 = vst.msk [vmem:[%s4 + $0x5b8] sm:$0xff] %vm1906, %v4166
  %4423 = vst.msk [vmem:[%s4 + $0x5c0] sm:$0xff] %vm1906, %v4167
  %4424 = vst.msk [vmem:[%s4 + $0x5c8] sm:$0xff] %vm1906, %v4168
  %4425 = vst.msk [vmem:[%s4 + $0x5d0] sm:$0xff] %vm1906, %v4169
  %4426 = vst.msk [vmem:[%s4 + $0x5d8] sm:$0xff] %vm1906, %v4170
  %4427 = vst.msk [vmem:[%s4 + $0x5e0] sm:$0xff] %vm1906, %v4171
  %4428 = vst.msk [vmem:[%s4 + $0x5e8] sm:$0xff] %vm1906, %v4172
  %4429 = vst.msk [vmem:[%s4 + $0x5f0] sm:$0xff] %vm1906, %v4173
  %4430 = vst.msk [vmem:[%s4 + $0x5f8] sm:$0xff] %vm1906, %v4174
  %4431 = vst.msk [vmem:[%s4 + $0x600] sm:$0xff] %vm1906, %v4175
  %4432 = vst.msk [vmem:[%s4 + $0x608] sm:$0xff] %vm1906, %v4176
  %4433 = vst.msk [vmem:[%s4 + $0x610] sm:$0xff] %vm1906, %v4177
  %4434 = vst.msk [vmem:[%s4 + $0x618] sm:$0xff] %vm1906, %v4178
  %4435 = vst.msk [vmem:[%s4 + $0x620] sm:$0xff] %vm1906, %v4179
  %4436 = vst.msk [vmem:[%s4 + $0x628] sm:$0xff] %vm1906, %v4180
  %4437 = vst.msk [vmem:[%s4 + $0x630] sm:$0xff] %vm1906, %v4181
  %4438 = vst.msk [vmem:[%s4 + $0x638] sm:$0xff] %vm1906, %v4182
  %4439 = vst.msk [vmem:[%s4 + $0x640] sm:$0xff] %vm1906, %v4183
  %4440 = vst.msk [vmem:[%s4 + $0x648] sm:$0xff] %vm1906, %v4184
  %4441 = vst.msk [vmem:[%s4 + $0x650] sm:$0xff] %vm1906, %v4185
  %4442 = vst.msk [vmem:[%s4 + $0x658] sm:$0xff] %vm1906, %v4186
  %4443 = vst.msk [vmem:[%s4 + $0x660] sm:$0xff] %vm1906, %v4187
  %4444 = vst.msk [vmem:[%s4 + $0x668] sm:$0xff] %vm1906, %v4188
  %4445 = vst.msk [vmem:[%s4 + $0x670] sm:$0xff] %vm1906, %v4189
  %4446 = vst.msk [vmem:[%s4 + $0x678] sm:$0xff] %vm1906, %v4190
  %4447 = vst.msk [vmem:[%s4 + $0x680] sm:$0xff] %vm1906, %v4191
  %4448 = vst.msk [vmem:[%s4 + $0x688] sm:$0xff] %vm1906, %v4192
  %4449 = vst.msk [vmem:[%s4 + $0x690] sm:$0xff] %vm1906, %v4193
  %4450 = vst.msk [vmem:[%s4 + $0x698] sm:$0xff] %vm1906, %v4194
  %4451 = vst.msk [vmem:[%s4 + $0x6a0] sm:$0xff] %vm1906, %v4195
  %4452 = vst.msk [vmem:[%s4 + $0x6a8] sm:$0xff] %vm1906, %v4196
  %4453 = vst.msk [vmem:[%s4 + $0x6b0] sm:$0xff] %vm1906, %v4197
  %4454 = vst.msk [vmem:[%s4 + $0x6b8] sm:$0xff] %vm1906, %v4198
  %4455 = vst.msk [vmem:[%s4 + $0x6c0] sm:$0xff] %vm1906, %v4199
  %4456 = vst.msk [vmem:[%s4 + $0x6c8] sm:$0xff] %vm1906, %v4200
  %4457 = vst.msk [vmem:[%s4 + $0x6d0] sm:$0xff] %vm1906, %v4201
  %4458 = vst.msk [vmem:[%s4 + $0x6d8] sm:$0xff] %vm1906, %v4202
  %4459 = vst.msk [vmem:[%s4 + $0x6e0] sm:$0xff] %vm1906, %v4203
  %4460 = vst.msk [vmem:[%s4 + $0x6e8] sm:$0xff] %vm1906, %v4204
  %4461 = vst.msk [vmem:[%s4 + $0x6f0] sm:$0xff] %vm1906, %v4205
  %4462 = vst.msk [vmem:[%s4 + $0x6f8] sm:$0xff] %vm1906, %v4206
  %4463 = vst.msk [vmem:[%s4 + $0x700] sm:$0xff] %vm1906, %v4207
  %4464 = vst.msk [vmem:[%s4 + $0x708] sm:$0xff] %vm1906, %v4208
  %4465 = vst.msk [vmem:[%s4 + $0x710] sm:$0xff] %vm1906, %v4209
  %4466 = vst.msk [vmem:[%s4 + $0x718] sm:$0xff] %vm1906, %v4210
  %4467 = vst.msk [vmem:[%s4 + $0x720] sm:$0xff] %vm1906, %v4211
  %4468 = vst.msk [vmem:[%s4 + $0x728] sm:$0xff] %vm1906, %v4212
  %4469 = vst.msk [vmem:[%s4 + $0x730] sm:$0xff] %vm1906, %v4213
  %4470 = vst.msk [vmem:[%s4 + $0x738] sm:$0xff] %vm1906, %v4214
  %4471 = vst.msk [vmem:[%s4 + $0x740] sm:$0xff] %vm1906, %v4215
  %4472 = vst.msk [vmem:[%s4 + $0x748] sm:$0xff] %vm1906, %v4216
  %4473 = vst.msk [vmem:[%s4 + $0x750] sm:$0xff] %vm1906, %v4217
  %4474 = vst.msk [vmem:[%s4 + $0x758] sm:$0xff] %vm1906, %v4218
  %4475 = vst.msk [vmem:[%s4 + $0x760] sm:$0xff] %vm1906, %v4219
  %4476 = vst.msk [vmem:[%s4 + $0x768] sm:$0xff] %vm1906, %v4220
  %4477 = vst.msk [vmem:[%s4 + $0x770] sm:$0xff] %vm1906, %v4221
  %4478 = vst.msk [vmem:[%s4 + $0x778] sm:$0xff] %vm1906, %v4222
  %4479 = vst.msk [vmem:[%s4 + $0x780] sm:$0xff] %vm1906, %v4223
  %4480 = vst.msk [vmem:[%s4 + $0x788] sm:$0xff] %vm1906, %v4224
  %4481 = vst.msk [vmem:[%s4 + $0x790] sm:$0xff] %vm1906, %v4225
  %4482 = vst.msk [vmem:[%s4 + $0x798] sm:$0xff] %vm1906, %v4226
  %4483 = vst.msk [vmem:[%s4 + $0x7a0] sm:$0xff] %vm1906, %v4227
  %4484 = vst.msk [vmem:[%s4 + $0x7a8] sm:$0xff] %vm1906, %v4228
  %4485 = vst.msk [vmem:[%s4 + $0x7b0] sm:$0xff] %vm1906, %v4229
  %4486 = vst.msk [vmem:[%s4 + $0x7b8] sm:$0xff] %vm1906, %v4230
  %4487 = vst.msk [vmem:[%s4 + $0x7c0] sm:$0xff] %vm1906, %v4231
  %4488 = vst.msk [vmem:[%s4 + $0x7c8] sm:$0xff] %vm1906, %v4232
  %4489 = vst.msk [vmem:[%s4 + $0x7d0] sm:$0xff] %vm1906, %v4233
  %4490 = vst.msk [vmem:[%s4 + $0x7d8] sm:$0xff] %vm1906, %v4234
  %4491 = vst.msk [vmem:[%s4 + $0x7e0] sm:$0xff] %vm1906, %v4235
  %4492 = vst.msk [vmem:[%s4 + $0x7e8] sm:$0xff] %vm1906, %v4236
  %4493 = vst.msk [vmem:[%s4 + $0x7f0] sm:$0xff] %vm1906, %v4237
  %4494 = vst.msk [vmem:[%s4 + $0x7f8] sm:$0xff] %vm1906, %v4238
  // Predicated region
  $region18: #{generator_forward.8} parent=0 // pred_check
    _
  $region19: #{generator_forward.8} parent=0 // pred_check_branch
    %4496 = sbr.rel (0) target = $region21
  $region20: #{generator_forward.8} parent=0 // pred_region
    _
  $region21: #{generator_forward.8} parent=0 // pred_fallthru
    _
  // Predicated region
  $region22: #{generator_forward.8} parent=0 // pred_check
    _
  $region23: #{generator_forward.8} parent=0 // pred_check_branch
    %4498 = sbr.rel (0) target = $region25
  $region24: #{generator_forward.8} parent=0 // pred_region
    _
  $region25: #{generator_forward.8} parent=0 // pred_fallthru
    _

// kernel: generator_forward.9
$region0: #{generator_forward.9}
  #allocation0 [shape = 'u32[]', space=smem, size = 0x4, offset = 0x4, fixed_abs, tag = 'smem constant byte address 0x4 - core index']
  #allocation1 [shape = 'u32[144,128]{1,0:T(1,128)}', space=vmem, size = 0x12000, scoped, tag = 'internal scratch']
  %s0 = inlined_call_operand.vmem [shape: f32[8192,128], index: 0, kind: input, shape index: {}]
  %s1 = inlined_call_operand.vmem [shape: f32[128,3], index: 1, kind: input, shape index: {}]
  %s2 = inlined_call_operand.vmem [shape: f32[8192,3], index: 2, kind: output, shape index: {}]
  %s3 = sld [smem:[#allocation0]]
  $region41: #{generator_forward.9} parent=0
    _
  %s5 = ssub.s32 1, %s3
  %s6 = scalar_select 0, %s5, %s3
  loop: start=0, step=1, limit=6
  $region2: #{generator_forward.9} parent=0 // loop_pre_header
    _
  $region3: #{generator_forward.9} parent=0 // loop_header
    %s8 = sphi 0, %s12
    %p9 = scmp.ge.s32.totalorder %s8, 6
    %s18 = sphi 0, %s20
    %s21 = sphi 0, %s18
    %s22 = sphi 0, %s21
    %s38 = sphi 0, %s22
    %s42 = sphi 0, %s42
    %s44 = sphi 0, %s42
    %s45 = sphi 0, %s44
    %s59 = sphi 0, %s45
    %s65 = sphi 0, %s67
    %s68 = sphi 0, %s65
    %s69 = sphi 0, %s68
    %s85 = sphi 0, %s69
  $region4: #{generator_forward.9} parent=0 // loop_header_branch
    %11 = sbr.rel (%p9) target = $region8
  $region5: #{generator_forward.9} parent=0 // loop_body
    %s13 = ssub.s32 %s8, 1
    %s14 = ssub.s32 %s8, 2
    %s15 = sadd.s32 %s8, 1
    %s16 = ssub.s32 %s8, %s15
    %p17 = scmp.eq.s32.totalorder %s16, 0
    %s19 = sadd.s32 %s18, 1
    %s20 = scalar_select %p17, %s18, %s19
    %p23 = pneg %p17
    %p24 = scmp.eq.s32.totalorder %s8, 3
    %p25 = por %p23, %p24
    %p26 = scmp.ne.s32.totalorder %s18, %s21
    %p27 = scmp.eq.s32.totalorder %s8, 0
    %p28 = por %p26, %p27
    %p29 = scmp.ne.s32.totalorder %s18, %s21
    %p30 = scmp.eq.s32.totalorder %s13, 3
    %p31 = por %p29, %p30
    %p32 = scmp.ne.s32.totalorder %s21, %s22
    %p33 = scmp.eq.s32.totalorder %s13, 0
    %p34 = por %p32, %p33
    %p35 = scmp.ne.s32.totalorder %s21, %s22
    %p36 = scmp.eq.s32.totalorder %s14, 3
    %p37 = por %p35, %p36
    %p39 = scmp.ne.s32.totalorder %s22, %s38
    %p40 = scmp.eq.s32.totalorder %s14, 0
    %p41 = por %p39, %p40
    %s43 = sadd.s32 %s42, 1
    %p46 = scmp.eq.s32.totalorder %s8, 3
    %p47 = scmp.ne.s32.totalorder %s42, %s44
    %p48 = scmp.eq.s32.totalorder %s8, 0
    %p49 = por %p47, %p48
    %p50 = scmp.ne.s32.totalorder %s42, %s44
    %p51 = scmp.eq.s32.totalorder %s13, 3
    %p52 = por %p50, %p51
    %p53 = scmp.ne.s32.totalorder %s44, %s45
    %p54 = scmp.eq.s32.totalorder %s13, 0
    %p55 = por %p53, %p54
    %p56 = scmp.ne.s32.totalorder %s44, %s45
    %p57 = scmp.eq.s32.totalorder %s14, 3
    %p58 = por %p56, %p57
    %p60 = scmp.ne.s32.totalorder %s45, %s59
    %p61 = scmp.eq.s32.totalorder %s14, 0
    %p62 = por %p60, %p61
    %s63 = ssub.s32 %s8, %s15
    %p64 = scmp.eq.s32.totalorder %s63, 0
    %s66 = sadd.s32 %s65, 1
    %s67 = scalar_select %p64, %s65, %s66
    %p70 = pneg %p64
    %p71 = scmp.eq.s32.totalorder %s8, 3
    %p72 = por %p70, %p71
    %p73 = scmp.ne.s32.totalorder %s65, %s68
    %p74 = scmp.eq.s32.totalorder %s8, 0
    %p75 = por %p73, %p74
    %p76 = scmp.ne.s32.totalorder %s65, %s68
    %p77 = scmp.eq.s32.totalorder %s13, 3
    %p78 = por %p76, %p77
    %p79 = scmp.ne.s32.totalorder %s68, %s69
    %p80 = scmp.eq.s32.totalorder %s13, 0
    %p81 = por %p79, %p80
    %p82 = scmp.ne.s32.totalorder %s68, %s69
    %p83 = scmp.eq.s32.totalorder %s14, 3
    %p84 = por %p82, %p83
    %p86 = scmp.ne.s32.totalorder %s69, %s85
    %p87 = scmp.eq.s32.totalorder %s14, 0
    %p88 = por %p86, %p87
    %p89 = scmp.le.s32.totalorder 1, %s8
    %p90 = scmp.lt.s32.totalorder %s8, 5
    %p91 = pnand %p89, %p90
    %p92 = pneg %p91
    // Predicated region
    $region9: #{generator_forward.9} parent=5 // pred_check
      _
    $region10: #{generator_forward.9} parent=5 // pred_check_branch
      %94 = sbr.rel (%p91) target = $region12
    $region11: #{generator_forward.9} parent=5 // pred_region
      %s95 = ssub.s32 %s8, 1
      // Predicated region
      $region13: #{generator_forward.9} parent=11 // pred_check
        %p96 = pneg %p55
      $region14: #{generator_forward.9} parent=11 // pred_check_branch
        %98 = sbr.rel (%p96) target = $region16
      $region15: #{generator_forward.9} parent=11 // pred_region
        _
      $region16: #{generator_forward.9} parent=11 // pred_fallthru
        _
    $region12: #{generator_forward.9} parent=5 // pred_fallthru
      _
    %p99 = scmp.lt.s32.totalorder %s8, 4
    // Predicated region
    $region17: #{generator_forward.9} parent=5 // pred_check
      %p100 = pneg %p99
    $region18: #{generator_forward.9} parent=5 // pred_check_branch
      %102 = sbr.rel (%p100) target = $region20
    $region19: #{generator_forward.9} parent=5 // pred_region
      // Predicated region
      $region21: #{generator_forward.9} parent=19 // pred_check
        %p103 = pneg %p28
      $region22: #{generator_forward.9} parent=19 // pred_check_branch
        %105 = sbr.rel (%p103) target = $region24
      $region23: #{generator_forward.9} parent=19 // pred_region
        %s106 = smul.u32 256, %s8
        %p107 = scmp.lt.s32.totalorder %s106, 1023
        %s108 = scalar_select %p107, %s106, 1023
        %s109 = smul.addr %s108, 8
        %s110 = scalar_lea.vmem %s0, %s109
        %s111 = smul.u32 256, %s8
      $region24: #{generator_forward.9} parent=19 // pred_fallthru
        _
    $region20: #{generator_forward.9} parent=5 // pred_fallthru
      _
    %p112 = scmp.le.s32.totalorder 1, %s8
    %p113 = scmp.lt.s32.totalorder %s8, 5
    %p114 = pnand %p112, %p113
    %p115 = pneg %p114
    // Predicated region
    $region25: #{generator_forward.9} parent=5 // pred_check
      _
    $region26: #{generator_forward.9} parent=5 // pred_check_branch
      %117 = sbr.rel (%p114) target = $region28
    $region27: #{generator_forward.9} parent=5 // pred_region
      %s118 = ssub.s32 %s8, 1
      %s119 = smul.u32 256, %s13
      %p120 = scmp.lt.s32.totalorder %s119, 1023
      %s121 = scalar_select %p120, %s119, 1023
      %s122 = smul.addr %s121, 8
      %s123 = scalar_lea.vmem %s0, %s122
      %p124 = pneg %p34
      %p125 = pneg %p31
      %p126 = pneg %p55
      %p127 = pneg %p52
      %p128 = pneg %p81
      %p129 = pneg %p78
      %s130 = smul.u32 256, %s13
      %p131 = scmp.lt.s32.totalorder %s130, 1023
      %s132 = scalar_select %p131, %s130, 1023
      %s133 = smul.addr %s132, 8
      %s134 = scalar_lea.vmem %s2, %s133
      %s135 = smul.u32 256, %s13
      %p136 = scmp.lt.s32.totalorder %s135, 1023
      %s137 = scalar_select %p136, %s135, 1023
      %s138 = smul.addr %s137, 8
      %s139 = scalar_lea.vmem %s0, %s138
      %s140 = smul.u32 256, %s13
      %s141 = smul.u32 256, %s13
      %p142 = scmp.lt.s32.totalorder %s141, 1023
      %s143 = scalar_select %p142, %s141, 1023
      %s144 = smul.addr %s143, 8
      %s145 = scalar_lea.vmem %s2, %s144
      %s146 = smul.u32 256, %s13
      %v147 = vld [vmem:[%s139] sm:$0xff]
      %v148 = vld [vmem:[%s139 + $0x8] sm:$0xff]
      %v149 = vld [vmem:[%s139 + $0x10] sm:$0xff]
      %v150 = vld [vmem:[%s139 + $0x18] sm:$0xff]
      %v151 = vld [vmem:[%s139 + $0x20] sm:$0xff]
      %v152 = vld [vmem:[%s139 + $0x28] sm:$0xff]
      %v153 = vld [vmem:[%s139 + $0x30] sm:$0xff]
      %v154 = vld [vmem:[%s139 + $0x38] sm:$0xff]
      %v155 = vld [vmem:[%s139 + $0x40] sm:$0xff]
      %v156 = vld [vmem:[%s139 + $0x48] sm:$0xff]
      %v157 = vld [vmem:[%s139 + $0x50] sm:$0xff]
      %v158 = vld [vmem:[%s139 + $0x58] sm:$0xff]
      %v159 = vld [vmem:[%s139 + $0x60] sm:$0xff]
      %v160 = vld [vmem:[%s139 + $0x68] sm:$0xff]
      %v161 = vld [vmem:[%s139 + $0x70] sm:$0xff]
      %v162 = vld [vmem:[%s139 + $0x78] sm:$0xff]
      %v163 = vld [vmem:[%s139 + $0x80] sm:$0xff]
      %v164 = vld [vmem:[%s139 + $0x88] sm:$0xff]
      %v165 = vld [vmem:[%s139 + $0x90] sm:$0xff]
      %v166 = vld [vmem:[%s139 + $0x98] sm:$0xff]
      %v167 = vld [vmem:[%s139 + $0xa0] sm:$0xff]
      %v168 = vld [vmem:[%s139 + $0xa8] sm:$0xff]
      %v169 = vld [vmem:[%s139 + $0xb0] sm:$0xff]
      %v170 = vld [vmem:[%s139 + $0xb8] sm:$0xff]
      %v171 = vld [vmem:[%s139 + $0xc0] sm:$0xff]
      %v172 = vld [vmem:[%s139 + $0xc8] sm:$0xff]
      %v173 = vld [vmem:[%s139 + $0xd0] sm:$0xff]
      %v174 = vld [vmem:[%s139 + $0xd8] sm:$0xff]
      %v175 = vld [vmem:[%s139 + $0xe0] sm:$0xff]
      %v176 = vld [vmem:[%s139 + $0xe8] sm:$0xff]
      %v177 = vld [vmem:[%s139 + $0xf0] sm:$0xff]
      %v178 = vld [vmem:[%s139 + $0xf8] sm:$0xff]
      %v179 = vld [vmem:[%s139 + $0x100] sm:$0xff]
      %v180 = vld [vmem:[%s139 + $0x108] sm:$0xff]
      %v181 = vld [vmem:[%s139 + $0x110] sm:$0xff]
      %v182 = vld [vmem:[%s139 + $0x118] sm:$0xff]
      %v183 = vld [vmem:[%s139 + $0x120] sm:$0xff]
      %v184 = vld [vmem:[%s139 + $0x128] sm:$0xff]
      %v185 = vld [vmem:[%s139 + $0x130] sm:$0xff]
      %v186 = vld [vmem:[%s139 + $0x138] sm:$0xff]
      %v187 = vld [vmem:[%s139 + $0x140] sm:$0xff]
      %v188 = vld [vmem:[%s139 + $0x148] sm:$0xff]
      %v189 = vld [vmem:[%s139 + $0x150] sm:$0xff]
      %v190 = vld [vmem:[%s139 + $0x158] sm:$0xff]
      %v191 = vld [vmem:[%s139 + $0x160] sm:$0xff]
      %v192 = vld [vmem:[%s139 + $0x168] sm:$0xff]
      %v193 = vld [vmem:[%s139 + $0x170] sm:$0xff]
      %v194 = vld [vmem:[%s139 + $0x178] sm:$0xff]
      %v195 = vld [vmem:[%s139 + $0x180] sm:$0xff]
      %v196 = vld [vmem:[%s139 + $0x188] sm:$0xff]
      %v197 = vld [vmem:[%s139 + $0x190] sm:$0xff]
      %v198 = vld [vmem:[%s139 + $0x198] sm:$0xff]
      %v199 = vld [vmem:[%s139 + $0x1a0] sm:$0xff]
      %v200 = vld [vmem:[%s139 + $0x1a8] sm:$0xff]
      %v201 = vld [vmem:[%s139 + $0x1b0] sm:$0xff]
      %v202 = vld [vmem:[%s139 + $0x1b8] sm:$0xff]
      %v203 = vld [vmem:[%s139 + $0x1c0] sm:$0xff]
      %v204 = vld [vmem:[%s139 + $0x1c8] sm:$0xff]
      %v205 = vld [vmem:[%s139 + $0x1d0] sm:$0xff]
      %v206 = vld [vmem:[%s139 + $0x1d8] sm:$0xff]
      %v207 = vld [vmem:[%s139 + $0x1e0] sm:$0xff]
      %v208 = vld [vmem:[%s139 + $0x1e8] sm:$0xff]
      %v209 = vld [vmem:[%s139 + $0x1f0] sm:$0xff]
      %v210 = vld [vmem:[%s139 + $0x1f8] sm:$0xff]
      %v211 = vld [vmem:[%s139 + $0x200] sm:$0xff]
      %v212 = vld [vmem:[%s139 + $0x208] sm:$0xff]
      %v213 = vld [vmem:[%s139 + $0x210] sm:$0xff]
      %v214 = vld [vmem:[%s139 + $0x218] sm:$0xff]
      %v215 = vld [vmem:[%s139 + $0x220] sm:$0xff]
      %v216 = vld [vmem:[%s139 + $0x228] sm:$0xff]
      %v217 = vld [vmem:[%s139 + $0x230] sm:$0xff]
      %v218 = vld [vmem:[%s139 + $0x238] sm:$0xff]
      %v219 = vld [vmem:[%s139 + $0x240] sm:$0xff]
      %v220 = vld [vmem:[%s139 + $0x248] sm:$0xff]
      %v221 = vld [vmem:[%s139 + $0x250] sm:$0xff]
      %v222 = vld [vmem:[%s139 + $0x258] sm:$0xff]
      %v223 = vld [vmem:[%s139 + $0x260] sm:$0xff]
      %v224 = vld [vmem:[%s139 + $0x268] sm:$0xff]
      %v225 = vld [vmem:[%s139 + $0x270] sm:$0xff]
      %v226 = vld [vmem:[%s139 + $0x278] sm:$0xff]
      %v227 = vld [vmem:[%s139 + $0x280] sm:$0xff]
      %v228 = vld [vmem:[%s139 + $0x288] sm:$0xff]
      %v229 = vld [vmem:[%s139 + $0x290] sm:$0xff]
      %v230 = vld [vmem:[%s139 + $0x298] sm:$0xff]
      %v231 = vld [vmem:[%s139 + $0x2a0] sm:$0xff]
      %v232 = vld [vmem:[%s139 + $0x2a8] sm:$0xff]
      %v233 = vld [vmem:[%s139 + $0x2b0] sm:$0xff]
      %v234 = vld [vmem:[%s139 + $0x2b8] sm:$0xff]
      %v235 = vld [vmem:[%s139 + $0x2c0] sm:$0xff]
      %v236 = vld [vmem:[%s139 + $0x2c8] sm:$0xff]
      %v237 = vld [vmem:[%s139 + $0x2d0] sm:$0xff]
      %v238 = vld [vmem:[%s139 + $0x2d8] sm:$0xff]
      %v239 = vld [vmem:[%s139 + $0x2e0] sm:$0xff]
      %v240 = vld [vmem:[%s139 + $0x2e8] sm:$0xff]
      %v241 = vld [vmem:[%s139 + $0x2f0] sm:$0xff]
      %v242 = vld [vmem:[%s139 + $0x2f8] sm:$0xff]
      %v243 = vld [vmem:[%s139 + $0x300] sm:$0xff]
      %v244 = vld [vmem:[%s139 + $0x308] sm:$0xff]
      %v245 = vld [vmem:[%s139 + $0x310] sm:$0xff]
      %v246 = vld [vmem:[%s139 + $0x318] sm:$0xff]
      %v247 = vld [vmem:[%s139 + $0x320] sm:$0xff]
      %v248 = vld [vmem:[%s139 + $0x328] sm:$0xff]
      %v249 = vld [vmem:[%s139 + $0x330] sm:$0xff]
      %v250 = vld [vmem:[%s139 + $0x338] sm:$0xff]
      %v251 = vld [vmem:[%s139 + $0x340] sm:$0xff]
      %v252 = vld [vmem:[%s139 + $0x348] sm:$0xff]
      %v253 = vld [vmem:[%s139 + $0x350] sm:$0xff]
      %v254 = vld [vmem:[%s139 + $0x358] sm:$0xff]
      %v255 = vld [vmem:[%s139 + $0x360] sm:$0xff]
      %v256 = vld [vmem:[%s139 + $0x368] sm:$0xff]
      %v257 = vld [vmem:[%s139 + $0x370] sm:$0xff]
      %v258 = vld [vmem:[%s139 + $0x378] sm:$0xff]
      %v259 = vld [vmem:[%s139 + $0x380] sm:$0xff]
      %v260 = vld [vmem:[%s139 + $0x388] sm:$0xff]
      %v261 = vld [vmem:[%s139 + $0x390] sm:$0xff]
      %v262 = vld [vmem:[%s139 + $0x398] sm:$0xff]
      %v263 = vld [vmem:[%s139 + $0x3a0] sm:$0xff]
      %v264 = vld [vmem:[%s139 + $0x3a8] sm:$0xff]
      %v265 = vld [vmem:[%s139 + $0x3b0] sm:$0xff]
      %v266 = vld [vmem:[%s139 + $0x3b8] sm:$0xff]
      %v267 = vld [vmem:[%s139 + $0x3c0] sm:$0xff]
      %v268 = vld [vmem:[%s139 + $0x3c8] sm:$0xff]
      %v269 = vld [vmem:[%s139 + $0x3d0] sm:$0xff]
      %v270 = vld [vmem:[%s139 + $0x3d8] sm:$0xff]
      %v271 = vld [vmem:[%s139 + $0x3e0] sm:$0xff]
      %v272 = vld [vmem:[%s139 + $0x3e8] sm:$0xff]
      %v273 = vld [vmem:[%s139 + $0x3f0] sm:$0xff]
      %v274 = vld [vmem:[%s139 + $0x3f8] sm:$0xff]
      %v275 = vld [vmem:[%s139 + $0x400] sm:$0xff]
      %v276 = vld [vmem:[%s139 + $0x408] sm:$0xff]
      %v277 = vld [vmem:[%s139 + $0x410] sm:$0xff]
      %v278 = vld [vmem:[%s139 + $0x418] sm:$0xff]
      %v279 = vld [vmem:[%s139 + $0x420] sm:$0xff]
      %v280 = vld [vmem:[%s139 + $0x428] sm:$0xff]
      %v281 = vld [vmem:[%s139 + $0x430] sm:$0xff]
      %v282 = vld [vmem:[%s139 + $0x438] sm:$0xff]
      %v283 = vld [vmem:[%s139 + $0x440] sm:$0xff]
      %v284 = vld [vmem:[%s139 + $0x448] sm:$0xff]
      %v285 = vld [vmem:[%s139 + $0x450] sm:$0xff]
      %v286 = vld [vmem:[%s139 + $0x458] sm:$0xff]
      %v287 = vld [vmem:[%s139 + $0x460] sm:$0xff]
      %v288 = vld [vmem:[%s139 + $0x468] sm:$0xff]
      %v289 = vld [vmem:[%s139 + $0x470] sm:$0xff]
      %v290 = vld [vmem:[%s139 + $0x478] sm:$0xff]
      %v291 = vld [vmem:[%s139 + $0x480] sm:$0xff]
      %v292 = vld [vmem:[%s139 + $0x488] sm:$0xff]
      %v293 = vld [vmem:[%s139 + $0x490] sm:$0xff]
      %v294 = vld [vmem:[%s139 + $0x498] sm:$0xff]
      %v295 = vld [vmem:[%s139 + $0x4a0] sm:$0xff]
      %v296 = vld [vmem:[%s139 + $0x4a8] sm:$0xff]
      %v297 = vld [vmem:[%s139 + $0x4b0] sm:$0xff]
      %v298 = vld [vmem:[%s139 + $0x4b8] sm:$0xff]
      %v299 = vld [vmem:[%s139 + $0x4c0] sm:$0xff]
      %v300 = vld [vmem:[%s139 + $0x4c8] sm:$0xff]
      %v301 = vld [vmem:[%s139 + $0x4d0] sm:$0xff]
      %v302 = vld [vmem:[%s139 + $0x4d8] sm:$0xff]
      %v303 = vld [vmem:[%s139 + $0x4e0] sm:$0xff]
      %v304 = vld [vmem:[%s139 + $0x4e8] sm:$0xff]
      %v305 = vld [vmem:[%s139 + $0x4f0] sm:$0xff]
      %v306 = vld [vmem:[%s139 + $0x4f8] sm:$0xff]
      %v307 = vld [vmem:[%s139 + $0x500] sm:$0xff]
      %v308 = vld [vmem:[%s139 + $0x508] sm:$0xff]
      %v309 = vld [vmem:[%s139 + $0x510] sm:$0xff]
      %v310 = vld [vmem:[%s139 + $0x518] sm:$0xff]
      %v311 = vld [vmem:[%s139 + $0x520] sm:$0xff]
      %v312 = vld [vmem:[%s139 + $0x528] sm:$0xff]
      %v313 = vld [vmem:[%s139 + $0x530] sm:$0xff]
      %v314 = vld [vmem:[%s139 + $0x538] sm:$0xff]
      %v315 = vld [vmem:[%s139 + $0x540] sm:$0xff]
      %v316 = vld [vmem:[%s139 + $0x548] sm:$0xff]
      %v317 = vld [vmem:[%s139 + $0x550] sm:$0xff]
      %v318 = vld [vmem:[%s139 + $0x558] sm:$0xff]
      %v319 = vld [vmem:[%s139 + $0x560] sm:$0xff]
      %v320 = vld [vmem:[%s139 + $0x568] sm:$0xff]
      %v321 = vld [vmem:[%s139 + $0x570] sm:$0xff]
      %v322 = vld [vmem:[%s139 + $0x578] sm:$0xff]
      %v323 = vld [vmem:[%s139 + $0x580] sm:$0xff]
      %v324 = vld [vmem:[%s139 + $0x588] sm:$0xff]
      %v325 = vld [vmem:[%s139 + $0x590] sm:$0xff]
      %v326 = vld [vmem:[%s139 + $0x598] sm:$0xff]
      %v327 = vld [vmem:[%s139 + $0x5a0] sm:$0xff]
      %v328 = vld [vmem:[%s139 + $0x5a8] sm:$0xff]
      %v329 = vld [vmem:[%s139 + $0x5b0] sm:$0xff]
      %v330 = vld [vmem:[%s139 + $0x5b8] sm:$0xff]
      %v331 = vld [vmem:[%s139 + $0x5c0] sm:$0xff]
      %v332 = vld [vmem:[%s139 + $0x5c8] sm:$0xff]
      %v333 = vld [vmem:[%s139 + $0x5d0] sm:$0xff]
      %v334 = vld [vmem:[%s139 + $0x5d8] sm:$0xff]
      %v335 = vld [vmem:[%s139 + $0x5e0] sm:$0xff]
      %v336 = vld [vmem:[%s139 + $0x5e8] sm:$0xff]
      %v337 = vld [vmem:[%s139 + $0x5f0] sm:$0xff]
      %v338 = vld [vmem:[%s139 + $0x5f8] sm:$0xff]
      %v339 = vld [vmem:[%s139 + $0x600] sm:$0xff]
      %v340 = vld [vmem:[%s139 + $0x608] sm:$0xff]
      %v341 = vld [vmem:[%s139 + $0x610] sm:$0xff]
      %v342 = vld [vmem:[%s139 + $0x618] sm:$0xff]
      %v343 = vld [vmem:[%s139 + $0x620] sm:$0xff]
      %v344 = vld [vmem:[%s139 + $0x628] sm:$0xff]
      %v345 = vld [vmem:[%s139 + $0x630] sm:$0xff]
      %v346 = vld [vmem:[%s139 + $0x638] sm:$0xff]
      %v347 = vld [vmem:[%s139 + $0x640] sm:$0xff]
      %v348 = vld [vmem:[%s139 + $0x648] sm:$0xff]
      %v349 = vld [vmem:[%s139 + $0x650] sm:$0xff]
      %v350 = vld [vmem:[%s139 + $0x658] sm:$0xff]
      %v351 = vld [vmem:[%s139 + $0x660] sm:$0xff]
      %v352 = vld [vmem:[%s139 + $0x668] sm:$0xff]
      %v353 = vld [vmem:[%s139 + $0x670] sm:$0xff]
      %v354 = vld [vmem:[%s139 + $0x678] sm:$0xff]
      %v355 = vld [vmem:[%s139 + $0x680] sm:$0xff]
      %v356 = vld [vmem:[%s139 + $0x688] sm:$0xff]
      %v357 = vld [vmem:[%s139 + $0x690] sm:$0xff]
      %v358 = vld [vmem:[%s139 + $0x698] sm:$0xff]
      %v359 = vld [vmem:[%s139 + $0x6a0] sm:$0xff]
      %v360 = vld [vmem:[%s139 + $0x6a8] sm:$0xff]
      %v361 = vld [vmem:[%s139 + $0x6b0] sm:$0xff]
      %v362 = vld [vmem:[%s139 + $0x6b8] sm:$0xff]
      %v363 = vld [vmem:[%s139 + $0x6c0] sm:$0xff]
      %v364 = vld [vmem:[%s139 + $0x6c8] sm:$0xff]
      %v365 = vld [vmem:[%s139 + $0x6d0] sm:$0xff]
      %v366 = vld [vmem:[%s139 + $0x6d8] sm:$0xff]
      %v367 = vld [vmem:[%s139 + $0x6e0] sm:$0xff]
      %v368 = vld [vmem:[%s139 + $0x6e8] sm:$0xff]
      %v369 = vld [vmem:[%s139 + $0x6f0] sm:$0xff]
      %v370 = vld [vmem:[%s139 + $0x6f8] sm:$0xff]
      %v371 = vld [vmem:[%s139 + $0x700] sm:$0xff]
      %v372 = vld [vmem:[%s139 + $0x708] sm:$0xff]
      %v373 = vld [vmem:[%s139 + $0x710] sm:$0xff]
      %v374 = vld [vmem:[%s139 + $0x718] sm:$0xff]
      %v375 = vld [vmem:[%s139 + $0x720] sm:$0xff]
      %v376 = vld [vmem:[%s139 + $0x728] sm:$0xff]
      %v377 = vld [vmem:[%s139 + $0x730] sm:$0xff]
      %v378 = vld [vmem:[%s139 + $0x738] sm:$0xff]
      %v379 = vld [vmem:[%s139 + $0x740] sm:$0xff]
      %v380 = vld [vmem:[%s139 + $0x748] sm:$0xff]
      %v381 = vld [vmem:[%s139 + $0x750] sm:$0xff]
      %v382 = vld [vmem:[%s139 + $0x758] sm:$0xff]
      %v383 = vld [vmem:[%s139 + $0x760] sm:$0xff]
      %v384 = vld [vmem:[%s139 + $0x768] sm:$0xff]
      %v385 = vld [vmem:[%s139 + $0x770] sm:$0xff]
      %v386 = vld [vmem:[%s139 + $0x778] sm:$0xff]
      %v387 = vld [vmem:[%s139 + $0x780] sm:$0xff]
      %v388 = vld [vmem:[%s139 + $0x788] sm:$0xff]
      %v389 = vld [vmem:[%s139 + $0x790] sm:$0xff]
      %v390 = vld [vmem:[%s139 + $0x798] sm:$0xff]
      %v391 = vld [vmem:[%s139 + $0x7a0] sm:$0xff]
      %v392 = vld [vmem:[%s139 + $0x7a8] sm:$0xff]
      %v393 = vld [vmem:[%s139 + $0x7b0] sm:$0xff]
      %v394 = vld [vmem:[%s139 + $0x7b8] sm:$0xff]
      %v395 = vld [vmem:[%s139 + $0x7c0] sm:$0xff]
      %v396 = vld [vmem:[%s139 + $0x7c8] sm:$0xff]
      %v397 = vld [vmem:[%s139 + $0x7d0] sm:$0xff]
      %v398 = vld [vmem:[%s139 + $0x7d8] sm:$0xff]
      %v399 = vld [vmem:[%s139 + $0x7e0] sm:$0xff]
      %v400 = vld [vmem:[%s139 + $0x7e8] sm:$0xff]
      %v401 = vld [vmem:[%s139 + $0x7f0] sm:$0xff]
      %v402 = vld [vmem:[%s139 + $0x7f8] sm:$0xff]
      %v403 = vld [vmem:[%s1] sm:$0xff]
      %v404 = vld [vmem:[%s1 + $0x8] sm:$0xff]
      %v405 = vld [vmem:[%s1 + $0x10] sm:$0xff]
      %v406 = vld [vmem:[%s1 + $0x18] sm:$0xff]
      %v407 = vld [vmem:[%s1 + $0x20] sm:$0xff]
      %v408 = vld [vmem:[%s1 + $0x28] sm:$0xff]
      %v409 = vld [vmem:[%s1 + $0x30] sm:$0xff]
      %v410 = vld [vmem:[%s1 + $0x38] sm:$0xff]
      %v411 = vld [vmem:[%s1 + $0x40] sm:$0xff]
      %v412 = vld [vmem:[%s1 + $0x48] sm:$0xff]
      %v413 = vld [vmem:[%s1 + $0x50] sm:$0xff]
      %v414 = vld [vmem:[%s1 + $0x58] sm:$0xff]
      %v415 = vld [vmem:[%s1 + $0x60] sm:$0xff]
      %v416 = vld [vmem:[%s1 + $0x68] sm:$0xff]
      %v417 = vld [vmem:[%s1 + $0x70] sm:$0xff]
      %v418 = vld [vmem:[%s1 + $0x78] sm:$0xff]
      %419 = vmatprep.subr.mxu0 0.0
      %420 = vmatpush1.msra.mxu0 %v418
      %421 = vmatprep.subr.mxu0 0.0
      %422 = vmatpush1.msra.mxu0 %v417
      %423 = vmatprep.subr.mxu0 0.0
      %424 = vmatpush1.msra.mxu0 %v416
      %425 = vmatprep.subr.mxu0 0.0
      %426 = vmatpush1.msra.mxu0 %v415
      %427 = vmatprep.subr.mxu0 0.0
      %428 = vmatpush1.msra.mxu0 %v414
      %429 = vmatprep.subr.mxu0 0.0
      %430 = vmatpush1.msra.mxu0 %v413
      %431 = vmatprep.subr.mxu0 0.0
      %432 = vmatpush1.msra.mxu0 %v412
      %433 = vmatprep.subr.mxu0 0.0
      %434 = vmatpush1.msra.mxu0 %v411
      %435 = vmatprep.subr.mxu0 0.0
      %436 = vmatpush1.msra.mxu0 %v410
      %437 = vmatprep.subr.mxu0 0.0
      %438 = vmatpush1.msra.mxu0 %v409
      %439 = vmatprep.subr.mxu0 0.0
      %440 = vmatpush1.msra.mxu0 %v408
      %441 = vmatprep.subr.mxu0 0.0
      %442 = vmatpush1.msra.mxu0 %v407
      %443 = vmatprep.subr.mxu0 0.0
      %444 = vmatpush1.msra.mxu0 %v406
      %445 = vmatprep.subr.mxu0 0.0
      %446 = vmatpush1.msra.mxu0 %v405
      %447 = vmatprep.subr.mxu0 0.0
      %448 = vmatpush1.msra.mxu0 %v404
      %449 = vmatprep.subr.mxu0 0.0
      %450 = vmatpush1.msra.mxu0 %v403
      %451 = vmatprep.subr.mxu0 0.0
      %452 = vmatpush2.msra.mxu0 0.0
      %453 = vmatprep.subr.mxu0 0.0
      %454 = vmatpush2.msra.mxu0 0.0
      %455 = vmatprep.subr.mxu0 0.0
      %456 = vmatpush2.msra.mxu0 0.0
      %457 = vmatprep.subr.mxu0 0.0
      %458 = vmatpush2.msra.mxu0 0.0
      %459 = vmatprep.subr.mxu0 0.0
      %460 = vmatpush2.msra.mxu0 0.0
      %461 = vmatprep.subr.mxu0 0.0
      %462 = vmatpush2.msra.mxu0 0.0
      %463 = vmatprep.subr.mxu0 0.0
      %464 = vmatpush2.msra.mxu0 0.0
      %465 = vmatprep.subr.mxu0 0.0
      %466 = vmatpush2.msra.mxu0 0.0
      %467 = vmatprep.subr.mxu0 0.0
      %468 = vmatpush2.msra.mxu0 0.0
      %469 = vmatprep.subr.mxu0 0.0
      %470 = vmatpush2.msra.mxu0 0.0
      %471 = vmatprep.subr.mxu0 0.0
      %472 = vmatpush2.msra.mxu0 0.0
      %473 = vmatprep.subr.mxu0 0.0
      %474 = vmatpush2.msra.mxu0 0.0
      %475 = vmatprep.subr.mxu0 0.0
      %476 = vmatpush2.msra.mxu0 0.0
      %477 = vmatprep.subr.mxu0 0.0
      %478 = vmatpush2.msra.mxu0 0.0
      %479 = vmatprep.subr.mxu0 0.0
      %480 = vmatpush2.msra.mxu0 0.0
      %481 = vmatprep.subr.mxu0 0.0
      %482 = vmatpush2.msra.mxu0 0.0
      %483 = vmatprep.mubr.f32.mxu0 0.0
      %484 = vmatmul.mubr.f32.gmra.mxu0 %v147
      %v485 = vpop.f32.mrf.mxu0
      %v486 = vadd.f32 0.0, %v485
      %v487 = vpop.f32.mrf.mxu0
      %488 = vmatprep.mubr.f32.mxu0 0.0
      %489 = vmatmul.mubr.f32.gmra.mxu0 %v148
      %v490 = vpop.f32.mrf.mxu0
      %v491 = vadd.f32 0.0, %v490
      %v492 = vpop.f32.mrf.mxu0
      %493 = vmatprep.mubr.f32.mxu0 0.0
      %494 = vmatmul.mubr.f32.gmra.mxu0 %v149
      %v495 = vpop.f32.mrf.mxu0
      %v496 = vadd.f32 0.0, %v495
      %v497 = vpop.f32.mrf.mxu0
      %498 = vmatprep.mubr.f32.mxu0 0.0
      %499 = vmatmul.mubr.f32.gmra.mxu0 %v150
      %v500 = vpop.f32.mrf.mxu0
      %v501 = vadd.f32 0.0, %v500
      %v502 = vpop.f32.mrf.mxu0
      %503 = vmatprep.mubr.f32.mxu0 0.0
      %504 = vmatmul.mubr.f32.gmra.mxu0 %v151
      %v505 = vpop.f32.mrf.mxu0
      %v506 = vadd.f32 0.0, %v505
      %v507 = vpop.f32.mrf.mxu0
      %508 = vmatprep.mubr.f32.mxu0 0.0
      %509 = vmatmul.mubr.f32.gmra.mxu0 %v152
      %v510 = vpop.f32.mrf.mxu0
      %v511 = vadd.f32 0.0, %v510
      %v512 = vpop.f32.mrf.mxu0
      %513 = vmatprep.mubr.f32.mxu0 0.0
      %514 = vmatmul.mubr.f32.gmra.mxu0 %v153
      %v515 = vpop.f32.mrf.mxu0
      %v516 = vadd.f32 0.0, %v515
      %v517 = vpop.f32.mrf.mxu0
      %518 = vmatprep.mubr.f32.mxu0 0.0
      %519 = vmatmul.mubr.f32.gmra.mxu0 %v154
      %v520 = vpop.f32.mrf.mxu0
      %v521 = vadd.f32 0.0, %v520
      %v522 = vpop.f32.mrf.mxu0
      %523 = vmatprep.mubr.f32.mxu0 0.0
      %524 = vmatmul.mubr.f32.gmra.mxu0 %v155
      %v525 = vpop.f32.mrf.mxu0
      %v526 = vadd.f32 0.0, %v525
      %v527 = vpop.f32.mrf.mxu0
      %528 = vmatprep.mubr.f32.mxu0 0.0
      %529 = vmatmul.mubr.f32.gmra.mxu0 %v156
      %v530 = vpop.f32.mrf.mxu0
      %v531 = vadd.f32 0.0, %v530
      %v532 = vpop.f32.mrf.mxu0
      %533 = vmatprep.mubr.f32.mxu0 0.0
      %534 = vmatmul.mubr.f32.gmra.mxu0 %v157
      %v535 = vpop.f32.mrf.mxu0
      %v536 = vadd.f32 0.0, %v535
      %v537 = vpop.f32.mrf.mxu0
      %538 = vmatprep.mubr.f32.mxu0 0.0
      %539 = vmatmul.mubr.f32.gmra.mxu0 %v158
      %v540 = vpop.f32.mrf.mxu0
      %v541 = vadd.f32 0.0, %v540
      %v542 = vpop.f32.mrf.mxu0
      %543 = vmatprep.mubr.f32.mxu0 0.0
      %544 = vmatmul.mubr.f32.gmra.mxu0 %v159
      %v545 = vpop.f32.mrf.mxu0
      %v546 = vadd.f32 0.0, %v545
      %v547 = vpop.f32.mrf.mxu0
      %548 = vmatprep.mubr.f32.mxu0 0.0
      %549 = vmatmul.mubr.f32.gmra.mxu0 %v160
      %v550 = vpop.f32.mrf.mxu0
      %v551 = vadd.f32 0.0, %v550
      %v552 = vpop.f32.mrf.mxu0
      %553 = vmatprep.mubr.f32.mxu0 0.0
      %554 = vmatmul.mubr.f32.gmra.mxu0 %v161
      %v555 = vpop.f32.mrf.mxu0
      %v556 = vadd.f32 0.0, %v555
      %v557 = vpop.f32.mrf.mxu0
      %558 = vmatprep.mubr.f32.mxu0 0.0
      %559 = vmatmul.mubr.f32.gmra.mxu0 %v162
      %v560 = vpop.f32.mrf.mxu0
      %v561 = vadd.f32 0.0, %v560
      %v562 = vpop.f32.mrf.mxu0
      %563 = vmatprep.mubr.f32.mxu0 0.0
      %564 = vmatmul.mubr.f32.gmra.mxu0 %v163
      %v565 = vpop.f32.mrf.mxu0
      %v566 = vadd.f32 0.0, %v565
      %v567 = vpop.f32.mrf.mxu0
      %568 = vmatprep.mubr.f32.mxu0 0.0
      %569 = vmatmul.mubr.f32.gmra.mxu0 %v164
      %v570 = vpop.f32.mrf.mxu0
      %v571 = vadd.f32 0.0, %v570
      %v572 = vpop.f32.mrf.mxu0
      %573 = vmatprep.mubr.f32.mxu0 0.0
      %574 = vmatmul.mubr.f32.gmra.mxu0 %v165
      %v575 = vpop.f32.mrf.mxu0
      %v576 = vadd.f32 0.0, %v575
      %v577 = vpop.f32.mrf.mxu0
      %578 = vmatprep.mubr.f32.mxu0 0.0
      %579 = vmatmul.mubr.f32.gmra.mxu0 %v166
      %v580 = vpop.f32.mrf.mxu0
      %v581 = vadd.f32 0.0, %v580
      %v582 = vpop.f32.mrf.mxu0
      %583 = vmatprep.mubr.f32.mxu0 0.0
      %584 = vmatmul.mubr.f32.gmra.mxu0 %v167
      %v585 = vpop.f32.mrf.mxu0
      %v586 = vadd.f32 0.0, %v585
      %v587 = vpop.f32.mrf.mxu0
      %588 = vmatprep.mubr.f32.mxu0 0.0
      %589 = vmatmul.mubr.f32.gmra.mxu0 %v168
      %v590 = vpop.f32.mrf.mxu0
      %v591 = vadd.f32 0.0, %v590
      %v592 = vpop.f32.mrf.mxu0
      %593 = vmatprep.mubr.f32.mxu0 0.0
      %594 = vmatmul.mubr.f32.gmra.mxu0 %v169
      %v595 = vpop.f32.mrf.mxu0
      %v596 = vadd.f32 0.0, %v595
      %v597 = vpop.f32.mrf.mxu0
      %598 = vmatprep.mubr.f32.mxu0 0.0
      %599 = vmatmul.mubr.f32.gmra.mxu0 %v170
      %v600 = vpop.f32.mrf.mxu0
      %v601 = vadd.f32 0.0, %v600
      %v602 = vpop.f32.mrf.mxu0
      %603 = vmatprep.mubr.f32.mxu0 0.0
      %604 = vmatmul.mubr.f32.gmra.mxu0 %v171
      %v605 = vpop.f32.mrf.mxu0
      %v606 = vadd.f32 0.0, %v605
      %v607 = vpop.f32.mrf.mxu0
      %608 = vmatprep.mubr.f32.mxu0 0.0
      %609 = vmatmul.mubr.f32.gmra.mxu0 %v172
      %v610 = vpop.f32.mrf.mxu0
      %v611 = vadd.f32 0.0, %v610
      %v612 = vpop.f32.mrf.mxu0
      %613 = vmatprep.mubr.f32.mxu0 0.0
      %614 = vmatmul.mubr.f32.gmra.mxu0 %v173
      %v615 = vpop.f32.mrf.mxu0
      %v616 = vadd.f32 0.0, %v615
      %v617 = vpop.f32.mrf.mxu0
      %618 = vmatprep.mubr.f32.mxu0 0.0
      %619 = vmatmul.mubr.f32.gmra.mxu0 %v174
      %v620 = vpop.f32.mrf.mxu0
      %v621 = vadd.f32 0.0, %v620
      %v622 = vpop.f32.mrf.mxu0
      %623 = vmatprep.mubr.f32.mxu0 0.0
      %624 = vmatmul.mubr.f32.gmra.mxu0 %v175
      %v625 = vpop.f32.mrf.mxu0
      %v626 = vadd.f32 0.0, %v625
      %v627 = vpop.f32.mrf.mxu0
      %628 = vmatprep.mubr.f32.mxu0 0.0
      %629 = vmatmul.mubr.f32.gmra.mxu0 %v176
      %v630 = vpop.f32.mrf.mxu0
      %v631 = vadd.f32 0.0, %v630
      %v632 = vpop.f32.mrf.mxu0
      %633 = vmatprep.mubr.f32.mxu0 0.0
      %634 = vmatmul.mubr.f32.gmra.mxu0 %v177
      %v635 = vpop.f32.mrf.mxu0
      %v636 = vadd.f32 0.0, %v635
      %v637 = vpop.f32.mrf.mxu0
      %638 = vmatprep.mubr.f32.mxu0 0.0
      %639 = vmatmul.mubr.f32.gmra.mxu0 %v178
      %v640 = vpop.f32.mrf.mxu0
      %v641 = vadd.f32 0.0, %v640
      %v642 = vpop.f32.mrf.mxu0
      %643 = vmatprep.mubr.f32.mxu0 0.0
      %644 = vmatmul.mubr.f32.gmra.mxu0 %v179
      %v645 = vpop.f32.mrf.mxu0
      %v646 = vadd.f32 0.0, %v645
      %v647 = vpop.f32.mrf.mxu0
      %648 = vmatprep.mubr.f32.mxu0 0.0
      %649 = vmatmul.mubr.f32.gmra.mxu0 %v180
      %v650 = vpop.f32.mrf.mxu0
      %v651 = vadd.f32 0.0, %v650
      %v652 = vpop.f32.mrf.mxu0
      %653 = vmatprep.mubr.f32.mxu0 0.0
      %654 = vmatmul.mubr.f32.gmra.mxu0 %v181
      %v655 = vpop.f32.mrf.mxu0
      %v656 = vadd.f32 0.0, %v655
      %v657 = vpop.f32.mrf.mxu0
      %658 = vmatprep.mubr.f32.mxu0 0.0
      %659 = vmatmul.mubr.f32.gmra.mxu0 %v182
      %v660 = vpop.f32.mrf.mxu0
      %v661 = vadd.f32 0.0, %v660
      %v662 = vpop.f32.mrf.mxu0
      %663 = vmatprep.mubr.f32.mxu0 0.0
      %664 = vmatmul.mubr.f32.gmra.mxu0 %v183
      %v665 = vpop.f32.mrf.mxu0
      %v666 = vadd.f32 0.0, %v665
      %v667 = vpop.f32.mrf.mxu0
      %668 = vmatprep.mubr.f32.mxu0 0.0
      %669 = vmatmul.mubr.f32.gmra.mxu0 %v184
      %v670 = vpop.f32.mrf.mxu0
      %v671 = vadd.f32 0.0, %v670
      %v672 = vpop.f32.mrf.mxu0
      %673 = vmatprep.mubr.f32.mxu0 0.0
      %674 = vmatmul.mubr.f32.gmra.mxu0 %v185
      %v675 = vpop.f32.mrf.mxu0
      %v676 = vadd.f32 0.0, %v675
      %v677 = vpop.f32.mrf.mxu0
      %678 = vmatprep.mubr.f32.mxu0 0.0
      %679 = vmatmul.mubr.f32.gmra.mxu0 %v186
      %v680 = vpop.f32.mrf.mxu0
      %v681 = vadd.f32 0.0, %v680
      %v682 = vpop.f32.mrf.mxu0
      %683 = vmatprep.mubr.f32.mxu0 0.0
      %684 = vmatmul.mubr.f32.gmra.mxu0 %v187
      %v685 = vpop.f32.mrf.mxu0
      %v686 = vadd.f32 0.0, %v685
      %v687 = vpop.f32.mrf.mxu0
      %688 = vmatprep.mubr.f32.mxu0 0.0
      %689 = vmatmul.mubr.f32.gmra.mxu0 %v188
      %v690 = vpop.f32.mrf.mxu0
      %v691 = vadd.f32 0.0, %v690
      %v692 = vpop.f32.mrf.mxu0
      %693 = vmatprep.mubr.f32.mxu0 0.0
      %694 = vmatmul.mubr.f32.gmra.mxu0 %v189
      %v695 = vpop.f32.mrf.mxu0
      %v696 = vadd.f32 0.0, %v695
      %v697 = vpop.f32.mrf.mxu0
      %698 = vmatprep.mubr.f32.mxu0 0.0
      %699 = vmatmul.mubr.f32.gmra.mxu0 %v190
      %v700 = vpop.f32.mrf.mxu0
      %v701 = vadd.f32 0.0, %v700
      %v702 = vpop.f32.mrf.mxu0
      %703 = vmatprep.mubr.f32.mxu0 0.0
      %704 = vmatmul.mubr.f32.gmra.mxu0 %v191
      %v705 = vpop.f32.mrf.mxu0
      %v706 = vadd.f32 0.0, %v705
      %v707 = vpop.f32.mrf.mxu0
      %708 = vmatprep.mubr.f32.mxu0 0.0
      %709 = vmatmul.mubr.f32.gmra.mxu0 %v192
      %v710 = vpop.f32.mrf.mxu0
      %v711 = vadd.f32 0.0, %v710
      %v712 = vpop.f32.mrf.mxu0
      %713 = vmatprep.mubr.f32.mxu0 0.0
      %714 = vmatmul.mubr.f32.gmra.mxu0 %v193
      %v715 = vpop.f32.mrf.mxu0
      %v716 = vadd.f32 0.0, %v715
      %v717 = vpop.f32.mrf.mxu0
      %718 = vmatprep.mubr.f32.mxu0 0.0
      %719 = vmatmul.mubr.f32.gmra.mxu0 %v194
      %v720 = vpop.f32.mrf.mxu0
      %v721 = vadd.f32 0.0, %v720
      %v722 = vpop.f32.mrf.mxu0
      %723 = vmatprep.mubr.f32.mxu0 0.0
      %724 = vmatmul.mubr.f32.gmra.mxu0 %v195
      %v725 = vpop.f32.mrf.mxu0
      %v726 = vadd.f32 0.0, %v725
      %v727 = vpop.f32.mrf.mxu0
      %728 = vmatprep.mubr.f32.mxu0 0.0
      %729 = vmatmul.mubr.f32.gmra.mxu0 %v196
      %v730 = vpop.f32.mrf.mxu0
      %v731 = vadd.f32 0.0, %v730
      %v732 = vpop.f32.mrf.mxu0
      %733 = vmatprep.mubr.f32.mxu0 0.0
      %734 = vmatmul.mubr.f32.gmra.mxu0 %v197
      %v735 = vpop.f32.mrf.mxu0
      %v736 = vadd.f32 0.0, %v735
      %v737 = vpop.f32.mrf.mxu0
      %738 = vmatprep.mubr.f32.mxu0 0.0
      %739 = vmatmul.mubr.f32.gmra.mxu0 %v198
      %v740 = vpop.f32.mrf.mxu0
      %v741 = vadd.f32 0.0, %v740
      %v742 = vpop.f32.mrf.mxu0
      %743 = vmatprep.mubr.f32.mxu0 0.0
      %744 = vmatmul.mubr.f32.gmra.mxu0 %v199
      %v745 = vpop.f32.mrf.mxu0
      %v746 = vadd.f32 0.0, %v745
      %v747 = vpop.f32.mrf.mxu0
      %748 = vmatprep.mubr.f32.mxu0 0.0
      %749 = vmatmul.mubr.f32.gmra.mxu0 %v200
      %v750 = vpop.f32.mrf.mxu0
      %v751 = vadd.f32 0.0, %v750
      %v752 = vpop.f32.mrf.mxu0
      %753 = vmatprep.mubr.f32.mxu0 0.0
      %754 = vmatmul.mubr.f32.gmra.mxu0 %v201
      %v755 = vpop.f32.mrf.mxu0
      %v756 = vadd.f32 0.0, %v755
      %v757 = vpop.f32.mrf.mxu0
      %758 = vmatprep.mubr.f32.mxu0 0.0
      %759 = vmatmul.mubr.f32.gmra.mxu0 %v202
      %v760 = vpop.f32.mrf.mxu0
      %v761 = vadd.f32 0.0, %v760
      %v762 = vpop.f32.mrf.mxu0
      %763 = vmatprep.mubr.f32.mxu0 0.0
      %764 = vmatmul.mubr.f32.gmra.mxu0 %v203
      %v765 = vpop.f32.mrf.mxu0
      %v766 = vadd.f32 0.0, %v765
      %v767 = vpop.f32.mrf.mxu0
      %768 = vmatprep.mubr.f32.mxu0 0.0
      %769 = vmatmul.mubr.f32.gmra.mxu0 %v204
      %v770 = vpop.f32.mrf.mxu0
      %v771 = vadd.f32 0.0, %v770
      %v772 = vpop.f32.mrf.mxu0
      %773 = vmatprep.mubr.f32.mxu0 0.0
      %774 = vmatmul.mubr.f32.gmra.mxu0 %v205
      %v775 = vpop.f32.mrf.mxu0
      %v776 = vadd.f32 0.0, %v775
      %v777 = vpop.f32.mrf.mxu0
      %778 = vmatprep.mubr.f32.mxu0 0.0
      %779 = vmatmul.mubr.f32.gmra.mxu0 %v206
      %v780 = vpop.f32.mrf.mxu0
      %v781 = vadd.f32 0.0, %v780
      %v782 = vpop.f32.mrf.mxu0
      %783 = vmatprep.mubr.f32.mxu0 0.0
      %784 = vmatmul.mubr.f32.gmra.mxu0 %v207
      %v785 = vpop.f32.mrf.mxu0
      %v786 = vadd.f32 0.0, %v785
      %v787 = vpop.f32.mrf.mxu0
      %788 = vmatprep.mubr.f32.mxu0 0.0
      %789 = vmatmul.mubr.f32.gmra.mxu0 %v208
      %v790 = vpop.f32.mrf.mxu0
      %v791 = vadd.f32 0.0, %v790
      %v792 = vpop.f32.mrf.mxu0
      %793 = vmatprep.mubr.f32.mxu0 0.0
      %794 = vmatmul.mubr.f32.gmra.mxu0 %v209
      %v795 = vpop.f32.mrf.mxu0
      %v796 = vadd.f32 0.0, %v795
      %v797 = vpop.f32.mrf.mxu0
      %798 = vmatprep.mubr.f32.mxu0 0.0
      %799 = vmatmul.mubr.f32.gmra.mxu0 %v210
      %v800 = vpop.f32.mrf.mxu0
      %v801 = vadd.f32 0.0, %v800
      %v802 = vpop.f32.mrf.mxu0
      %803 = vmatprep.mubr.f32.mxu0 0.0
      %804 = vmatmul.mubr.f32.gmra.mxu0 %v211
      %v805 = vpop.f32.mrf.mxu0
      %v806 = vadd.f32 0.0, %v805
      %v807 = vpop.f32.mrf.mxu0
      %808 = vmatprep.mubr.f32.mxu0 0.0
      %809 = vmatmul.mubr.f32.gmra.mxu0 %v212
      %v810 = vpop.f32.mrf.mxu0
      %v811 = vadd.f32 0.0, %v810
      %v812 = vpop.f32.mrf.mxu0
      %813 = vmatprep.mubr.f32.mxu0 0.0
      %814 = vmatmul.mubr.f32.gmra.mxu0 %v213
      %v815 = vpop.f32.mrf.mxu0
      %v816 = vadd.f32 0.0, %v815
      %v817 = vpop.f32.mrf.mxu0
      %818 = vmatprep.mubr.f32.mxu0 0.0
      %819 = vmatmul.mubr.f32.gmra.mxu0 %v214
      %v820 = vpop.f32.mrf.mxu0
      %v821 = vadd.f32 0.0, %v820
      %v822 = vpop.f32.mrf.mxu0
      %823 = vmatprep.mubr.f32.mxu0 0.0
      %824 = vmatmul.mubr.f32.gmra.mxu0 %v215
      %v825 = vpop.f32.mrf.mxu0
      %v826 = vadd.f32 0.0, %v825
      %v827 = vpop.f32.mrf.mxu0
      %828 = vmatprep.mubr.f32.mxu0 0.0
      %829 = vmatmul.mubr.f32.gmra.mxu0 %v216
      %v830 = vpop.f32.mrf.mxu0
      %v831 = vadd.f32 0.0, %v830
      %v832 = vpop.f32.mrf.mxu0
      %833 = vmatprep.mubr.f32.mxu0 0.0
      %834 = vmatmul.mubr.f32.gmra.mxu0 %v217
      %v835 = vpop.f32.mrf.mxu0
      %v836 = vadd.f32 0.0, %v835
      %v837 = vpop.f32.mrf.mxu0
      %838 = vmatprep.mubr.f32.mxu0 0.0
      %839 = vmatmul.mubr.f32.gmra.mxu0 %v218
      %v840 = vpop.f32.mrf.mxu0
      %v841 = vadd.f32 0.0, %v840
      %v842 = vpop.f32.mrf.mxu0
      %843 = vmatprep.mubr.f32.mxu0 0.0
      %844 = vmatmul.mubr.f32.gmra.mxu0 %v219
      %v845 = vpop.f32.mrf.mxu0
      %v846 = vadd.f32 0.0, %v845
      %v847 = vpop.f32.mrf.mxu0
      %848 = vmatprep.mubr.f32.mxu0 0.0
      %849 = vmatmul.mubr.f32.gmra.mxu0 %v220
      %v850 = vpop.f32.mrf.mxu0
      %v851 = vadd.f32 0.0, %v850
      %v852 = vpop.f32.mrf.mxu0
      %853 = vmatprep.mubr.f32.mxu0 0.0
      %854 = vmatmul.mubr.f32.gmra.mxu0 %v221
      %v855 = vpop.f32.mrf.mxu0
      %v856 = vadd.f32 0.0, %v855
      %v857 = vpop.f32.mrf.mxu0
      %858 = vmatprep.mubr.f32.mxu0 0.0
      %859 = vmatmul.mubr.f32.gmra.mxu0 %v222
      %v860 = vpop.f32.mrf.mxu0
      %v861 = vadd.f32 0.0, %v860
      %v862 = vpop.f32.mrf.mxu0
      %863 = vmatprep.mubr.f32.mxu0 0.0
      %864 = vmatmul.mubr.f32.gmra.mxu0 %v223
      %v865 = vpop.f32.mrf.mxu0
      %v866 = vadd.f32 0.0, %v865
      %v867 = vpop.f32.mrf.mxu0
      %868 = vmatprep.mubr.f32.mxu0 0.0
      %869 = vmatmul.mubr.f32.gmra.mxu0 %v224
      %v870 = vpop.f32.mrf.mxu0
      %v871 = vadd.f32 0.0, %v870
      %v872 = vpop.f32.mrf.mxu0
      %873 = vmatprep.mubr.f32.mxu0 0.0
      %874 = vmatmul.mubr.f32.gmra.mxu0 %v225
      %v875 = vpop.f32.mrf.mxu0
      %v876 = vadd.f32 0.0, %v875
      %v877 = vpop.f32.mrf.mxu0
      %878 = vmatprep.mubr.f32.mxu0 0.0
      %879 = vmatmul.mubr.f32.gmra.mxu0 %v226
      %v880 = vpop.f32.mrf.mxu0
      %v881 = vadd.f32 0.0, %v880
      %v882 = vpop.f32.mrf.mxu0
      %883 = vmatprep.mubr.f32.mxu0 0.0
      %884 = vmatmul.mubr.f32.gmra.mxu0 %v227
      %v885 = vpop.f32.mrf.mxu0
      %v886 = vadd.f32 0.0, %v885
      %v887 = vpop.f32.mrf.mxu0
      %888 = vmatprep.mubr.f32.mxu0 0.0
      %889 = vmatmul.mubr.f32.gmra.mxu0 %v228
      %v890 = vpop.f32.mrf.mxu0
      %v891 = vadd.f32 0.0, %v890
      %v892 = vpop.f32.mrf.mxu0
      %893 = vmatprep.mubr.f32.mxu0 0.0
      %894 = vmatmul.mubr.f32.gmra.mxu0 %v229
      %v895 = vpop.f32.mrf.mxu0
      %v896 = vadd.f32 0.0, %v895
      %v897 = vpop.f32.mrf.mxu0
      %898 = vmatprep.mubr.f32.mxu0 0.0
      %899 = vmatmul.mubr.f32.gmra.mxu0 %v230
      %v900 = vpop.f32.mrf.mxu0
      %v901 = vadd.f32 0.0, %v900
      %v902 = vpop.f32.mrf.mxu0
      %903 = vmatprep.mubr.f32.mxu0 0.0
      %904 = vmatmul.mubr.f32.gmra.mxu0 %v231
      %v905 = vpop.f32.mrf.mxu0
      %v906 = vadd.f32 0.0, %v905
      %v907 = vpop.f32.mrf.mxu0
      %908 = vmatprep.mubr.f32.mxu0 0.0
      %909 = vmatmul.mubr.f32.gmra.mxu0 %v232
      %v910 = vpop.f32.mrf.mxu0
      %v911 = vadd.f32 0.0, %v910
      %v912 = vpop.f32.mrf.mxu0
      %913 = vmatprep.mubr.f32.mxu0 0.0
      %914 = vmatmul.mubr.f32.gmra.mxu0 %v233
      %v915 = vpop.f32.mrf.mxu0
      %v916 = vadd.f32 0.0, %v915
      %v917 = vpop.f32.mrf.mxu0
      %918 = vmatprep.mubr.f32.mxu0 0.0
      %919 = vmatmul.mubr.f32.gmra.mxu0 %v234
      %v920 = vpop.f32.mrf.mxu0
      %v921 = vadd.f32 0.0, %v920
      %v922 = vpop.f32.mrf.mxu0
      %923 = vmatprep.mubr.f32.mxu0 0.0
      %924 = vmatmul.mubr.f32.gmra.mxu0 %v235
      %v925 = vpop.f32.mrf.mxu0
      %v926 = vadd.f32 0.0, %v925
      %v927 = vpop.f32.mrf.mxu0
      %928 = vmatprep.mubr.f32.mxu0 0.0
      %929 = vmatmul.mubr.f32.gmra.mxu0 %v236
      %v930 = vpop.f32.mrf.mxu0
      %v931 = vadd.f32 0.0, %v930
      %v932 = vpop.f32.mrf.mxu0
      %933 = vmatprep.mubr.f32.mxu0 0.0
      %934 = vmatmul.mubr.f32.gmra.mxu0 %v237
      %v935 = vpop.f32.mrf.mxu0
      %v936 = vadd.f32 0.0, %v935
      %v937 = vpop.f32.mrf.mxu0
      %938 = vmatprep.mubr.f32.mxu0 0.0
      %939 = vmatmul.mubr.f32.gmra.mxu0 %v238
      %v940 = vpop.f32.mrf.mxu0
      %v941 = vadd.f32 0.0, %v940
      %v942 = vpop.f32.mrf.mxu0
      %943 = vmatprep.mubr.f32.mxu0 0.0
      %944 = vmatmul.mubr.f32.gmra.mxu0 %v239
      %v945 = vpop.f32.mrf.mxu0
      %v946 = vadd.f32 0.0, %v945
      %v947 = vpop.f32.mrf.mxu0
      %948 = vmatprep.mubr.f32.mxu0 0.0
      %949 = vmatmul.mubr.f32.gmra.mxu0 %v240
      %v950 = vpop.f32.mrf.mxu0
      %v951 = vadd.f32 0.0, %v950
      %v952 = vpop.f32.mrf.mxu0
      %953 = vmatprep.mubr.f32.mxu0 0.0
      %954 = vmatmul.mubr.f32.gmra.mxu0 %v241
      %v955 = vpop.f32.mrf.mxu0
      %v956 = vadd.f32 0.0, %v955
      %v957 = vpop.f32.mrf.mxu0
      %958 = vmatprep.mubr.f32.mxu0 0.0
      %959 = vmatmul.mubr.f32.gmra.mxu0 %v242
      %v960 = vpop.f32.mrf.mxu0
      %v961 = vadd.f32 0.0, %v960
      %v962 = vpop.f32.mrf.mxu0
      %963 = vmatprep.mubr.f32.mxu0 0.0
      %964 = vmatmul.mubr.f32.gmra.mxu0 %v243
      %v965 = vpop.f32.mrf.mxu0
      %v966 = vadd.f32 0.0, %v965
      %v967 = vpop.f32.mrf.mxu0
      %968 = vmatprep.mubr.f32.mxu0 0.0
      %969 = vmatmul.mubr.f32.gmra.mxu0 %v244
      %v970 = vpop.f32.mrf.mxu0
      %v971 = vadd.f32 0.0, %v970
      %v972 = vpop.f32.mrf.mxu0
      %973 = vmatprep.mubr.f32.mxu0 0.0
      %974 = vmatmul.mubr.f32.gmra.mxu0 %v245
      %v975 = vpop.f32.mrf.mxu0
      %v976 = vadd.f32 0.0, %v975
      %v977 = vpop.f32.mrf.mxu0
      %978 = vmatprep.mubr.f32.mxu0 0.0
      %979 = vmatmul.mubr.f32.gmra.mxu0 %v246
      %v980 = vpop.f32.mrf.mxu0
      %v981 = vadd.f32 0.0, %v980
      %v982 = vpop.f32.mrf.mxu0
      %983 = vmatprep.mubr.f32.mxu0 0.0
      %984 = vmatmul.mubr.f32.gmra.mxu0 %v247
      %v985 = vpop.f32.mrf.mxu0
      %v986 = vadd.f32 0.0, %v985
      %v987 = vpop.f32.mrf.mxu0
      %988 = vmatprep.mubr.f32.mxu0 0.0
      %989 = vmatmul.mubr.f32.gmra.mxu0 %v248
      %v990 = vpop.f32.mrf.mxu0
      %v991 = vadd.f32 0.0, %v990
      %v992 = vpop.f32.mrf.mxu0
      %993 = vmatprep.mubr.f32.mxu0 0.0
      %994 = vmatmul.mubr.f32.gmra.mxu0 %v249
      %v995 = vpop.f32.mrf.mxu0
      %v996 = vadd.f32 0.0, %v995
      %v997 = vpop.f32.mrf.mxu0
      %998 = vmatprep.mubr.f32.mxu0 0.0
      %999 = vmatmul.mubr.f32.gmra.mxu0 %v250
      %v1000 = vpop.f32.mrf.mxu0
      %v1001 = vadd.f32 0.0, %v1000
      %v1002 = vpop.f32.mrf.mxu0
      %1003 = vmatprep.mubr.f32.mxu0 0.0
      %1004 = vmatmul.mubr.f32.gmra.mxu0 %v251
      %v1005 = vpop.f32.mrf.mxu0
      %v1006 = vadd.f32 0.0, %v1005
      %v1007 = vpop.f32.mrf.mxu0
      %1008 = vmatprep.mubr.f32.mxu0 0.0
      %1009 = vmatmul.mubr.f32.gmra.mxu0 %v252
      %v1010 = vpop.f32.mrf.mxu0
      %v1011 = vadd.f32 0.0, %v1010
      %v1012 = vpop.f32.mrf.mxu0
      %1013 = vmatprep.mubr.f32.mxu0 0.0
      %1014 = vmatmul.mubr.f32.gmra.mxu0 %v253
      %v1015 = vpop.f32.mrf.mxu0
      %v1016 = vadd.f32 0.0, %v1015
      %v1017 = vpop.f32.mrf.mxu0
      %1018 = vmatprep.mubr.f32.mxu0 0.0
      %1019 = vmatmul.mubr.f32.gmra.mxu0 %v254
      %v1020 = vpop.f32.mrf.mxu0
      %v1021 = vadd.f32 0.0, %v1020
      %v1022 = vpop.f32.mrf.mxu0
      %1023 = vmatprep.mubr.f32.mxu0 0.0
      %1024 = vmatmul.mubr.f32.gmra.mxu0 %v255
      %v1025 = vpop.f32.mrf.mxu0
      %v1026 = vadd.f32 0.0, %v1025
      %v1027 = vpop.f32.mrf.mxu0
      %1028 = vmatprep.mubr.f32.mxu0 0.0
      %1029 = vmatmul.mubr.f32.gmra.mxu0 %v256
      %v1030 = vpop.f32.mrf.mxu0
      %v1031 = vadd.f32 0.0, %v1030
      %v1032 = vpop.f32.mrf.mxu0
      %1033 = vmatprep.mubr.f32.mxu0 0.0
      %1034 = vmatmul.mubr.f32.gmra.mxu0 %v257
      %v1035 = vpop.f32.mrf.mxu0
      %v1036 = vadd.f32 0.0, %v1035
      %v1037 = vpop.f32.mrf.mxu0
      %1038 = vmatprep.mubr.f32.mxu0 0.0
      %1039 = vmatmul.mubr.f32.gmra.mxu0 %v258
      %v1040 = vpop.f32.mrf.mxu0
      %v1041 = vadd.f32 0.0, %v1040
      %v1042 = vpop.f32.mrf.mxu0
      %1043 = vmatprep.mubr.f32.mxu0 0.0
      %1044 = vmatmul.mubr.f32.gmra.mxu0 %v259
      %v1045 = vpop.f32.mrf.mxu0
      %v1046 = vadd.f32 0.0, %v1045
      %v1047 = vpop.f32.mrf.mxu0
      %1048 = vmatprep.mubr.f32.mxu0 0.0
      %1049 = vmatmul.mubr.f32.gmra.mxu0 %v260
      %v1050 = vpop.f32.mrf.mxu0
      %v1051 = vadd.f32 0.0, %v1050
      %v1052 = vpop.f32.mrf.mxu0
      %1053 = vmatprep.mubr.f32.mxu0 0.0
      %1054 = vmatmul.mubr.f32.gmra.mxu0 %v261
      %v1055 = vpop.f32.mrf.mxu0
      %v1056 = vadd.f32 0.0, %v1055
      %v1057 = vpop.f32.mrf.mxu0
      %1058 = vmatprep.mubr.f32.mxu0 0.0
      %1059 = vmatmul.mubr.f32.gmra.mxu0 %v262
      %v1060 = vpop.f32.mrf.mxu0
      %v1061 = vadd.f32 0.0, %v1060
      %v1062 = vpop.f32.mrf.mxu0
      %1063 = vmatprep.mubr.f32.mxu0 0.0
      %1064 = vmatmul.mubr.f32.gmra.mxu0 %v263
      %v1065 = vpop.f32.mrf.mxu0
      %v1066 = vadd.f32 0.0, %v1065
      %v1067 = vpop.f32.mrf.mxu0
      %1068 = vmatprep.mubr.f32.mxu0 0.0
      %1069 = vmatmul.mubr.f32.gmra.mxu0 %v264
      %v1070 = vpop.f32.mrf.mxu0
      %v1071 = vadd.f32 0.0, %v1070
      %v1072 = vpop.f32.mrf.mxu0
      %1073 = vmatprep.mubr.f32.mxu0 0.0
      %1074 = vmatmul.mubr.f32.gmra.mxu0 %v265
      %v1075 = vpop.f32.mrf.mxu0
      %v1076 = vadd.f32 0.0, %v1075
      %v1077 = vpop.f32.mrf.mxu0
      %1078 = vmatprep.mubr.f32.mxu0 0.0
      %1079 = vmatmul.mubr.f32.gmra.mxu0 %v266
      %v1080 = vpop.f32.mrf.mxu0
      %v1081 = vadd.f32 0.0, %v1080
      %v1082 = vpop.f32.mrf.mxu0
      %1083 = vmatprep.mubr.f32.mxu0 0.0
      %1084 = vmatmul.mubr.f32.gmra.mxu0 %v267
      %v1085 = vpop.f32.mrf.mxu0
      %v1086 = vadd.f32 0.0, %v1085
      %v1087 = vpop.f32.mrf.mxu0
      %1088 = vmatprep.mubr.f32.mxu0 0.0
      %1089 = vmatmul.mubr.f32.gmra.mxu0 %v268
      %v1090 = vpop.f32.mrf.mxu0
      %v1091 = vadd.f32 0.0, %v1090
      %v1092 = vpop.f32.mrf.mxu0
      %1093 = vmatprep.mubr.f32.mxu0 0.0
      %1094 = vmatmul.mubr.f32.gmra.mxu0 %v269
      %v1095 = vpop.f32.mrf.mxu0
      %v1096 = vadd.f32 0.0, %v1095
      %v1097 = vpop.f32.mrf.mxu0
      %1098 = vmatprep.mubr.f32.mxu0 0.0
      %1099 = vmatmul.mubr.f32.gmra.mxu0 %v270
      %v1100 = vpop.f32.mrf.mxu0
      %v1101 = vadd.f32 0.0, %v1100
      %v1102 = vpop.f32.mrf.mxu0
      %1103 = vmatprep.mubr.f32.mxu0 0.0
      %1104 = vmatmul.mubr.f32.gmra.mxu0 %v271
      %v1105 = vpop.f32.mrf.mxu0
      %v1106 = vadd.f32 0.0, %v1105
      %v1107 = vpop.f32.mrf.mxu0
      %1108 = vmatprep.mubr.f32.mxu0 0.0
      %1109 = vmatmul.mubr.f32.gmra.mxu0 %v272
      %v1110 = vpop.f32.mrf.mxu0
      %v1111 = vadd.f32 0.0, %v1110
      %v1112 = vpop.f32.mrf.mxu0
      %1113 = vmatprep.mubr.f32.mxu0 0.0
      %1114 = vmatmul.mubr.f32.gmra.mxu0 %v273
      %v1115 = vpop.f32.mrf.mxu0
      %v1116 = vadd.f32 0.0, %v1115
      %v1117 = vpop.f32.mrf.mxu0
      %1118 = vmatprep.mubr.f32.mxu0 0.0
      %1119 = vmatmul.mubr.f32.gmra.mxu0 %v274
      %v1120 = vpop.f32.mrf.mxu0
      %v1121 = vadd.f32 0.0, %v1120
      %v1122 = vpop.f32.mrf.mxu0
      %1123 = vmatprep.mubr.f32.mxu0 0.0
      %1124 = vmatmul.mubr.f32.gmra.mxu0 %v275
      %v1125 = vpop.f32.mrf.mxu0
      %v1126 = vadd.f32 0.0, %v1125
      %v1127 = vpop.f32.mrf.mxu0
      %1128 = vmatprep.mubr.f32.mxu0 0.0
      %1129 = vmatmul.mubr.f32.gmra.mxu0 %v276
      %v1130 = vpop.f32.mrf.mxu0
      %v1131 = vadd.f32 0.0, %v1130
      %v1132 = vpop.f32.mrf.mxu0
      %1133 = vmatprep.mubr.f32.mxu0 0.0
      %1134 = vmatmul.mubr.f32.gmra.mxu0 %v277
      %v1135 = vpop.f32.mrf.mxu0
      %v1136 = vadd.f32 0.0, %v1135
      %v1137 = vpop.f32.mrf.mxu0
      %1138 = vmatprep.mubr.f32.mxu0 0.0
      %1139 = vmatmul.mubr.f32.gmra.mxu0 %v278
      %v1140 = vpop.f32.mrf.mxu0
      %v1141 = vadd.f32 0.0, %v1140
      %v1142 = vpop.f32.mrf.mxu0
      %1143 = vmatprep.mubr.f32.mxu0 0.0
      %1144 = vmatmul.mubr.f32.gmra.mxu0 %v279
      %v1145 = vpop.f32.mrf.mxu0
      %v1146 = vadd.f32 0.0, %v1145
      %v1147 = vpop.f32.mrf.mxu0
      %1148 = vmatprep.mubr.f32.mxu0 0.0
      %1149 = vmatmul.mubr.f32.gmra.mxu0 %v280
      %v1150 = vpop.f32.mrf.mxu0
      %v1151 = vadd.f32 0.0, %v1150
      %v1152 = vpop.f32.mrf.mxu0
      %1153 = vmatprep.mubr.f32.mxu0 0.0
      %1154 = vmatmul.mubr.f32.gmra.mxu0 %v281
      %v1155 = vpop.f32.mrf.mxu0
      %v1156 = vadd.f32 0.0, %v1155
      %v1157 = vpop.f32.mrf.mxu0
      %1158 = vmatprep.mubr.f32.mxu0 0.0
      %1159 = vmatmul.mubr.f32.gmra.mxu0 %v282
      %v1160 = vpop.f32.mrf.mxu0
      %v1161 = vadd.f32 0.0, %v1160
      %v1162 = vpop.f32.mrf.mxu0
      %1163 = vmatprep.mubr.f32.mxu0 0.0
      %1164 = vmatmul.mubr.f32.gmra.mxu0 %v283
      %v1165 = vpop.f32.mrf.mxu0
      %v1166 = vadd.f32 0.0, %v1165
      %v1167 = vpop.f32.mrf.mxu0
      %1168 = vmatprep.mubr.f32.mxu0 0.0
      %1169 = vmatmul.mubr.f32.gmra.mxu0 %v284
      %v1170 = vpop.f32.mrf.mxu0
      %v1171 = vadd.f32 0.0, %v1170
      %v1172 = vpop.f32.mrf.mxu0
      %1173 = vmatprep.mubr.f32.mxu0 0.0
      %1174 = vmatmul.mubr.f32.gmra.mxu0 %v285
      %v1175 = vpop.f32.mrf.mxu0
      %v1176 = vadd.f32 0.0, %v1175
      %v1177 = vpop.f32.mrf.mxu0
      %1178 = vmatprep.mubr.f32.mxu0 0.0
      %1179 = vmatmul.mubr.f32.gmra.mxu0 %v286
      %v1180 = vpop.f32.mrf.mxu0
      %v1181 = vadd.f32 0.0, %v1180
      %v1182 = vpop.f32.mrf.mxu0
      %1183 = vmatprep.mubr.f32.mxu0 0.0
      %1184 = vmatmul.mubr.f32.gmra.mxu0 %v287
      %v1185 = vpop.f32.mrf.mxu0
      %v1186 = vadd.f32 0.0, %v1185
      %v1187 = vpop.f32.mrf.mxu0
      %1188 = vmatprep.mubr.f32.mxu0 0.0
      %1189 = vmatmul.mubr.f32.gmra.mxu0 %v288
      %v1190 = vpop.f32.mrf.mxu0
      %v1191 = vadd.f32 0.0, %v1190
      %v1192 = vpop.f32.mrf.mxu0
      %1193 = vmatprep.mubr.f32.mxu0 0.0
      %1194 = vmatmul.mubr.f32.gmra.mxu0 %v289
      %v1195 = vpop.f32.mrf.mxu0
      %v1196 = vadd.f32 0.0, %v1195
      %v1197 = vpop.f32.mrf.mxu0
      %1198 = vmatprep.mubr.f32.mxu0 0.0
      %1199 = vmatmul.mubr.f32.gmra.mxu0 %v290
      %v1200 = vpop.f32.mrf.mxu0
      %v1201 = vadd.f32 0.0, %v1200
      %v1202 = vpop.f32.mrf.mxu0
      %1203 = vmatprep.mubr.f32.mxu0 0.0
      %1204 = vmatmul.mubr.f32.gmra.mxu0 %v291
      %v1205 = vpop.f32.mrf.mxu0
      %v1206 = vadd.f32 0.0, %v1205
      %v1207 = vpop.f32.mrf.mxu0
      %1208 = vmatprep.mubr.f32.mxu0 0.0
      %1209 = vmatmul.mubr.f32.gmra.mxu0 %v292
      %v1210 = vpop.f32.mrf.mxu0
      %v1211 = vadd.f32 0.0, %v1210
      %v1212 = vpop.f32.mrf.mxu0
      %1213 = vmatprep.mubr.f32.mxu0 0.0
      %1214 = vmatmul.mubr.f32.gmra.mxu0 %v293
      %v1215 = vpop.f32.mrf.mxu0
      %v1216 = vadd.f32 0.0, %v1215
      %v1217 = vpop.f32.mrf.mxu0
      %1218 = vmatprep.mubr.f32.mxu0 0.0
      %1219 = vmatmul.mubr.f32.gmra.mxu0 %v294
      %v1220 = vpop.f32.mrf.mxu0
      %v1221 = vadd.f32 0.0, %v1220
      %v1222 = vpop.f32.mrf.mxu0
      %1223 = vmatprep.mubr.f32.mxu0 0.0
      %1224 = vmatmul.mubr.f32.gmra.mxu0 %v295
      %v1225 = vpop.f32.mrf.mxu0
      %v1226 = vadd.f32 0.0, %v1225
      %v1227 = vpop.f32.mrf.mxu0
      %1228 = vmatprep.mubr.f32.mxu0 0.0
      %1229 = vmatmul.mubr.f32.gmra.mxu0 %v296
      %v1230 = vpop.f32.mrf.mxu0
      %v1231 = vadd.f32 0.0, %v1230
      %v1232 = vpop.f32.mrf.mxu0
      %1233 = vmatprep.mubr.f32.mxu0 0.0
      %1234 = vmatmul.mubr.f32.gmra.mxu0 %v297
      %v1235 = vpop.f32.mrf.mxu0
      %v1236 = vadd.f32 0.0, %v1235
      %v1237 = vpop.f32.mrf.mxu0
      %1238 = vmatprep.mubr.f32.mxu0 0.0
      %1239 = vmatmul.mubr.f32.gmra.mxu0 %v298
      %v1240 = vpop.f32.mrf.mxu0
      %v1241 = vadd.f32 0.0, %v1240
      %v1242 = vpop.f32.mrf.mxu0
      %1243 = vmatprep.mubr.f32.mxu0 0.0
      %1244 = vmatmul.mubr.f32.gmra.mxu0 %v299
      %v1245 = vpop.f32.mrf.mxu0
      %v1246 = vadd.f32 0.0, %v1245
      %v1247 = vpop.f32.mrf.mxu0
      %1248 = vmatprep.mubr.f32.mxu0 0.0
      %1249 = vmatmul.mubr.f32.gmra.mxu0 %v300
      %v1250 = vpop.f32.mrf.mxu0
      %v1251 = vadd.f32 0.0, %v1250
      %v1252 = vpop.f32.mrf.mxu0
      %1253 = vmatprep.mubr.f32.mxu0 0.0
      %1254 = vmatmul.mubr.f32.gmra.mxu0 %v301
      %v1255 = vpop.f32.mrf.mxu0
      %v1256 = vadd.f32 0.0, %v1255
      %v1257 = vpop.f32.mrf.mxu0
      %1258 = vmatprep.mubr.f32.mxu0 0.0
      %1259 = vmatmul.mubr.f32.gmra.mxu0 %v302
      %v1260 = vpop.f32.mrf.mxu0
      %v1261 = vadd.f32 0.0, %v1260
      %v1262 = vpop.f32.mrf.mxu0
      %1263 = vmatprep.mubr.f32.mxu0 0.0
      %1264 = vmatmul.mubr.f32.gmra.mxu0 %v303
      %v1265 = vpop.f32.mrf.mxu0
      %v1266 = vadd.f32 0.0, %v1265
      %v1267 = vpop.f32.mrf.mxu0
      %1268 = vmatprep.mubr.f32.mxu0 0.0
      %1269 = vmatmul.mubr.f32.gmra.mxu0 %v304
      %v1270 = vpop.f32.mrf.mxu0
      %v1271 = vadd.f32 0.0, %v1270
      %v1272 = vpop.f32.mrf.mxu0
      %1273 = vmatprep.mubr.f32.mxu0 0.0
      %1274 = vmatmul.mubr.f32.gmra.mxu0 %v305
      %v1275 = vpop.f32.mrf.mxu0
      %v1276 = vadd.f32 0.0, %v1275
      %v1277 = vpop.f32.mrf.mxu0
      %1278 = vmatprep.mubr.f32.mxu0 0.0
      %1279 = vmatmul.mubr.f32.gmra.mxu0 %v306
      %v1280 = vpop.f32.mrf.mxu0
      %v1281 = vadd.f32 0.0, %v1280
      %v1282 = vpop.f32.mrf.mxu0
      %1283 = vmatprep.mubr.f32.mxu0 0.0
      %1284 = vmatmul.mubr.f32.gmra.mxu0 %v307
      %v1285 = vpop.f32.mrf.mxu0
      %v1286 = vadd.f32 0.0, %v1285
      %v1287 = vpop.f32.mrf.mxu0
      %1288 = vmatprep.mubr.f32.mxu0 0.0
      %1289 = vmatmul.mubr.f32.gmra.mxu0 %v308
      %v1290 = vpop.f32.mrf.mxu0
      %v1291 = vadd.f32 0.0, %v1290
      %v1292 = vpop.f32.mrf.mxu0
      %1293 = vmatprep.mubr.f32.mxu0 0.0
      %1294 = vmatmul.mubr.f32.gmra.mxu0 %v309
      %v1295 = vpop.f32.mrf.mxu0
      %v1296 = vadd.f32 0.0, %v1295
      %v1297 = vpop.f32.mrf.mxu0
      %1298 = vmatprep.mubr.f32.mxu0 0.0
      %1299 = vmatmul.mubr.f32.gmra.mxu0 %v310
      %v1300 = vpop.f32.mrf.mxu0
      %v1301 = vadd.f32 0.0, %v1300
      %v1302 = vpop.f32.mrf.mxu0
      %1303 = vmatprep.mubr.f32.mxu0 0.0
      %1304 = vmatmul.mubr.f32.gmra.mxu0 %v311
      %v1305 = vpop.f32.mrf.mxu0
      %v1306 = vadd.f32 0.0, %v1305
      %v1307 = vpop.f32.mrf.mxu0
      %1308 = vmatprep.mubr.f32.mxu0 0.0
      %1309 = vmatmul.mubr.f32.gmra.mxu0 %v312
      %v1310 = vpop.f32.mrf.mxu0
      %v1311 = vadd.f32 0.0, %v1310
      %v1312 = vpop.f32.mrf.mxu0
      %1313 = vmatprep.mubr.f32.mxu0 0.0
      %1314 = vmatmul.mubr.f32.gmra.mxu0 %v313
      %v1315 = vpop.f32.mrf.mxu0
      %v1316 = vadd.f32 0.0, %v1315
      %v1317 = vpop.f32.mrf.mxu0
      %1318 = vmatprep.mubr.f32.mxu0 0.0
      %1319 = vmatmul.mubr.f32.gmra.mxu0 %v314
      %v1320 = vpop.f32.mrf.mxu0
      %v1321 = vadd.f32 0.0, %v1320
      %v1322 = vpop.f32.mrf.mxu0
      %1323 = vmatprep.mubr.f32.mxu0 0.0
      %1324 = vmatmul.mubr.f32.gmra.mxu0 %v315
      %v1325 = vpop.f32.mrf.mxu0
      %v1326 = vadd.f32 0.0, %v1325
      %v1327 = vpop.f32.mrf.mxu0
      %1328 = vmatprep.mubr.f32.mxu0 0.0
      %1329 = vmatmul.mubr.f32.gmra.mxu0 %v316
      %v1330 = vpop.f32.mrf.mxu0
      %v1331 = vadd.f32 0.0, %v1330
      %v1332 = vpop.f32.mrf.mxu0
      %1333 = vmatprep.mubr.f32.mxu0 0.0
      %1334 = vmatmul.mubr.f32.gmra.mxu0 %v317
      %v1335 = vpop.f32.mrf.mxu0
      %v1336 = vadd.f32 0.0, %v1335
      %v1337 = vpop.f32.mrf.mxu0
      %1338 = vmatprep.mubr.f32.mxu0 0.0
      %1339 = vmatmul.mubr.f32.gmra.mxu0 %v318
      %v1340 = vpop.f32.mrf.mxu0
      %v1341 = vadd.f32 0.0, %v1340
      %v1342 = vpop.f32.mrf.mxu0
      %1343 = vmatprep.mubr.f32.mxu0 0.0
      %1344 = vmatmul.mubr.f32.gmra.mxu0 %v319
      %v1345 = vpop.f32.mrf.mxu0
      %v1346 = vadd.f32 0.0, %v1345
      %v1347 = vpop.f32.mrf.mxu0
      %1348 = vmatprep.mubr.f32.mxu0 0.0
      %1349 = vmatmul.mubr.f32.gmra.mxu0 %v320
      %v1350 = vpop.f32.mrf.mxu0
      %v1351 = vadd.f32 0.0, %v1350
      %v1352 = vpop.f32.mrf.mxu0
      %1353 = vmatprep.mubr.f32.mxu0 0.0
      %1354 = vmatmul.mubr.f32.gmra.mxu0 %v321
      %v1355 = vpop.f32.mrf.mxu0
      %v1356 = vadd.f32 0.0, %v1355
      %v1357 = vpop.f32.mrf.mxu0
      %1358 = vmatprep.mubr.f32.mxu0 0.0
      %1359 = vmatmul.mubr.f32.gmra.mxu0 %v322
      %v1360 = vpop.f32.mrf.mxu0
      %v1361 = vadd.f32 0.0, %v1360
      %v1362 = vpop.f32.mrf.mxu0
      %1363 = vmatprep.mubr.f32.mxu0 0.0
      %1364 = vmatmul.mubr.f32.gmra.mxu0 %v323
      %v1365 = vpop.f32.mrf.mxu0
      %v1366 = vadd.f32 0.0, %v1365
      %v1367 = vpop.f32.mrf.mxu0
      %1368 = vmatprep.mubr.f32.mxu0 0.0
      %1369 = vmatmul.mubr.f32.gmra.mxu0 %v324
      %v1370 = vpop.f32.mrf.mxu0
      %v1371 = vadd.f32 0.0, %v1370
      %v1372 = vpop.f32.mrf.mxu0
      %1373 = vmatprep.mubr.f32.mxu0 0.0
      %1374 = vmatmul.mubr.f32.gmra.mxu0 %v325
      %v1375 = vpop.f32.mrf.mxu0
      %v1376 = vadd.f32 0.0, %v1375
      %v1377 = vpop.f32.mrf.mxu0
      %1378 = vmatprep.mubr.f32.mxu0 0.0
      %1379 = vmatmul.mubr.f32.gmra.mxu0 %v326
      %v1380 = vpop.f32.mrf.mxu0
      %v1381 = vadd.f32 0.0, %v1380
      %v1382 = vpop.f32.mrf.mxu0
      %1383 = vmatprep.mubr.f32.mxu0 0.0
      %1384 = vmatmul.mubr.f32.gmra.mxu0 %v327
      %v1385 = vpop.f32.mrf.mxu0
      %v1386 = vadd.f32 0.0, %v1385
      %v1387 = vpop.f32.mrf.mxu0
      %1388 = vmatprep.mubr.f32.mxu0 0.0
      %1389 = vmatmul.mubr.f32.gmra.mxu0 %v328
      %v1390 = vpop.f32.mrf.mxu0
      %v1391 = vadd.f32 0.0, %v1390
      %v1392 = vpop.f32.mrf.mxu0
      %1393 = vmatprep.mubr.f32.mxu0 0.0
      %1394 = vmatmul.mubr.f32.gmra.mxu0 %v329
      %v1395 = vpop.f32.mrf.mxu0
      %v1396 = vadd.f32 0.0, %v1395
      %v1397 = vpop.f32.mrf.mxu0
      %1398 = vmatprep.mubr.f32.mxu0 0.0
      %1399 = vmatmul.mubr.f32.gmra.mxu0 %v330
      %v1400 = vpop.f32.mrf.mxu0
      %v1401 = vadd.f32 0.0, %v1400
      %v1402 = vpop.f32.mrf.mxu0
      %1403 = vmatprep.mubr.f32.mxu0 0.0
      %1404 = vmatmul.mubr.f32.gmra.mxu0 %v331
      %v1405 = vpop.f32.mrf.mxu0
      %v1406 = vadd.f32 0.0, %v1405
      %v1407 = vpop.f32.mrf.mxu0
      %1408 = vmatprep.mubr.f32.mxu0 0.0
      %1409 = vmatmul.mubr.f32.gmra.mxu0 %v332
      %v1410 = vpop.f32.mrf.mxu0
      %v1411 = vadd.f32 0.0, %v1410
      %v1412 = vpop.f32.mrf.mxu0
      %1413 = vmatprep.mubr.f32.mxu0 0.0
      %1414 = vmatmul.mubr.f32.gmra.mxu0 %v333
      %v1415 = vpop.f32.mrf.mxu0
      %v1416 = vadd.f32 0.0, %v1415
      %v1417 = vpop.f32.mrf.mxu0
      %1418 = vmatprep.mubr.f32.mxu0 0.0
      %1419 = vmatmul.mubr.f32.gmra.mxu0 %v334
      %v1420 = vpop.f32.mrf.mxu0
      %v1421 = vadd.f32 0.0, %v1420
      %v1422 = vpop.f32.mrf.mxu0
      %1423 = vmatprep.mubr.f32.mxu0 0.0
      %1424 = vmatmul.mubr.f32.gmra.mxu0 %v335
      %v1425 = vpop.f32.mrf.mxu0
      %v1426 = vadd.f32 0.0, %v1425
      %v1427 = vpop.f32.mrf.mxu0
      %1428 = vmatprep.mubr.f32.mxu0 0.0
      %1429 = vmatmul.mubr.f32.gmra.mxu0 %v336
      %v1430 = vpop.f32.mrf.mxu0
      %v1431 = vadd.f32 0.0, %v1430
      %v1432 = vpop.f32.mrf.mxu0
      %1433 = vmatprep.mubr.f32.mxu0 0.0
      %1434 = vmatmul.mubr.f32.gmra.mxu0 %v337
      %v1435 = vpop.f32.mrf.mxu0
      %v1436 = vadd.f32 0.0, %v1435
      %v1437 = vpop.f32.mrf.mxu0
      %1438 = vmatprep.mubr.f32.mxu0 0.0
      %1439 = vmatmul.mubr.f32.gmra.mxu0 %v338
      %v1440 = vpop.f32.mrf.mxu0
      %v1441 = vadd.f32 0.0, %v1440
      %v1442 = vpop.f32.mrf.mxu0
      %1443 = vmatprep.mubr.f32.mxu0 0.0
      %1444 = vmatmul.mubr.f32.gmra.mxu0 %v339
      %v1445 = vpop.f32.mrf.mxu0
      %v1446 = vadd.f32 0.0, %v1445
      %v1447 = vpop.f32.mrf.mxu0
      %1448 = vmatprep.mubr.f32.mxu0 0.0
      %1449 = vmatmul.mubr.f32.gmra.mxu0 %v340
      %v1450 = vpop.f32.mrf.mxu0
      %v1451 = vadd.f32 0.0, %v1450
      %v1452 = vpop.f32.mrf.mxu0
      %1453 = vmatprep.mubr.f32.mxu0 0.0
      %1454 = vmatmul.mubr.f32.gmra.mxu0 %v341
      %v1455 = vpop.f32.mrf.mxu0
      %v1456 = vadd.f32 0.0, %v1455
      %v1457 = vpop.f32.mrf.mxu0
      %1458 = vmatprep.mubr.f32.mxu0 0.0
      %1459 = vmatmul.mubr.f32.gmra.mxu0 %v342
      %v1460 = vpop.f32.mrf.mxu0
      %v1461 = vadd.f32 0.0, %v1460
      %v1462 = vpop.f32.mrf.mxu0
      %1463 = vmatprep.mubr.f32.mxu0 0.0
      %1464 = vmatmul.mubr.f32.gmra.mxu0 %v343
      %v1465 = vpop.f32.mrf.mxu0
      %v1466 = vadd.f32 0.0, %v1465
      %v1467 = vpop.f32.mrf.mxu0
      %1468 = vmatprep.mubr.f32.mxu0 0.0
      %1469 = vmatmul.mubr.f32.gmra.mxu0 %v344
      %v1470 = vpop.f32.mrf.mxu0
      %v1471 = vadd.f32 0.0, %v1470
      %v1472 = vpop.f32.mrf.mxu0
      %1473 = vmatprep.mubr.f32.mxu0 0.0
      %1474 = vmatmul.mubr.f32.gmra.mxu0 %v345
      %v1475 = vpop.f32.mrf.mxu0
      %v1476 = vadd.f32 0.0, %v1475
      %v1477 = vpop.f32.mrf.mxu0
      %1478 = vmatprep.mubr.f32.mxu0 0.0
      %1479 = vmatmul.mubr.f32.gmra.mxu0 %v346
      %v1480 = vpop.f32.mrf.mxu0
      %v1481 = vadd.f32 0.0, %v1480
      %v1482 = vpop.f32.mrf.mxu0
      %1483 = vmatprep.mubr.f32.mxu0 0.0
      %1484 = vmatmul.mubr.f32.gmra.mxu0 %v347
      %v1485 = vpop.f32.mrf.mxu0
      %v1486 = vadd.f32 0.0, %v1485
      %v1487 = vpop.f32.mrf.mxu0
      %1488 = vmatprep.mubr.f32.mxu0 0.0
      %1489 = vmatmul.mubr.f32.gmra.mxu0 %v348
      %v1490 = vpop.f32.mrf.mxu0
      %v1491 = vadd.f32 0.0, %v1490
      %v1492 = vpop.f32.mrf.mxu0
      %1493 = vmatprep.mubr.f32.mxu0 0.0
      %1494 = vmatmul.mubr.f32.gmra.mxu0 %v349
      %v1495 = vpop.f32.mrf.mxu0
      %v1496 = vadd.f32 0.0, %v1495
      %v1497 = vpop.f32.mrf.mxu0
      %1498 = vmatprep.mubr.f32.mxu0 0.0
      %1499 = vmatmul.mubr.f32.gmra.mxu0 %v350
      %v1500 = vpop.f32.mrf.mxu0
      %v1501 = vadd.f32 0.0, %v1500
      %v1502 = vpop.f32.mrf.mxu0
      %1503 = vmatprep.mubr.f32.mxu0 0.0
      %1504 = vmatmul.mubr.f32.gmra.mxu0 %v351
      %v1505 = vpop.f32.mrf.mxu0
      %v1506 = vadd.f32 0.0, %v1505
      %v1507 = vpop.f32.mrf.mxu0
      %1508 = vmatprep.mubr.f32.mxu0 0.0
      %1509 = vmatmul.mubr.f32.gmra.mxu0 %v352
      %v1510 = vpop.f32.mrf.mxu0
      %v1511 = vadd.f32 0.0, %v1510
      %v1512 = vpop.f32.mrf.mxu0
      %1513 = vmatprep.mubr.f32.mxu0 0.0
      %1514 = vmatmul.mubr.f32.gmra.mxu0 %v353
      %v1515 = vpop.f32.mrf.mxu0
      %v1516 = vadd.f32 0.0, %v1515
      %v1517 = vpop.f32.mrf.mxu0
      %1518 = vmatprep.mubr.f32.mxu0 0.0
      %1519 = vmatmul.mubr.f32.gmra.mxu0 %v354
      %v1520 = vpop.f32.mrf.mxu0
      %v1521 = vadd.f32 0.0, %v1520
      %v1522 = vpop.f32.mrf.mxu0
      %1523 = vmatprep.mubr.f32.mxu0 0.0
      %1524 = vmatmul.mubr.f32.gmra.mxu0 %v355
      %v1525 = vpop.f32.mrf.mxu0
      %v1526 = vadd.f32 0.0, %v1525
      %v1527 = vpop.f32.mrf.mxu0
      %1528 = vmatprep.mubr.f32.mxu0 0.0
      %1529 = vmatmul.mubr.f32.gmra.mxu0 %v356
      %v1530 = vpop.f32.mrf.mxu0
      %v1531 = vadd.f32 0.0, %v1530
      %v1532 = vpop.f32.mrf.mxu0
      %1533 = vmatprep.mubr.f32.mxu0 0.0
      %1534 = vmatmul.mubr.f32.gmra.mxu0 %v357
      %v1535 = vpop.f32.mrf.mxu0
      %v1536 = vadd.f32 0.0, %v1535
      %v1537 = vpop.f32.mrf.mxu0
      %1538 = vmatprep.mubr.f32.mxu0 0.0
      %1539 = vmatmul.mubr.f32.gmra.mxu0 %v358
      %v1540 = vpop.f32.mrf.mxu0
      %v1541 = vadd.f32 0.0, %v1540
      %v1542 = vpop.f32.mrf.mxu0
      %1543 = vmatprep.mubr.f32.mxu0 0.0
      %1544 = vmatmul.mubr.f32.gmra.mxu0 %v359
      %v1545 = vpop.f32.mrf.mxu0
      %v1546 = vadd.f32 0.0, %v1545
      %v1547 = vpop.f32.mrf.mxu0
      %1548 = vmatprep.mubr.f32.mxu0 0.0
      %1549 = vmatmul.mubr.f32.gmra.mxu0 %v360
      %v1550 = vpop.f32.mrf.mxu0
      %v1551 = vadd.f32 0.0, %v1550
      %v1552 = vpop.f32.mrf.mxu0
      %1553 = vmatprep.mubr.f32.mxu0 0.0
      %1554 = vmatmul.mubr.f32.gmra.mxu0 %v361
      %v1555 = vpop.f32.mrf.mxu0
      %v1556 = vadd.f32 0.0, %v1555
      %v1557 = vpop.f32.mrf.mxu0
      %1558 = vmatprep.mubr.f32.mxu0 0.0
      %1559 = vmatmul.mubr.f32.gmra.mxu0 %v362
      %v1560 = vpop.f32.mrf.mxu0
      %v1561 = vadd.f32 0.0, %v1560
      %v1562 = vpop.f32.mrf.mxu0
      %1563 = vmatprep.mubr.f32.mxu0 0.0
      %1564 = vmatmul.mubr.f32.gmra.mxu0 %v363
      %v1565 = vpop.f32.mrf.mxu0
      %v1566 = vadd.f32 0.0, %v1565
      %v1567 = vpop.f32.mrf.mxu0
      %1568 = vmatprep.mubr.f32.mxu0 0.0
      %1569 = vmatmul.mubr.f32.gmra.mxu0 %v364
      %v1570 = vpop.f32.mrf.mxu0
      %v1571 = vadd.f32 0.0, %v1570
      %v1572 = vpop.f32.mrf.mxu0
      %1573 = vmatprep.mubr.f32.mxu0 0.0
      %1574 = vmatmul.mubr.f32.gmra.mxu0 %v365
      %v1575 = vpop.f32.mrf.mxu0
      %v1576 = vadd.f32 0.0, %v1575
      %v1577 = vpop.f32.mrf.mxu0
      %1578 = vmatprep.mubr.f32.mxu0 0.0
      %1579 = vmatmul.mubr.f32.gmra.mxu0 %v366
      %v1580 = vpop.f32.mrf.mxu0
      %v1581 = vadd.f32 0.0, %v1580
      %v1582 = vpop.f32.mrf.mxu0
      %1583 = vmatprep.mubr.f32.mxu0 0.0
      %1584 = vmatmul.mubr.f32.gmra.mxu0 %v367
      %v1585 = vpop.f32.mrf.mxu0
      %v1586 = vadd.f32 0.0, %v1585
      %v1587 = vpop.f32.mrf.mxu0
      %1588 = vmatprep.mubr.f32.mxu0 0.0
      %1589 = vmatmul.mubr.f32.gmra.mxu0 %v368
      %v1590 = vpop.f32.mrf.mxu0
      %v1591 = vadd.f32 0.0, %v1590
      %v1592 = vpop.f32.mrf.mxu0
      %1593 = vmatprep.mubr.f32.mxu0 0.0
      %1594 = vmatmul.mubr.f32.gmra.mxu0 %v369
      %v1595 = vpop.f32.mrf.mxu0
      %v1596 = vadd.f32 0.0, %v1595
      %v1597 = vpop.f32.mrf.mxu0
      %1598 = vmatprep.mubr.f32.mxu0 0.0
      %1599 = vmatmul.mubr.f32.gmra.mxu0 %v370
      %v1600 = vpop.f32.mrf.mxu0
      %v1601 = vadd.f32 0.0, %v1600
      %v1602 = vpop.f32.mrf.mxu0
      %1603 = vmatprep.mubr.f32.mxu0 0.0
      %1604 = vmatmul.mubr.f32.gmra.mxu0 %v371
      %v1605 = vpop.f32.mrf.mxu0
      %v1606 = vadd.f32 0.0, %v1605
      %v1607 = vpop.f32.mrf.mxu0
      %1608 = vmatprep.mubr.f32.mxu0 0.0
      %1609 = vmatmul.mubr.f32.gmra.mxu0 %v372
      %v1610 = vpop.f32.mrf.mxu0
      %v1611 = vadd.f32 0.0, %v1610
      %v1612 = vpop.f32.mrf.mxu0
      %1613 = vmatprep.mubr.f32.mxu0 0.0
      %1614 = vmatmul.mubr.f32.gmra.mxu0 %v373
      %v1615 = vpop.f32.mrf.mxu0
      %v1616 = vadd.f32 0.0, %v1615
      %v1617 = vpop.f32.mrf.mxu0
      %1618 = vmatprep.mubr.f32.mxu0 0.0
      %1619 = vmatmul.mubr.f32.gmra.mxu0 %v374
      %v1620 = vpop.f32.mrf.mxu0
      %v1621 = vadd.f32 0.0, %v1620
      %v1622 = vpop.f32.mrf.mxu0
      %1623 = vmatprep.mubr.f32.mxu0 0.0
      %1624 = vmatmul.mubr.f32.gmra.mxu0 %v375
      %v1625 = vpop.f32.mrf.mxu0
      %v1626 = vadd.f32 0.0, %v1625
      %v1627 = vpop.f32.mrf.mxu0
      %1628 = vmatprep.mubr.f32.mxu0 0.0
      %1629 = vmatmul.mubr.f32.gmra.mxu0 %v376
      %v1630 = vpop.f32.mrf.mxu0
      %v1631 = vadd.f32 0.0, %v1630
      %v1632 = vpop.f32.mrf.mxu0
      %1633 = vmatprep.mubr.f32.mxu0 0.0
      %1634 = vmatmul.mubr.f32.gmra.mxu0 %v377
      %v1635 = vpop.f32.mrf.mxu0
      %v1636 = vadd.f32 0.0, %v1635
      %v1637 = vpop.f32.mrf.mxu0
      %1638 = vmatprep.mubr.f32.mxu0 0.0
      %1639 = vmatmul.mubr.f32.gmra.mxu0 %v378
      %v1640 = vpop.f32.mrf.mxu0
      %v1641 = vadd.f32 0.0, %v1640
      %v1642 = vpop.f32.mrf.mxu0
      %1643 = vmatprep.mubr.f32.mxu0 0.0
      %1644 = vmatmul.mubr.f32.gmra.mxu0 %v379
      %v1645 = vpop.f32.mrf.mxu0
      %v1646 = vadd.f32 0.0, %v1645
      %v1647 = vpop.f32.mrf.mxu0
      %1648 = vmatprep.mubr.f32.mxu0 0.0
      %1649 = vmatmul.mubr.f32.gmra.mxu0 %v380
      %v1650 = vpop.f32.mrf.mxu0
      %v1651 = vadd.f32 0.0, %v1650
      %v1652 = vpop.f32.mrf.mxu0
      %1653 = vmatprep.mubr.f32.mxu0 0.0
      %1654 = vmatmul.mubr.f32.gmra.mxu0 %v381
      %v1655 = vpop.f32.mrf.mxu0
      %v1656 = vadd.f32 0.0, %v1655
      %v1657 = vpop.f32.mrf.mxu0
      %1658 = vmatprep.mubr.f32.mxu0 0.0
      %1659 = vmatmul.mubr.f32.gmra.mxu0 %v382
      %v1660 = vpop.f32.mrf.mxu0
      %v1661 = vadd.f32 0.0, %v1660
      %v1662 = vpop.f32.mrf.mxu0
      %1663 = vmatprep.mubr.f32.mxu0 0.0
      %1664 = vmatmul.mubr.f32.gmra.mxu0 %v383
      %v1665 = vpop.f32.mrf.mxu0
      %v1666 = vadd.f32 0.0, %v1665
      %v1667 = vpop.f32.mrf.mxu0
      %1668 = vmatprep.mubr.f32.mxu0 0.0
      %1669 = vmatmul.mubr.f32.gmra.mxu0 %v384
      %v1670 = vpop.f32.mrf.mxu0
      %v1671 = vadd.f32 0.0, %v1670
      %v1672 = vpop.f32.mrf.mxu0
      %1673 = vmatprep.mubr.f32.mxu0 0.0
      %1674 = vmatmul.mubr.f32.gmra.mxu0 %v385
      %v1675 = vpop.f32.mrf.mxu0
      %v1676 = vadd.f32 0.0, %v1675
      %v1677 = vpop.f32.mrf.mxu0
      %1678 = vmatprep.mubr.f32.mxu0 0.0
      %1679 = vmatmul.mubr.f32.gmra.mxu0 %v386
      %v1680 = vpop.f32.mrf.mxu0
      %v1681 = vadd.f32 0.0, %v1680
      %v1682 = vpop.f32.mrf.mxu0
      %1683 = vmatprep.mubr.f32.mxu0 0.0
      %1684 = vmatmul.mubr.f32.gmra.mxu0 %v387
      %v1685 = vpop.f32.mrf.mxu0
      %v1686 = vadd.f32 0.0, %v1685
      %v1687 = vpop.f32.mrf.mxu0
      %1688 = vmatprep.mubr.f32.mxu0 0.0
      %1689 = vmatmul.mubr.f32.gmra.mxu0 %v388
      %v1690 = vpop.f32.mrf.mxu0
      %v1691 = vadd.f32 0.0, %v1690
      %v1692 = vpop.f32.mrf.mxu0
      %1693 = vmatprep.mubr.f32.mxu0 0.0
      %1694 = vmatmul.mubr.f32.gmra.mxu0 %v389
      %v1695 = vpop.f32.mrf.mxu0
      %v1696 = vadd.f32 0.0, %v1695
      %v1697 = vpop.f32.mrf.mxu0
      %1698 = vmatprep.mubr.f32.mxu0 0.0
      %1699 = vmatmul.mubr.f32.gmra.mxu0 %v390
      %v1700 = vpop.f32.mrf.mxu0
      %v1701 = vadd.f32 0.0, %v1700
      %v1702 = vpop.f32.mrf.mxu0
      %1703 = vmatprep.mubr.f32.mxu0 0.0
      %1704 = vmatmul.mubr.f32.gmra.mxu0 %v391
      %v1705 = vpop.f32.mrf.mxu0
      %v1706 = vadd.f32 0.0, %v1705
      %v1707 = vpop.f32.mrf.mxu0
      %1708 = vmatprep.mubr.f32.mxu0 0.0
      %1709 = vmatmul.mubr.f32.gmra.mxu0 %v392
      %v1710 = vpop.f32.mrf.mxu0
      %v1711 = vadd.f32 0.0, %v1710
      %v1712 = vpop.f32.mrf.mxu0
      %1713 = vmatprep.mubr.f32.mxu0 0.0
      %1714 = vmatmul.mubr.f32.gmra.mxu0 %v393
      %v1715 = vpop.f32.mrf.mxu0
      %v1716 = vadd.f32 0.0, %v1715
      %v1717 = vpop.f32.mrf.mxu0
      %1718 = vmatprep.mubr.f32.mxu0 0.0
      %1719 = vmatmul.mubr.f32.gmra.mxu0 %v394
      %v1720 = vpop.f32.mrf.mxu0
      %v1721 = vadd.f32 0.0, %v1720
      %v1722 = vpop.f32.mrf.mxu0
      %1723 = vmatprep.mubr.f32.mxu0 0.0
      %1724 = vmatmul.mubr.f32.gmra.mxu0 %v395
      %v1725 = vpop.f32.mrf.mxu0
      %v1726 = vadd.f32 0.0, %v1725
      %v1727 = vpop.f32.mrf.mxu0
      %1728 = vmatprep.mubr.f32.mxu0 0.0
      %1729 = vmatmul.mubr.f32.gmra.mxu0 %v396
      %v1730 = vpop.f32.mrf.mxu0
      %v1731 = vadd.f32 0.0, %v1730
      %v1732 = vpop.f32.mrf.mxu0
      %1733 = vmatprep.mubr.f32.mxu0 0.0
      %1734 = vmatmul.mubr.f32.gmra.mxu0 %v397
      %v1735 = vpop.f32.mrf.mxu0
      %v1736 = vadd.f32 0.0, %v1735
      %v1737 = vpop.f32.mrf.mxu0
      %1738 = vmatprep.mubr.f32.mxu0 0.0
      %1739 = vmatmul.mubr.f32.gmra.mxu0 %v398
      %v1740 = vpop.f32.mrf.mxu0
      %v1741 = vadd.f32 0.0, %v1740
      %v1742 = vpop.f32.mrf.mxu0
      %1743 = vmatprep.mubr.f32.mxu0 0.0
      %1744 = vmatmul.mubr.f32.gmra.mxu0 %v399
      %v1745 = vpop.f32.mrf.mxu0
      %v1746 = vadd.f32 0.0, %v1745
      %v1747 = vpop.f32.mrf.mxu0
      %1748 = vmatprep.mubr.f32.mxu0 0.0
      %1749 = vmatmul.mubr.f32.gmra.mxu0 %v400
      %v1750 = vpop.f32.mrf.mxu0
      %v1751 = vadd.f32 0.0, %v1750
      %v1752 = vpop.f32.mrf.mxu0
      %1753 = vmatprep.mubr.f32.mxu0 0.0
      %1754 = vmatmul.mubr.f32.gmra.mxu0 %v401
      %v1755 = vpop.f32.mrf.mxu0
      %v1756 = vadd.f32 0.0, %v1755
      %v1757 = vpop.f32.mrf.mxu0
      %1758 = vmatprep.mubr.f32.mxu0 0.0
      %1759 = vmatmul.mubr.f32.gmra.mxu0 %v402
      %v1760 = vpop.f32.mrf.mxu0
      %v1761 = vadd.f32 0.0, %v1760
      %v1762 = vpop.f32.mrf.mxu0
      %1763 = vdwg.mxu0
      %v1764 = vtanh.pop %v486
      %v1765 = vtanh.pop %v491
      %v1766 = vtanh.pop %v496
      %v1767 = vtanh.pop %v501
      %v1768 = vtanh.pop %v506
      %v1769 = vtanh.pop %v511
      %v1770 = vtanh.pop %v516
      %v1771 = vtanh.pop %v521
      %v1772 = vtanh.pop %v526
      %v1773 = vtanh.pop %v531
      %v1774 = vtanh.pop %v536
      %v1775 = vtanh.pop %v541
      %v1776 = vtanh.pop %v546
      %v1777 = vtanh.pop %v551
      %v1778 = vtanh.pop %v556
      %v1779 = vtanh.pop %v561
      %v1780 = vtanh.pop %v566
      %v1781 = vtanh.pop %v571
      %v1782 = vtanh.pop %v576
      %v1783 = vtanh.pop %v581
      %v1784 = vtanh.pop %v586
      %v1785 = vtanh.pop %v591
      %v1786 = vtanh.pop %v596
      %v1787 = vtanh.pop %v601
      %v1788 = vtanh.pop %v606
      %v1789 = vtanh.pop %v611
      %v1790 = vtanh.pop %v616
      %v1791 = vtanh.pop %v621
      %v1792 = vtanh.pop %v626
      %v1793 = vtanh.pop %v631
      %v1794 = vtanh.pop %v636
      %v1795 = vtanh.pop %v641
      %v1796 = vtanh.pop %v646
      %v1797 = vtanh.pop %v651
      %v1798 = vtanh.pop %v656
      %v1799 = vtanh.pop %v661
      %v1800 = vtanh.pop %v666
      %v1801 = vtanh.pop %v671
      %v1802 = vtanh.pop %v676
      %v1803 = vtanh.pop %v681
      %v1804 = vtanh.pop %v686
      %v1805 = vtanh.pop %v691
      %v1806 = vtanh.pop %v696
      %v1807 = vtanh.pop %v701
      %v1808 = vtanh.pop %v706
      %v1809 = vtanh.pop %v711
      %v1810 = vtanh.pop %v716
      %v1811 = vtanh.pop %v721
      %v1812 = vtanh.pop %v726
      %v1813 = vtanh.pop %v731
      %v1814 = vtanh.pop %v736
      %v1815 = vtanh.pop %v741
      %v1816 = vtanh.pop %v746
      %v1817 = vtanh.pop %v751
      %v1818 = vtanh.pop %v756
      %v1819 = vtanh.pop %v761
      %v1820 = vtanh.pop %v766
      %v1821 = vtanh.pop %v771
      %v1822 = vtanh.pop %v776
      %v1823 = vtanh.pop %v781
      %v1824 = vtanh.pop %v786
      %v1825 = vtanh.pop %v791
      %v1826 = vtanh.pop %v796
      %v1827 = vtanh.pop %v801
      %v1828 = vtanh.pop %v806
      %v1829 = vtanh.pop %v811
      %v1830 = vtanh.pop %v816
      %v1831 = vtanh.pop %v821
      %v1832 = vtanh.pop %v826
      %v1833 = vtanh.pop %v831
      %v1834 = vtanh.pop %v836
      %v1835 = vtanh.pop %v841
      %v1836 = vtanh.pop %v846
      %v1837 = vtanh.pop %v851
      %v1838 = vtanh.pop %v856
      %v1839 = vtanh.pop %v861
      %v1840 = vtanh.pop %v866
      %v1841 = vtanh.pop %v871
      %v1842 = vtanh.pop %v876
      %v1843 = vtanh.pop %v881
      %v1844 = vtanh.pop %v886
      %v1845 = vtanh.pop %v891
      %v1846 = vtanh.pop %v896
      %v1847 = vtanh.pop %v901
      %v1848 = vtanh.pop %v906
      %v1849 = vtanh.pop %v911
      %v1850 = vtanh.pop %v916
      %v1851 = vtanh.pop %v921
      %v1852 = vtanh.pop %v926
      %v1853 = vtanh.pop %v931
      %v1854 = vtanh.pop %v936
      %v1855 = vtanh.pop %v941
      %v1856 = vtanh.pop %v946
      %v1857 = vtanh.pop %v951
      %v1858 = vtanh.pop %v956
      %v1859 = vtanh.pop %v961
      %v1860 = vtanh.pop %v966
      %v1861 = vtanh.pop %v971
      %v1862 = vtanh.pop %v976
      %v1863 = vtanh.pop %v981
      %v1864 = vtanh.pop %v986
      %v1865 = vtanh.pop %v991
      %v1866 = vtanh.pop %v996
      %v1867 = vtanh.pop %v1001
      %v1868 = vtanh.pop %v1006
      %v1869 = vtanh.pop %v1011
      %v1870 = vtanh.pop %v1016
      %v1871 = vtanh.pop %v1021
      %v1872 = vtanh.pop %v1026
      %v1873 = vtanh.pop %v1031
      %v1874 = vtanh.pop %v1036
      %v1875 = vtanh.pop %v1041
      %v1876 = vtanh.pop %v1046
      %v1877 = vtanh.pop %v1051
      %v1878 = vtanh.pop %v1056
      %v1879 = vtanh.pop %v1061
      %v1880 = vtanh.pop %v1066
      %v1881 = vtanh.pop %v1071
      %v1882 = vtanh.pop %v1076
      %v1883 = vtanh.pop %v1081
      %v1884 = vtanh.pop %v1086
      %v1885 = vtanh.pop %v1091
      %v1886 = vtanh.pop %v1096
      %v1887 = vtanh.pop %v1101
      %v1888 = vtanh.pop %v1106
      %v1889 = vtanh.pop %v1111
      %v1890 = vtanh.pop %v1116
      %v1891 = vtanh.pop %v1121
      %v1892 = vtanh.pop %v1126
      %v1893 = vtanh.pop %v1131
      %v1894 = vtanh.pop %v1136
      %v1895 = vtanh.pop %v1141
      %v1896 = vtanh.pop %v1146
      %v1897 = vtanh.pop %v1151
      %v1898 = vtanh.pop %v1156
      %v1899 = vtanh.pop %v1161
      %v1900 = vtanh.pop %v1166
      %v1901 = vtanh.pop %v1171
      %v1902 = vtanh.pop %v1176
      %v1903 = vtanh.pop %v1181
      %v1904 = vtanh.pop %v1186
      %v1905 = vtanh.pop %v1191
      %v1906 = vtanh.pop %v1196
      %v1907 = vtanh.pop %v1201
      %v1908 = vtanh.pop %v1206
      %v1909 = vtanh.pop %v1211
      %v1910 = vtanh.pop %v1216
      %v1911 = vtanh.pop %v1221
      %v1912 = vtanh.pop %v1226
      %v1913 = vtanh.pop %v1231
      %v1914 = vtanh.pop %v1236
      %v1915 = vtanh.pop %v1241
      %v1916 = vtanh.pop %v1246
      %v1917 = vtanh.pop %v1251
      %v1918 = vtanh.pop %v1256
      %v1919 = vtanh.pop %v1261
      %v1920 = vtanh.pop %v1266
      %v1921 = vtanh.pop %v1271
      %v1922 = vtanh.pop %v1276
      %v1923 = vtanh.pop %v1281
      %v1924 = vtanh.pop %v1286
      %v1925 = vtanh.pop %v1291
      %v1926 = vtanh.pop %v1296
      %v1927 = vtanh.pop %v1301
      %v1928 = vtanh.pop %v1306
      %v1929 = vtanh.pop %v1311
      %v1930 = vtanh.pop %v1316
      %v1931 = vtanh.pop %v1321
      %v1932 = vtanh.pop %v1326
      %v1933 = vtanh.pop %v1331
      %v1934 = vtanh.pop %v1336
      %v1935 = vtanh.pop %v1341
      %v1936 = vtanh.pop %v1346
      %v1937 = vtanh.pop %v1351
      %v1938 = vtanh.pop %v1356
      %v1939 = vtanh.pop %v1361
      %v1940 = vtanh.pop %v1366
      %v1941 = vtanh.pop %v1371
      %v1942 = vtanh.pop %v1376
      %v1943 = vtanh.pop %v1381
      %v1944 = vtanh.pop %v1386
      %v1945 = vtanh.pop %v1391
      %v1946 = vtanh.pop %v1396
      %v1947 = vtanh.pop %v1401
      %v1948 = vtanh.pop %v1406
      %v1949 = vtanh.pop %v1411
      %v1950 = vtanh.pop %v1416
      %v1951 = vtanh.pop %v1421
      %v1952 = vtanh.pop %v1426
      %v1953 = vtanh.pop %v1431
      %v1954 = vtanh.pop %v1436
      %v1955 = vtanh.pop %v1441
      %v1956 = vtanh.pop %v1446
      %v1957 = vtanh.pop %v1451
      %v1958 = vtanh.pop %v1456
      %v1959 = vtanh.pop %v1461
      %v1960 = vtanh.pop %v1466
      %v1961 = vtanh.pop %v1471
      %v1962 = vtanh.pop %v1476
      %v1963 = vtanh.pop %v1481
      %v1964 = vtanh.pop %v1486
      %v1965 = vtanh.pop %v1491
      %v1966 = vtanh.pop %v1496
      %v1967 = vtanh.pop %v1501
      %v1968 = vtanh.pop %v1506
      %v1969 = vtanh.pop %v1511
      %v1970 = vtanh.pop %v1516
      %v1971 = vtanh.pop %v1521
      %v1972 = vtanh.pop %v1526
      %v1973 = vtanh.pop %v1531
      %v1974 = vtanh.pop %v1536
      %v1975 = vtanh.pop %v1541
      %v1976 = vtanh.pop %v1546
      %v1977 = vtanh.pop %v1551
      %v1978 = vtanh.pop %v1556
      %v1979 = vtanh.pop %v1561
      %v1980 = vtanh.pop %v1566
      %v1981 = vtanh.pop %v1571
      %v1982 = vtanh.pop %v1576
      %v1983 = vtanh.pop %v1581
      %v1984 = vtanh.pop %v1586
      %v1985 = vtanh.pop %v1591
      %v1986 = vtanh.pop %v1596
      %v1987 = vtanh.pop %v1601
      %v1988 = vtanh.pop %v1606
      %v1989 = vtanh.pop %v1611
      %v1990 = vtanh.pop %v1616
      %v1991 = vtanh.pop %v1621
      %v1992 = vtanh.pop %v1626
      %v1993 = vtanh.pop %v1631
      %v1994 = vtanh.pop %v1636
      %v1995 = vtanh.pop %v1641
      %v1996 = vtanh.pop %v1646
      %v1997 = vtanh.pop %v1651
      %v1998 = vtanh.pop %v1656
      %v1999 = vtanh.pop %v1661
      %v2000 = vtanh.pop %v1666
      %v2001 = vtanh.pop %v1671
      %v2002 = vtanh.pop %v1676
      %v2003 = vtanh.pop %v1681
      %v2004 = vtanh.pop %v1686
      %v2005 = vtanh.pop %v1691
      %v2006 = vtanh.pop %v1696
      %v2007 = vtanh.pop %v1701
      %v2008 = vtanh.pop %v1706
      %v2009 = vtanh.pop %v1711
      %v2010 = vtanh.pop %v1716
      %v2011 = vtanh.pop %v1721
      %v2012 = vtanh.pop %v1726
      %v2013 = vtanh.pop %v1731
      %v2014 = vtanh.pop %v1736
      %v2015 = vtanh.pop %v1741
      %v2016 = vtanh.pop %v1746
      %v2017 = vtanh.pop %v1751
      %v2018 = vtanh.pop %v1756
      %v2019 = vtanh.pop %v1761
      %vm2020 = vcmask 23552
      %2021 = vst.msk [vmem:[%s145] sm:$0xff] %vm2020, %v1764
      %2022 = vst.msk [vmem:[%s145 + $0x8] sm:$0xff] %vm2020, %v1765
      %2023 = vst.msk [vmem:[%s145 + $0x10] sm:$0xff] %vm2020, %v1766
      %2024 = vst.msk [vmem:[%s145 + $0x18] sm:$0xff] %vm2020, %v1767
      %2025 = vst.msk [vmem:[%s145 + $0x20] sm:$0xff] %vm2020, %v1768
      %2026 = vst.msk [vmem:[%s145 + $0x28] sm:$0xff] %vm2020, %v1769
      %2027 = vst.msk [vmem:[%s145 + $0x30] sm:$0xff] %vm2020, %v1770
      %2028 = vst.msk [vmem:[%s145 + $0x38] sm:$0xff] %vm2020, %v1771
      %2029 = vst.msk [vmem:[%s145 + $0x40] sm:$0xff] %vm2020, %v1772
      %2030 = vst.msk [vmem:[%s145 + $0x48] sm:$0xff] %vm2020, %v1773
      %2031 = vst.msk [vmem:[%s145 + $0x50] sm:$0xff] %vm2020, %v1774
      %2032 = vst.msk [vmem:[%s145 + $0x58] sm:$0xff] %vm2020, %v1775
      %2033 = vst.msk [vmem:[%s145 + $0x60] sm:$0xff] %vm2020, %v1776
      %2034 = vst.msk [vmem:[%s145 + $0x68] sm:$0xff] %vm2020, %v1777
      %2035 = vst.msk [vmem:[%s145 + $0x70] sm:$0xff] %vm2020, %v1778
      %2036 = vst.msk [vmem:[%s145 + $0x78] sm:$0xff] %vm2020, %v1779
      %2037 = vst.msk [vmem:[%s145 + $0x80] sm:$0xff] %vm2020, %v1780
      %2038 = vst.msk [vmem:[%s145 + $0x88] sm:$0xff] %vm2020, %v1781
      %2039 = vst.msk [vmem:[%s145 + $0x90] sm:$0xff] %vm2020, %v1782
      %2040 = vst.msk [vmem:[%s145 + $0x98] sm:$0xff] %vm2020, %v1783
      %2041 = vst.msk [vmem:[%s145 + $0xa0] sm:$0xff] %vm2020, %v1784
      %2042 = vst.msk [vmem:[%s145 + $0xa8] sm:$0xff] %vm2020, %v1785
      %2043 = vst.msk [vmem:[%s145 + $0xb0] sm:$0xff] %vm2020, %v1786
      %2044 = vst.msk [vmem:[%s145 + $0xb8] sm:$0xff] %vm2020, %v1787
      %2045 = vst.msk [vmem:[%s145 + $0xc0] sm:$0xff] %vm2020, %v1788
      %2046 = vst.msk [vmem:[%s145 + $0xc8] sm:$0xff] %vm2020, %v1789
      %2047 = vst.msk [vmem:[%s145 + $0xd0] sm:$0xff] %vm2020, %v1790
      %2048 = vst.msk [vmem:[%s145 + $0xd8] sm:$0xff] %vm2020, %v1791
      %2049 = vst.msk [vmem:[%s145 + $0xe0] sm:$0xff] %vm2020, %v1792
      %2050 = vst.msk [vmem:[%s145 + $0xe8] sm:$0xff] %vm2020, %v1793
      %2051 = vst.msk [vmem:[%s145 + $0xf0] sm:$0xff] %vm2020, %v1794
      %2052 = vst.msk [vmem:[%s145 + $0xf8] sm:$0xff] %vm2020, %v1795
      %2053 = vst.msk [vmem:[%s145 + $0x100] sm:$0xff] %vm2020, %v1796
      %2054 = vst.msk [vmem:[%s145 + $0x108] sm:$0xff] %vm2020, %v1797
      %2055 = vst.msk [vmem:[%s145 + $0x110] sm:$0xff] %vm2020, %v1798
      %2056 = vst.msk [vmem:[%s145 + $0x118] sm:$0xff] %vm2020, %v1799
      %2057 = vst.msk [vmem:[%s145 + $0x120] sm:$0xff] %vm2020, %v1800
      %2058 = vst.msk [vmem:[%s145 + $0x128] sm:$0xff] %vm2020, %v1801
      %2059 = vst.msk [vmem:[%s145 + $0x130] sm:$0xff] %vm2020, %v1802
      %2060 = vst.msk [vmem:[%s145 + $0x138] sm:$0xff] %vm2020, %v1803
      %2061 = vst.msk [vmem:[%s145 + $0x140] sm:$0xff] %vm2020, %v1804
      %2062 = vst.msk [vmem:[%s145 + $0x148] sm:$0xff] %vm2020, %v1805
      %2063 = vst.msk [vmem:[%s145 + $0x150] sm:$0xff] %vm2020, %v1806
      %2064 = vst.msk [vmem:[%s145 + $0x158] sm:$0xff] %vm2020, %v1807
      %2065 = vst.msk [vmem:[%s145 + $0x160] sm:$0xff] %vm2020, %v1808
      %2066 = vst.msk [vmem:[%s145 + $0x168] sm:$0xff] %vm2020, %v1809
      %2067 = vst.msk [vmem:[%s145 + $0x170] sm:$0xff] %vm2020, %v1810
      %2068 = vst.msk [vmem:[%s145 + $0x178] sm:$0xff] %vm2020, %v1811
      %2069 = vst.msk [vmem:[%s145 + $0x180] sm:$0xff] %vm2020, %v1812
      %2070 = vst.msk [vmem:[%s145 + $0x188] sm:$0xff] %vm2020, %v1813
      %2071 = vst.msk [vmem:[%s145 + $0x190] sm:$0xff] %vm2020, %v1814
      %2072 = vst.msk [vmem:[%s145 + $0x198] sm:$0xff] %vm2020, %v1815
      %2073 = vst.msk [vmem:[%s145 + $0x1a0] sm:$0xff] %vm2020, %v1816
      %2074 = vst.msk [vmem:[%s145 + $0x1a8] sm:$0xff] %vm2020, %v1817
      %2075 = vst.msk [vmem:[%s145 + $0x1b0] sm:$0xff] %vm2020, %v1818
      %2076 = vst.msk [vmem:[%s145 + $0x1b8] sm:$0xff] %vm2020, %v1819
      %2077 = vst.msk [vmem:[%s145 + $0x1c0] sm:$0xff] %vm2020, %v1820
      %2078 = vst.msk [vmem:[%s145 + $0x1c8] sm:$0xff] %vm2020, %v1821
      %2079 = vst.msk [vmem:[%s145 + $0x1d0] sm:$0xff] %vm2020, %v1822
      %2080 = vst.msk [vmem:[%s145 + $0x1d8] sm:$0xff] %vm2020, %v1823
      %2081 = vst.msk [vmem:[%s145 + $0x1e0] sm:$0xff] %vm2020, %v1824
      %2082 = vst.msk [vmem:[%s145 + $0x1e8] sm:$0xff] %vm2020, %v1825
      %2083 = vst.msk [vmem:[%s145 + $0x1f0] sm:$0xff] %vm2020, %v1826
      %2084 = vst.msk [vmem:[%s145 + $0x1f8] sm:$0xff] %vm2020, %v1827
      %2085 = vst.msk [vmem:[%s145 + $0x200] sm:$0xff] %vm2020, %v1828
      %2086 = vst.msk [vmem:[%s145 + $0x208] sm:$0xff] %vm2020, %v1829
      %2087 = vst.msk [vmem:[%s145 + $0x210] sm:$0xff] %vm2020, %v1830
      %2088 = vst.msk [vmem:[%s145 + $0x218] sm:$0xff] %vm2020, %v1831
      %2089 = vst.msk [vmem:[%s145 + $0x220] sm:$0xff] %vm2020, %v1832
      %2090 = vst.msk [vmem:[%s145 + $0x228] sm:$0xff] %vm2020, %v1833
      %2091 = vst.msk [vmem:[%s145 + $0x230] sm:$0xff] %vm2020, %v1834
      %2092 = vst.msk [vmem:[%s145 + $0x238] sm:$0xff] %vm2020, %v1835
      %2093 = vst.msk [vmem:[%s145 + $0x240] sm:$0xff] %vm2020, %v1836
      %2094 = vst.msk [vmem:[%s145 + $0x248] sm:$0xff] %vm2020, %v1837
      %2095 = vst.msk [vmem:[%s145 + $0x250] sm:$0xff] %vm2020, %v1838
      %2096 = vst.msk [vmem:[%s145 + $0x258] sm:$0xff] %vm2020, %v1839
      %2097 = vst.msk [vmem:[%s145 + $0x260] sm:$0xff] %vm2020, %v1840
      %2098 = vst.msk [vmem:[%s145 + $0x268] sm:$0xff] %vm2020, %v1841
      %2099 = vst.msk [vmem:[%s145 + $0x270] sm:$0xff] %vm2020, %v1842
      %2100 = vst.msk [vmem:[%s145 + $0x278] sm:$0xff] %vm2020, %v1843
      %2101 = vst.msk [vmem:[%s145 + $0x280] sm:$0xff] %vm2020, %v1844
      %2102 = vst.msk [vmem:[%s145 + $0x288] sm:$0xff] %vm2020, %v1845
      %2103 = vst.msk [vmem:[%s145 + $0x290] sm:$0xff] %vm2020, %v1846
      %2104 = vst.msk [vmem:[%s145 + $0x298] sm:$0xff] %vm2020, %v1847
      %2105 = vst.msk [vmem:[%s145 + $0x2a0] sm:$0xff] %vm2020, %v1848
      %2106 = vst.msk [vmem:[%s145 + $0x2a8] sm:$0xff] %vm2020, %v1849
      %2107 = vst.msk [vmem:[%s145 + $0x2b0] sm:$0xff] %vm2020, %v1850
      %2108 = vst.msk [vmem:[%s145 + $0x2b8] sm:$0xff] %vm2020, %v1851
      %2109 = vst.msk [vmem:[%s145 + $0x2c0] sm:$0xff] %vm2020, %v1852
      %2110 = vst.msk [vmem:[%s145 + $0x2c8] sm:$0xff] %vm2020, %v1853
      %2111 = vst.msk [vmem:[%s145 + $0x2d0] sm:$0xff] %vm2020, %v1854
      %2112 = vst.msk [vmem:[%s145 + $0x2d8] sm:$0xff] %vm2020, %v1855
      %2113 = vst.msk [vmem:[%s145 + $0x2e0] sm:$0xff] %vm2020, %v1856
      %2114 = vst.msk [vmem:[%s145 + $0x2e8] sm:$0xff] %vm2020, %v1857
      %2115 = vst.msk [vmem:[%s145 + $0x2f0] sm:$0xff] %vm2020, %v1858
      %2116 = vst.msk [vmem:[%s145 + $0x2f8] sm:$0xff] %vm2020, %v1859
      %2117 = vst.msk [vmem:[%s145 + $0x300] sm:$0xff] %vm2020, %v1860
      %2118 = vst.msk [vmem:[%s145 + $0x308] sm:$0xff] %vm2020, %v1861
      %2119 = vst.msk [vmem:[%s145 + $0x310] sm:$0xff] %vm2020, %v1862
      %2120 = vst.msk [vmem:[%s145 + $0x318] sm:$0xff] %vm2020, %v1863
      %2121 = vst.msk [vmem:[%s145 + $0x320] sm:$0xff] %vm2020, %v1864
      %2122 = vst.msk [vmem:[%s145 + $0x328] sm:$0xff] %vm2020, %v1865
      %2123 = vst.msk [vmem:[%s145 + $0x330] sm:$0xff] %vm2020, %v1866
      %2124 = vst.msk [vmem:[%s145 + $0x338] sm:$0xff] %vm2020, %v1867
      %2125 = vst.msk [vmem:[%s145 + $0x340] sm:$0xff] %vm2020, %v1868
      %2126 = vst.msk [vmem:[%s145 + $0x348] sm:$0xff] %vm2020, %v1869
      %2127 = vst.msk [vmem:[%s145 + $0x350] sm:$0xff] %vm2020, %v1870
      %2128 = vst.msk [vmem:[%s145 + $0x358] sm:$0xff] %vm2020, %v1871
      %2129 = vst.msk [vmem:[%s145 + $0x360] sm:$0xff] %vm2020, %v1872
      %2130 = vst.msk [vmem:[%s145 + $0x368] sm:$0xff] %vm2020, %v1873
      %2131 = vst.msk [vmem:[%s145 + $0x370] sm:$0xff] %vm2020, %v1874
      %2132 = vst.msk [vmem:[%s145 + $0x378] sm:$0xff] %vm2020, %v1875
      %2133 = vst.msk [vmem:[%s145 + $0x380] sm:$0xff] %vm2020, %v1876
      %2134 = vst.msk [vmem:[%s145 + $0x388] sm:$0xff] %vm2020, %v1877
      %2135 = vst.msk [vmem:[%s145 + $0x390] sm:$0xff] %vm2020, %v1878
      %2136 = vst.msk [vmem:[%s145 + $0x398] sm:$0xff] %vm2020, %v1879
      %2137 = vst.msk [vmem:[%s145 + $0x3a0] sm:$0xff] %vm2020, %v1880
      %2138 = vst.msk [vmem:[%s145 + $0x3a8] sm:$0xff] %vm2020, %v1881
      %2139 = vst.msk [vmem:[%s145 + $0x3b0] sm:$0xff] %vm2020, %v1882
      %2140 = vst.msk [vmem:[%s145 + $0x3b8] sm:$0xff] %vm2020, %v1883
      %2141 = vst.msk [vmem:[%s145 + $0x3c0] sm:$0xff] %vm2020, %v1884
      %2142 = vst.msk [vmem:[%s145 + $0x3c8] sm:$0xff] %vm2020, %v1885
      %2143 = vst.msk [vmem:[%s145 + $0x3d0] sm:$0xff] %vm2020, %v1886
      %2144 = vst.msk [vmem:[%s145 + $0x3d8] sm:$0xff] %vm2020, %v1887
      %2145 = vst.msk [vmem:[%s145 + $0x3e0] sm:$0xff] %vm2020, %v1888
      %2146 = vst.msk [vmem:[%s145 + $0x3e8] sm:$0xff] %vm2020, %v1889
      %2147 = vst.msk [vmem:[%s145 + $0x3f0] sm:$0xff] %vm2020, %v1890
      %2148 = vst.msk [vmem:[%s145 + $0x3f8] sm:$0xff] %vm2020, %v1891
      %2149 = vst.msk [vmem:[%s145 + $0x400] sm:$0xff] %vm2020, %v1892
      %2150 = vst.msk [vmem:[%s145 + $0x408] sm:$0xff] %vm2020, %v1893
      %2151 = vst.msk [vmem:[%s145 + $0x410] sm:$0xff] %vm2020, %v1894
      %2152 = vst.msk [vmem:[%s145 + $0x418] sm:$0xff] %vm2020, %v1895
      %2153 = vst.msk [vmem:[%s145 + $0x420] sm:$0xff] %vm2020, %v1896
      %2154 = vst.msk [vmem:[%s145 + $0x428] sm:$0xff] %vm2020, %v1897
      %2155 = vst.msk [vmem:[%s145 + $0x430] sm:$0xff] %vm2020, %v1898
      %2156 = vst.msk [vmem:[%s145 + $0x438] sm:$0xff] %vm2020, %v1899
      %2157 = vst.msk [vmem:[%s145 + $0x440] sm:$0xff] %vm2020, %v1900
      %2158 = vst.msk [vmem:[%s145 + $0x448] sm:$0xff] %vm2020, %v1901
      %2159 = vst.msk [vmem:[%s145 + $0x450] sm:$0xff] %vm2020, %v1902
      %2160 = vst.msk [vmem:[%s145 + $0x458] sm:$0xff] %vm2020, %v1903
      %2161 = vst.msk [vmem:[%s145 + $0x460] sm:$0xff] %vm2020, %v1904
      %2162 = vst.msk [vmem:[%s145 + $0x468] sm:$0xff] %vm2020, %v1905
      %2163 = vst.msk [vmem:[%s145 + $0x470] sm:$0xff] %vm2020, %v1906
      %2164 = vst.msk [vmem:[%s145 + $0x478] sm:$0xff] %vm2020, %v1907
      %2165 = vst.msk [vmem:[%s145 + $0x480] sm:$0xff] %vm2020, %v1908
      %2166 = vst.msk [vmem:[%s145 + $0x488] sm:$0xff] %vm2020, %v1909
      %2167 = vst.msk [vmem:[%s145 + $0x490] sm:$0xff] %vm2020, %v1910
      %2168 = vst.msk [vmem:[%s145 + $0x498] sm:$0xff] %vm2020, %v1911
      %2169 = vst.msk [vmem:[%s145 + $0x4a0] sm:$0xff] %vm2020, %v1912
      %2170 = vst.msk [vmem:[%s145 + $0x4a8] sm:$0xff] %vm2020, %v1913
      %2171 = vst.msk [vmem:[%s145 + $0x4b0] sm:$0xff] %vm2020, %v1914
      %2172 = vst.msk [vmem:[%s145 + $0x4b8] sm:$0xff] %vm2020, %v1915
      %2173 = vst.msk [vmem:[%s145 + $0x4c0] sm:$0xff] %vm2020, %v1916
      %2174 = vst.msk [vmem:[%s145 + $0x4c8] sm:$0xff] %vm2020, %v1917
      %2175 = vst.msk [vmem:[%s145 + $0x4d0] sm:$0xff] %vm2020, %v1918
      %2176 = vst.msk [vmem:[%s145 + $0x4d8] sm:$0xff] %vm2020, %v1919
      %2177 = vst.msk [vmem:[%s145 + $0x4e0] sm:$0xff] %vm2020, %v1920
      %2178 = vst.msk [vmem:[%s145 + $0x4e8] sm:$0xff] %vm2020, %v1921
      %2179 = vst.msk [vmem:[%s145 + $0x4f0] sm:$0xff] %vm2020, %v1922
      %2180 = vst.msk [vmem:[%s145 + $0x4f8] sm:$0xff] %vm2020, %v1923
      %2181 = vst.msk [vmem:[%s145 + $0x500] sm:$0xff] %vm2020, %v1924
      %2182 = vst.msk [vmem:[%s145 + $0x508] sm:$0xff] %vm2020, %v1925
      %2183 = vst.msk [vmem:[%s145 + $0x510] sm:$0xff] %vm2020, %v1926
      %2184 = vst.msk [vmem:[%s145 + $0x518] sm:$0xff] %vm2020, %v1927
      %2185 = vst.msk [vmem:[%s145 + $0x520] sm:$0xff] %vm2020, %v1928
      %2186 = vst.msk [vmem:[%s145 + $0x528] sm:$0xff] %vm2020, %v1929
      %2187 = vst.msk [vmem:[%s145 + $0x530] sm:$0xff] %vm2020, %v1930
      %2188 = vst.msk [vmem:[%s145 + $0x538] sm:$0xff] %vm2020, %v1931
      %2189 = vst.msk [vmem:[%s145 + $0x540] sm:$0xff] %vm2020, %v1932
      %2190 = vst.msk [vmem:[%s145 + $0x548] sm:$0xff] %vm2020, %v1933
      %2191 = vst.msk [vmem:[%s145 + $0x550] sm:$0xff] %vm2020, %v1934
      %2192 = vst.msk [vmem:[%s145 + $0x558] sm:$0xff] %vm2020, %v1935
      %2193 = vst.msk [vmem:[%s145 + $0x560] sm:$0xff] %vm2020, %v1936
      %2194 = vst.msk [vmem:[%s145 + $0x568] sm:$0xff] %vm2020, %v1937
      %2195 = vst.msk [vmem:[%s145 + $0x570] sm:$0xff] %vm2020, %v1938
      %2196 = vst.msk [vmem:[%s145 + $0x578] sm:$0xff] %vm2020, %v1939
      %2197 = vst.msk [vmem:[%s145 + $0x580] sm:$0xff] %vm2020, %v1940
      %2198 = vst.msk [vmem:[%s145 + $0x588] sm:$0xff] %vm2020, %v1941
      %2199 = vst.msk [vmem:[%s145 + $0x590] sm:$0xff] %vm2020, %v1942
      %2200 = vst.msk [vmem:[%s145 + $0x598] sm:$0xff] %vm2020, %v1943
      %2201 = vst.msk [vmem:[%s145 + $0x5a0] sm:$0xff] %vm2020, %v1944
      %2202 = vst.msk [vmem:[%s145 + $0x5a8] sm:$0xff] %vm2020, %v1945
      %2203 = vst.msk [vmem:[%s145 + $0x5b0] sm:$0xff] %vm2020, %v1946
      %2204 = vst.msk [vmem:[%s145 + $0x5b8] sm:$0xff] %vm2020, %v1947
      %2205 = vst.msk [vmem:[%s145 + $0x5c0] sm:$0xff] %vm2020, %v1948
      %2206 = vst.msk [vmem:[%s145 + $0x5c8] sm:$0xff] %vm2020, %v1949
      %2207 = vst.msk [vmem:[%s145 + $0x5d0] sm:$0xff] %vm2020, %v1950
      %2208 = vst.msk [vmem:[%s145 + $0x5d8] sm:$0xff] %vm2020, %v1951
      %2209 = vst.msk [vmem:[%s145 + $0x5e0] sm:$0xff] %vm2020, %v1952
      %2210 = vst.msk [vmem:[%s145 + $0x5e8] sm:$0xff] %vm2020, %v1953
      %2211 = vst.msk [vmem:[%s145 + $0x5f0] sm:$0xff] %vm2020, %v1954
      %2212 = vst.msk [vmem:[%s145 + $0x5f8] sm:$0xff] %vm2020, %v1955
      %2213 = vst.msk [vmem:[%s145 + $0x600] sm:$0xff] %vm2020, %v1956
      %2214 = vst.msk [vmem:[%s145 + $0x608] sm:$0xff] %vm2020, %v1957
      %2215 = vst.msk [vmem:[%s145 + $0x610] sm:$0xff] %vm2020, %v1958
      %2216 = vst.msk [vmem:[%s145 + $0x618] sm:$0xff] %vm2020, %v1959
      %2217 = vst.msk [vmem:[%s145 + $0x620] sm:$0xff] %vm2020, %v1960
      %2218 = vst.msk [vmem:[%s145 + $0x628] sm:$0xff] %vm2020, %v1961
      %2219 = vst.msk [vmem:[%s145 + $0x630] sm:$0xff] %vm2020, %v1962
      %2220 = vst.msk [vmem:[%s145 + $0x638] sm:$0xff] %vm2020, %v1963
      %2221 = vst.msk [vmem:[%s145 + $0x640] sm:$0xff] %vm2020, %v1964
      %2222 = vst.msk [vmem:[%s145 + $0x648] sm:$0xff] %vm2020, %v1965
      %2223 = vst.msk [vmem:[%s145 + $0x650] sm:$0xff] %vm2020, %v1966
      %2224 = vst.msk [vmem:[%s145 + $0x658] sm:$0xff] %vm2020, %v1967
      %2225 = vst.msk [vmem:[%s145 + $0x660] sm:$0xff] %vm2020, %v1968
      %2226 = vst.msk [vmem:[%s145 + $0x668] sm:$0xff] %vm2020, %v1969
      %2227 = vst.msk [vmem:[%s145 + $0x670] sm:$0xff] %vm2020, %v1970
      %2228 = vst.msk [vmem:[%s145 + $0x678] sm:$0xff] %vm2020, %v1971
      %2229 = vst.msk [vmem:[%s145 + $0x680] sm:$0xff] %vm2020, %v1972
      %2230 = vst.msk [vmem:[%s145 + $0x688] sm:$0xff] %vm2020, %v1973
      %2231 = vst.msk [vmem:[%s145 + $0x690] sm:$0xff] %vm2020, %v1974
      %2232 = vst.msk [vmem:[%s145 + $0x698] sm:$0xff] %vm2020, %v1975
      %2233 = vst.msk [vmem:[%s145 + $0x6a0] sm:$0xff] %vm2020, %v1976
      %2234 = vst.msk [vmem:[%s145 + $0x6a8] sm:$0xff] %vm2020, %v1977
      %2235 = vst.msk [vmem:[%s145 + $0x6b0] sm:$0xff] %vm2020, %v1978
      %2236 = vst.msk [vmem:[%s145 + $0x6b8] sm:$0xff] %vm2020, %v1979
      %2237 = vst.msk [vmem:[%s145 + $0x6c0] sm:$0xff] %vm2020, %v1980
      %2238 = vst.msk [vmem:[%s145 + $0x6c8] sm:$0xff] %vm2020, %v1981
      %2239 = vst.msk [vmem:[%s145 + $0x6d0] sm:$0xff] %vm2020, %v1982
      %2240 = vst.msk [vmem:[%s145 + $0x6d8] sm:$0xff] %vm2020, %v1983
      %2241 = vst.msk [vmem:[%s145 + $0x6e0] sm:$0xff] %vm2020, %v1984
      %2242 = vst.msk [vmem:[%s145 + $0x6e8] sm:$0xff] %vm2020, %v1985
      %2243 = vst.msk [vmem:[%s145 + $0x6f0] sm:$0xff] %vm2020, %v1986
      %2244 = vst.msk [vmem:[%s145 + $0x6f8] sm:$0xff] %vm2020, %v1987
      %2245 = vst.msk [vmem:[%s145 + $0x700] sm:$0xff] %vm2020, %v1988
      %2246 = vst.msk [vmem:[%s145 + $0x708] sm:$0xff] %vm2020, %v1989
      %2247 = vst.msk [vmem:[%s145 + $0x710] sm:$0xff] %vm2020, %v1990
      %2248 = vst.msk [vmem:[%s145 + $0x718] sm:$0xff] %vm2020, %v1991
      %2249 = vst.msk [vmem:[%s145 + $0x720] sm:$0xff] %vm2020, %v1992
      %2250 = vst.msk [vmem:[%s145 + $0x728] sm:$0xff] %vm2020, %v1993
      %2251 = vst.msk [vmem:[%s145 + $0x730] sm:$0xff] %vm2020, %v1994
      %2252 = vst.msk [vmem:[%s145 + $0x738] sm:$0xff] %vm2020, %v1995
      %2253 = vst.msk [vmem:[%s145 + $0x740] sm:$0xff] %vm2020, %v1996
      %2254 = vst.msk [vmem:[%s145 + $0x748] sm:$0xff] %vm2020, %v1997
      %2255 = vst.msk [vmem:[%s145 + $0x750] sm:$0xff] %vm2020, %v1998
      %2256 = vst.msk [vmem:[%s145 + $0x758] sm:$0xff] %vm2020, %v1999
      %2257 = vst.msk [vmem:[%s145 + $0x760] sm:$0xff] %vm2020, %v2000
      %2258 = vst.msk [vmem:[%s145 + $0x768] sm:$0xff] %vm2020, %v2001
      %2259 = vst.msk [vmem:[%s145 + $0x770] sm:$0xff] %vm2020, %v2002
      %2260 = vst.msk [vmem:[%s145 + $0x778] sm:$0xff] %vm2020, %v2003
      %2261 = vst.msk [vmem:[%s145 + $0x780] sm:$0xff] %vm2020, %v2004
      %2262 = vst.msk [vmem:[%s145 + $0x788] sm:$0xff] %vm2020, %v2005
      %2263 = vst.msk [vmem:[%s145 + $0x790] sm:$0xff] %vm2020, %v2006
      %2264 = vst.msk [vmem:[%s145 + $0x798] sm:$0xff] %vm2020, %v2007
      %2265 = vst.msk [vmem:[%s145 + $0x7a0] sm:$0xff] %vm2020, %v2008
      %2266 = vst.msk [vmem:[%s145 + $0x7a8] sm:$0xff] %vm2020, %v2009
      %2267 = vst.msk [vmem:[%s145 + $0x7b0] sm:$0xff] %vm2020, %v2010
      %2268 = vst.msk [vmem:[%s145 + $0x7b8] sm:$0xff] %vm2020, %v2011
      %2269 = vst.msk [vmem:[%s145 + $0x7c0] sm:$0xff] %vm2020, %v2012
      %2270 = vst.msk [vmem:[%s145 + $0x7c8] sm:$0xff] %vm2020, %v2013
      %2271 = vst.msk [vmem:[%s145 + $0x7d0] sm:$0xff] %vm2020, %v2014
      %2272 = vst.msk [vmem:[%s145 + $0x7d8] sm:$0xff] %vm2020, %v2015
      %2273 = vst.msk [vmem:[%s145 + $0x7e0] sm:$0xff] %vm2020, %v2016
      %2274 = vst.msk [vmem:[%s145 + $0x7e8] sm:$0xff] %vm2020, %v2017
      %2275 = vst.msk [vmem:[%s145 + $0x7f0] sm:$0xff] %vm2020, %v2018
      %2276 = vst.msk [vmem:[%s145 + $0x7f8] sm:$0xff] %vm2020, %v2019
      %s2277 = smul.u32 256, %s13
      %p2278 = scmp.lt.s32.totalorder %s2277, 1023
      %s2279 = scalar_select %p2278, %s2277, 1023
      %s2280 = smul.addr %s2279, 8
      %s2281 = scalar_lea.vmem %s2, %s2280
      // Predicated region
      $region29: #{generator_forward.9} parent=27 // pred_check
        %p2282 = pneg %p78
      $region30: #{generator_forward.9} parent=27 // pred_check_branch
        %2284 = sbr.rel (%p2282) target = $region32
      $region31: #{generator_forward.9} parent=27 // pred_region
        %s2285 = smul.u32 256, %s13
      $region32: #{generator_forward.9} parent=27 // pred_fallthru
        _
    $region28: #{generator_forward.9} parent=5 // pred_fallthru
      _
    %p2286 = scmp.le.s32.totalorder 2, %s8
    // Predicated region
    $region33: #{generator_forward.9} parent=5 // pred_check
      %p2287 = pneg %p2286
    $region34: #{generator_forward.9} parent=5 // pred_check_branch
      %2289 = sbr.rel (%p2287) target = $region36
    $region35: #{generator_forward.9} parent=5 // pred_region
      %s2290 = ssub.s32 %s8, 2
      // Predicated region
      $region37: #{generator_forward.9} parent=35 // pred_check
        %p2291 = pneg %p84
      $region38: #{generator_forward.9} parent=35 // pred_check_branch
        %2293 = sbr.rel (%p2291) target = $region40
      $region39: #{generator_forward.9} parent=35 // pred_region
        %s2294 = smul.u32 256, %s14
        %p2295 = scmp.lt.s32.totalorder %s2294, 1023
        %s2296 = scalar_select %p2295, %s2294, 1023
        %s2297 = smul.addr %s2296, 8
        %s2298 = scalar_lea.vmem %s2, %s2297
      $region40: #{generator_forward.9} parent=35 // pred_fallthru
        _
    $region36: #{generator_forward.9} parent=5 // pred_fallthru
      _
  $region6: #{generator_forward.9} parent=0 // loop_footer
    %s12 = sadd.s32 1, %s8
  $region7: #{generator_forward.9} parent=0 // loop_footer_branch
    %7 = sbr.rel target = $region3
  $region8: #{generator_forward.9} parent=0 // loop_exit
    _

</llo_original>
